<compile_context>
chip_gen: v7x
topology: tpu7x:2x2x1
jax: 0.10.0
libtpu: 0.0.40
codegen_flags: <defaults>
</compile_context>

<pallas_src>
import functools
import math

import jax
import jax.numpy as jnp
from jax.experimental import pallas as pl
from jax.experimental.pallas import tpu as pltpu

BN_EPS = 1e-5
VMEM_LIMIT = 48 * 1024 * 1024   # safe on v5e/v6e (128 MiB) and v7x (64 MiB)
MATMUL_TM_TARGET = 256          # store-lean tile; fits v5e scoped-VMEM default


def _cparams(n_grid_dims):
    return pltpu.CompilerParams(
        dimension_semantics=("parallel",) * n_grid_dims,
        vmem_limit_bytes=VMEM_LIMIT,
    )


def _pick_tile_m(m, target=MATMUL_TM_TARGET):
    """Largest multiple-of-8 divisor of m that is <= target (else m)."""
    if m <= target:
        return m
    for t in range(target - target % 8, 7, -8):
        if m % t == 0:
            return t
    return m


# --------------------------------------------------------------------------
# Kernel 1: tiled matmul + per-output-channel affine (+ optional ReLU).
#   Used for 1x1 convs, the im2col'd 3x3 stem conv and (via _head_kernel) FC.
#   bf16 operands, f32 MXU accumulation; weight block is VMEM-resident
#   (constant index_map) while activation tiles stream.
# --------------------------------------------------------------------------
def _matmul_affine_kernel(x_ref, w_ref, s_ref, b_ref, o_ref, *, relu):
    acc = jnp.dot(x_ref[...], w_ref[...], preferred_element_type=jnp.float32)
    y = acc * s_ref[...] + b_ref[...]
    if relu:
        y = jnp.maximum(y, 0.0)
    o_ref[...] = y.astype(o_ref.dtype)


def matmul_affine(x2d, w, scale, bias, relu, out_dtype=jnp.bfloat16):
    m, k = x2d.shape
    cout = w.shape[1]
    tm = _pick_tile_m(m)
    grid_m = m // tm
    cost = pl.CostEstimate(
        flops=2 * m * k * cout,
        transcendentals=0,
        bytes_accessed=2 * (m * k + k * cout + m * cout) + 8 * cout,
    )
    return pl.pallas_call(
        functools.partial(_matmul_affine_kernel, relu=relu),
        grid=(grid_m,),
        in_specs=[
            pl.BlockSpec((tm, k), lambda i: (i, 0)),      # activations stream
            pl.BlockSpec((k, cout), lambda i: (0, 0)),    # weight resident
            pl.BlockSpec((1, cout), lambda i: (0, 0)),    # scale resident
            pl.BlockSpec((1, cout), lambda i: (0, 0)),    # bias resident
        ],
        out_specs=pl.BlockSpec((tm, cout), lambda i: (i, 0)),
        out_shape=jax.ShapeDtypeStruct((m, cout), out_dtype),
        compiler_params=_cparams(1),
        cost_estimate=cost,
    )(x2d.astype(jnp.bfloat16), w.astype(jnp.bfloat16),
      scale.reshape(1, cout).astype(jnp.float32),
      bias.reshape(1, cout).astype(jnp.float32))


def conv1x1_bn(x, w, scale, bias, relu=True):
    # x: (N, H, W, Cin), w: (Cin, Cout)
    n, h, wd, cin = x.shape
    cout = w.shape[1]
    y = matmul_affine(x.reshape(n * h * wd, cin), w, scale, bias, relu)
    return y.reshape(n, h, wd, cout)


def conv3x3_s2_bn_relu(x, w, scale, bias):
    # One-off stem conv (Cin=3): patch extraction in JAX, tiled bf16 matmul
    # kernel for the compute.
    # TODO(synk): fuse the 9-tap patch extraction into the matmul kernel.
    n, h, wd, cin = x.shape
    cout = w.shape[-1]
    ho = (h - 1) // 2 + 1
    wo = (wd - 1) // 2 + 1
    xp = jnp.pad(x, ((0, 0), (1, 1), (1, 1), (0, 0)))
    patches = []
    for kh in range(3):
        for kw in range(3):
            patches.append(
                xp[:, kh:kh + 2 * (ho - 1) + 1:2, kw:kw + 2 * (wo - 1) + 1:2, :])
    p = jnp.stack(patches, axis=3).reshape(n * ho * wo, 9 * cin)
    y = matmul_affine(p, w.reshape(9 * cin, cout), scale, bias, relu=True)
    return y.reshape(n, ho, wo, cout)


# --------------------------------------------------------------------------
# 2x2 polyphase decomposition of a padded NHWC tensor: each stride-2 3x3 tap
# becomes a contiguous slice of one of the four phase tensors, so stride-2
# kernels do 1x work with only contiguous VMEM slicing.
# --------------------------------------------------------------------------
def _phase_split(xp):
    return (xp[:, 0::2, 0::2, :], xp[:, 0::2, 1::2, :],
            xp[:, 1::2, 0::2, :], xp[:, 1::2, 1::2, :])


# --------------------------------------------------------------------------
# Kernel 2: depthwise 3x3 conv + folded-BN (stride 1 and direct stride 2).
#   Gridded over batch; weights/scale/bias resident (constant index_map).
# --------------------------------------------------------------------------
def _dw3x3_s1_kernel(x_ref, w_ref, s_ref, b_ref, o_ref):
    h, wd = o_ref.shape[1], o_ref.shape[2]
    x = x_ref[...].astype(jnp.float32)          # (1, H+2, W+2, C)
    acc = jnp.zeros(o_ref.shape, jnp.float32)
    for kh in range(3):
        for kw in range(3):
            acc = acc + x[:, kh:kh + h, kw:kw + wd, :] * w_ref[kh * 3 + kw]
    o_ref[...] = (acc * s_ref[...] + b_ref[...]).astype(o_ref.dtype)


def _dw3x3_s2_kernel(x00_ref, x01_ref, x10_ref, x11_ref,
                     w_ref, s_ref, b_ref, o_ref):
    ho, wo = o_ref.shape[1], o_ref.shape[2]
    xs = ((x00_ref[...].astype(jnp.float32), x01_ref[...].astype(jnp.float32)),
          (x10_ref[...].astype(jnp.float32), x11_ref[...].astype(jnp.float32)))
    acc = jnp.zeros(o_ref.shape, jnp.float32)
    for kh in range(3):
        for kw in range(3):
            tap = xs[kh % 2][kw % 2][:, kh // 2:kh // 2 + ho,
                                     kw // 2:kw // 2 + wo, :]
            acc = acc + tap * w_ref[kh * 3 + kw]
    o_ref[...] = (acc * s_ref[...] + b_ref[...]).astype(o_ref.dtype)


def dwconv3x3_bn(x, w, scale, bias, stride):
    # x: (N, H, W, C) bf16, w: (3, 3, C) f32
    n, h, wd, c = x.shape
    w9 = w.reshape(9, 1, 1, c).astype(jnp.float32)
    s4 = scale.reshape(1, 1, 1, c).astype(jnp.float32)
    b4 = bias.reshape(1, 1, 1, c).astype(jnp.float32)
    const_spec = lambda shape: pl.BlockSpec(shape, lambda i: (0, 0, 0, 0))
    xp = jnp.pad(x, ((0, 0), (1, 1), (1, 1), (0, 0)))

    if stride == 1:
        return pl.pallas_call(
            _dw3x3_s1_kernel,
            grid=(n,),
            in_specs=[
                pl.BlockSpec((1, h + 2, wd + 2, c), lambda i: (i, 0, 0, 0)),
                const_spec((9, 1, 1, c)),
                const_spec((1, 1, 1, c)),
                const_spec((1, 1, 1, c)),
            ],
            out_specs=pl.BlockSpec((1, h, wd, c), lambda i: (i, 0, 0, 0)),
            out_shape=jax.ShapeDtypeStruct((n, h, wd, c), x.dtype),
            compiler_params=_cparams(1),
        )(xp, w9, s4, b4)

    # stride == 2: direct stride-2 output via polyphase inputs (no 4x work).
    ho = (h - 1) // 2 + 1
    wo = (wd - 1) // 2 + 1
    phases = _phase_split(xp)
    phase_specs = [
        pl.BlockSpec((1,) + p.shape[1:], lambda i: (i, 0, 0, 0)) for p in phases
    ]
    return pl.pallas_call(
        _dw3x3_s2_kernel,
        grid=(n,),
        in_specs=phase_specs + [
            const_spec((9, 1, 1, c)),
            const_spec((1, 1, 1, c)),
            const_spec((1, 1, 1, c)),
        ],
        out_specs=pl.BlockSpec((1, ho, wo, c), lambda i: (i, 0, 0, 0)),
        out_shape=jax.ShapeDtypeStruct((n, ho, wo, c), x.dtype),
        compiler_params=_cparams(1),
    )(*phases, w9, s4, b4)


# --------------------------------------------------------------------------
# Kernel 3: maxpool 3x3 stride 2 computed directly at stride 2 (polyphase).
# --------------------------------------------------------------------------
def _maxpool3x3_s2_kernel(x00_ref, x01_ref, x10_ref, x11_ref, o_ref):
    ho, wo = o_ref.shape[1], o_ref.shape[2]
    xs = ((x00_ref[...].astype(jnp.float32), x01_ref[...].astype(jnp.float32)),
          (x10_ref[...].astype(jnp.float32), x11_ref[...].astype(jnp.float32)))
    out = None
    for kh in range(3):
        for kw in range(3):
            tap = xs[kh % 2][kw % 2][:, kh // 2:kh // 2 + ho,
                                     kw // 2:kw // 2 + wo, :]
            out = tap if out is None else jnp.maximum(out, tap)
    o_ref[...] = out.astype(o_ref.dtype)


def maxpool3x3_s2(x):
    n, h, wd, c = x.shape
    ho = (h - 1) // 2 + 1
    wo = (wd - 1) // 2 + 1
    xp = jnp.pad(x, ((0, 0), (1, 1), (1, 1), (0, 0)),
                 constant_values=-jnp.inf)
    phases = _phase_split(xp)
    phase_specs = [
        pl.BlockSpec((1,) + p.shape[1:], lambda i: (i, 0, 0, 0)) for p in phases
    ]
    return pl.pallas_call(
        _maxpool3x3_s2_kernel,
        grid=(n,),
        in_specs=phase_specs,
        out_specs=pl.BlockSpec((1, ho, wo, c), lambda i: (i, 0, 0, 0)),
        out_shape=jax.ShapeDtypeStruct((n, ho, wo, c), x.dtype),
        compiler_params=_cparams(1),
    )(*phases)


# --------------------------------------------------------------------------
# Kernel 4: global average pool + fully-connected head (tiny; single block).
# --------------------------------------------------------------------------
def _head_kernel(x_ref, w_ref, b_ref, o_ref):
    pooled = jnp.mean(x_ref[...].astype(jnp.float32), axis=1)       # (N, C)
    o_ref[...] = (
        jnp.dot(pooled.astype(jnp.bfloat16), w_ref[...],
                preferred_element_type=jnp.float32) + b_ref[...]
    )


def avgpool_fc(x, fc_w, fc_b):
    n, h, wd, c = x.shape
    num_classes = fc_w.shape[1]
    vmem = pl.BlockSpec(memory_space=pltpu.MemorySpace.VMEM)
    return pl.pallas_call(
        _head_kernel,
        out_shape=jax.ShapeDtypeStruct((n, num_classes), jnp.float32),
        in_specs=[vmem, vmem, vmem],
        out_specs=vmem,
    )(x.reshape(n, h * wd, c).astype(jnp.bfloat16),
      fc_w.astype(jnp.bfloat16),
      fc_b.reshape(1, num_classes).astype(jnp.float32))


# --------------------------------------------------------------------------
# Glue: channel shuffle / InvertedResidual / full forward
# (pure layout ops stay in XLA; see TODO at top about fusing them further)
# --------------------------------------------------------------------------
def channel_shuffle_nhwc(x, groups):
    n, h, wd, c = x.shape
    x = x.reshape(n, h, wd, groups, c // groups)
    x = jnp.swapaxes(x, 3, 4)
    return x.reshape(n, h, wd, c)


def _branch1(x, p, stride):
    y = dwconv3x3_bn(x, p["dw_w"], p["dw_s"], p["dw_b"], stride)
    y = conv1x1_bn(y, p["pw_w"], p["pw_s"], p["pw_b"], relu=True)
    return y


def _branch2(x, p, stride):
    y = conv1x1_bn(x, p["pw1_w"], p["pw1_s"], p["pw1_b"], relu=True)
    y = dwconv3x3_bn(y, p["dw_w"], p["dw_s"], p["dw_b"], stride)
    y = conv1x1_bn(y, p["pw2_w"], p["pw2_s"], p["pw2_b"], relu=True)
    return y


def inverted_residual(x, p, stride):
    if stride == 1:
        c = x.shape[-1] // 2
        x1, x2 = x[..., :c], x[..., c:]
        out = jnp.concatenate([x1, _branch2(x2, p["branch2"], stride)], axis=-1)
    else:
        out = jnp.concatenate(
            [_branch1(x, p["branch1"], stride),
             _branch2(x, p["branch2"], stride)], axis=-1)
    return channel_shuffle_nhwc(out, 2)


def shufflenet_v2_forward(x_nchw, params):
    # NCHW -> NHWC, bf16 activations throughout (f32 accumulation in kernels).
    x = jnp.transpose(x_nchw, (0, 2, 3, 1)).astype(jnp.bfloat16)
    x = conv3x3_s2_bn_relu(x, params["conv1_w"], params["conv1_s"],
                           params["conv1_b"])
    x = maxpool3x3_s2(x)
    for stage in ("stage2", "stage3", "stage4"):
        for i, bp in enumerate(params[stage]):
            stride = 2 if i == 0 else 1
            x = inverted_residual(x, bp, stride)
    x = conv1x1_bn(x, params["conv5_w"], params["conv5_s"],
                   params["conv5_b"], relu=True)
    return avgpool_fc(x, params["fc_w"], params["fc_b"])


# --------------------------------------------------------------------------
# Deterministic parameter initialization (mirrors the module's init scheme)
# --------------------------------------------------------------------------
def _init_bn(c):
    scale = jnp.full((c,), 1.0 / math.sqrt(1.0 + BN_EPS), jnp.float32)
    bias = jnp.zeros((c,), jnp.float32)
    return scale, bias


def _init_conv3x3(key, cin, cout):
    n = 3 * 3 * cout
    return jax.random.normal(key, (3, 3, cin, cout), jnp.float32) * math.sqrt(2.0 / n)


def _init_dw3x3(key, c):
    n = 3 * 3 * c
    return jax.random.normal(key, (3, 3, c), jnp.float32) * math.sqrt(2.0 / n)


def _init_pw(key, cin, cout):
    n = 1 * 1 * cout
    return jax.random.normal(key, (cin, cout), jnp.float32) * math.sqrt(2.0 / n)


def _init_block(nk, inp, oup, stride):
    bf = oup // 2
    p = {}
    if stride > 1:
        dw_s, dw_b = _init_bn(inp)
        pw_s, pw_b = _init_bn(bf)
        p["branch1"] = dict(
            dw_w=_init_dw3x3(nk(), inp), dw_s=dw_s, dw_b=dw_b,
            pw_w=_init_pw(nk(), inp, bf), pw_s=pw_s, pw_b=pw_b,
        )
    in2 = inp if stride > 1 else bf
    pw1_s, pw1_b = _init_bn(bf)
    dw_s, dw_b = _init_bn(bf)
    pw2_s, pw2_b = _init_bn(bf)
    p["branch2"] = dict(
        pw1_w=_init_pw(nk(), in2, bf), pw1_s=pw1_s, pw1_b=pw1_b,
        dw_w=_init_dw3x3(nk(), bf), dw_s=dw_s, dw_b=dw_b,
        pw2_w=_init_pw(nk(), bf, bf), pw2_s=pw2_s, pw2_b=pw2_b,
    )
    return p


def make_params(key, stages_repeats, stages_out_channels, num_classes):
    keys = iter(jax.random.split(key, 512))
    nk = lambda: next(keys)
    params = {}
    in_ch = 3
    out_ch = stages_out_channels[0]
    params["conv1_w"] = _init_conv3x3(nk(), in_ch, out_ch)
    params["conv1_s"], params["conv1_b"] = _init_bn(out_ch)
    in_ch = out_ch
    for si, (reps, out_ch) in enumerate(zip(stages_repeats,
                                            stages_out_channels[1:4])):
        blocks = [_init_block(nk, in_ch, out_ch, 2)]
        for _ in range(reps - 1):
            blocks.append(_init_block(nk, out_ch, out_ch, 1))
        params[f"stage{si + 2}"] = blocks
        in_ch = out_ch
    out_ch = stages_out_channels[-1]
    params["conv5_w"] = _init_pw(nk(), in_ch, out_ch)
    params["conv5_s"], params["conv5_b"] = _init_bn(out_ch)
    params["fc_w"] = jax.random.normal(nk(), (out_ch, num_classes),
                                       jnp.float32) * (1.0 / out_ch)
    params["fc_b"] = jnp.zeros((num_classes,), jnp.float32)
    return params


if __name__ == "__main__":
    key = jax.random.PRNGKey(0)
    k_param, k_in = jax.random.split(key)

    # Small synthetic config: 3 stages with 2 repeats each, tiny channel counts.
    stages_repeats = [2, 2, 2]
    stages_out_channels = [8, 16, 32, 64, 128]
    num_classes = 10

    params = make_params(k_param, stages_repeats, stages_out_channels,
                         num_classes)

    # Input in PyTorch NCHW convention: batch=2, channels=3, spatial=32x32.
    x = jax.random.normal(k_in, (2, 3, 32, 32), jnp.float32)

    fwd = jax.jit(shufflenet_v2_forward)
    out = fwd(x, params)
    out = jax.block_until_ready(out)
    assert out.shape == (2, num_classes)
    assert bool(jnp.all(jnp.isfinite(out)))
    print("KERNEL_OK")
</pallas_src>

<mosaic_0001>
module attributes {stable_mosaic.version = 11 : i64} {
  func.func @_matmul_affine_kernel(%arg0: i32, %arg1: memref<256x27xbf16, #tpu.memory_space<vmem>>, %arg2: memref<27x8xbf16, #tpu.memory_space<vmem>>, %arg3: memref<1x8xf32, #tpu.memory_space<vmem>>, %arg4: memref<1x8xf32, #tpu.memory_space<vmem>>, %arg5: memref<256x8xbf16, #tpu.memory_space<vmem>>) attributes {dimension_semantics = [#tpu.dimension_semantics<parallel>], iteration_bounds = array<i64: 2>, scalar_prefetch = 0 : i64, scratch_operands = 0 : i64, tpu.core_type = #tpu.core_type<tc>, window_params = [{transform_indices = @transform_0, window_bounds = array<i64: 256, 27>}, {pipeline_mode = #tpu.pipeline_mode<synchronous>, transform_indices = @transform_1, window_bounds = array<i64: 27, 8>}, {pipeline_mode = #tpu.pipeline_mode<synchronous>, transform_indices = @transform_2, window_bounds = array<i64: 1, 8>}, {pipeline_mode = #tpu.pipeline_mode<synchronous>, transform_indices = @transform_3, window_bounds = array<i64: 1, 8>}, {transform_indices = @transform_4, window_bounds = array<i64: 256, 8>}]} {
    %c0 = arith.constant 0 : index
    %c0_0 = arith.constant 0 : index
    %0 = vector.load %arg1[%c0, %c0_0] : memref<256x27xbf16, #tpu.memory_space<vmem>>, vector<256x27xbf16>
    %c0_1 = arith.constant 0 : index
    %c0_2 = arith.constant 0 : index
    %1 = vector.load %arg2[%c0_1, %c0_2] : memref<27x8xbf16, #tpu.memory_space<vmem>>, vector<27x8xbf16>
    %cst = arith.constant dense<0.000000e+00> : vector<256x8xf32>
    %2 = tpu.matmul %0, %1, %cst {dimension_numbers = #tpu.dot_dimension_numbers<[1], [0], [0], [1], [0, 0, 1, 1], [], []>} : vector<256x27xbf16>, vector<27x8xbf16>, vector<256x8xf32> -> vector<256x8xf32>
    %c0_3 = arith.constant 0 : index
    %c0_4 = arith.constant 0 : index
    %3 = vector.load %arg3[%c0_3, %c0_4] : memref<1x8xf32, #tpu.memory_space<vmem>>, vector<1x8xf32>
    %4 = vector.broadcast %3 : vector<1x8xf32> to vector<256x8xf32>
    %5 = arith.mulf %2, %4 : vector<256x8xf32>
    %c0_5 = arith.constant 0 : index
    %c0_6 = arith.constant 0 : index
    %6 = vector.load %arg4[%c0_5, %c0_6] : memref<1x8xf32, #tpu.memory_space<vmem>>, vector<1x8xf32>
    %7 = vector.broadcast %6 : vector<1x8xf32> to vector<256x8xf32>
    %8 = arith.addf %5, %7 : vector<256x8xf32>
    %cst_7 = arith.constant 0.000000e+00 : f32
    %9 = vector.broadcast %cst_7 : f32 to vector<256x8xf32>
    %10 = arith.maximumf %8, %9 : vector<256x8xf32>
    %11 = arith.truncf %10 : vector<256x8xf32> to vector<256x8xbf16>
    %c0_8 = arith.constant 0 : index
    %c0_9 = arith.constant 0 : index
    %12 = vector.load %arg5[%c0_8, %c0_9] : memref<256x8xbf16, #tpu.memory_space<vmem>>, vector<256x8xbf16>
    tpu.vector_store %arg5[%c0_8, %c0_9], %11 {strides = array<i32>} : memref<256x8xbf16, #tpu.memory_space<vmem>>, vector<256x8xbf16>,
    return
  }
  func.func @transform_0(%arg0: i32) -> (i32, i32) {
    %c0_i32 = arith.constant 0 : i32
    %c0_i32_0 = arith.constant 0 : i32
    return %arg0, %c0_i32 : i32, i32
  }
  func.func @transform_1(%arg0: i32) -> (i32, i32) {
    %c0_i32 = arith.constant 0 : i32
    %c0_i32_0 = arith.constant 0 : i32
    %c0_i32_1 = arith.constant 0 : i32
    return %c0_i32, %c0_i32_0 : i32, i32
  }
  func.func @transform_2(%arg0: i32) -> (i32, i32) {
    %c0_i32 = arith.constant 0 : i32
    %c0_i32_0 = arith.constant 0 : i32
    %c0_i32_1 = arith.constant 0 : i32
    return %c0_i32, %c0_i32_0 : i32, i32
  }
  func.func @transform_3(%arg0: i32) -> (i32, i32) {
    %c0_i32 = arith.constant 0 : i32
    %c0_i32_0 = arith.constant 0 : i32
    %c0_i32_1 = arith.constant 0 : i32
    return %c0_i32, %c0_i32_0 : i32, i32
  }
  func.func @transform_4(%arg0: i32) -> (i32, i32) {
    %c0_i32 = arith.constant 0 : i32
    %c0_i32_0 = arith.constant 0 : i32
    return %arg0, %c0_i32 : i32, i32
  }
}

module attributes {stable_mosaic.version = 11 : i64} {
  func.func @_maxpool3x3_s2_kernel(%arg0: i32, %arg1: memref<1x9x9x8xbf16, #tpu.memory_space<vmem>>, %arg2: memref<1x9x9x8xbf16, #tpu.memory_space<vmem>>, %arg3: memref<1x9x9x8xbf16, #tpu.memory_space<vmem>>, %arg4: memref<1x9x9x8xbf16, #tpu.memory_space<vmem>>, %arg5: memref<1x8x8x8xbf16, #tpu.memory_space<vmem>>) attributes {dimension_semantics = [#tpu.dimension_semantics<parallel>], iteration_bounds = array<i64: 2>, scalar_prefetch = 0 : i64, scratch_operands = 0 : i64, tpu.core_type = #tpu.core_type<tc>, window_params = [{transform_indices = @transform_0, window_bounds = array<i64: 1, 9, 9, 8>}, {transform_indices = @transform_1, window_bounds = array<i64: 1, 9, 9, 8>}, {transform_indices = @transform_2, window_bounds = array<i64: 1, 9, 9, 8>}, {transform_indices = @transform_3, window_bounds = array<i64: 1, 9, 9, 8>}, {transform_indices = @transform_4, window_bounds = array<i64: 1, 8, 8, 8>}]} {
    %c0 = arith.constant 0 : index
    %c0_0 = arith.constant 0 : index
    %c0_1 = arith.constant 0 : index
    %c0_2 = arith.constant 0 : index
    %0 = vector.load %arg1[%c0, %c0_0, %c0_1, %c0_2] : memref<1x9x9x8xbf16, #tpu.memory_space<vmem>>, vector<1x9x9x8xbf16>
    %1 = arith.extf %0 : vector<1x9x9x8xbf16> to vector<1x9x9x8xf32>
    %c0_3 = arith.constant 0 : index
    %c0_4 = arith.constant 0 : index
    %c0_5 = arith.constant 0 : index
    %c0_6 = arith.constant 0 : index
    %2 = vector.load %arg2[%c0_3, %c0_4, %c0_5, %c0_6] : memref<1x9x9x8xbf16, #tpu.memory_space<vmem>>, vector<1x9x9x8xbf16>
    %3 = arith.extf %2 : vector<1x9x9x8xbf16> to vector<1x9x9x8xf32>
    %c0_7 = arith.constant 0 : index
    %c0_8 = arith.constant 0 : index
    %c0_9 = arith.constant 0 : index
    %c0_10 = arith.constant 0 : index
    %4 = vector.load %arg3[%c0_7, %c0_8, %c0_9, %c0_10] : memref<1x9x9x8xbf16, #tpu.memory_space<vmem>>, vector<1x9x9x8xbf16>
    %5 = arith.extf %4 : vector<1x9x9x8xbf16> to vector<1x9x9x8xf32>
    %c0_11 = arith.constant 0 : index
    %c0_12 = arith.constant 0 : index
    %c0_13 = arith.constant 0 : index
    %c0_14 = arith.constant 0 : index
    %6 = vector.load %arg4[%c0_11, %c0_12, %c0_13, %c0_14] : memref<1x9x9x8xbf16, #tpu.memory_space<vmem>>, vector<1x9x9x8xbf16>
    %7 = arith.extf %6 : vector<1x9x9x8xbf16> to vector<1x9x9x8xf32>
    %8 = vector.extract_strided_slice %1 {offsets = [0, 0, 0, 0], sizes = [1, 8, 8, 8], strides = [1, 1, 1, 1]} : vector<1x9x9x8xf32> to vector<1x8x8x8xf32>
    %9 = vector.extract_strided_slice %3 {offsets = [0, 0, 0, 0], sizes = [1, 8, 8, 8], strides = [1, 1, 1, 1]} : vector<1x9x9x8xf32> to vector<1x8x8x8xf32>
    %10 = arith.maximumf %8, %9 : vector<1x8x8x8xf32>
    %11 = vector.extract_strided_slice %1 {offsets = [0, 0, 1, 0], sizes = [1, 8, 8, 8], strides = [1, 1, 1, 1]} : vector<1x9x9x8xf32> to vector<1x8x8x8xf32>
    %12 = arith.maximumf %10, %11 : vector<1x8x8x8xf32>
    %13 = vector.extract_strided_slice %5 {offsets = [0, 0, 0, 0], sizes = [1, 8, 8, 8], strides = [1, 1, 1, 1]} : vector<1x9x9x8xf32> to vector<1x8x8x8xf32>
    %14 = arith.maximumf %12, %13 : vector<1x8x8x8xf32>
    %15 = vector.extract_strided_slice %7 {offsets = [0, 0, 0, 0], sizes = [1, 8, 8, 8], strides = [1, 1, 1, 1]} : vector<1x9x9x8xf32> to vector<1x8x8x8xf32>
    %16 = arith.maximumf %14, %15 : vector<1x8x8x8xf32>
    %17 = vector.extract_strided_slice %5 {offsets = [0, 0, 1, 0], sizes = [1, 8, 8, 8], strides = [1, 1, 1, 1]} : vector<1x9x9x8xf32> to vector<1x8x8x8xf32>
    %18 = arith.maximumf %16, %17 : vector<1x8x8x8xf32>
    %19 = vector.extract_strided_slice %1 {offsets = [0, 1, 0, 0], sizes = [1, 8, 8, 8], strides = [1, 1, 1, 1]} : vector<1x9x9x8xf32> to vector<1x8x8x8xf32>
    %20 = arith.maximumf %18, %19 : vector<1x8x8x8xf32>
    %21 = vector.extract_strided_slice %3 {offsets = [0, 1, 0, 0], sizes = [1, 8, 8, 8], strides = [1, 1, 1, 1]} : vector<1x9x9x8xf32> to vector<1x8x8x8xf32>
    %22 = arith.maximumf %20, %21 : vector<1x8x8x8xf32>
    %23 = vector.extract_strided_slice %1 {offsets = [0, 1, 1, 0], sizes = [1, 8, 8, 8], strides = [1, 1, 1, 1]} : vector<1x9x9x8xf32> to vector<1x8x8x8xf32>
    %24 = arith.maximumf %22, %23 : vector<1x8x8x8xf32>
    %25 = arith.truncf %24 : vector<1x8x8x8xf32> to vector<1x8x8x8xbf16>
    %c0_15 = arith.constant 0 : index
    %c0_16 = arith.constant 0 : index
    %c0_17 = arith.constant 0 : index
    %c0_18 = arith.constant 0 : index
    %26 = vector.load %arg5[%c0_15, %c0_16, %c0_17, %c0_18] : memref<1x8x8x8xbf16, #tpu.memory_space<vmem>>, vector<1x8x8x8xbf16>
    tpu.vector_store %arg5[%c0_15, %c0_16, %c0_17, %c0_18], %25 {strides = array<i32>} : memref<1x8x8x8xbf16, #tpu.memory_space<vmem>>, vector<1x8x8x8xbf16>,
    return
  }
  func.func @transform_0(%arg0: i32) -> (i32, i32, i32, i32) {
    %c0_i32 = arith.constant 0 : i32
    %c0_i32_0 = arith.constant 0 : i32
    %c0_i32_1 = arith.constant 0 : i32
    %c0_i32_2 = arith.constant 0 : i32
    return %arg0, %c0_i32, %c0_i32_0, %c0_i32_1 : i32, i32, i32, i32
  }
  func.func @transform_1(%arg0: i32) -> (i32, i32, i32, i32) {
    %c0_i32 = arith.constant 0 : i32
    %c0_i32_0 = arith.constant 0 : i32
    %c0_i32_1 = arith.constant 0 : i32
    %c0_i32_2 = arith.constant 0 : i32
    return %arg0, %c0_i32, %c0_i32_0, %c0_i32_1 : i32, i32, i32, i32
  }
  func.func @transform_2(%arg0: i32) -> (i32, i32, i32, i32) {
    %c0_i32 = arith.constant 0 : i32
    %c0_i32_0 = arith.constant 0 : i32
    %c0_i32_1 = arith.constant 0 : i32
    %c0_i32_2 = arith.constant 0 : i32
    return %arg0, %c0_i32, %c0_i32_0, %c0_i32_1 : i32, i32, i32, i32
  }
  func.func @transform_3(%arg0: i32) -> (i32, i32, i32, i32) {
    %c0_i32 = arith.constant 0 : i32
    %c0_i32_0 = arith.constant 0 : i32
    %c0_i32_1 = arith.constant 0 : i32
    %c0_i32_2 = arith.constant 0 : i32
    return %arg0, %c0_i32, %c0_i32_0, %c0_i32_1 : i32, i32, i32, i32
  }
  func.func @transform_4(%arg0: i32) -> (i32, i32, i32, i32) {
    %c0_i32 = arith.constant 0 : i32
    %c0_i32_0 = arith.constant 0 : i32
    %c0_i32_1 = arith.constant 0 : i32
    %c0_i32_2 = arith.constant 0 : i32
    return %arg0, %c0_i32, %c0_i32_0, %c0_i32_1 : i32, i32, i32, i32
  }
}

module attributes {stable_mosaic.version = 11 : i64} {
  func.func @_matmul_affine_kernel(%arg0: i32, %arg1: memref<32x8xbf16, #tpu.memory_space<vmem>>, %arg2: memref<8x8xbf16, #tpu.memory_space<vmem>>, %arg3: memref<1x8xf32, #tpu.memory_space<vmem>>, %arg4: memref<1x8xf32, #tpu.memory_space<vmem>>, %arg5: memref<32x8xbf16, #tpu.memory_space<vmem>>) attributes {dimension_semantics = [#tpu.dimension_semantics<parallel>], iteration_bounds = array<i64: 1>, scalar_prefetch = 0 : i64, scratch_operands = 0 : i64, tpu.core_type = #tpu.core_type<tc>, window_params = [{transform_indices = @transform_0, window_bounds = array<i64: 32, 8>}, {pipeline_mode = #tpu.pipeline_mode<synchronous>, transform_indices = @transform_1, window_bounds = array<i64: 8, 8>}, {pipeline_mode = #tpu.pipeline_mode<synchronous>, transform_indices = @transform_2, window_bounds = array<i64: 1, 8>}, {pipeline_mode = #tpu.pipeline_mode<synchronous>, transform_indices = @transform_3, window_bounds = array<i64: 1, 8>}, {transform_indices = @transform_4, window_bounds = array<i64: 32, 8>}]} {
    %c0 = arith.constant 0 : index
    %c0_0 = arith.constant 0 : index
    %0 = vector.load %arg1[%c0, %c0_0] : memref<32x8xbf16, #tpu.memory_space<vmem>>, vector<32x8xbf16>
    %c0_1 = arith.constant 0 : index
    %c0_2 = arith.constant 0 : index
    %1 = vector.load %arg2[%c0_1, %c0_2] : memref<8x8xbf16, #tpu.memory_space<vmem>>, vector<8x8xbf16>
    %cst = arith.constant dense<0.000000e+00> : vector<32x8xf32>
    %2 = tpu.matmul %0, %1, %cst {dimension_numbers = #tpu.dot_dimension_numbers<[1], [0], [0], [1], [0, 0, 1, 1], [], []>} : vector<32x8xbf16>, vector<8x8xbf16>, vector<32x8xf32> -> vector<32x8xf32>
    %c0_3 = arith.constant 0 : index
    %c0_4 = arith.constant 0 : index
    %3 = vector.load %arg3[%c0_3, %c0_4] : memref<1x8xf32, #tpu.memory_space<vmem>>, vector<1x8xf32>
    %4 = vector.broadcast %3 : vector<1x8xf32> to vector<32x8xf32>
    %5 = arith.mulf %2, %4 : vector<32x8xf32>
    %c0_5 = arith.constant 0 : index
    %c0_6 = arith.constant 0 : index
    %6 = vector.load %arg4[%c0_5, %c0_6] : memref<1x8xf32, #tpu.memory_space<vmem>>, vector<1x8xf32>
    %7 = vector.broadcast %6 : vector<1x8xf32> to vector<32x8xf32>
    %8 = arith.addf %5, %7 : vector<32x8xf32>
    %cst_7 = arith.constant 0.000000e+00 : f32
    %9 = vector.broadcast %cst_7 : f32 to vector<32x8xf32>
    %10 = arith.maximumf %8, %9 : vector<32x8xf32>
    %11 = arith.truncf %10 : vector<32x8xf32> to vector<32x8xbf16>
    %c0_8 = arith.constant 0 : index
    %c0_9 = arith.constant 0 : index
    %12 = vector.load %arg5[%c0_8, %c0_9] : memref<32x8xbf16, #tpu.memory_space<vmem>>, vector<32x8xbf16>
    tpu.vector_store %arg5[%c0_8, %c0_9], %11 {strides = array<i32>} : memref<32x8xbf16, #tpu.memory_space<vmem>>, vector<32x8xbf16>,
    return
  }
  func.func @transform_0(%arg0: i32) -> (i32, i32) {
    %c0_i32 = arith.constant 0 : i32
    %c0_i32_0 = arith.constant 0 : i32
    return %arg0, %c0_i32 : i32, i32
  }
  func.func @transform_1(%arg0: i32) -> (i32, i32) {
    %c0_i32 = arith.constant 0 : i32
    %c0_i32_0 = arith.constant 0 : i32
    %c0_i32_1 = arith.constant 0 : i32
    return %c0_i32, %c0_i32_0 : i32, i32
  }
  func.func @transform_2(%arg0: i32) -> (i32, i32) {
    %c0_i32 = arith.constant 0 : i32
    %c0_i32_0 = arith.constant 0 : i32
    %c0_i32_1 = arith.constant 0 : i32
    return %c0_i32, %c0_i32_0 : i32, i32
  }
  func.func @transform_3(%arg0: i32) -> (i32, i32) {
    %c0_i32 = arith.constant 0 : i32
    %c0_i32_0 = arith.constant 0 : i32
    %c0_i32_1 = arith.constant 0 : i32
    return %c0_i32, %c0_i32_0 : i32, i32
  }
  func.func @transform_4(%arg0: i32) -> (i32, i32) {
    %c0_i32 = arith.constant 0 : i32
    %c0_i32_0 = arith.constant 0 : i32
    return %arg0, %c0_i32 : i32, i32
  }
}

module attributes {stable_mosaic.version = 11 : i64} {
  func.func @_matmul_affine_kernel(%arg0: i32, %arg1: memref<128x8xbf16, #tpu.memory_space<vmem>>, %arg2: memref<8x8xbf16, #tpu.memory_space<vmem>>, %arg3: memref<1x8xf32, #tpu.memory_space<vmem>>, %arg4: memref<1x8xf32, #tpu.memory_space<vmem>>, %arg5: memref<128x8xbf16, #tpu.memory_space<vmem>>) attributes {dimension_semantics = [#tpu.dimension_semantics<parallel>], iteration_bounds = array<i64: 1>, scalar_prefetch = 0 : i64, scratch_operands = 0 : i64, tpu.core_type = #tpu.core_type<tc>, window_params = [{transform_indices = @transform_0, window_bounds = array<i64: 128, 8>}, {pipeline_mode = #tpu.pipeline_mode<synchronous>, transform_indices = @transform_1, window_bounds = array<i64: 8, 8>}, {pipeline_mode = #tpu.pipeline_mode<synchronous>, transform_indices = @transform_2, window_bounds = array<i64: 1, 8>}, {pipeline_mode = #tpu.pipeline_mode<synchronous>, transform_indices = @transform_3, window_bounds = array<i64: 1, 8>}, {transform_indices = @transform_4, window_bounds = array<i64: 128, 8>}]} {
    %c0 = arith.constant 0 : index
    %c0_0 = arith.constant 0 : index
    %0 = vector.load %arg1[%c0, %c0_0] : memref<128x8xbf16, #tpu.memory_space<vmem>>, vector<128x8xbf16>
    %c0_1 = arith.constant 0 : index
    %c0_2 = arith.constant 0 : index
    %1 = vector.load %arg2[%c0_1, %c0_2] : memref<8x8xbf16, #tpu.memory_space<vmem>>, vector<8x8xbf16>
    %cst = arith.constant dense<0.000000e+00> : vector<128x8xf32>
    %2 = tpu.matmul %0, %1, %cst {dimension_numbers = #tpu.dot_dimension_numbers<[1], [0], [0], [1], [0, 0, 1, 1], [], []>} : vector<128x8xbf16>, vector<8x8xbf16>, vector<128x8xf32> -> vector<128x8xf32>
    %c0_3 = arith.constant 0 : index
    %c0_4 = arith.constant 0 : index
    %3 = vector.load %arg3[%c0_3, %c0_4] : memref<1x8xf32, #tpu.memory_space<vmem>>, vector<1x8xf32>
    %4 = vector.broadcast %3 : vector<1x8xf32> to vector<128x8xf32>
    %5 = arith.mulf %2, %4 : vector<128x8xf32>
    %c0_5 = arith.constant 0 : index
    %c0_6 = arith.constant 0 : index
    %6 = vector.load %arg4[%c0_5, %c0_6] : memref<1x8xf32, #tpu.memory_space<vmem>>, vector<1x8xf32>
    %7 = vector.broadcast %6 : vector<1x8xf32> to vector<128x8xf32>
    %8 = arith.addf %5, %7 : vector<128x8xf32>
    %cst_7 = arith.constant 0.000000e+00 : f32
    %9 = vector.broadcast %cst_7 : f32 to vector<128x8xf32>
    %10 = arith.maximumf %8, %9 : vector<128x8xf32>
    %11 = arith.truncf %10 : vector<128x8xf32> to vector<128x8xbf16>
    %c0_8 = arith.constant 0 : index
    %c0_9 = arith.constant 0 : index
    %12 = vector.load %arg5[%c0_8, %c0_9] : memref<128x8xbf16, #tpu.memory_space<vmem>>, vector<128x8xbf16>
    tpu.vector_store %arg5[%c0_8, %c0_9], %11 {strides = array<i32>} : memref<128x8xbf16, #tpu.memory_space<vmem>>, vector<128x8xbf16>,
    return
  }
  func.func @transform_0(%arg0: i32) -> (i32, i32) {
    %c0_i32 = arith.constant 0 : i32
    %c0_i32_0 = arith.constant 0 : i32
    return %arg0, %c0_i32 : i32, i32
  }
  func.func @transform_1(%arg0: i32) -> (i32, i32) {
    %c0_i32 = arith.constant 0 : i32
    %c0_i32_0 = arith.constant 0 : i32
    %c0_i32_1 = arith.constant 0 : i32
    return %c0_i32, %c0_i32_0 : i32, i32
  }
  func.func @transform_2(%arg0: i32) -> (i32, i32) {
    %c0_i32 = arith.constant 0 : i32
    %c0_i32_0 = arith.constant 0 : i32
    %c0_i32_1 = arith.constant 0 : i32
    return %c0_i32, %c0_i32_0 : i32, i32
  }
  func.func @transform_3(%arg0: i32) -> (i32, i32) {
    %c0_i32 = arith.constant 0 : i32
    %c0_i32_0 = arith.constant 0 : i32
    %c0_i32_1 = arith.constant 0 : i32
    return %c0_i32, %c0_i32_0 : i32, i32
  }
  func.func @transform_4(%arg0: i32) -> (i32, i32) {
    %c0_i32 = arith.constant 0 : i32
    %c0_i32_0 = arith.constant 0 : i32
    return %arg0, %c0_i32 : i32, i32
  }
}

module attributes {stable_mosaic.version = 11 : i64} {
  func.func @_dw3x3_s2_kernel(%arg0: i32, %arg1: memref<1x5x5x8xbf16, #tpu.memory_space<vmem>>, %arg2: memref<1x5x5x8xbf16, #tpu.memory_space<vmem>>, %arg3: memref<1x5x5x8xbf16, #tpu.memory_space<vmem>>, %arg4: memref<1x5x5x8xbf16, #tpu.memory_space<vmem>>, %arg5: memref<9x1x1x8xf32, #tpu.memory_space<vmem>>, %arg6: memref<1x1x1x8xf32, #tpu.memory_space<vmem>>, %arg7: memref<1x1x1x8xf32, #tpu.memory_space<vmem>>, %arg8: memref<1x4x4x8xbf16, #tpu.memory_space<vmem>>) attributes {dimension_semantics = [#tpu.dimension_semantics<parallel>], iteration_bounds = array<i64: 2>, scalar_prefetch = 0 : i64, scratch_operands = 0 : i64, tpu.core_type = #tpu.core_type<tc>, window_params = [{transform_indices = @transform_0, window_bounds = array<i64: 1, 5, 5, 8>}, {transform_indices = @transform_1, window_bounds = array<i64: 1, 5, 5, 8>}, {transform_indices = @transform_2, window_bounds = array<i64: 1, 5, 5, 8>}, {transform_indices = @transform_3, window_bounds = array<i64: 1, 5, 5, 8>}, {pipeline_mode = #tpu.pipeline_mode<synchronous>, transform_indices = @transform_4, window_bounds = array<i64: 9, 1, 1, 8>}, {pipeline_mode = #tpu.pipeline_mode<synchronous>, transform_indices = @transform_5, window_bounds = array<i64: 1, 1, 1, 8>}, {pipeline_mode = #tpu.pipeline_mode<synchronous>, transform_indices = @transform_6, window_bounds = array<i64: 1, 1, 1, 8>}, {transform_indices = @transform_7, window_bounds = array<i64: 1, 4, 4, 8>}]} {
    %c0 = arith.constant 0 : index
    %c0_0 = arith.constant 0 : index
    %c0_1 = arith.constant 0 : index
    %c0_2 = arith.constant 0 : index
    %0 = vector.load %arg1[%c0, %c0_0, %c0_1, %c0_2] : memref<1x5x5x8xbf16, #tpu.memory_space<vmem>>, vector<1x5x5x8xbf16>
    %1 = arith.extf %0 : vector<1x5x5x8xbf16> to vector<1x5x5x8xf32>
    %c0_3 = arith.constant 0 : index
    %c0_4 = arith.constant 0 : index
    %c0_5 = arith.constant 0 : index
    %c0_6 = arith.constant 0 : index
    %2 = vector.load %arg2[%c0_3, %c0_4, %c0_5, %c0_6] : memref<1x5x5x8xbf16, #tpu.memory_space<vmem>>, vector<1x5x5x8xbf16>
    %3 = arith.extf %2 : vector<1x5x5x8xbf16> to vector<1x5x5x8xf32>
    %c0_7 = arith.constant 0 : index
    %c0_8 = arith.constant 0 : index
    %c0_9 = arith.constant 0 : index
    %c0_10 = arith.constant 0 : index
    %4 = vector.load %arg3[%c0_7, %c0_8, %c0_9, %c0_10] : memref<1x5x5x8xbf16, #tpu.memory_space<vmem>>, vector<1x5x5x8xbf16>
    %5 = arith.extf %4 : vector<1x5x5x8xbf16> to vector<1x5x5x8xf32>
    %c0_11 = arith.constant 0 : index
    %c0_12 = arith.constant 0 : index
    %c0_13 = arith.constant 0 : index
    %c0_14 = arith.constant 0 : index
    %6 = vector.load %arg4[%c0_11, %c0_12, %c0_13, %c0_14] : memref<1x5x5x8xbf16, #tpu.memory_space<vmem>>, vector<1x5x5x8xbf16>
    %7 = arith.extf %6 : vector<1x5x5x8xbf16> to vector<1x5x5x8xf32>
    %cst = arith.constant 0.000000e+00 : f32
    %8 = vector.broadcast %cst : f32 to vector<1x4x4x8xf32>
    %9 = vector.extract_strided_slice %1 {offsets = [0, 0, 0, 0], sizes = [1, 4, 4, 8], strides = [1, 1, 1, 1]} : vector<1x5x5x8xf32> to vector<1x4x4x8xf32>
    %c0_15 = arith.constant 0 : index
    %c0_16 = arith.constant 0 : index
    %c0_17 = arith.constant 0 : index
    %c0_18 = arith.constant 0 : index
    %10 = vector.load %arg5[%c0_15, %c0_16, %c0_17, %c0_18] : memref<9x1x1x8xf32, #tpu.memory_space<vmem>>, vector<1x1x1x8xf32>
    %11 = vector.shape_cast %10 : vector<1x1x1x8xf32> to vector<1x1x8xf32>
    %12 = vector.shape_cast %11 : vector<1x1x8xf32> to vector<1x1x1x8xf32>
    %13 = vector.broadcast %12 : vector<1x1x1x8xf32> to vector<1x4x4x8xf32>
    %14 = arith.mulf %9, %13 : vector<1x4x4x8xf32>
    %15 = arith.addf %8, %14 : vector<1x4x4x8xf32>
    %16 = vector.extract_strided_slice %3 {offsets = [0, 0, 0, 0], sizes = [1, 4, 4, 8], strides = [1, 1, 1, 1]} : vector<1x5x5x8xf32> to vector<1x4x4x8xf32>
    %c1 = arith.constant 1 : index
    %c0_19 = arith.constant 0 : index
    %c0_20 = arith.constant 0 : index
    %c0_21 = arith.constant 0 : index
    %17 = vector.load %arg5[%c1, %c0_19, %c0_20, %c0_21] : memref<9x1x1x8xf32, #tpu.memory_space<vmem>>, vector<1x1x1x8xf32>
    %18 = vector.shape_cast %17 : vector<1x1x1x8xf32> to vector<1x1x8xf32>
    %19 = vector.shape_cast %18 : vector<1x1x8xf32> to vector<1x1x1x8xf32>
    %20 = vector.broadcast %19 : vector<1x1x1x8xf32> to vector<1x4x4x8xf32>
    %21 = arith.mulf %16, %20 : vector<1x4x4x8xf32>
    %22 = arith.addf %15, %21 : vector<1x4x4x8xf32>
    %23 = vector.extract_strided_slice %1 {offsets = [0, 0, 1, 0], sizes = [1, 4, 4, 8], strides = [1, 1, 1, 1]} : vector<1x5x5x8xf32> to vector<1x4x4x8xf32>
    %c2 = arith.constant 2 : index
    %c0_22 = arith.constant 0 : index
    %c0_23 = arith.constant 0 : index
    %c0_24 = arith.constant 0 : index
    %24 = vector.load %arg5[%c2, %c0_22, %c0_23, %c0_24] : memref<9x1x1x8xf32, #tpu.memory_space<vmem>>, vector<1x1x1x8xf32>
    %25 = vector.shape_cast %24 : vector<1x1x1x8xf32> to vector<1x1x8xf32>
    %26 = vector.shape_cast %25 : vector<1x1x8xf32> to vector<1x1x1x8xf32>
    %27 = vector.broadcast %26 : vector<1x1x1x8xf32> to vector<1x4x4x8xf32>
    %28 = arith.mulf %23, %27 : vector<1x4x4x8xf32>
    %29 = arith.addf %22, %28 : vector<1x4x4x8xf32>
    %30 = vector.extract_strided_slice %5 {offsets = [0, 0, 0, 0], sizes = [1, 4, 4, 8], strides = [1, 1, 1, 1]} : vector<1x5x5x8xf32> to vector<1x4x4x8xf32>
    %c3 = arith.constant 3 : index
    %c0_25 = arith.constant 0 : index
    %c0_26 = arith.constant 0 : index
    %c0_27 = arith.constant 0 : index
    %31 = vector.load %arg5[%c3, %c0_25, %c0_26, %c0_27] : memref<9x1x1x8xf32, #tpu.memory_space<vmem>>, vector<1x1x1x8xf32>
    %32 = vector.shape_cast %31 : vector<1x1x1x8xf32> to vector<1x1x8xf32>
    %33 = vector.shape_cast %32 : vector<1x1x8xf32> to vector<1x1x1x8xf32>
    %34 = vector.broadcast %33 : vector<1x1x1x8xf32> to vector<1x4x4x8xf32>
    %35 = arith.mulf %30, %34 : vector<1x4x4x8xf32>
    %36 = arith.addf %29, %35 : vector<1x4x4x8xf32>
    %37 = vector.extract_strided_slice %7 {offsets = [0, 0, 0, 0], sizes = [1, 4, 4, 8], strides = [1, 1, 1, 1]} : vector<1x5x5x8xf32> to vector<1x4x4x8xf32>
    %c4 = arith.constant 4 : index
    %c0_28 = arith.constant 0 : index
    %c0_29 = arith.constant 0 : index
    %c0_30 = arith.constant 0 : index
    %38 = vector.load %arg5[%c4, %c0_28, %c0_29, %c0_30] : memref<9x1x1x8xf32, #tpu.memory_space<vmem>>, vector<1x1x1x8xf32>
    %39 = vector.shape_cast %38 : vector<1x1x1x8xf32> to vector<1x1x8xf32>
    %40 = vector.shape_cast %39 : vector<1x1x8xf32> to vector<1x1x1x8xf32>
    %41 = vector.broadcast %40 : vector<1x1x1x8xf32> to vector<1x4x4x8xf32>
    %42 = arith.mulf %37, %41 : vector<1x4x4x8xf32>
    %43 = arith.addf %36, %42 : vector<1x4x4x8xf32>
    %44 = vector.extract_strided_slice %5 {offsets = [0, 0, 1, 0], sizes = [1, 4, 4, 8], strides = [1, 1, 1, 1]} : vector<1x5x5x8xf32> to vector<1x4x4x8xf32>
    %c5 = arith.constant 5 : index
    %c0_31 = arith.constant 0 : index
    %c0_32 = arith.constant 0 : index
    %c0_33 = arith.constant 0 : index
    %45 = vector.load %arg5[%c5, %c0_31, %c0_32, %c0_33] : memref<9x1x1x8xf32, #tpu.memory_space<vmem>>, vector<1x1x1x8xf32>
    %46 = vector.shape_cast %45 : vector<1x1x1x8xf32> to vector<1x1x8xf32>
    %47 = vector.shape_cast %46 : vector<1x1x8xf32> to vector<1x1x1x8xf32>
    %48 = vector.broadcast %47 : vector<1x1x1x8xf32> to vector<1x4x4x8xf32>
    %49 = arith.mulf %44, %48 : vector<1x4x4x8xf32>
    %50 = arith.addf %43, %49 : vector<1x4x4x8xf32>
    %51 = vector.extract_strided_slice %1 {offsets = [0, 1, 0, 0], sizes = [1, 4, 4, 8], strides = [1, 1, 1, 1]} : vector<1x5x5x8xf32> to vector<1x4x4x8xf32>
    %c6 = arith.constant 6 : index
    %c0_34 = arith.constant 0 : index
    %c0_35 = arith.constant 0 : index
    %c0_36 = arith.constant 0 : index
    %52 = vector.load %arg5[%c6, %c0_34, %c0_35, %c0_36] : memref<9x1x1x8xf32, #tpu.memory_space<vmem>>, vector<1x1x1x8xf32>
    %53 = vector.shape_cast %52 : vector<1x1x1x8xf32> to vector<1x1x8xf32>
    %54 = vector.shape_cast %53 : vector<1x1x8xf32> to vector<1x1x1x8xf32>
    %55 = vector.broadcast %54 : vector<1x1x1x8xf32> to vector<1x4x4x8xf32>
    %56 = arith.mulf %51, %55 : vector<1x4x4x8xf32>
    %57 = arith.addf %50, %56 : vector<1x4x4x8xf32>
    %58 = vector.extract_strided_slice %3 {offsets = [0, 1, 0, 0], sizes = [1, 4, 4, 8], strides = [1, 1, 1, 1]} : vector<1x5x5x8xf32> to vector<1x4x4x8xf32>
    %c7 = arith.constant 7 : index
    %c0_37 = arith.constant 0 : index
    %c0_38 = arith.constant 0 : index
    %c0_39 = arith.constant 0 : index
    %59 = vector.load %arg5[%c7, %c0_37, %c0_38, %c0_39] : memref<9x1x1x8xf32, #tpu.memory_space<vmem>>, vector<1x1x1x8xf32>
    %60 = vector.shape_cast %59 : vector<1x1x1x8xf32> to vector<1x1x8xf32>
    %61 = vector.shape_cast %60 : vector<1x1x8xf32> to vector<1x1x1x8xf32>
    %62 = vector.broadcast %61 : vector<1x1x1x8xf32> to vector<1x4x4x8xf32>
    %63 = arith.mulf %58, %62 : vector<1x4x4x8xf32>
    %64 = arith.addf %57, %63 : vector<1x4x4x8xf32>
    %65 = vector.extract_strided_slice %1 {offsets = [0, 1, 1, 0], sizes = [1, 4, 4, 8], strides = [1, 1, 1, 1]} : vector<1x5x5x8xf32> to vector<1x4x4x8xf32>
    %c8 = arith.constant 8 : index
    %c0_40 = arith.constant 0 : index
    %c0_41 = arith.constant 0 : index
    %c0_42 = arith.constant 0 : index
    %66 = vector.load %arg5[%c8, %c0_40, %c0_41, %c0_42] : memref<9x1x1x8xf32, #tpu.memory_space<vmem>>, vector<1x1x1x8xf32>
    %67 = vector.shape_cast %66 : vector<1x1x1x8xf32> to vector<1x1x8xf32>
    %68 = vector.shape_cast %67 : vector<1x1x8xf32> to vector<1x1x1x8xf32>
    %69 = vector.broadcast %68 : vector<1x1x1x8xf32> to vector<1x4x4x8xf32>
    %70 = arith.mulf %65, %69 : vector<1x4x4x8xf32>
    %71 = arith.addf %64, %70 : vector<1x4x4x8xf32>
    %c0_43 = arith.constant 0 : index
    %c0_44 = arith.constant 0 : index
    %c0_45 = arith.constant 0 : index
    %c0_46 = arith.constant 0 : index
    %72 = vector.load %arg6[%c0_43, %c0_44, %c0_45, %c0_46] : memref<1x1x1x8xf32, #tpu.memory_space<vmem>>, vector<1x1x1x8xf32>
    %73 = vector.broadcast %72 : vector<1x1x1x8xf32> to vector<1x4x4x8xf32>
    %74 = arith.mulf %71, %73 : vector<1x4x4x8xf32>
    %c0_47 = arith.constant 0 : index
    %c0_48 = arith.constant 0 : index
    %c0_49 = arith.constant 0 : index
    %c0_50 = arith.constant 0 : index
    %75 = vector.load %arg7[%c0_47, %c0_48, %c0_49, %c0_50] : memref<1x1x1x8xf32, #tpu.memory_space<vmem>>, vector<1x1x1x8xf32>
    %76 = vector.broadcast %75 : vector<1x1x1x8xf32> to vector<1x4x4x8xf32>
    %77 = arith.addf %74, %76 : vector<1x4x4x8xf32>
    %78 = arith.truncf %77 : vector<1x4x4x8xf32> to vector<1x4x4x8xbf16>
    %c0_51 = arith.constant 0 : index
    %c0_52 = arith.constant 0 : index
    %c0_53 = arith.constant 0 : index
    %c0_54 = arith.constant 0 : index
    %79 = vector.load %arg8[%c0_51, %c0_52, %c0_53, %c0_54] : memref<1x4x4x8xbf16, #tpu.memory_space<vmem>>, vector<1x4x4x8xbf16>
    tpu.vector_store %arg8[%c0_51, %c0_52, %c0_53, %c0_54], %78 {strides = array<i32>} : memref<1x4x4x8xbf16, #tpu.memory_space<vmem>>, vector<1x4x4x8xbf16>,
    return
  }
  func.func @transform_0(%arg0: i32) -> (i32, i32, i32, i32) {
    %c0_i32 = arith.constant 0 : i32
    %c0_i32_0 = arith.constant 0 : i32
    %c0_i32_1 = arith.constant 0 : i32
    %c0_i32_2 = arith.constant 0 : i32
    return %arg0, %c0_i32, %c0_i32_0, %c0_i32_1 : i32, i32, i32, i32
  }
  func.func @transform_1(%arg0: i32) -> (i32, i32, i32, i32) {
    %c0_i32 = arith.constant 0 : i32
    %c0_i32_0 = arith.constant 0 : i32
    %c0_i32_1 = arith.constant 0 : i32
    %c0_i32_2 = arith.constant 0 : i32
    return %arg0, %c0_i32, %c0_i32_0, %c0_i32_1 : i32, i32, i32, i32
  }
  func.func @transform_2(%arg0: i32) -> (i32, i32, i32, i32) {
    %c0_i32 = arith.constant 0 : i32
    %c0_i32_0 = arith.constant 0 : i32
    %c0_i32_1 = arith.constant 0 : i32
    %c0_i32_2 = arith.constant 0 : i32
    return %arg0, %c0_i32, %c0_i32_0, %c0_i32_1 : i32, i32, i32, i32
  }
  func.func @transform_3(%arg0: i32) -> (i32, i32, i32, i32) {
    %c0_i32 = arith.constant 0 : i32
    %c0_i32_0 = arith.constant 0 : i32
    %c0_i32_1 = arith.constant 0 : i32
    %c0_i32_2 = arith.constant 0 : i32
    return %arg0, %c0_i32, %c0_i32_0, %c0_i32_1 : i32, i32, i32, i32
  }
  func.func @transform_4(%arg0: i32) -> (i32, i32, i32, i32) {
    %c0_i32 = arith.constant 0 : i32
    %c0_i32_0 = arith.constant 0 : i32
    %c0_i32_1 = arith.constant 0 : i32
    %c0_i32_2 = arith.constant 0 : i32
    %c0_i32_3 = arith.constant 0 : i32
    return %c0_i32, %c0_i32_0, %c0_i32_1, %c0_i32_2 : i32, i32, i32, i32
  }
  func.func @transform_5(%arg0: i32) -> (i32, i32, i32, i32) {
    %c0_i32 = arith.constant 0 : i32
    %c0_i32_0 = arith.constant 0 : i32
    %c0_i32_1 = arith.constant 0 : i32
    %c0_i32_2 = arith.constant 0 : i32
    %c0_i32_3 = arith.constant 0 : i32
    return %c0_i32, %c0_i32_0, %c0_i32_1, %c0_i32_2 : i32, i32, i32, i32
  }
  func.func @transform_6(%arg0: i32) -> (i32, i32, i32, i32) {
    %c0_i32 = arith.constant 0 : i32
    %c0_i32_0 = arith.constant 0 : i32
    %c0_i32_1 = arith.constant 0 : i32
    %c0_i32_2 = arith.constant 0 : i32
    %c0_i32_3 = arith.constant 0 : i32
    return %c0_i32, %c0_i32_0, %c0_i32_1, %c0_i32_2 : i32, i32, i32, i32
  }
  func.func @transform_7(%arg0: i32) -> (i32, i32, i32, i32) {
    %c0_i32 = arith.constant 0 : i32
    %c0_i32_0 = arith.constant 0 : i32
    %c0_i32_1 = arith.constant 0 : i32
    %c0_i32_2 = arith.constant 0 : i32
    return %arg0, %c0_i32, %c0_i32_0, %c0_i32_1 : i32, i32, i32, i32
  }
}

module attributes {stable_mosaic.version = 11 : i64} {
  func.func @_dw3x3_s1_kernel(%arg0: i32, %arg1: memref<1x6x6x8xbf16, #tpu.memory_space<vmem>>, %arg2: memref<9x1x1x8xf32, #tpu.memory_space<vmem>>, %arg3: memref<1x1x1x8xf32, #tpu.memory_space<vmem>>, %arg4: memref<1x1x1x8xf32, #tpu.memory_space<vmem>>, %arg5: memref<1x4x4x8xbf16, #tpu.memory_space<vmem>>) attributes {dimension_semantics = [#tpu.dimension_semantics<parallel>], iteration_bounds = array<i64: 2>, scalar_prefetch = 0 : i64, scratch_operands = 0 : i64, tpu.core_type = #tpu.core_type<tc>, window_params = [{transform_indices = @transform_0, window_bounds = array<i64: 1, 6, 6, 8>}, {pipeline_mode = #tpu.pipeline_mode<synchronous>, transform_indices = @transform_1, window_bounds = array<i64: 9, 1, 1, 8>}, {pipeline_mode = #tpu.pipeline_mode<synchronous>, transform_indices = @transform_2, window_bounds = array<i64: 1, 1, 1, 8>}, {pipeline_mode = #tpu.pipeline_mode<synchronous>, transform_indices = @transform_3, window_bounds = array<i64: 1, 1, 1, 8>}, {transform_indices = @transform_4, window_bounds = array<i64: 1, 4, 4, 8>}]} {
    %c0 = arith.constant 0 : index
    %c0_0 = arith.constant 0 : index
    %c0_1 = arith.constant 0 : index
    %c0_2 = arith.constant 0 : index
    %0 = vector.load %arg1[%c0, %c0_0, %c0_1, %c0_2] : memref<1x6x6x8xbf16, #tpu.memory_space<vmem>>, vector<1x6x6x8xbf16>
    %1 = arith.extf %0 : vector<1x6x6x8xbf16> to vector<1x6x6x8xf32>
    %cst = arith.constant 0.000000e+00 : f32
    %2 = vector.broadcast %cst : f32 to vector<1x4x4x8xf32>
    %3 = vector.extract_strided_slice %1 {offsets = [0, 0, 0, 0], sizes = [1, 4, 4, 8], strides = [1, 1, 1, 1]} : vector<1x6x6x8xf32> to vector<1x4x4x8xf32>
    %c0_3 = arith.constant 0 : index
    %c0_4 = arith.constant 0 : index
    %c0_5 = arith.constant 0 : index
    %c0_6 = arith.constant 0 : index
    %4 = vector.load %arg2[%c0_3, %c0_4, %c0_5, %c0_6] : memref<9x1x1x8xf32, #tpu.memory_space<vmem>>, vector<1x1x1x8xf32>
    %5 = vector.shape_cast %4 : vector<1x1x1x8xf32> to vector<1x1x8xf32>
    %6 = vector.shape_cast %5 : vector<1x1x8xf32> to vector<1x1x1x8xf32>
    %7 = vector.broadcast %6 : vector<1x1x1x8xf32> to vector<1x4x4x8xf32>
    %8 = arith.mulf %3, %7 : vector<1x4x4x8xf32>
    %9 = arith.addf %2, %8 : vector<1x4x4x8xf32>
    %10 = vector.extract_strided_slice %1 {offsets = [0, 0, 1, 0], sizes = [1, 4, 4, 8], strides = [1, 1, 1, 1]} : vector<1x6x6x8xf32> to vector<1x4x4x8xf32>
    %c1 = arith.constant 1 : index
    %c0_7 = arith.constant 0 : index
    %c0_8 = arith.constant 0 : index
    %c0_9 = arith.constant 0 : index
    %11 = vector.load %arg2[%c1, %c0_7, %c0_8, %c0_9] : memref<9x1x1x8xf32, #tpu.memory_space<vmem>>, vector<1x1x1x8xf32>
    %12 = vector.shape_cast %11 : vector<1x1x1x8xf32> to vector<1x1x8xf32>
    %13 = vector.shape_cast %12 : vector<1x1x8xf32> to vector<1x1x1x8xf32>
    %14 = vector.broadcast %13 : vector<1x1x1x8xf32> to vector<1x4x4x8xf32>
    %15 = arith.mulf %10, %14 : vector<1x4x4x8xf32>
    %16 = arith.addf %9, %15 : vector<1x4x4x8xf32>
    %17 = vector.extract_strided_slice %1 {offsets = [0, 0, 2, 0], sizes = [1, 4, 4, 8], strides = [1, 1, 1, 1]} : vector<1x6x6x8xf32> to vector<1x4x4x8xf32>
    %c2 = arith.constant 2 : index
    %c0_10 = arith.constant 0 : index
    %c0_11 = arith.constant 0 : index
    %c0_12 = arith.constant 0 : index
    %18 = vector.load %arg2[%c2, %c0_10, %c0_11, %c0_12] : memref<9x1x1x8xf32, #tpu.memory_space<vmem>>, vector<1x1x1x8xf32>
    %19 = vector.shape_cast %18 : vector<1x1x1x8xf32> to vector<1x1x8xf32>
    %20 = vector.shape_cast %19 : vector<1x1x8xf32> to vector<1x1x1x8xf32>
    %21 = vector.broadcast %20 : vector<1x1x1x8xf32> to vector<1x4x4x8xf32>
    %22 = arith.mulf %17, %21 : vector<1x4x4x8xf32>
    %23 = arith.addf %16, %22 : vector<1x4x4x8xf32>
    %24 = vector.extract_strided_slice %1 {offsets = [0, 1, 0, 0], sizes = [1, 4, 4, 8], strides = [1, 1, 1, 1]} : vector<1x6x6x8xf32> to vector<1x4x4x8xf32>
    %c3 = arith.constant 3 : index
    %c0_13 = arith.constant 0 : index
    %c0_14 = arith.constant 0 : index
    %c0_15 = arith.constant 0 : index
    %25 = vector.load %arg2[%c3, %c0_13, %c0_14, %c0_15] : memref<9x1x1x8xf32, #tpu.memory_space<vmem>>, vector<1x1x1x8xf32>
    %26 = vector.shape_cast %25 : vector<1x1x1x8xf32> to vector<1x1x8xf32>
    %27 = vector.shape_cast %26 : vector<1x1x8xf32> to vector<1x1x1x8xf32>
    %28 = vector.broadcast %27 : vector<1x1x1x8xf32> to vector<1x4x4x8xf32>
    %29 = arith.mulf %24, %28 : vector<1x4x4x8xf32>
    %30 = arith.addf %23, %29 : vector<1x4x4x8xf32>
    %31 = vector.extract_strided_slice %1 {offsets = [0, 1, 1, 0], sizes = [1, 4, 4, 8], strides = [1, 1, 1, 1]} : vector<1x6x6x8xf32> to vector<1x4x4x8xf32>
    %c4 = arith.constant 4 : index
    %c0_16 = arith.constant 0 : index
    %c0_17 = arith.constant 0 : index
    %c0_18 = arith.constant 0 : index
    %32 = vector.load %arg2[%c4, %c0_16, %c0_17, %c0_18] : memref<9x1x1x8xf32, #tpu.memory_space<vmem>>, vector<1x1x1x8xf32>
    %33 = vector.shape_cast %32 : vector<1x1x1x8xf32> to vector<1x1x8xf32>
    %34 = vector.shape_cast %33 : vector<1x1x8xf32> to vector<1x1x1x8xf32>
    %35 = vector.broadcast %34 : vector<1x1x1x8xf32> to vector<1x4x4x8xf32>
    %36 = arith.mulf %31, %35 : vector<1x4x4x8xf32>
    %37 = arith.addf %30, %36 : vector<1x4x4x8xf32>
    %38 = vector.extract_strided_slice %1 {offsets = [0, 1, 2, 0], sizes = [1, 4, 4, 8], strides = [1, 1, 1, 1]} : vector<1x6x6x8xf32> to vector<1x4x4x8xf32>
    %c5 = arith.constant 5 : index
    %c0_19 = arith.constant 0 : index
    %c0_20 = arith.constant 0 : index
    %c0_21 = arith.constant 0 : index
    %39 = vector.load %arg2[%c5, %c0_19, %c0_20, %c0_21] : memref<9x1x1x8xf32, #tpu.memory_space<vmem>>, vector<1x1x1x8xf32>
    %40 = vector.shape_cast %39 : vector<1x1x1x8xf32> to vector<1x1x8xf32>
    %41 = vector.shape_cast %40 : vector<1x1x8xf32> to vector<1x1x1x8xf32>
    %42 = vector.broadcast %41 : vector<1x1x1x8xf32> to vector<1x4x4x8xf32>
    %43 = arith.mulf %38, %42 : vector<1x4x4x8xf32>
    %44 = arith.addf %37, %43 : vector<1x4x4x8xf32>
    %45 = vector.extract_strided_slice %1 {offsets = [0, 2, 0, 0], sizes = [1, 4, 4, 8], strides = [1, 1, 1, 1]} : vector<1x6x6x8xf32> to vector<1x4x4x8xf32>
    %c6 = arith.constant 6 : index
    %c0_22 = arith.constant 0 : index
    %c0_23 = arith.constant 0 : index
    %c0_24 = arith.constant 0 : index
    %46 = vector.load %arg2[%c6, %c0_22, %c0_23, %c0_24] : memref<9x1x1x8xf32, #tpu.memory_space<vmem>>, vector<1x1x1x8xf32>
    %47 = vector.shape_cast %46 : vector<1x1x1x8xf32> to vector<1x1x8xf32>
    %48 = vector.shape_cast %47 : vector<1x1x8xf32> to vector<1x1x1x8xf32>
    %49 = vector.broadcast %48 : vector<1x1x1x8xf32> to vector<1x4x4x8xf32>
    %50 = arith.mulf %45, %49 : vector<1x4x4x8xf32>
    %51 = arith.addf %44, %50 : vector<1x4x4x8xf32>
    %52 = vector.extract_strided_slice %1 {offsets = [0, 2, 1, 0], sizes = [1, 4, 4, 8], strides = [1, 1, 1, 1]} : vector<1x6x6x8xf32> to vector<1x4x4x8xf32>
    %c7 = arith.constant 7 : index
    %c0_25 = arith.constant 0 : index
    %c0_26 = arith.constant 0 : index
    %c0_27 = arith.constant 0 : index
    %53 = vector.load %arg2[%c7, %c0_25, %c0_26, %c0_27] : memref<9x1x1x8xf32, #tpu.memory_space<vmem>>, vector<1x1x1x8xf32>
    %54 = vector.shape_cast %53 : vector<1x1x1x8xf32> to vector<1x1x8xf32>
    %55 = vector.shape_cast %54 : vector<1x1x8xf32> to vector<1x1x1x8xf32>
    %56 = vector.broadcast %55 : vector<1x1x1x8xf32> to vector<1x4x4x8xf32>
    %57 = arith.mulf %52, %56 : vector<1x4x4x8xf32>
    %58 = arith.addf %51, %57 : vector<1x4x4x8xf32>
    %59 = vector.extract_strided_slice %1 {offsets = [0, 2, 2, 0], sizes = [1, 4, 4, 8], strides = [1, 1, 1, 1]} : vector<1x6x6x8xf32> to vector<1x4x4x8xf32>
    %c8 = arith.constant 8 : index
    %c0_28 = arith.constant 0 : index
    %c0_29 = arith.constant 0 : index
    %c0_30 = arith.constant 0 : index
    %60 = vector.load %arg2[%c8, %c0_28, %c0_29, %c0_30] : memref<9x1x1x8xf32, #tpu.memory_space<vmem>>, vector<1x1x1x8xf32>
    %61 = vector.shape_cast %60 : vector<1x1x1x8xf32> to vector<1x1x8xf32>
    %62 = vector.shape_cast %61 : vector<1x1x8xf32> to vector<1x1x1x8xf32>
    %63 = vector.broadcast %62 : vector<1x1x1x8xf32> to vector<1x4x4x8xf32>
    %64 = arith.mulf %59, %63 : vector<1x4x4x8xf32>
    %65 = arith.addf %58, %64 : vector<1x4x4x8xf32>
    %c0_31 = arith.constant 0 : index
    %c0_32 = arith.constant 0 : index
    %c0_33 = arith.constant 0 : index
    %c0_34 = arith.constant 0 : index
    %66 = vector.load %arg3[%c0_31, %c0_32, %c0_33, %c0_34] : memref<1x1x1x8xf32, #tpu.memory_space<vmem>>, vector<1x1x1x8xf32>
    %67 = vector.broadcast %66 : vector<1x1x1x8xf32> to vector<1x4x4x8xf32>
    %68 = arith.mulf %65, %67 : vector<1x4x4x8xf32>
    %c0_35 = arith.constant 0 : index
    %c0_36 = arith.constant 0 : index
    %c0_37 = arith.constant 0 : index
    %c0_38 = arith.constant 0 : index
    %69 = vector.load %arg4[%c0_35, %c0_36, %c0_37, %c0_38] : memref<1x1x1x8xf32, #tpu.memory_space<vmem>>, vector<1x1x1x8xf32>
    %70 = vector.broadcast %69 : vector<1x1x1x8xf32> to vector<1x4x4x8xf32>
    %71 = arith.addf %68, %70 : vector<1x4x4x8xf32>
    %72 = arith.truncf %71 : vector<1x4x4x8xf32> to vector<1x4x4x8xbf16>
    %c0_39 = arith.constant 0 : index
    %c0_40 = arith.constant 0 : index
    %c0_41 = arith.constant 0 : index
    %c0_42 = arith.constant 0 : index
    %73 = vector.load %arg5[%c0_39, %c0_40, %c0_41, %c0_42] : memref<1x4x4x8xbf16, #tpu.memory_space<vmem>>, vector<1x4x4x8xbf16>
    tpu.vector_store %arg5[%c0_39, %c0_40, %c0_41, %c0_42], %72 {strides = array<i32>} : memref<1x4x4x8xbf16, #tpu.memory_space<vmem>>, vector<1x4x4x8xbf16>,
    return
  }
  func.func @transform_0(%arg0: i32) -> (i32, i32, i32, i32) {
    %c0_i32 = arith.constant 0 : i32
    %c0_i32_0 = arith.constant 0 : i32
    %c0_i32_1 = arith.constant 0 : i32
    %c0_i32_2 = arith.constant 0 : i32
    return %arg0, %c0_i32, %c0_i32_0, %c0_i32_1 : i32, i32, i32, i32
  }
  func.func @transform_1(%arg0: i32) -> (i32, i32, i32, i32) {
    %c0_i32 = arith.constant 0 : i32
    %c0_i32_0 = arith.constant 0 : i32
    %c0_i32_1 = arith.constant 0 : i32
    %c0_i32_2 = arith.constant 0 : i32
    %c0_i32_3 = arith.constant 0 : i32
    return %c0_i32, %c0_i32_0, %c0_i32_1, %c0_i32_2 : i32, i32, i32, i32
  }
  func.func @transform_2(%arg0: i32) -> (i32, i32, i32, i32) {
    %c0_i32 = arith.constant 0 : i32
    %c0_i32_0 = arith.constant 0 : i32
    %c0_i32_1 = arith.constant 0 : i32
    %c0_i32_2 = arith.constant 0 : i32
    %c0_i32_3 = arith.constant 0 : i32
    return %c0_i32, %c0_i32_0, %c0_i32_1, %c0_i32_2 : i32, i32, i32, i32
  }
  func.func @transform_3(%arg0: i32) -> (i32, i32, i32, i32) {
    %c0_i32 = arith.constant 0 : i32
    %c0_i32_0 = arith.constant 0 : i32
    %c0_i32_1 = arith.constant 0 : i32
    %c0_i32_2 = arith.constant 0 : i32
    %c0_i32_3 = arith.constant 0 : i32
    return %c0_i32, %c0_i32_0, %c0_i32_1, %c0_i32_2 : i32, i32, i32, i32
  }
  func.func @transform_4(%arg0: i32) -> (i32, i32, i32, i32) {
    %c0_i32 = arith.constant 0 : i32
    %c0_i32_0 = arith.constant 0 : i32
    %c0_i32_1 = arith.constant 0 : i32
    %c0_i32_2 = arith.constant 0 : i32
    return %arg0, %c0_i32, %c0_i32_0, %c0_i32_1 : i32, i32, i32, i32
  }
}

module attributes {stable_mosaic.version = 11 : i64} {
  func.func @_matmul_affine_kernel(%arg0: i32, %arg1: memref<8x16xbf16, #tpu.memory_space<vmem>>, %arg2: memref<16x16xbf16, #tpu.memory_space<vmem>>, %arg3: memref<1x16xf32, #tpu.memory_space<vmem>>, %arg4: memref<1x16xf32, #tpu.memory_space<vmem>>, %arg5: memref<8x16xbf16, #tpu.memory_space<vmem>>) attributes {dimension_semantics = [#tpu.dimension_semantics<parallel>], iteration_bounds = array<i64: 1>, scalar_prefetch = 0 : i64, scratch_operands = 0 : i64, tpu.core_type = #tpu.core_type<tc>, window_params = [{transform_indices = @transform_0, window_bounds = array<i64: 8, 16>}, {pipeline_mode = #tpu.pipeline_mode<synchronous>, transform_indices = @transform_1, window_bounds = array<i64: 16, 16>}, {pipeline_mode = #tpu.pipeline_mode<synchronous>, transform_indices = @transform_2, window_bounds = array<i64: 1, 16>}, {pipeline_mode = #tpu.pipeline_mode<synchronous>, transform_indices = @transform_3, window_bounds = array<i64: 1, 16>}, {transform_indices = @transform_4, window_bounds = array<i64: 8, 16>}]} {
    %c0 = arith.constant 0 : index
    %c0_0 = arith.constant 0 : index
    %0 = vector.load %arg1[%c0, %c0_0] : memref<8x16xbf16, #tpu.memory_space<vmem>>, vector<8x16xbf16>
    %c0_1 = arith.constant 0 : index
    %c0_2 = arith.constant 0 : index
    %1 = vector.load %arg2[%c0_1, %c0_2] : memref<16x16xbf16, #tpu.memory_space<vmem>>, vector<16x16xbf16>
    %cst = arith.constant dense<0.000000e+00> : vector<8x16xf32>
    %2 = tpu.matmul %0, %1, %cst {dimension_numbers = #tpu.dot_dimension_numbers<[1], [0], [0], [1], [0, 0, 1, 1], [], []>} : vector<8x16xbf16>, vector<16x16xbf16>, vector<8x16xf32> -> vector<8x16xf32>
    %c0_3 = arith.constant 0 : index
    %c0_4 = arith.constant 0 : index
    %3 = vector.load %arg3[%c0_3, %c0_4] : memref<1x16xf32, #tpu.memory_space<vmem>>, vector<1x16xf32>
    %4 = vector.broadcast %3 : vector<1x16xf32> to vector<8x16xf32>
    %5 = arith.mulf %2, %4 : vector<8x16xf32>
    %c0_5 = arith.constant 0 : index
    %c0_6 = arith.constant 0 : index
    %6 = vector.load %arg4[%c0_5, %c0_6] : memref<1x16xf32, #tpu.memory_space<vmem>>, vector<1x16xf32>
    %7 = vector.broadcast %6 : vector<1x16xf32> to vector<8x16xf32>
    %8 = arith.addf %5, %7 : vector<8x16xf32>
    %cst_7 = arith.constant 0.000000e+00 : f32
    %9 = vector.broadcast %cst_7 : f32 to vector<8x16xf32>
    %10 = arith.maximumf %8, %9 : vector<8x16xf32>
    %11 = arith.truncf %10 : vector<8x16xf32> to vector<8x16xbf16>
    %c0_8 = arith.constant 0 : index
    %c0_9 = arith.constant 0 : index
    %12 = vector.load %arg5[%c0_8, %c0_9] : memref<8x16xbf16, #tpu.memory_space<vmem>>, vector<8x16xbf16>
    tpu.vector_store %arg5[%c0_8, %c0_9], %11 {strides = array<i32>} : memref<8x16xbf16, #tpu.memory_space<vmem>>, vector<8x16xbf16>,
    return
  }
  func.func @transform_0(%arg0: i32) -> (i32, i32) {
    %c0_i32 = arith.constant 0 : i32
    %c0_i32_0 = arith.constant 0 : i32
    return %arg0, %c0_i32 : i32, i32
  }
  func.func @transform_1(%arg0: i32) -> (i32, i32) {
    %c0_i32 = arith.constant 0 : i32
    %c0_i32_0 = arith.constant 0 : i32
    %c0_i32_1 = arith.constant 0 : i32
    return %c0_i32, %c0_i32_0 : i32, i32
  }
  func.func @transform_2(%arg0: i32) -> (i32, i32) {
    %c0_i32 = arith.constant 0 : i32
    %c0_i32_0 = arith.constant 0 : i32
    %c0_i32_1 = arith.constant 0 : i32
    return %c0_i32, %c0_i32_0 : i32, i32
  }
  func.func @transform_3(%arg0: i32) -> (i32, i32) {
    %c0_i32 = arith.constant 0 : i32
    %c0_i32_0 = arith.constant 0 : i32
    %c0_i32_1 = arith.constant 0 : i32
    return %c0_i32, %c0_i32_0 : i32, i32
  }
  func.func @transform_4(%arg0: i32) -> (i32, i32) {
    %c0_i32 = arith.constant 0 : i32
    %c0_i32_0 = arith.constant 0 : i32
    return %arg0, %c0_i32 : i32, i32
  }
}

module attributes {stable_mosaic.version = 11 : i64} {
  func.func @_dw3x3_s2_kernel(%arg0: i32, %arg1: memref<1x3x3x16xbf16, #tpu.memory_space<vmem>>, %arg2: memref<1x3x3x16xbf16, #tpu.memory_space<vmem>>, %arg3: memref<1x3x3x16xbf16, #tpu.memory_space<vmem>>, %arg4: memref<1x3x3x16xbf16, #tpu.memory_space<vmem>>, %arg5: memref<9x1x1x16xf32, #tpu.memory_space<vmem>>, %arg6: memref<1x1x1x16xf32, #tpu.memory_space<vmem>>, %arg7: memref<1x1x1x16xf32, #tpu.memory_space<vmem>>, %arg8: memref<1x2x2x16xbf16, #tpu.memory_space<vmem>>) attributes {dimension_semantics = [#tpu.dimension_semantics<parallel>], iteration_bounds = array<i64: 2>, scalar_prefetch = 0 : i64, scratch_operands = 0 : i64, tpu.core_type = #tpu.core_type<tc>, window_params = [{transform_indices = @transform_0, window_bounds = array<i64: 1, 3, 3, 16>}, {transform_indices = @transform_1, window_bounds = array<i64: 1, 3, 3, 16>}, {transform_indices = @transform_2, window_bounds = array<i64: 1, 3, 3, 16>}, {transform_indices = @transform_3, window_bounds = array<i64: 1, 3, 3, 16>}, {pipeline_mode = #tpu.pipeline_mode<synchronous>, transform_indices = @transform_4, window_bounds = array<i64: 9, 1, 1, 16>}, {pipeline_mode = #tpu.pipeline_mode<synchronous>, transform_indices = @transform_5, window_bounds = array<i64: 1, 1, 1, 16>}, {pipeline_mode = #tpu.pipeline_mode<synchronous>, transform_indices = @transform_6, window_bounds = array<i64: 1, 1, 1, 16>}, {transform_indices = @transform_7, window_bounds = array<i64: 1, 2, 2, 16>}]} {
    %c0 = arith.constant 0 : index
    %c0_0 = arith.constant 0 : index
    %c0_1 = arith.constant 0 : index
    %c0_2 = arith.constant 0 : index
    %0 = vector.load %arg1[%c0, %c0_0, %c0_1, %c0_2] : memref<1x3x3x16xbf16, #tpu.memory_space<vmem>>, vector<1x3x3x16xbf16>
    %1 = arith.extf %0 : vector<1x3x3x16xbf16> to vector<1x3x3x16xf32>
    %c0_3 = arith.constant 0 : index
    %c0_4 = arith.constant 0 : index
    %c0_5 = arith.constant 0 : index
    %c0_6 = arith.constant 0 : index
    %2 = vector.load %arg2[%c0_3, %c0_4, %c0_5, %c0_6] : memref<1x3x3x16xbf16, #tpu.memory_space<vmem>>, vector<1x3x3x16xbf16>
    %3 = arith.extf %2 : vector<1x3x3x16xbf16> to vector<1x3x3x16xf32>
    %c0_7 = arith.constant 0 : index
    %c0_8 = arith.constant 0 : index
    %c0_9 = arith.constant 0 : index
    %c0_10 = arith.constant 0 : index
    %4 = vector.load %arg3[%c0_7, %c0_8, %c0_9, %c0_10] : memref<1x3x3x16xbf16, #tpu.memory_space<vmem>>, vector<1x3x3x16xbf16>
    %5 = arith.extf %4 : vector<1x3x3x16xbf16> to vector<1x3x3x16xf32>
    %c0_11 = arith.constant 0 : index
    %c0_12 = arith.constant 0 : index
    %c0_13 = arith.constant 0 : index
    %c0_14 = arith.constant 0 : index
    %6 = vector.load %arg4[%c0_11, %c0_12, %c0_13, %c0_14] : memref<1x3x3x16xbf16, #tpu.memory_space<vmem>>, vector<1x3x3x16xbf16>
    %7 = arith.extf %6 : vector<1x3x3x16xbf16> to vector<1x3x3x16xf32>
    %cst = arith.constant 0.000000e+00 : f32
    %8 = vector.broadcast %cst : f32 to vector<1x2x2x16xf32>
    %9 = vector.extract_strided_slice %1 {offsets = [0, 0, 0, 0], sizes = [1, 2, 2, 16], strides = [1, 1, 1, 1]} : vector<1x3x3x16xf32> to vector<1x2x2x16xf32>
    %c0_15 = arith.constant 0 : index
    %c0_16 = arith.constant 0 : index
    %c0_17 = arith.constant 0 : index
    %c0_18 = arith.constant 0 : index
    %10 = vector.load %arg5[%c0_15, %c0_16, %c0_17, %c0_18] : memref<9x1x1x16xf32, #tpu.memory_space<vmem>>, vector<1x1x1x16xf32>
    %11 = vector.shape_cast %10 : vector<1x1x1x16xf32> to vector<1x1x16xf32>
    %12 = vector.shape_cast %11 : vector<1x1x16xf32> to vector<1x1x1x16xf32>
    %13 = vector.broadcast %12 : vector<1x1x1x16xf32> to vector<1x2x2x16xf32>
    %14 = arith.mulf %9, %13 : vector<1x2x2x16xf32>
    %15 = arith.addf %8, %14 : vector<1x2x2x16xf32>
    %16 = vector.extract_strided_slice %3 {offsets = [0, 0, 0, 0], sizes = [1, 2, 2, 16], strides = [1, 1, 1, 1]} : vector<1x3x3x16xf32> to vector<1x2x2x16xf32>
    %c1 = arith.constant 1 : index
    %c0_19 = arith.constant 0 : index
    %c0_20 = arith.constant 0 : index
    %c0_21 = arith.constant 0 : index
    %17 = vector.load %arg5[%c1, %c0_19, %c0_20, %c0_21] : memref<9x1x1x16xf32, #tpu.memory_space<vmem>>, vector<1x1x1x16xf32>
    %18 = vector.shape_cast %17 : vector<1x1x1x16xf32> to vector<1x1x16xf32>
    %19 = vector.shape_cast %18 : vector<1x1x16xf32> to vector<1x1x1x16xf32>
    %20 = vector.broadcast %19 : vector<1x1x1x16xf32> to vector<1x2x2x16xf32>
    %21 = arith.mulf %16, %20 : vector<1x2x2x16xf32>
    %22 = arith.addf %15, %21 : vector<1x2x2x16xf32>
    %23 = vector.extract_strided_slice %1 {offsets = [0, 0, 1, 0], sizes = [1, 2, 2, 16], strides = [1, 1, 1, 1]} : vector<1x3x3x16xf32> to vector<1x2x2x16xf32>
    %c2 = arith.constant 2 : index
    %c0_22 = arith.constant 0 : index
    %c0_23 = arith.constant 0 : index
    %c0_24 = arith.constant 0 : index
    %24 = vector.load %arg5[%c2, %c0_22, %c0_23, %c0_24] : memref<9x1x1x16xf32, #tpu.memory_space<vmem>>, vector<1x1x1x16xf32>
    %25 = vector.shape_cast %24 : vector<1x1x1x16xf32> to vector<1x1x16xf32>
    %26 = vector.shape_cast %25 : vector<1x1x16xf32> to vector<1x1x1x16xf32>
    %27 = vector.broadcast %26 : vector<1x1x1x16xf32> to vector<1x2x2x16xf32>
    %28 = arith.mulf %23, %27 : vector<1x2x2x16xf32>
    %29 = arith.addf %22, %28 : vector<1x2x2x16xf32>
    %30 = vector.extract_strided_slice %5 {offsets = [0, 0, 0, 0], sizes = [1, 2, 2, 16], strides = [1, 1, 1, 1]} : vector<1x3x3x16xf32> to vector<1x2x2x16xf32>
    %c3 = arith.constant 3 : index
    %c0_25 = arith.constant 0 : index
    %c0_26 = arith.constant 0 : index
    %c0_27 = arith.constant 0 : index
    %31 = vector.load %arg5[%c3, %c0_25, %c0_26, %c0_27] : memref<9x1x1x16xf32, #tpu.memory_space<vmem>>, vector<1x1x1x16xf32>
    %32 = vector.shape_cast %31 : vector<1x1x1x16xf32> to vector<1x1x16xf32>
    %33 = vector.shape_cast %32 : vector<1x1x16xf32> to vector<1x1x1x16xf32>
    %34 = vector.broadcast %33 : vector<1x1x1x16xf32> to vector<1x2x2x16xf32>
    %35 = arith.mulf %30, %34 : vector<1x2x2x16xf32>
    %36 = arith.addf %29, %35 : vector<1x2x2x16xf32>
    %37 = vector.extract_strided_slice %7 {offsets = [0, 0, 0, 0], sizes = [1, 2, 2, 16], strides = [1, 1, 1, 1]} : vector<1x3x3x16xf32> to vector<1x2x2x16xf32>
    %c4 = arith.constant 4 : index
    %c0_28 = arith.constant 0 : index
    %c0_29 = arith.constant 0 : index
    %c0_30 = arith.constant 0 : index
    %38 = vector.load %arg5[%c4, %c0_28, %c0_29, %c0_30] : memref<9x1x1x16xf32, #tpu.memory_space<vmem>>, vector<1x1x1x16xf32>
    %39 = vector.shape_cast %38 : vector<1x1x1x16xf32> to vector<1x1x16xf32>
    %40 = vector.shape_cast %39 : vector<1x1x16xf32> to vector<1x1x1x16xf32>
    %41 = vector.broadcast %40 : vector<1x1x1x16xf32> to vector<1x2x2x16xf32>
    %42 = arith.mulf %37, %41 : vector<1x2x2x16xf32>
    %43 = arith.addf %36, %42 : vector<1x2x2x16xf32>
    %44 = vector.extract_strided_slice %5 {offsets = [0, 0, 1, 0], sizes = [1, 2, 2, 16], strides = [1, 1, 1, 1]} : vector<1x3x3x16xf32> to vector<1x2x2x16xf32>
    %c5 = arith.constant 5 : index
    %c0_31 = arith.constant 0 : index
    %c0_32 = arith.constant 0 : index
    %c0_33 = arith.constant 0 : index
    %45 = vector.load %arg5[%c5, %c0_31, %c0_32, %c0_33] : memref<9x1x1x16xf32, #tpu.memory_space<vmem>>, vector<1x1x1x16xf32>
    %46 = vector.shape_cast %45 : vector<1x1x1x16xf32> to vector<1x1x16xf32>
    %47 = vector.shape_cast %46 : vector<1x1x16xf32> to vector<1x1x1x16xf32>
    %48 = vector.broadcast %47 : vector<1x1x1x16xf32> to vector<1x2x2x16xf32>
    %49 = arith.mulf %44, %48 : vector<1x2x2x16xf32>
    %50 = arith.addf %43, %49 : vector<1x2x2x16xf32>
    %51 = vector.extract_strided_slice %1 {offsets = [0, 1, 0, 0], sizes = [1, 2, 2, 16], strides = [1, 1, 1, 1]} : vector<1x3x3x16xf32> to vector<1x2x2x16xf32>
    %c6 = arith.constant 6 : index
    %c0_34 = arith.constant 0 : index
    %c0_35 = arith.constant 0 : index
    %c0_36 = arith.constant 0 : index
    %52 = vector.load %arg5[%c6, %c0_34, %c0_35, %c0_36] : memref<9x1x1x16xf32, #tpu.memory_space<vmem>>, vector<1x1x1x16xf32>
    %53 = vector.shape_cast %52 : vector<1x1x1x16xf32> to vector<1x1x16xf32>
    %54 = vector.shape_cast %53 : vector<1x1x16xf32> to vector<1x1x1x16xf32>
    %55 = vector.broadcast %54 : vector<1x1x1x16xf32> to vector<1x2x2x16xf32>
    %56 = arith.mulf %51, %55 : vector<1x2x2x16xf32>
    %57 = arith.addf %50, %56 : vector<1x2x2x16xf32>
    %58 = vector.extract_strided_slice %3 {offsets = [0, 1, 0, 0], sizes = [1, 2, 2, 16], strides = [1, 1, 1, 1]} : vector<1x3x3x16xf32> to vector<1x2x2x16xf32>
    %c7 = arith.constant 7 : index
    %c0_37 = arith.constant 0 : index
    %c0_38 = arith.constant 0 : index
    %c0_39 = arith.constant 0 : index
    %59 = vector.load %arg5[%c7, %c0_37, %c0_38, %c0_39] : memref<9x1x1x16xf32, #tpu.memory_space<vmem>>, vector<1x1x1x16xf32>
    %60 = vector.shape_cast %59 : vector<1x1x1x16xf32> to vector<1x1x16xf32>
    %61 = vector.shape_cast %60 : vector<1x1x16xf32> to vector<1x1x1x16xf32>
    %62 = vector.broadcast %61 : vector<1x1x1x16xf32> to vector<1x2x2x16xf32>
    %63 = arith.mulf %58, %62 : vector<1x2x2x16xf32>
    %64 = arith.addf %57, %63 : vector<1x2x2x16xf32>
    %65 = vector.extract_strided_slice %1 {offsets = [0, 1, 1, 0], sizes = [1, 2, 2, 16], strides = [1, 1, 1, 1]} : vector<1x3x3x16xf32> to vector<1x2x2x16xf32>
    %c8 = arith.constant 8 : index
    %c0_40 = arith.constant 0 : index
    %c0_41 = arith.constant 0 : index
    %c0_42 = arith.constant 0 : index
    %66 = vector.load %arg5[%c8, %c0_40, %c0_41, %c0_42] : memref<9x1x1x16xf32, #tpu.memory_space<vmem>>, vector<1x1x1x16xf32>
    %67 = vector.shape_cast %66 : vector<1x1x1x16xf32> to vector<1x1x16xf32>
    %68 = vector.shape_cast %67 : vector<1x1x16xf32> to vector<1x1x1x16xf32>
    %69 = vector.broadcast %68 : vector<1x1x1x16xf32> to vector<1x2x2x16xf32>
    %70 = arith.mulf %65, %69 : vector<1x2x2x16xf32>
    %71 = arith.addf %64, %70 : vector<1x2x2x16xf32>
    %c0_43 = arith.constant 0 : index
    %c0_44 = arith.constant 0 : index
    %c0_45 = arith.constant 0 : index
    %c0_46 = arith.constant 0 : index
    %72 = vector.load %arg6[%c0_43, %c0_44, %c0_45, %c0_46] : memref<1x1x1x16xf32, #tpu.memory_space<vmem>>, vector<1x1x1x16xf32>
    %73 = vector.broadcast %72 : vector<1x1x1x16xf32> to vector<1x2x2x16xf32>
    %74 = arith.mulf %71, %73 : vector<1x2x2x16xf32>
    %c0_47 = arith.constant 0 : index
    %c0_48 = arith.constant 0 : index
    %c0_49 = arith.constant 0 : index
    %c0_50 = arith.constant 0 : index
    %75 = vector.load %arg7[%c0_47, %c0_48, %c0_49, %c0_50] : memref<1x1x1x16xf32, #tpu.memory_space<vmem>>, vector<1x1x1x16xf32>
    %76 = vector.broadcast %75 : vector<1x1x1x16xf32> to vector<1x2x2x16xf32>
    %77 = arith.addf %74, %76 : vector<1x2x2x16xf32>
    %78 = arith.truncf %77 : vector<1x2x2x16xf32> to vector<1x2x2x16xbf16>
    %c0_51 = arith.constant 0 : index
    %c0_52 = arith.constant 0 : index
    %c0_53 = arith.constant 0 : index
    %c0_54 = arith.constant 0 : index
    %79 = vector.load %arg8[%c0_51, %c0_52, %c0_53, %c0_54] : memref<1x2x2x16xbf16, #tpu.memory_space<vmem>>, vector<1x2x2x16xbf16>
    tpu.vector_store %arg8[%c0_51, %c0_52, %c0_53, %c0_54], %78 {strides = array<i32>} : memref<1x2x2x16xbf16, #tpu.memory_space<vmem>>, vector<1x2x2x16xbf16>,
    return
  }
  func.func @transform_0(%arg0: i32) -> (i32, i32, i32, i32) {
    %c0_i32 = arith.constant 0 : i32
    %c0_i32_0 = arith.constant 0 : i32
    %c0_i32_1 = arith.constant 0 : i32
    %c0_i32_2 = arith.constant 0 : i32
    return %arg0, %c0_i32, %c0_i32_0, %c0_i32_1 : i32, i32, i32, i32
  }
  func.func @transform_1(%arg0: i32) -> (i32, i32, i32, i32) {
    %c0_i32 = arith.constant 0 : i32
    %c0_i32_0 = arith.constant 0 : i32
    %c0_i32_1 = arith.constant 0 : i32
    %c0_i32_2 = arith.constant 0 : i32
    return %arg0, %c0_i32, %c0_i32_0, %c0_i32_1 : i32, i32, i32, i32
  }
  func.func @transform_2(%arg0: i32) -> (i32, i32, i32, i32) {
    %c0_i32 = arith.constant 0 : i32
    %c0_i32_0 = arith.constant 0 : i32
    %c0_i32_1 = arith.constant 0 : i32
    %c0_i32_2 = arith.constant 0 : i32
    return %arg0, %c0_i32, %c0_i32_0, %c0_i32_1 : i32, i32, i32, i32
  }
  func.func @transform_3(%arg0: i32) -> (i32, i32, i32, i32) {
    %c0_i32 = arith.constant 0 : i32
    %c0_i32_0 = arith.constant 0 : i32
    %c0_i32_1 = arith.constant 0 : i32
    %c0_i32_2 = arith.constant 0 : i32
    return %arg0, %c0_i32, %c0_i32_0, %c0_i32_1 : i32, i32, i32, i32
  }
  func.func @transform_4(%arg0: i32) -> (i32, i32, i32, i32) {
    %c0_i32 = arith.constant 0 : i32
    %c0_i32_0 = arith.constant 0 : i32
    %c0_i32_1 = arith.constant 0 : i32
    %c0_i32_2 = arith.constant 0 : i32
    %c0_i32_3 = arith.constant 0 : i32
    return %c0_i32, %c0_i32_0, %c0_i32_1, %c0_i32_2 : i32, i32, i32, i32
  }
  func.func @transform_5(%arg0: i32) -> (i32, i32, i32, i32) {
    %c0_i32 = arith.constant 0 : i32
    %c0_i32_0 = arith.constant 0 : i32
    %c0_i32_1 = arith.constant 0 : i32
    %c0_i32_2 = arith.constant 0 : i32
    %c0_i32_3 = arith.constant 0 : i32
    return %c0_i32, %c0_i32_0, %c0_i32_1, %c0_i32_2 : i32, i32, i32, i32
  }
  func.func @transform_6(%arg0: i32) -> (i32, i32, i32, i32) {
    %c0_i32 = arith.constant 0 : i32
    %c0_i32_0 = arith.constant 0 : i32
    %c0_i32_1 = arith.constant 0 : i32
    %c0_i32_2 = arith.constant 0 : i32
    %c0_i32_3 = arith.constant 0 : i32
    return %c0_i32, %c0_i32_0, %c0_i32_1, %c0_i32_2 : i32, i32, i32, i32
  }
  func.func @transform_7(%arg0: i32) -> (i32, i32, i32, i32) {
    %c0_i32 = arith.constant 0 : i32
    %c0_i32_0 = arith.constant 0 : i32
    %c0_i32_1 = arith.constant 0 : i32
    %c0_i32_2 = arith.constant 0 : i32
    return %arg0, %c0_i32, %c0_i32_0, %c0_i32_1 : i32, i32, i32, i32
  }
}

module attributes {stable_mosaic.version = 11 : i64} {
  func.func @_matmul_affine_kernel(%arg0: i32, %arg1: memref<32x16xbf16, #tpu.memory_space<vmem>>, %arg2: memref<16x16xbf16, #tpu.memory_space<vmem>>, %arg3: memref<1x16xf32, #tpu.memory_space<vmem>>, %arg4: memref<1x16xf32, #tpu.memory_space<vmem>>, %arg5: memref<32x16xbf16, #tpu.memory_space<vmem>>) attributes {dimension_semantics = [#tpu.dimension_semantics<parallel>], iteration_bounds = array<i64: 1>, scalar_prefetch = 0 : i64, scratch_operands = 0 : i64, tpu.core_type = #tpu.core_type<tc>, window_params = [{transform_indices = @transform_0, window_bounds = array<i64: 32, 16>}, {pipeline_mode = #tpu.pipeline_mode<synchronous>, transform_indices = @transform_1, window_bounds = array<i64: 16, 16>}, {pipeline_mode = #tpu.pipeline_mode<synchronous>, transform_indices = @transform_2, window_bounds = array<i64: 1, 16>}, {pipeline_mode = #tpu.pipeline_mode<synchronous>, transform_indices = @transform_3, window_bounds = array<i64: 1, 16>}, {transform_indices = @transform_4, window_bounds = array<i64: 32, 16>}]} {
    %c0 = arith.constant 0 : index
    %c0_0 = arith.constant 0 : index
    %0 = vector.load %arg1[%c0, %c0_0] : memref<32x16xbf16, #tpu.memory_space<vmem>>, vector<32x16xbf16>
    %c0_1 = arith.constant 0 : index
    %c0_2 = arith.constant 0 : index
    %1 = vector.load %arg2[%c0_1, %c0_2] : memref<16x16xbf16, #tpu.memory_space<vmem>>, vector<16x16xbf16>
    %cst = arith.constant dense<0.000000e+00> : vector<32x16xf32>
    %2 = tpu.matmul %0, %1, %cst {dimension_numbers = #tpu.dot_dimension_numbers<[1], [0], [0], [1], [0, 0, 1, 1], [], []>} : vector<32x16xbf16>, vector<16x16xbf16>, vector<32x16xf32> -> vector<32x16xf32>
    %c0_3 = arith.constant 0 : index
    %c0_4 = arith.constant 0 : index
    %3 = vector.load %arg3[%c0_3, %c0_4] : memref<1x16xf32, #tpu.memory_space<vmem>>, vector<1x16xf32>
    %4 = vector.broadcast %3 : vector<1x16xf32> to vector<32x16xf32>
    %5 = arith.mulf %2, %4 : vector<32x16xf32>
    %c0_5 = arith.constant 0 : index
    %c0_6 = arith.constant 0 : index
    %6 = vector.load %arg4[%c0_5, %c0_6] : memref<1x16xf32, #tpu.memory_space<vmem>>, vector<1x16xf32>
    %7 = vector.broadcast %6 : vector<1x16xf32> to vector<32x16xf32>
    %8 = arith.addf %5, %7 : vector<32x16xf32>
    %cst_7 = arith.constant 0.000000e+00 : f32
    %9 = vector.broadcast %cst_7 : f32 to vector<32x16xf32>
    %10 = arith.maximumf %8, %9 : vector<32x16xf32>
    %11 = arith.truncf %10 : vector<32x16xf32> to vector<32x16xbf16>
    %c0_8 = arith.constant 0 : index
    %c0_9 = arith.constant 0 : index
    %12 = vector.load %arg5[%c0_8, %c0_9] : memref<32x16xbf16, #tpu.memory_space<vmem>>, vector<32x16xbf16>
    tpu.vector_store %arg5[%c0_8, %c0_9], %11 {strides = array<i32>} : memref<32x16xbf16, #tpu.memory_space<vmem>>, vector<32x16xbf16>,
    return
  }
  func.func @transform_0(%arg0: i32) -> (i32, i32) {
    %c0_i32 = arith.constant 0 : i32
    %c0_i32_0 = arith.constant 0 : i32
    return %arg0, %c0_i32 : i32, i32
  }
  func.func @transform_1(%arg0: i32) -> (i32, i32) {
    %c0_i32 = arith.constant 0 : i32
    %c0_i32_0 = arith.constant 0 : i32
    %c0_i32_1 = arith.constant 0 : i32
    return %c0_i32, %c0_i32_0 : i32, i32
  }
  func.func @transform_2(%arg0: i32) -> (i32, i32) {
    %c0_i32 = arith.constant 0 : i32
    %c0_i32_0 = arith.constant 0 : i32
    %c0_i32_1 = arith.constant 0 : i32
    return %c0_i32, %c0_i32_0 : i32, i32
  }
  func.func @transform_3(%arg0: i32) -> (i32, i32) {
    %c0_i32 = arith.constant 0 : i32
    %c0_i32_0 = arith.constant 0 : i32
    %c0_i32_1 = arith.constant 0 : i32
    return %c0_i32, %c0_i32_0 : i32, i32
  }
  func.func @transform_4(%arg0: i32) -> (i32, i32) {
    %c0_i32 = arith.constant 0 : i32
    %c0_i32_0 = arith.constant 0 : i32
    return %arg0, %c0_i32 : i32, i32
  }
}

module attributes {stable_mosaic.version = 11 : i64} {
  func.func @_dw3x3_s1_kernel(%arg0: i32, %arg1: memref<1x4x4x16xbf16, #tpu.memory_space<vmem>>, %arg2: memref<9x1x1x16xf32, #tpu.memory_space<vmem>>, %arg3: memref<1x1x1x16xf32, #tpu.memory_space<vmem>>, %arg4: memref<1x1x1x16xf32, #tpu.memory_space<vmem>>, %arg5: memref<1x2x2x16xbf16, #tpu.memory_space<vmem>>) attributes {dimension_semantics = [#tpu.dimension_semantics<parallel>], iteration_bounds = array<i64: 2>, scalar_prefetch = 0 : i64, scratch_operands = 0 : i64, tpu.core_type = #tpu.core_type<tc>, window_params = [{transform_indices = @transform_0, window_bounds = array<i64: 1, 4, 4, 16>}, {pipeline_mode = #tpu.pipeline_mode<synchronous>, transform_indices = @transform_1, window_bounds = array<i64: 9, 1, 1, 16>}, {pipeline_mode = #tpu.pipeline_mode<synchronous>, transform_indices = @transform_2, window_bounds = array<i64: 1, 1, 1, 16>}, {pipeline_mode = #tpu.pipeline_mode<synchronous>, transform_indices = @transform_3, window_bounds = array<i64: 1, 1, 1, 16>}, {transform_indices = @transform_4, window_bounds = array<i64: 1, 2, 2, 16>}]} {
    %c0 = arith.constant 0 : index
    %c0_0 = arith.constant 0 : index
    %c0_1 = arith.constant 0 : index
    %c0_2 = arith.constant 0 : index
    %0 = vector.load %arg1[%c0, %c0_0, %c0_1, %c0_2] : memref<1x4x4x16xbf16, #tpu.memory_space<vmem>>, vector<1x4x4x16xbf16>
    %1 = arith.extf %0 : vector<1x4x4x16xbf16> to vector<1x4x4x16xf32>
    %cst = arith.constant 0.000000e+00 : f32
    %2 = vector.broadcast %cst : f32 to vector<1x2x2x16xf32>
    %3 = vector.extract_strided_slice %1 {offsets = [0, 0, 0, 0], sizes = [1, 2, 2, 16], strides = [1, 1, 1, 1]} : vector<1x4x4x16xf32> to vector<1x2x2x16xf32>
    %c0_3 = arith.constant 0 : index
    %c0_4 = arith.constant 0 : index
    %c0_5 = arith.constant 0 : index
    %c0_6 = arith.constant 0 : index
    %4 = vector.load %arg2[%c0_3, %c0_4, %c0_5, %c0_6] : memref<9x1x1x16xf32, #tpu.memory_space<vmem>>, vector<1x1x1x16xf32>
    %5 = vector.shape_cast %4 : vector<1x1x1x16xf32> to vector<1x1x16xf32>
    %6 = vector.shape_cast %5 : vector<1x1x16xf32> to vector<1x1x1x16xf32>
    %7 = vector.broadcast %6 : vector<1x1x1x16xf32> to vector<1x2x2x16xf32>
    %8 = arith.mulf %3, %7 : vector<1x2x2x16xf32>
    %9 = arith.addf %2, %8 : vector<1x2x2x16xf32>
    %10 = vector.extract_strided_slice %1 {offsets = [0, 0, 1, 0], sizes = [1, 2, 2, 16], strides = [1, 1, 1, 1]} : vector<1x4x4x16xf32> to vector<1x2x2x16xf32>
    %c1 = arith.constant 1 : index
    %c0_7 = arith.constant 0 : index
    %c0_8 = arith.constant 0 : index
    %c0_9 = arith.constant 0 : index
    %11 = vector.load %arg2[%c1, %c0_7, %c0_8, %c0_9] : memref<9x1x1x16xf32, #tpu.memory_space<vmem>>, vector<1x1x1x16xf32>
    %12 = vector.shape_cast %11 : vector<1x1x1x16xf32> to vector<1x1x16xf32>
    %13 = vector.shape_cast %12 : vector<1x1x16xf32> to vector<1x1x1x16xf32>
    %14 = vector.broadcast %13 : vector<1x1x1x16xf32> to vector<1x2x2x16xf32>
    %15 = arith.mulf %10, %14 : vector<1x2x2x16xf32>
    %16 = arith.addf %9, %15 : vector<1x2x2x16xf32>
    %17 = vector.extract_strided_slice %1 {offsets = [0, 0, 2, 0], sizes = [1, 2, 2, 16], strides = [1, 1, 1, 1]} : vector<1x4x4x16xf32> to vector<1x2x2x16xf32>
    %c2 = arith.constant 2 : index
    %c0_10 = arith.constant 0 : index
    %c0_11 = arith.constant 0 : index
    %c0_12 = arith.constant 0 : index
    %18 = vector.load %arg2[%c2, %c0_10, %c0_11, %c0_12] : memref<9x1x1x16xf32, #tpu.memory_space<vmem>>, vector<1x1x1x16xf32>
    %19 = vector.shape_cast %18 : vector<1x1x1x16xf32> to vector<1x1x16xf32>
    %20 = vector.shape_cast %19 : vector<1x1x16xf32> to vector<1x1x1x16xf32>
    %21 = vector.broadcast %20 : vector<1x1x1x16xf32> to vector<1x2x2x16xf32>
    %22 = arith.mulf %17, %21 : vector<1x2x2x16xf32>
    %23 = arith.addf %16, %22 : vector<1x2x2x16xf32>
    %24 = vector.extract_strided_slice %1 {offsets = [0, 1, 0, 0], sizes = [1, 2, 2, 16], strides = [1, 1, 1, 1]} : vector<1x4x4x16xf32> to vector<1x2x2x16xf32>
    %c3 = arith.constant 3 : index
    %c0_13 = arith.constant 0 : index
    %c0_14 = arith.constant 0 : index
    %c0_15 = arith.constant 0 : index
    %25 = vector.load %arg2[%c3, %c0_13, %c0_14, %c0_15] : memref<9x1x1x16xf32, #tpu.memory_space<vmem>>, vector<1x1x1x16xf32>
    %26 = vector.shape_cast %25 : vector<1x1x1x16xf32> to vector<1x1x16xf32>
    %27 = vector.shape_cast %26 : vector<1x1x16xf32> to vector<1x1x1x16xf32>
    %28 = vector.broadcast %27 : vector<1x1x1x16xf32> to vector<1x2x2x16xf32>
    %29 = arith.mulf %24, %28 : vector<1x2x2x16xf32>
    %30 = arith.addf %23, %29 : vector<1x2x2x16xf32>
    %31 = vector.extract_strided_slice %1 {offsets = [0, 1, 1, 0], sizes = [1, 2, 2, 16], strides = [1, 1, 1, 1]} : vector<1x4x4x16xf32> to vector<1x2x2x16xf32>
    %c4 = arith.constant 4 : index
    %c0_16 = arith.constant 0 : index
    %c0_17 = arith.constant 0 : index
    %c0_18 = arith.constant 0 : index
    %32 = vector.load %arg2[%c4, %c0_16, %c0_17, %c0_18] : memref<9x1x1x16xf32, #tpu.memory_space<vmem>>, vector<1x1x1x16xf32>
    %33 = vector.shape_cast %32 : vector<1x1x1x16xf32> to vector<1x1x16xf32>
    %34 = vector.shape_cast %33 : vector<1x1x16xf32> to vector<1x1x1x16xf32>
    %35 = vector.broadcast %34 : vector<1x1x1x16xf32> to vector<1x2x2x16xf32>
    %36 = arith.mulf %31, %35 : vector<1x2x2x16xf32>
    %37 = arith.addf %30, %36 : vector<1x2x2x16xf32>
    %38 = vector.extract_strided_slice %1 {offsets = [0, 1, 2, 0], sizes = [1, 2, 2, 16], strides = [1, 1, 1, 1]} : vector<1x4x4x16xf32> to vector<1x2x2x16xf32>
    %c5 = arith.constant 5 : index
    %c0_19 = arith.constant 0 : index
    %c0_20 = arith.constant 0 : index
    %c0_21 = arith.constant 0 : index
    %39 = vector.load %arg2[%c5, %c0_19, %c0_20, %c0_21] : memref<9x1x1x16xf32, #tpu.memory_space<vmem>>, vector<1x1x1x16xf32>
    %40 = vector.shape_cast %39 : vector<1x1x1x16xf32> to vector<1x1x16xf32>
    %41 = vector.shape_cast %40 : vector<1x1x16xf32> to vector<1x1x1x16xf32>
    %42 = vector.broadcast %41 : vector<1x1x1x16xf32> to vector<1x2x2x16xf32>
    %43 = arith.mulf %38, %42 : vector<1x2x2x16xf32>
    %44 = arith.addf %37, %43 : vector<1x2x2x16xf32>
    %45 = vector.extract_strided_slice %1 {offsets = [0, 2, 0, 0], sizes = [1, 2, 2, 16], strides = [1, 1, 1, 1]} : vector<1x4x4x16xf32> to vector<1x2x2x16xf32>
    %c6 = arith.constant 6 : index
    %c0_22 = arith.constant 0 : index
    %c0_23 = arith.constant 0 : index
    %c0_24 = arith.constant 0 : index
    %46 = vector.load %arg2[%c6, %c0_22, %c0_23, %c0_24] : memref<9x1x1x16xf32, #tpu.memory_space<vmem>>, vector<1x1x1x16xf32>
    %47 = vector.shape_cast %46 : vector<1x1x1x16xf32> to vector<1x1x16xf32>
    %48 = vector.shape_cast %47 : vector<1x1x16xf32> to vector<1x1x1x16xf32>
    %49 = vector.broadcast %48 : vector<1x1x1x16xf32> to vector<1x2x2x16xf32>
    %50 = arith.mulf %45, %49 : vector<1x2x2x16xf32>
    %51 = arith.addf %44, %50 : vector<1x2x2x16xf32>
    %52 = vector.extract_strided_slice %1 {offsets = [0, 2, 1, 0], sizes = [1, 2, 2, 16], strides = [1, 1, 1, 1]} : vector<1x4x4x16xf32> to vector<1x2x2x16xf32>
    %c7 = arith.constant 7 : index
    %c0_25 = arith.constant 0 : index
    %c0_26 = arith.constant 0 : index
    %c0_27 = arith.constant 0 : index
    %53 = vector.load %arg2[%c7, %c0_25, %c0_26, %c0_27] : memref<9x1x1x16xf32, #tpu.memory_space<vmem>>, vector<1x1x1x16xf32>
    %54 = vector.shape_cast %53 : vector<1x1x1x16xf32> to vector<1x1x16xf32>
    %55 = vector.shape_cast %54 : vector<1x1x16xf32> to vector<1x1x1x16xf32>
    %56 = vector.broadcast %55 : vector<1x1x1x16xf32> to vector<1x2x2x16xf32>
    %57 = arith.mulf %52, %56 : vector<1x2x2x16xf32>
    %58 = arith.addf %51, %57 : vector<1x2x2x16xf32>
    %59 = vector.extract_strided_slice %1 {offsets = [0, 2, 2, 0], sizes = [1, 2, 2, 16], strides = [1, 1, 1, 1]} : vector<1x4x4x16xf32> to vector<1x2x2x16xf32>
    %c8 = arith.constant 8 : index
    %c0_28 = arith.constant 0 : index
    %c0_29 = arith.constant 0 : index
    %c0_30 = arith.constant 0 : index
    %60 = vector.load %arg2[%c8, %c0_28, %c0_29, %c0_30] : memref<9x1x1x16xf32, #tpu.memory_space<vmem>>, vector<1x1x1x16xf32>
    %61 = vector.shape_cast %60 : vector<1x1x1x16xf32> to vector<1x1x16xf32>
    %62 = vector.shape_cast %61 : vector<1x1x16xf32> to vector<1x1x1x16xf32>
    %63 = vector.broadcast %62 : vector<1x1x1x16xf32> to vector<1x2x2x16xf32>
    %64 = arith.mulf %59, %63 : vector<1x2x2x16xf32>
    %65 = arith.addf %58, %64 : vector<1x2x2x16xf32>
    %c0_31 = arith.constant 0 : index
    %c0_32 = arith.constant 0 : index
    %c0_33 = arith.constant 0 : index
    %c0_34 = arith.constant 0 : index
    %66 = vector.load %arg3[%c0_31, %c0_32, %c0_33, %c0_34] : memref<1x1x1x16xf32, #tpu.memory_space<vmem>>, vector<1x1x1x16xf32>
    %67 = vector.broadcast %66 : vector<1x1x1x16xf32> to vector<1x2x2x16xf32>
    %68 = arith.mulf %65, %67 : vector<1x2x2x16xf32>
    %c0_35 = arith.constant 0 : index
    %c0_36 = arith.constant 0 : index
    %c0_37 = arith.constant 0 : index
    %c0_38 = arith.constant 0 : index
    %69 = vector.load %arg4[%c0_35, %c0_36, %c0_37, %c0_38] : memref<1x1x1x16xf32, #tpu.memory_space<vmem>>, vector<1x1x1x16xf32>
    %70 = vector.broadcast %69 : vector<1x1x1x16xf32> to vector<1x2x2x16xf32>
    %71 = arith.addf %68, %70 : vector<1x2x2x16xf32>
    %72 = arith.truncf %71 : vector<1x2x2x16xf32> to vector<1x2x2x16xbf16>
    %c0_39 = arith.constant 0 : index
    %c0_40 = arith.constant 0 : index
    %c0_41 = arith.constant 0 : index
    %c0_42 = arith.constant 0 : index
    %73 = vector.load %arg5[%c0_39, %c0_40, %c0_41, %c0_42] : memref<1x2x2x16xbf16, #tpu.memory_space<vmem>>, vector<1x2x2x16xbf16>
    tpu.vector_store %arg5[%c0_39, %c0_40, %c0_41, %c0_42], %72 {strides = array<i32>} : memref<1x2x2x16xbf16, #tpu.memory_space<vmem>>, vector<1x2x2x16xbf16>,
    return
  }
  func.func @transform_0(%arg0: i32) -> (i32, i32, i32, i32) {
    %c0_i32 = arith.constant 0 : i32
    %c0_i32_0 = arith.constant 0 : i32
    %c0_i32_1 = arith.constant 0 : i32
    %c0_i32_2 = arith.constant 0 : i32
    return %arg0, %c0_i32, %c0_i32_0, %c0_i32_1 : i32, i32, i32, i32
  }
  func.func @transform_1(%arg0: i32) -> (i32, i32, i32, i32) {
    %c0_i32 = arith.constant 0 : i32
    %c0_i32_0 = arith.constant 0 : i32
    %c0_i32_1 = arith.constant 0 : i32
    %c0_i32_2 = arith.constant 0 : i32
    %c0_i32_3 = arith.constant 0 : i32
    return %c0_i32, %c0_i32_0, %c0_i32_1, %c0_i32_2 : i32, i32, i32, i32
  }
  func.func @transform_2(%arg0: i32) -> (i32, i32, i32, i32) {
    %c0_i32 = arith.constant 0 : i32
    %c0_i32_0 = arith.constant 0 : i32
    %c0_i32_1 = arith.constant 0 : i32
    %c0_i32_2 = arith.constant 0 : i32
    %c0_i32_3 = arith.constant 0 : i32
    return %c0_i32, %c0_i32_0, %c0_i32_1, %c0_i32_2 : i32, i32, i32, i32
  }
  func.func @transform_3(%arg0: i32) -> (i32, i32, i32, i32) {
    %c0_i32 = arith.constant 0 : i32
    %c0_i32_0 = arith.constant 0 : i32
    %c0_i32_1 = arith.constant 0 : i32
    %c0_i32_2 = arith.constant 0 : i32
    %c0_i32_3 = arith.constant 0 : i32
    return %c0_i32, %c0_i32_0, %c0_i32_1, %c0_i32_2 : i32, i32, i32, i32
  }
  func.func @transform_4(%arg0: i32) -> (i32, i32, i32, i32) {
    %c0_i32 = arith.constant 0 : i32
    %c0_i32_0 = arith.constant 0 : i32
    %c0_i32_1 = arith.constant 0 : i32
    %c0_i32_2 = arith.constant 0 : i32
    return %arg0, %c0_i32, %c0_i32_0, %c0_i32_1 : i32, i32, i32, i32
  }
}

module attributes {stable_mosaic.version = 11 : i64} {
  func.func @_matmul_affine_kernel(%arg0: i32, %arg1: memref<2x32xbf16, #tpu.memory_space<vmem>>, %arg2: memref<32x32xbf16, #tpu.memory_space<vmem>>, %arg3: memref<1x32xf32, #tpu.memory_space<vmem>>, %arg4: memref<1x32xf32, #tpu.memory_space<vmem>>, %arg5: memref<2x32xbf16, #tpu.memory_space<vmem>>) attributes {dimension_semantics = [#tpu.dimension_semantics<parallel>], iteration_bounds = array<i64: 1>, scalar_prefetch = 0 : i64, scratch_operands = 0 : i64, tpu.core_type = #tpu.core_type<tc>, window_params = [{transform_indices = @transform_0, window_bounds = array<i64: 2, 32>}, {pipeline_mode = #tpu.pipeline_mode<synchronous>, transform_indices = @transform_1, window_bounds = array<i64: 32, 32>}, {pipeline_mode = #tpu.pipeline_mode<synchronous>, transform_indices = @transform_2, window_bounds = array<i64: 1, 32>}, {pipeline_mode = #tpu.pipeline_mode<synchronous>, transform_indices = @transform_3, window_bounds = array<i64: 1, 32>}, {transform_indices = @transform_4, window_bounds = array<i64: 2, 32>}]} {
    %c0 = arith.constant 0 : index
    %c0_0 = arith.constant 0 : index
    %0 = vector.load %arg1[%c0, %c0_0] : memref<2x32xbf16, #tpu.memory_space<vmem>>, vector<2x32xbf16>
    %c0_1 = arith.constant 0 : index
    %c0_2 = arith.constant 0 : index
    %1 = vector.load %arg2[%c0_1, %c0_2] : memref<32x32xbf16, #tpu.memory_space<vmem>>, vector<32x32xbf16>
    %cst = arith.constant dense<0.000000e+00> : vector<2x32xf32>
    %2 = tpu.matmul %0, %1, %cst {dimension_numbers = #tpu.dot_dimension_numbers<[1], [0], [0], [1], [0, 0, 1, 1], [], []>} : vector<2x32xbf16>, vector<32x32xbf16>, vector<2x32xf32> -> vector<2x32xf32>
    %c0_3 = arith.constant 0 : index
    %c0_4 = arith.constant 0 : index
    %3 = vector.load %arg3[%c0_3, %c0_4] : memref<1x32xf32, #tpu.memory_space<vmem>>, vector<1x32xf32>
    %4 = vector.broadcast %3 : vector<1x32xf32> to vector<2x32xf32>
    %5 = arith.mulf %2, %4 : vector<2x32xf32>
    %c0_5 = arith.constant 0 : index
    %c0_6 = arith.constant 0 : index
    %6 = vector.load %arg4[%c0_5, %c0_6] : memref<1x32xf32, #tpu.memory_space<vmem>>, vector<1x32xf32>
    %7 = vector.broadcast %6 : vector<1x32xf32> to vector<2x32xf32>
    %8 = arith.addf %5, %7 : vector<2x32xf32>
    %cst_7 = arith.constant 0.000000e+00 : f32
    %9 = vector.broadcast %cst_7 : f32 to vector<2x32xf32>
    %10 = arith.maximumf %8, %9 : vector<2x32xf32>
    %11 = arith.truncf %10 : vector<2x32xf32> to vector<2x32xbf16>
    %c0_8 = arith.constant 0 : index
    %c0_9 = arith.constant 0 : index
    %12 = vector.load %arg5[%c0_8, %c0_9] : memref<2x32xbf16, #tpu.memory_space<vmem>>, vector<2x32xbf16>
    tpu.vector_store %arg5[%c0_8, %c0_9], %11 {strides = array<i32>} : memref<2x32xbf16, #tpu.memory_space<vmem>>, vector<2x32xbf16>,
    return
  }
  func.func @transform_0(%arg0: i32) -> (i32, i32) {
    %c0_i32 = arith.constant 0 : i32
    %c0_i32_0 = arith.constant 0 : i32
    return %arg0, %c0_i32 : i32, i32
  }
  func.func @transform_1(%arg0: i32) -> (i32, i32) {
    %c0_i32 = arith.constant 0 : i32
    %c0_i32_0 = arith.constant 0 : i32
    %c0_i32_1 = arith.constant 0 : i32
    return %c0_i32, %c0_i32_0 : i32, i32
  }
  func.func @transform_2(%arg0: i32) -> (i32, i32) {
    %c0_i32 = arith.constant 0 : i32
    %c0_i32_0 = arith.constant 0 : i32
    %c0_i32_1 = arith.constant 0 : i32
    return %c0_i32, %c0_i32_0 : i32, i32
  }
  func.func @transform_3(%arg0: i32) -> (i32, i32) {
    %c0_i32 = arith.constant 0 : i32
    %c0_i32_0 = arith.constant 0 : i32
    %c0_i32_1 = arith.constant 0 : i32
    return %c0_i32, %c0_i32_0 : i32, i32
  }
  func.func @transform_4(%arg0: i32) -> (i32, i32) {
    %c0_i32 = arith.constant 0 : i32
    %c0_i32_0 = arith.constant 0 : i32
    return %arg0, %c0_i32 : i32, i32
  }
}

module attributes {stable_mosaic.version = 11 : i64} {
  func.func @_dw3x3_s2_kernel(%arg0: i32, %arg1: memref<1x2x2x32xbf16, #tpu.memory_space<vmem>>, %arg2: memref<1x2x2x32xbf16, #tpu.memory_space<vmem>>, %arg3: memref<1x2x2x32xbf16, #tpu.memory_space<vmem>>, %arg4: memref<1x2x2x32xbf16, #tpu.memory_space<vmem>>, %arg5: memref<9x1x1x32xf32, #tpu.memory_space<vmem>>, %arg6: memref<1x1x1x32xf32, #tpu.memory_space<vmem>>, %arg7: memref<1x1x1x32xf32, #tpu.memory_space<vmem>>, %arg8: memref<1x1x1x32xbf16, #tpu.memory_space<vmem>>) attributes {dimension_semantics = [#tpu.dimension_semantics<parallel>], iteration_bounds = array<i64: 2>, scalar_prefetch = 0 : i64, scratch_operands = 0 : i64, tpu.core_type = #tpu.core_type<tc>, window_params = [{transform_indices = @transform_0, window_bounds = array<i64: 1, 2, 2, 32>}, {transform_indices = @transform_1, window_bounds = array<i64: 1, 2, 2, 32>}, {transform_indices = @transform_2, window_bounds = array<i64: 1, 2, 2, 32>}, {transform_indices = @transform_3, window_bounds = array<i64: 1, 2, 2, 32>}, {pipeline_mode = #tpu.pipeline_mode<synchronous>, transform_indices = @transform_4, window_bounds = array<i64: 9, 1, 1, 32>}, {pipeline_mode = #tpu.pipeline_mode<synchronous>, transform_indices = @transform_5, window_bounds = array<i64: 1, 1, 1, 32>}, {pipeline_mode = #tpu.pipeline_mode<synchronous>, transform_indices = @transform_6, window_bounds = array<i64: 1, 1, 1, 32>}, {transform_indices = @transform_7, window_bounds = array<i64: 1, 1, 1, 32>}]} {
    %c0 = arith.constant 0 : index
    %c0_0 = arith.constant 0 : index
    %c0_1 = arith.constant 0 : index
    %c0_2 = arith.constant 0 : index
    %0 = vector.load %arg1[%c0, %c0_0, %c0_1, %c0_2] : memref<1x2x2x32xbf16, #tpu.memory_space<vmem>>, vector<1x2x2x32xbf16>
    %1 = arith.extf %0 : vector<1x2x2x32xbf16> to vector<1x2x2x32xf32>
    %c0_3 = arith.constant 0 : index
    %c0_4 = arith.constant 0 : index
    %c0_5 = arith.constant 0 : index
    %c0_6 = arith.constant 0 : index
    %2 = vector.load %arg2[%c0_3, %c0_4, %c0_5, %c0_6] : memref<1x2x2x32xbf16, #tpu.memory_space<vmem>>, vector<1x2x2x32xbf16>
    %3 = arith.extf %2 : vector<1x2x2x32xbf16> to vector<1x2x2x32xf32>
    %c0_7 = arith.constant 0 : index
    %c0_8 = arith.constant 0 : index
    %c0_9 = arith.constant 0 : index
    %c0_10 = arith.constant 0 : index
    %4 = vector.load %arg3[%c0_7, %c0_8, %c0_9, %c0_10] : memref<1x2x2x32xbf16, #tpu.memory_space<vmem>>, vector<1x2x2x32xbf16>
    %5 = arith.extf %4 : vector<1x2x2x32xbf16> to vector<1x2x2x32xf32>
    %c0_11 = arith.constant 0 : index
    %c0_12 = arith.constant 0 : index
    %c0_13 = arith.constant 0 : index
    %c0_14 = arith.constant 0 : index
    %6 = vector.load %arg4[%c0_11, %c0_12, %c0_13, %c0_14] : memref<1x2x2x32xbf16, #tpu.memory_space<vmem>>, vector<1x2x2x32xbf16>
    %7 = arith.extf %6 : vector<1x2x2x32xbf16> to vector<1x2x2x32xf32>
    %cst = arith.constant 0.000000e+00 : f32
    %8 = vector.broadcast %cst : f32 to vector<1x1x1x32xf32>
    %9 = vector.extract_strided_slice %1 {offsets = [0, 0, 0, 0], sizes = [1, 1, 1, 32], strides = [1, 1, 1, 1]} : vector<1x2x2x32xf32> to vector<1x1x1x32xf32>
    %c0_15 = arith.constant 0 : index
    %c0_16 = arith.constant 0 : index
    %c0_17 = arith.constant 0 : index
    %c0_18 = arith.constant 0 : index
    %10 = vector.load %arg5[%c0_15, %c0_16, %c0_17, %c0_18] : memref<9x1x1x32xf32, #tpu.memory_space<vmem>>, vector<1x1x1x32xf32>
    %11 = vector.shape_cast %10 : vector<1x1x1x32xf32> to vector<1x1x32xf32>
    %12 = vector.shape_cast %11 : vector<1x1x32xf32> to vector<1x1x1x32xf32>
    %13 = arith.mulf %9, %12 : vector<1x1x1x32xf32>
    %14 = arith.addf %8, %13 : vector<1x1x1x32xf32>
    %15 = vector.extract_strided_slice %3 {offsets = [0, 0, 0, 0], sizes = [1, 1, 1, 32], strides = [1, 1, 1, 1]} : vector<1x2x2x32xf32> to vector<1x1x1x32xf32>
    %c1 = arith.constant 1 : index
    %c0_19 = arith.constant 0 : index
    %c0_20 = arith.constant 0 : index
    %c0_21 = arith.constant 0 : index
    %16 = vector.load %arg5[%c1, %c0_19, %c0_20, %c0_21] : memref<9x1x1x32xf32, #tpu.memory_space<vmem>>, vector<1x1x1x32xf32>
    %17 = vector.shape_cast %16 : vector<1x1x1x32xf32> to vector<1x1x32xf32>
    %18 = vector.shape_cast %17 : vector<1x1x32xf32> to vector<1x1x1x32xf32>
    %19 = arith.mulf %15, %18 : vector<1x1x1x32xf32>
    %20 = arith.addf %14, %19 : vector<1x1x1x32xf32>
    %21 = vector.extract_strided_slice %1 {offsets = [0, 0, 1, 0], sizes = [1, 1, 1, 32], strides = [1, 1, 1, 1]} : vector<1x2x2x32xf32> to vector<1x1x1x32xf32>
    %c2 = arith.constant 2 : index
    %c0_22 = arith.constant 0 : index
    %c0_23 = arith.constant 0 : index
    %c0_24 = arith.constant 0 : index
    %22 = vector.load %arg5[%c2, %c0_22, %c0_23, %c0_24] : memref<9x1x1x32xf32, #tpu.memory_space<vmem>>, vector<1x1x1x32xf32>
    %23 = vector.shape_cast %22 : vector<1x1x1x32xf32> to vector<1x1x32xf32>
    %24 = vector.shape_cast %23 : vector<1x1x32xf32> to vector<1x1x1x32xf32>
    %25 = arith.mulf %21, %24 : vector<1x1x1x32xf32>
    %26 = arith.addf %20, %25 : vector<1x1x1x32xf32>
    %27 = vector.extract_strided_slice %5 {offsets = [0, 0, 0, 0], sizes = [1, 1, 1, 32], strides = [1, 1, 1, 1]} : vector<1x2x2x32xf32> to vector<1x1x1x32xf32>
    %c3 = arith.constant 3 : index
    %c0_25 = arith.constant 0 : index
    %c0_26 = arith.constant 0 : index
    %c0_27 = arith.constant 0 : index
    %28 = vector.load %arg5[%c3, %c0_25, %c0_26, %c0_27] : memref<9x1x1x32xf32, #tpu.memory_space<vmem>>, vector<1x1x1x32xf32>
    %29 = vector.shape_cast %28 : vector<1x1x1x32xf32> to vector<1x1x32xf32>
    %30 = vector.shape_cast %29 : vector<1x1x32xf32> to vector<1x1x1x32xf32>
    %31 = arith.mulf %27, %30 : vector<1x1x1x32xf32>
    %32 = arith.addf %26, %31 : vector<1x1x1x32xf32>
    %33 = vector.extract_strided_slice %7 {offsets = [0, 0, 0, 0], sizes = [1, 1, 1, 32], strides = [1, 1, 1, 1]} : vector<1x2x2x32xf32> to vector<1x1x1x32xf32>
    %c4 = arith.constant 4 : index
    %c0_28 = arith.constant 0 : index
    %c0_29 = arith.constant 0 : index
    %c0_30 = arith.constant 0 : index
    %34 = vector.load %arg5[%c4, %c0_28, %c0_29, %c0_30] : memref<9x1x1x32xf32, #tpu.memory_space<vmem>>, vector<1x1x1x32xf32>
    %35 = vector.shape_cast %34 : vector<1x1x1x32xf32> to vector<1x1x32xf32>
    %36 = vector.shape_cast %35 : vector<1x1x32xf32> to vector<1x1x1x32xf32>
    %37 = arith.mulf %33, %36 : vector<1x1x1x32xf32>
    %38 = arith.addf %32, %37 : vector<1x1x1x32xf32>
    %39 = vector.extract_strided_slice %5 {offsets = [0, 0, 1, 0], sizes = [1, 1, 1, 32], strides = [1, 1, 1, 1]} : vector<1x2x2x32xf32> to vector<1x1x1x32xf32>
    %c5 = arith.constant 5 : index
    %c0_31 = arith.constant 0 : index
    %c0_32 = arith.constant 0 : index
    %c0_33 = arith.constant 0 : index
    %40 = vector.load %arg5[%c5, %c0_31, %c0_32, %c0_33] : memref<9x1x1x32xf32, #tpu.memory_space<vmem>>, vector<1x1x1x32xf32>
    %41 = vector.shape_cast %40 : vector<1x1x1x32xf32> to vector<1x1x32xf32>
    %42 = vector.shape_cast %41 : vector<1x1x32xf32> to vector<1x1x1x32xf32>
    %43 = arith.mulf %39, %42 : vector<1x1x1x32xf32>
    %44 = arith.addf %38, %43 : vector<1x1x1x32xf32>
    %45 = vector.extract_strided_slice %1 {offsets = [0, 1, 0, 0], sizes = [1, 1, 1, 32], strides = [1, 1, 1, 1]} : vector<1x2x2x32xf32> to vector<1x1x1x32xf32>
    %c6 = arith.constant 6 : index
    %c0_34 = arith.constant 0 : index
    %c0_35 = arith.constant 0 : index
    %c0_36 = arith.constant 0 : index
    %46 = vector.load %arg5[%c6, %c0_34, %c0_35, %c0_36] : memref<9x1x1x32xf32, #tpu.memory_space<vmem>>, vector<1x1x1x32xf32>
    %47 = vector.shape_cast %46 : vector<1x1x1x32xf32> to vector<1x1x32xf32>
    %48 = vector.shape_cast %47 : vector<1x1x32xf32> to vector<1x1x1x32xf32>
    %49 = arith.mulf %45, %48 : vector<1x1x1x32xf32>
    %50 = arith.addf %44, %49 : vector<1x1x1x32xf32>
    %51 = vector.extract_strided_slice %3 {offsets = [0, 1, 0, 0], sizes = [1, 1, 1, 32], strides = [1, 1, 1, 1]} : vector<1x2x2x32xf32> to vector<1x1x1x32xf32>
    %c7 = arith.constant 7 : index
    %c0_37 = arith.constant 0 : index
    %c0_38 = arith.constant 0 : index
    %c0_39 = arith.constant 0 : index
    %52 = vector.load %arg5[%c7, %c0_37, %c0_38, %c0_39] : memref<9x1x1x32xf32, #tpu.memory_space<vmem>>, vector<1x1x1x32xf32>
    %53 = vector.shape_cast %52 : vector<1x1x1x32xf32> to vector<1x1x32xf32>
    %54 = vector.shape_cast %53 : vector<1x1x32xf32> to vector<1x1x1x32xf32>
    %55 = arith.mulf %51, %54 : vector<1x1x1x32xf32>
    %56 = arith.addf %50, %55 : vector<1x1x1x32xf32>
    %57 = vector.extract_strided_slice %1 {offsets = [0, 1, 1, 0], sizes = [1, 1, 1, 32], strides = [1, 1, 1, 1]} : vector<1x2x2x32xf32> to vector<1x1x1x32xf32>
    %c8 = arith.constant 8 : index
    %c0_40 = arith.constant 0 : index
    %c0_41 = arith.constant 0 : index
    %c0_42 = arith.constant 0 : index
    %58 = vector.load %arg5[%c8, %c0_40, %c0_41, %c0_42] : memref<9x1x1x32xf32, #tpu.memory_space<vmem>>, vector<1x1x1x32xf32>
    %59 = vector.shape_cast %58 : vector<1x1x1x32xf32> to vector<1x1x32xf32>
    %60 = vector.shape_cast %59 : vector<1x1x32xf32> to vector<1x1x1x32xf32>
    %61 = arith.mulf %57, %60 : vector<1x1x1x32xf32>
    %62 = arith.addf %56, %61 : vector<1x1x1x32xf32>
    %c0_43 = arith.constant 0 : index
    %c0_44 = arith.constant 0 : index
    %c0_45 = arith.constant 0 : index
    %c0_46 = arith.constant 0 : index
    %63 = vector.load %arg6[%c0_43, %c0_44, %c0_45, %c0_46] : memref<1x1x1x32xf32, #tpu.memory_space<vmem>>, vector<1x1x1x32xf32>
    %64 = arith.mulf %62, %63 : vector<1x1x1x32xf32>
    %c0_47 = arith.constant 0 : index
    %c0_48 = arith.constant 0 : index
    %c0_49 = arith.constant 0 : index
    %c0_50 = arith.constant 0 : index
    %65 = vector.load %arg7[%c0_47, %c0_48, %c0_49, %c0_50] : memref<1x1x1x32xf32, #tpu.memory_space<vmem>>, vector<1x1x1x32xf32>
    %66 = arith.addf %64, %65 : vector<1x1x1x32xf32>
    %67 = arith.truncf %66 : vector<1x1x1x32xf32> to vector<1x1x1x32xbf16>
    %c0_51 = arith.constant 0 : index
    %c0_52 = arith.constant 0 : index
    %c0_53 = arith.constant 0 : index
    %c0_54 = arith.constant 0 : index
    %68 = vector.load %arg8[%c0_51, %c0_52, %c0_53, %c0_54] : memref<1x1x1x32xbf16, #tpu.memory_space<vmem>>, vector<1x1x1x32xbf16>
    tpu.vector_store %arg8[%c0_51, %c0_52, %c0_53, %c0_54], %67 {strides = array<i32>} : memref<1x1x1x32xbf16, #tpu.memory_space<vmem>>, vector<1x1x1x32xbf16>,
    return
  }
  func.func @transform_0(%arg0: i32) -> (i32, i32, i32, i32) {
    %c0_i32 = arith.constant 0 : i32
    %c0_i32_0 = arith.constant 0 : i32
    %c0_i32_1 = arith.constant 0 : i32
    %c0_i32_2 = arith.constant 0 : i32
    return %arg0, %c0_i32, %c0_i32_0, %c0_i32_1 : i32, i32, i32, i32
  }
  func.func @transform_1(%arg0: i32) -> (i32, i32, i32, i32) {
    %c0_i32 = arith.constant 0 : i32
    %c0_i32_0 = arith.constant 0 : i32
    %c0_i32_1 = arith.constant 0 : i32
    %c0_i32_2 = arith.constant 0 : i32
    return %arg0, %c0_i32, %c0_i32_0, %c0_i32_1 : i32, i32, i32, i32
  }
  func.func @transform_2(%arg0: i32) -> (i32, i32, i32, i32) {
    %c0_i32 = arith.constant 0 : i32
    %c0_i32_0 = arith.constant 0 : i32
    %c0_i32_1 = arith.constant 0 : i32
    %c0_i32_2 = arith.constant 0 : i32
    return %arg0, %c0_i32, %c0_i32_0, %c0_i32_1 : i32, i32, i32, i32
  }
  func.func @transform_3(%arg0: i32) -> (i32, i32, i32, i32) {
    %c0_i32 = arith.constant 0 : i32
    %c0_i32_0 = arith.constant 0 : i32
    %c0_i32_1 = arith.constant 0 : i32
    %c0_i32_2 = arith.constant 0 : i32
    return %arg0, %c0_i32, %c0_i32_0, %c0_i32_1 : i32, i32, i32, i32
  }
  func.func @transform_4(%arg0: i32) -> (i32, i32, i32, i32) {
    %c0_i32 = arith.constant 0 : i32
    %c0_i32_0 = arith.constant 0 : i32
    %c0_i32_1 = arith.constant 0 : i32
    %c0_i32_2 = arith.constant 0 : i32
    %c0_i32_3 = arith.constant 0 : i32
    return %c0_i32, %c0_i32_0, %c0_i32_1, %c0_i32_2 : i32, i32, i32, i32
  }
  func.func @transform_5(%arg0: i32) -> (i32, i32, i32, i32) {
    %c0_i32 = arith.constant 0 : i32
    %c0_i32_0 = arith.constant 0 : i32
    %c0_i32_1 = arith.constant 0 : i32
    %c0_i32_2 = arith.constant 0 : i32
    %c0_i32_3 = arith.constant 0 : i32
    return %c0_i32, %c0_i32_0, %c0_i32_1, %c0_i32_2 : i32, i32, i32, i32
  }
  func.func @transform_6(%arg0: i32) -> (i32, i32, i32, i32) {
    %c0_i32 = arith.constant 0 : i32
    %c0_i32_0 = arith.constant 0 : i32
    %c0_i32_1 = arith.constant 0 : i32
    %c0_i32_2 = arith.constant 0 : i32
    %c0_i32_3 = arith.constant 0 : i32
    return %c0_i32, %c0_i32_0, %c0_i32_1, %c0_i32_2 : i32, i32, i32, i32
  }
  func.func @transform_7(%arg0: i32) -> (i32, i32, i32, i32) {
    %c0_i32 = arith.constant 0 : i32
    %c0_i32_0 = arith.constant 0 : i32
    %c0_i32_1 = arith.constant 0 : i32
    %c0_i32_2 = arith.constant 0 : i32
    return %arg0, %c0_i32, %c0_i32_0, %c0_i32_1 : i32, i32, i32, i32
  }
}

module attributes {stable_mosaic.version = 11 : i64} {
  func.func @_matmul_affine_kernel(%arg0: i32, %arg1: memref<8x32xbf16, #tpu.memory_space<vmem>>, %arg2: memref<32x32xbf16, #tpu.memory_space<vmem>>, %arg3: memref<1x32xf32, #tpu.memory_space<vmem>>, %arg4: memref<1x32xf32, #tpu.memory_space<vmem>>, %arg5: memref<8x32xbf16, #tpu.memory_space<vmem>>) attributes {dimension_semantics = [#tpu.dimension_semantics<parallel>], iteration_bounds = array<i64: 1>, scalar_prefetch = 0 : i64, scratch_operands = 0 : i64, tpu.core_type = #tpu.core_type<tc>, window_params = [{transform_indices = @transform_0, window_bounds = array<i64: 8, 32>}, {pipeline_mode = #tpu.pipeline_mode<synchronous>, transform_indices = @transform_1, window_bounds = array<i64: 32, 32>}, {pipeline_mode = #tpu.pipeline_mode<synchronous>, transform_indices = @transform_2, window_bounds = array<i64: 1, 32>}, {pipeline_mode = #tpu.pipeline_mode<synchronous>, transform_indices = @transform_3, window_bounds = array<i64: 1, 32>}, {transform_indices = @transform_4, window_bounds = array<i64: 8, 32>}]} {
    %c0 = arith.constant 0 : index
    %c0_0 = arith.constant 0 : index
    %0 = vector.load %arg1[%c0, %c0_0] : memref<8x32xbf16, #tpu.memory_space<vmem>>, vector<8x32xbf16>
    %c0_1 = arith.constant 0 : index
    %c0_2 = arith.constant 0 : index
    %1 = vector.load %arg2[%c0_1, %c0_2] : memref<32x32xbf16, #tpu.memory_space<vmem>>, vector<32x32xbf16>
    %cst = arith.constant dense<0.000000e+00> : vector<8x32xf32>
    %2 = tpu.matmul %0, %1, %cst {dimension_numbers = #tpu.dot_dimension_numbers<[1], [0], [0], [1], [0, 0, 1, 1], [], []>} : vector<8x32xbf16>, vector<32x32xbf16>, vector<8x32xf32> -> vector<8x32xf32>
    %c0_3 = arith.constant 0 : index
    %c0_4 = arith.constant 0 : index
    %3 = vector.load %arg3[%c0_3, %c0_4] : memref<1x32xf32, #tpu.memory_space<vmem>>, vector<1x32xf32>
    %4 = vector.broadcast %3 : vector<1x32xf32> to vector<8x32xf32>
    %5 = arith.mulf %2, %4 : vector<8x32xf32>
    %c0_5 = arith.constant 0 : index
    %c0_6 = arith.constant 0 : index
    %6 = vector.load %arg4[%c0_5, %c0_6] : memref<1x32xf32, #tpu.memory_space<vmem>>, vector<1x32xf32>
    %7 = vector.broadcast %6 : vector<1x32xf32> to vector<8x32xf32>
    %8 = arith.addf %5, %7 : vector<8x32xf32>
    %cst_7 = arith.constant 0.000000e+00 : f32
    %9 = vector.broadcast %cst_7 : f32 to vector<8x32xf32>
    %10 = arith.maximumf %8, %9 : vector<8x32xf32>
    %11 = arith.truncf %10 : vector<8x32xf32> to vector<8x32xbf16>
    %c0_8 = arith.constant 0 : index
    %c0_9 = arith.constant 0 : index
    %12 = vector.load %arg5[%c0_8, %c0_9] : memref<8x32xbf16, #tpu.memory_space<vmem>>, vector<8x32xbf16>
    tpu.vector_store %arg5[%c0_8, %c0_9], %11 {strides = array<i32>} : memref<8x32xbf16, #tpu.memory_space<vmem>>, vector<8x32xbf16>,
    return
  }
  func.func @transform_0(%arg0: i32) -> (i32, i32) {
    %c0_i32 = arith.constant 0 : i32
    %c0_i32_0 = arith.constant 0 : i32
    return %arg0, %c0_i32 : i32, i32
  }
  func.func @transform_1(%arg0: i32) -> (i32, i32) {
    %c0_i32 = arith.constant 0 : i32
    %c0_i32_0 = arith.constant 0 : i32
    %c0_i32_1 = arith.constant 0 : i32
    return %c0_i32, %c0_i32_0 : i32, i32
  }
  func.func @transform_2(%arg0: i32) -> (i32, i32) {
    %c0_i32 = arith.constant 0 : i32
    %c0_i32_0 = arith.constant 0 : i32
    %c0_i32_1 = arith.constant 0 : i32
    return %c0_i32, %c0_i32_0 : i32, i32
  }
  func.func @transform_3(%arg0: i32) -> (i32, i32) {
    %c0_i32 = arith.constant 0 : i32
    %c0_i32_0 = arith.constant 0 : i32
    %c0_i32_1 = arith.constant 0 : i32
    return %c0_i32, %c0_i32_0 : i32, i32
  }
  func.func @transform_4(%arg0: i32) -> (i32, i32) {
    %c0_i32 = arith.constant 0 : i32
    %c0_i32_0 = arith.constant 0 : i32
    return %arg0, %c0_i32 : i32, i32
  }
}

module attributes {stable_mosaic.version = 11 : i64} {
  func.func @_dw3x3_s1_kernel(%arg0: i32, %arg1: memref<1x3x3x32xbf16, #tpu.memory_space<vmem>>, %arg2: memref<9x1x1x32xf32, #tpu.memory_space<vmem>>, %arg3: memref<1x1x1x32xf32, #tpu.memory_space<vmem>>, %arg4: memref<1x1x1x32xf32, #tpu.memory_space<vmem>>, %arg5: memref<1x1x1x32xbf16, #tpu.memory_space<vmem>>) attributes {dimension_semantics = [#tpu.dimension_semantics<parallel>], iteration_bounds = array<i64: 2>, scalar_prefetch = 0 : i64, scratch_operands = 0 : i64, tpu.core_type = #tpu.core_type<tc>, window_params = [{transform_indices = @transform_0, window_bounds = array<i64: 1, 3, 3, 32>}, {pipeline_mode = #tpu.pipeline_mode<synchronous>, transform_indices = @transform_1, window_bounds = array<i64: 9, 1, 1, 32>}, {pipeline_mode = #tpu.pipeline_mode<synchronous>, transform_indices = @transform_2, window_bounds = array<i64: 1, 1, 1, 32>}, {pipeline_mode = #tpu.pipeline_mode<synchronous>, transform_indices = @transform_3, window_bounds = array<i64: 1, 1, 1, 32>}, {transform_indices = @transform_4, window_bounds = array<i64: 1, 1, 1, 32>}]} {
    %c0 = arith.constant 0 : index
    %c0_0 = arith.constant 0 : index
    %c0_1 = arith.constant 0 : index
    %c0_2 = arith.constant 0 : index
    %0 = vector.load %arg1[%c0, %c0_0, %c0_1, %c0_2] : memref<1x3x3x32xbf16, #tpu.memory_space<vmem>>, vector<1x3x3x32xbf16>
    %1 = arith.extf %0 : vector<1x3x3x32xbf16> to vector<1x3x3x32xf32>
    %cst = arith.constant 0.000000e+00 : f32
    %2 = vector.broadcast %cst : f32 to vector<1x1x1x32xf32>
    %3 = vector.extract_strided_slice %1 {offsets = [0, 0, 0, 0], sizes = [1, 1, 1, 32], strides = [1, 1, 1, 1]} : vector<1x3x3x32xf32> to vector<1x1x1x32xf32>
    %c0_3 = arith.constant 0 : index
    %c0_4 = arith.constant 0 : index
    %c0_5 = arith.constant 0 : index
    %c0_6 = arith.constant 0 : index
    %4 = vector.load %arg2[%c0_3, %c0_4, %c0_5, %c0_6] : memref<9x1x1x32xf32, #tpu.memory_space<vmem>>, vector<1x1x1x32xf32>
    %5 = vector.shape_cast %4 : vector<1x1x1x32xf32> to vector<1x1x32xf32>
    %6 = vector.shape_cast %5 : vector<1x1x32xf32> to vector<1x1x1x32xf32>
    %7 = arith.mulf %3, %6 : vector<1x1x1x32xf32>
    %8 = arith.addf %2, %7 : vector<1x1x1x32xf32>
    %9 = vector.extract_strided_slice %1 {offsets = [0, 0, 1, 0], sizes = [1, 1, 1, 32], strides = [1, 1, 1, 1]} : vector<1x3x3x32xf32> to vector<1x1x1x32xf32>
    %c1 = arith.constant 1 : index
    %c0_7 = arith.constant 0 : index
    %c0_8 = arith.constant 0 : index
    %c0_9 = arith.constant 0 : index
    %10 = vector.load %arg2[%c1, %c0_7, %c0_8, %c0_9] : memref<9x1x1x32xf32, #tpu.memory_space<vmem>>, vector<1x1x1x32xf32>
    %11 = vector.shape_cast %10 : vector<1x1x1x32xf32> to vector<1x1x32xf32>
    %12 = vector.shape_cast %11 : vector<1x1x32xf32> to vector<1x1x1x32xf32>
    %13 = arith.mulf %9, %12 : vector<1x1x1x32xf32>
    %14 = arith.addf %8, %13 : vector<1x1x1x32xf32>
    %15 = vector.extract_strided_slice %1 {offsets = [0, 0, 2, 0], sizes = [1, 1, 1, 32], strides = [1, 1, 1, 1]} : vector<1x3x3x32xf32> to vector<1x1x1x32xf32>
    %c2 = arith.constant 2 : index
    %c0_10 = arith.constant 0 : index
    %c0_11 = arith.constant 0 : index
    %c0_12 = arith.constant 0 : index
    %16 = vector.load %arg2[%c2, %c0_10, %c0_11, %c0_12] : memref<9x1x1x32xf32, #tpu.memory_space<vmem>>, vector<1x1x1x32xf32>
    %17 = vector.shape_cast %16 : vector<1x1x1x32xf32> to vector<1x1x32xf32>
    %18 = vector.shape_cast %17 : vector<1x1x32xf32> to vector<1x1x1x32xf32>
    %19 = arith.mulf %15, %18 : vector<1x1x1x32xf32>
    %20 = arith.addf %14, %19 : vector<1x1x1x32xf32>
    %21 = vector.extract_strided_slice %1 {offsets = [0, 1, 0, 0], sizes = [1, 1, 1, 32], strides = [1, 1, 1, 1]} : vector<1x3x3x32xf32> to vector<1x1x1x32xf32>
    %c3 = arith.constant 3 : index
    %c0_13 = arith.constant 0 : index
    %c0_14 = arith.constant 0 : index
    %c0_15 = arith.constant 0 : index
    %22 = vector.load %arg2[%c3, %c0_13, %c0_14, %c0_15] : memref<9x1x1x32xf32, #tpu.memory_space<vmem>>, vector<1x1x1x32xf32>
    %23 = vector.shape_cast %22 : vector<1x1x1x32xf32> to vector<1x1x32xf32>
    %24 = vector.shape_cast %23 : vector<1x1x32xf32> to vector<1x1x1x32xf32>
    %25 = arith.mulf %21, %24 : vector<1x1x1x32xf32>
    %26 = arith.addf %20, %25 : vector<1x1x1x32xf32>
    %27 = vector.extract_strided_slice %1 {offsets = [0, 1, 1, 0], sizes = [1, 1, 1, 32], strides = [1, 1, 1, 1]} : vector<1x3x3x32xf32> to vector<1x1x1x32xf32>
    %c4 = arith.constant 4 : index
    %c0_16 = arith.constant 0 : index
    %c0_17 = arith.constant 0 : index
    %c0_18 = arith.constant 0 : index
    %28 = vector.load %arg2[%c4, %c0_16, %c0_17, %c0_18] : memref<9x1x1x32xf32, #tpu.memory_space<vmem>>, vector<1x1x1x32xf32>
    %29 = vector.shape_cast %28 : vector<1x1x1x32xf32> to vector<1x1x32xf32>
    %30 = vector.shape_cast %29 : vector<1x1x32xf32> to vector<1x1x1x32xf32>
    %31 = arith.mulf %27, %30 : vector<1x1x1x32xf32>
    %32 = arith.addf %26, %31 : vector<1x1x1x32xf32>
    %33 = vector.extract_strided_slice %1 {offsets = [0, 1, 2, 0], sizes = [1, 1, 1, 32], strides = [1, 1, 1, 1]} : vector<1x3x3x32xf32> to vector<1x1x1x32xf32>
    %c5 = arith.constant 5 : index
    %c0_19 = arith.constant 0 : index
    %c0_20 = arith.constant 0 : index
    %c0_21 = arith.constant 0 : index
    %34 = vector.load %arg2[%c5, %c0_19, %c0_20, %c0_21] : memref<9x1x1x32xf32, #tpu.memory_space<vmem>>, vector<1x1x1x32xf32>
    %35 = vector.shape_cast %34 : vector<1x1x1x32xf32> to vector<1x1x32xf32>
    %36 = vector.shape_cast %35 : vector<1x1x32xf32> to vector<1x1x1x32xf32>
    %37 = arith.mulf %33, %36 : vector<1x1x1x32xf32>
    %38 = arith.addf %32, %37 : vector<1x1x1x32xf32>
    %39 = vector.extract_strided_slice %1 {offsets = [0, 2, 0, 0], sizes = [1, 1, 1, 32], strides = [1, 1, 1, 1]} : vector<1x3x3x32xf32> to vector<1x1x1x32xf32>
    %c6 = arith.constant 6 : index
    %c0_22 = arith.constant 0 : index
    %c0_23 = arith.constant 0 : index
    %c0_24 = arith.constant 0 : index
    %40 = vector.load %arg2[%c6, %c0_22, %c0_23, %c0_24] : memref<9x1x1x32xf32, #tpu.memory_space<vmem>>, vector<1x1x1x32xf32>
    %41 = vector.shape_cast %40 : vector<1x1x1x32xf32> to vector<1x1x32xf32>
    %42 = vector.shape_cast %41 : vector<1x1x32xf32> to vector<1x1x1x32xf32>
    %43 = arith.mulf %39, %42 : vector<1x1x1x32xf32>
    %44 = arith.addf %38, %43 : vector<1x1x1x32xf32>
    %45 = vector.extract_strided_slice %1 {offsets = [0, 2, 1, 0], sizes = [1, 1, 1, 32], strides = [1, 1, 1, 1]} : vector<1x3x3x32xf32> to vector<1x1x1x32xf32>
    %c7 = arith.constant 7 : index
    %c0_25 = arith.constant 0 : index
    %c0_26 = arith.constant 0 : index
    %c0_27 = arith.constant 0 : index
    %46 = vector.load %arg2[%c7, %c0_25, %c0_26, %c0_27] : memref<9x1x1x32xf32, #tpu.memory_space<vmem>>, vector<1x1x1x32xf32>
    %47 = vector.shape_cast %46 : vector<1x1x1x32xf32> to vector<1x1x32xf32>
    %48 = vector.shape_cast %47 : vector<1x1x32xf32> to vector<1x1x1x32xf32>
    %49 = arith.mulf %45, %48 : vector<1x1x1x32xf32>
    %50 = arith.addf %44, %49 : vector<1x1x1x32xf32>
    %51 = vector.extract_strided_slice %1 {offsets = [0, 2, 2, 0], sizes = [1, 1, 1, 32], strides = [1, 1, 1, 1]} : vector<1x3x3x32xf32> to vector<1x1x1x32xf32>
    %c8 = arith.constant 8 : index
    %c0_28 = arith.constant 0 : index
    %c0_29 = arith.constant 0 : index
    %c0_30 = arith.constant 0 : index
    %52 = vector.load %arg2[%c8, %c0_28, %c0_29, %c0_30] : memref<9x1x1x32xf32, #tpu.memory_space<vmem>>, vector<1x1x1x32xf32>
    %53 = vector.shape_cast %52 : vector<1x1x1x32xf32> to vector<1x1x32xf32>
    %54 = vector.shape_cast %53 : vector<1x1x32xf32> to vector<1x1x1x32xf32>
    %55 = arith.mulf %51, %54 : vector<1x1x1x32xf32>
    %56 = arith.addf %50, %55 : vector<1x1x1x32xf32>
    %c0_31 = arith.constant 0 : index
    %c0_32 = arith.constant 0 : index
    %c0_33 = arith.constant 0 : index
    %c0_34 = arith.constant 0 : index
    %57 = vector.load %arg3[%c0_31, %c0_32, %c0_33, %c0_34] : memref<1x1x1x32xf32, #tpu.memory_space<vmem>>, vector<1x1x1x32xf32>
    %58 = arith.mulf %56, %57 : vector<1x1x1x32xf32>
    %c0_35 = arith.constant 0 : index
    %c0_36 = arith.constant 0 : index
    %c0_37 = arith.constant 0 : index
    %c0_38 = arith.constant 0 : index
    %59 = vector.load %arg4[%c0_35, %c0_36, %c0_37, %c0_38] : memref<1x1x1x32xf32, #tpu.memory_space<vmem>>, vector<1x1x1x32xf32>
    %60 = arith.addf %58, %59 : vector<1x1x1x32xf32>
    %61 = arith.truncf %60 : vector<1x1x1x32xf32> to vector<1x1x1x32xbf16>
    %c0_39 = arith.constant 0 : index
    %c0_40 = arith.constant 0 : index
    %c0_41 = arith.constant 0 : index
    %c0_42 = arith.constant 0 : index
    %62 = vector.load %arg5[%c0_39, %c0_40, %c0_41, %c0_42] : memref<1x1x1x32xbf16, #tpu.memory_space<vmem>>, vector<1x1x1x32xbf16>
    tpu.vector_store %arg5[%c0_39, %c0_40, %c0_41, %c0_42], %61 {strides = array<i32>} : memref<1x1x1x32xbf16, #tpu.memory_space<vmem>>, vector<1x1x1x32xbf16>,
    return
  }
  func.func @transform_0(%arg0: i32) -> (i32, i32, i32, i32) {
    %c0_i32 = arith.constant 0 : i32
    %c0_i32_0 = arith.constant 0 : i32
    %c0_i32_1 = arith.constant 0 : i32
    %c0_i32_2 = arith.constant 0 : i32
    return %arg0, %c0_i32, %c0_i32_0, %c0_i32_1 : i32, i32, i32, i32
  }
  func.func @transform_1(%arg0: i32) -> (i32, i32, i32, i32) {
    %c0_i32 = arith.constant 0 : i32
    %c0_i32_0 = arith.constant 0 : i32
    %c0_i32_1 = arith.constant 0 : i32
    %c0_i32_2 = arith.constant 0 : i32
    %c0_i32_3 = arith.constant 0 : i32
    return %c0_i32, %c0_i32_0, %c0_i32_1, %c0_i32_2 : i32, i32, i32, i32
  }
  func.func @transform_2(%arg0: i32) -> (i32, i32, i32, i32) {
    %c0_i32 = arith.constant 0 : i32
    %c0_i32_0 = arith.constant 0 : i32
    %c0_i32_1 = arith.constant 0 : i32
    %c0_i32_2 = arith.constant 0 : i32
    %c0_i32_3 = arith.constant 0 : i32
    return %c0_i32, %c0_i32_0, %c0_i32_1, %c0_i32_2 : i32, i32, i32, i32
  }
  func.func @transform_3(%arg0: i32) -> (i32, i32, i32, i32) {
    %c0_i32 = arith.constant 0 : i32
    %c0_i32_0 = arith.constant 0 : i32
    %c0_i32_1 = arith.constant 0 : i32
    %c0_i32_2 = arith.constant 0 : i32
    %c0_i32_3 = arith.constant 0 : i32
    return %c0_i32, %c0_i32_0, %c0_i32_1, %c0_i32_2 : i32, i32, i32, i32
  }
  func.func @transform_4(%arg0: i32) -> (i32, i32, i32, i32) {
    %c0_i32 = arith.constant 0 : i32
    %c0_i32_0 = arith.constant 0 : i32
    %c0_i32_1 = arith.constant 0 : i32
    %c0_i32_2 = arith.constant 0 : i32
    return %arg0, %c0_i32, %c0_i32_0, %c0_i32_1 : i32, i32, i32, i32
  }
}

module attributes {stable_mosaic.version = 11 : i64} {
  func.func @_matmul_affine_kernel(%arg0: i32, %arg1: memref<2x64xbf16, #tpu.memory_space<vmem>>, %arg2: memref<64x128xbf16, #tpu.memory_space<vmem>>, %arg3: memref<1x128xf32, #tpu.memory_space<vmem>>, %arg4: memref<1x128xf32, #tpu.memory_space<vmem>>, %arg5: memref<2x128xbf16, #tpu.memory_space<vmem>>) attributes {dimension_semantics = [#tpu.dimension_semantics<parallel>], iteration_bounds = array<i64: 1>, scalar_prefetch = 0 : i64, scratch_operands = 0 : i64, tpu.core_type = #tpu.core_type<tc>, window_params = [{transform_indices = @transform_0, window_bounds = array<i64: 2, 64>}, {pipeline_mode = #tpu.pipeline_mode<synchronous>, transform_indices = @transform_1, window_bounds = array<i64: 64, 128>}, {pipeline_mode = #tpu.pipeline_mode<synchronous>, transform_indices = @transform_2, window_bounds = array<i64: 1, 128>}, {pipeline_mode = #tpu.pipeline_mode<synchronous>, transform_indices = @transform_3, window_bounds = array<i64: 1, 128>}, {transform_indices = @transform_4, window_bounds = array<i64: 2, 128>}]} {
    %c0 = arith.constant 0 : index
    %c0_0 = arith.constant 0 : index
    %0 = vector.load %arg1[%c0, %c0_0] : memref<2x64xbf16, #tpu.memory_space<vmem>>, vector<2x64xbf16>
    %c0_1 = arith.constant 0 : index
    %c0_2 = arith.constant 0 : index
    %1 = vector.load %arg2[%c0_1, %c0_2] : memref<64x128xbf16, #tpu.memory_space<vmem>>, vector<64x128xbf16>
    %cst = arith.constant dense<0.000000e+00> : vector<2x128xf32>
    %2 = tpu.matmul %0, %1, %cst {dimension_numbers = #tpu.dot_dimension_numbers<[1], [0], [0], [1], [0, 0, 1, 1], [], []>} : vector<2x64xbf16>, vector<64x128xbf16>, vector<2x128xf32> -> vector<2x128xf32>
    %c0_3 = arith.constant 0 : index
    %c0_4 = arith.constant 0 : index
    %3 = vector.load %arg3[%c0_3, %c0_4] : memref<1x128xf32, #tpu.memory_space<vmem>>, vector<1x128xf32>
    %4 = vector.broadcast %3 : vector<1x128xf32> to vector<2x128xf32>
    %5 = arith.mulf %2, %4 : vector<2x128xf32>
    %c0_5 = arith.constant 0 : index
    %c0_6 = arith.constant 0 : index
    %6 = vector.load %arg4[%c0_5, %c0_6] : memref<1x128xf32, #tpu.memory_space<vmem>>, vector<1x128xf32>
    %7 = vector.broadcast %6 : vector<1x128xf32> to vector<2x128xf32>
    %8 = arith.addf %5, %7 : vector<2x128xf32>
    %cst_7 = arith.constant 0.000000e+00 : f32
    %9 = vector.broadcast %cst_7 : f32 to vector<2x128xf32>
    %10 = arith.maximumf %8, %9 : vector<2x128xf32>
    %11 = arith.truncf %10 : vector<2x128xf32> to vector<2x128xbf16>
    %c0_8 = arith.constant 0 : index
    %c0_9 = arith.constant 0 : index
    %12 = vector.load %arg5[%c0_8, %c0_9] : memref<2x128xbf16, #tpu.memory_space<vmem>>, vector<2x128xbf16>
    tpu.vector_store %arg5[%c0_8, %c0_9], %11 {strides = array<i32>} : memref<2x128xbf16, #tpu.memory_space<vmem>>, vector<2x128xbf16>,
    return
  }
  func.func @transform_0(%arg0: i32) -> (i32, i32) {
    %c0_i32 = arith.constant 0 : i32
    %c0_i32_0 = arith.constant 0 : i32
    return %arg0, %c0_i32 : i32, i32
  }
  func.func @transform_1(%arg0: i32) -> (i32, i32) {
    %c0_i32 = arith.constant 0 : i32
    %c0_i32_0 = arith.constant 0 : i32
    %c0_i32_1 = arith.constant 0 : i32
    return %c0_i32, %c0_i32_0 : i32, i32
  }
  func.func @transform_2(%arg0: i32) -> (i32, i32) {
    %c0_i32 = arith.constant 0 : i32
    %c0_i32_0 = arith.constant 0 : i32
    %c0_i32_1 = arith.constant 0 : i32
    return %c0_i32, %c0_i32_0 : i32, i32
  }
  func.func @transform_3(%arg0: i32) -> (i32, i32) {
    %c0_i32 = arith.constant 0 : i32
    %c0_i32_0 = arith.constant 0 : i32
    %c0_i32_1 = arith.constant 0 : i32
    return %c0_i32, %c0_i32_0 : i32, i32
  }
  func.func @transform_4(%arg0: i32) -> (i32, i32) {
    %c0_i32 = arith.constant 0 : i32
    %c0_i32_0 = arith.constant 0 : i32
    return %arg0, %c0_i32 : i32, i32
  }
}

module attributes {stable_mosaic.version = 11 : i64} {
  func.func @_head_kernel(%arg0: memref<2x1x128xbf16, #tpu.memory_space<vmem>>, %arg1: memref<128x10xbf16, #tpu.memory_space<vmem>>, %arg2: memref<1x10xf32, #tpu.memory_space<vmem>>, %arg3: memref<2x10xf32, #tpu.memory_space<vmem>>) attributes {dimension_semantics = [], scalar_prefetch = 0 : i64, scratch_operands = 0 : i64, tpu.core_type = #tpu.core_type<tc>} {
    %c0 = arith.constant 0 : index
    %c0_0 = arith.constant 0 : index
    %c0_1 = arith.constant 0 : index
    %0 = vector.load %arg0[%c0, %c0_0, %c0_1] : memref<2x1x128xbf16, #tpu.memory_space<vmem>>, vector<2x1x128xbf16>
    %1 = arith.extf %0 : vector<2x1x128xbf16> to vector<2x1x128xf32>
    %cst = arith.constant dense<0.000000e+00> : vector<2x128xf32>
    %2 = vector.multi_reduction <add>, %1, %cst [1] : vector<2x1x128xf32> to vector<2x128xf32>
    %cst_2 = arith.constant 1.000000e+00 : f32
    %3 = vector.broadcast %cst_2 : f32 to vector<2x128xf32>
    %4 = arith.divf %2, %3 : vector<2x128xf32>
    %5 = arith.truncf %4 : vector<2x128xf32> to vector<2x128xbf16>
    %c0_3 = arith.constant 0 : index
    %c0_4 = arith.constant 0 : index
    %6 = vector.load %arg1[%c0_3, %c0_4] : memref<128x10xbf16, #tpu.memory_space<vmem>>, vector<128x10xbf16>
    %cst_5 = arith.constant dense<0.000000e+00> : vector<2x10xf32>
    %7 = tpu.matmul %5, %6, %cst_5 {dimension_numbers = #tpu.dot_dimension_numbers<[1], [0], [0], [1], [0, 0, 1, 1], [], []>} : vector<2x128xbf16>, vector<128x10xbf16>, vector<2x10xf32> -> vector<2x10xf32>
    %c0_6 = arith.constant 0 : index
    %c0_7 = arith.constant 0 : index
    %8 = vector.load %arg2[%c0_6, %c0_7] : memref<1x10xf32, #tpu.memory_space<vmem>>, vector<1x10xf32>
    %9 = vector.broadcast %8 : vector<1x10xf32> to vector<2x10xf32>
    %10 = arith.addf %7, %9 : vector<2x10xf32>
    %c0_8 = arith.constant 0 : index
    %c0_9 = arith.constant 0 : index
    %11 = vector.load %arg3[%c0_8, %c0_9] : memref<2x10xf32, #tpu.memory_space<vmem>>, vector<2x10xf32>
    tpu.vector_store %arg3[%c0_8, %c0_9], %10 {strides = array<i32>} : memref<2x10xf32, #tpu.memory_space<vmem>>, vector<2x10xf32>,
    return
  }
}

</mosaic_0001>

<llo_original>
// kernel: shufflenet_v2_forward.28
$region0: #{shufflenet_v2_forward.28}
  #allocation0 [shape = 'u32[]', space=smem, size = 0x4, offset = 0x4, fixed_abs, tag = 'smem constant byte address 0x4 - core index']
  #allocation1 [shape = 'u32[144,128]{1,0:T(1,128)}', space=vmem, size = 0x12000, scoped, tag = 'internal scratch']
  %s0 = inlined_call_operand.vmem [shape: bf16[512,27], index: 0, kind: input, shape index: {}]
  %s1 = inlined_call_operand.vmem [shape: bf16[27,8], index: 1, kind: input, shape index: {}]
  %s2 = inlined_call_operand.vmem [shape: f32[1,8], index: 2, kind: input, shape index: {}]
  %s3 = inlined_call_operand.vmem [shape: f32[1,8], index: 3, kind: input, shape index: {}]
  %s4 = inlined_call_operand.vmem [shape: bf16[512,8], index: 4, kind: output, shape index: {}]
  %s5 = sld [smem:[#allocation0]]
  $region49: #{shufflenet_v2_forward.28} parent=0
    _
  %s7 = ssub.s32 1, %s5
  %s8 = scalar_select 0, %s7, %s5
  loop: start=0, step=1, limit=4
  $region2: #{shufflenet_v2_forward.28} parent=0 // loop_pre_header
    _
  $region3: #{shufflenet_v2_forward.28} parent=0 // loop_header
    %s10 = sphi 0, %s14
    %p11 = scmp.ge.s32.totalorder %s10, 4
    %s20 = sphi 0, %s22
    %s23 = sphi 0, %s20
    %s24 = sphi 0, %s23
    %s40 = sphi 0, %s24
    %s44 = sphi 0, %s44
    %s46 = sphi 0, %s44
    %s47 = sphi 0, %s46
    %s61 = sphi 0, %s47
    %s65 = sphi 0, %s65
    %s67 = sphi 0, %s65
    %s68 = sphi 0, %s67
    %s82 = sphi 0, %s68
    %s86 = sphi 0, %s86
    %s88 = sphi 0, %s86
    %s89 = sphi 0, %s88
    %s103 = sphi 0, %s89
    %s109 = sphi 0, %s111
    %s112 = sphi 0, %s109
    %s113 = sphi 0, %s112
    %s129 = sphi 0, %s113
  $region4: #{shufflenet_v2_forward.28} parent=0 // loop_header_branch
    %13 = sbr.rel (%p11) target = $region8
  $region5: #{shufflenet_v2_forward.28} parent=0 // loop_body
    %s15 = ssub.s32 %s10, 1
    %s16 = ssub.s32 %s10, 2
    %s17 = sadd.s32 %s10, 1
    %s18 = ssub.s32 %s10, %s17
    %p19 = scmp.eq.s32.totalorder %s18, 0
    %s21 = sadd.s32 %s20, 1
    %s22 = scalar_select %p19, %s20, %s21
    %p25 = pneg %p19
    %p26 = scmp.eq.s32.totalorder %s10, 1
    %p27 = por %p25, %p26
    %p28 = scmp.ne.s32.totalorder %s20, %s23
    %p29 = scmp.eq.s32.totalorder %s10, 0
    %p30 = por %p28, %p29
    %p31 = scmp.ne.s32.totalorder %s20, %s23
    %p32 = scmp.eq.s32.totalorder %s15, 1
    %p33 = por %p31, %p32
    %p34 = scmp.ne.s32.totalorder %s23, %s24
    %p35 = scmp.eq.s32.totalorder %s15, 0
    %p36 = por %p34, %p35
    %p37 = scmp.ne.s32.totalorder %s23, %s24
    %p38 = scmp.eq.s32.totalorder %s16, 1
    %p39 = por %p37, %p38
    %p41 = scmp.ne.s32.totalorder %s24, %s40
    %p42 = scmp.eq.s32.totalorder %s16, 0
    %p43 = por %p41, %p42
    %s45 = sadd.s32 %s44, 1
    %p48 = scmp.eq.s32.totalorder %s10, 1
    %p49 = scmp.ne.s32.totalorder %s44, %s46
    %p50 = scmp.eq.s32.totalorder %s10, 0
    %p51 = por %p49, %p50
    %p52 = scmp.ne.s32.totalorder %s44, %s46
    %p53 = scmp.eq.s32.totalorder %s15, 1
    %p54 = por %p52, %p53
    %p55 = scmp.ne.s32.totalorder %s46, %s47
    %p56 = scmp.eq.s32.totalorder %s15, 0
    %p57 = por %p55, %p56
    %p58 = scmp.ne.s32.totalorder %s46, %s47
    %p59 = scmp.eq.s32.totalorder %s16, 1
    %p60 = por %p58, %p59
    %p62 = scmp.ne.s32.totalorder %s47, %s61
    %p63 = scmp.eq.s32.totalorder %s16, 0
    %p64 = por %p62, %p63
    %s66 = sadd.s32 %s65, 1
    %p69 = scmp.eq.s32.totalorder %s10, 1
    %p70 = scmp.ne.s32.totalorder %s65, %s67
    %p71 = scmp.eq.s32.totalorder %s10, 0
    %p72 = por %p70, %p71
    %p73 = scmp.ne.s32.totalorder %s65, %s67
    %p74 = scmp.eq.s32.totalorder %s15, 1
    %p75 = por %p73, %p74
    %p76 = scmp.ne.s32.totalorder %s67, %s68
    %p77 = scmp.eq.s32.totalorder %s15, 0
    %p78 = por %p76, %p77
    %p79 = scmp.ne.s32.totalorder %s67, %s68
    %p80 = scmp.eq.s32.totalorder %s16, 1
    %p81 = por %p79, %p80
    %p83 = scmp.ne.s32.totalorder %s68, %s82
    %p84 = scmp.eq.s32.totalorder %s16, 0
    %p85 = por %p83, %p84
    %s87 = sadd.s32 %s86, 1
    %p90 = scmp.eq.s32.totalorder %s10, 1
    %p91 = scmp.ne.s32.totalorder %s86, %s88
    %p92 = scmp.eq.s32.totalorder %s10, 0
    %p93 = por %p91, %p92
    %p94 = scmp.ne.s32.totalorder %s86, %s88
    %p95 = scmp.eq.s32.totalorder %s15, 1
    %p96 = por %p94, %p95
    %p97 = scmp.ne.s32.totalorder %s88, %s89
    %p98 = scmp.eq.s32.totalorder %s15, 0
    %p99 = por %p97, %p98
    %p100 = scmp.ne.s32.totalorder %s88, %s89
    %p101 = scmp.eq.s32.totalorder %s16, 1
    %p102 = por %p100, %p101
    %p104 = scmp.ne.s32.totalorder %s89, %s103
    %p105 = scmp.eq.s32.totalorder %s16, 0
    %p106 = por %p104, %p105
    %s107 = ssub.s32 %s10, %s17
    %p108 = scmp.eq.s32.totalorder %s107, 0
    %s110 = sadd.s32 %s109, 1
    %s111 = scalar_select %p108, %s109, %s110
    %p114 = pneg %p108
    %p115 = scmp.eq.s32.totalorder %s10, 1
    %p116 = por %p114, %p115
    %p117 = scmp.ne.s32.totalorder %s109, %s112
    %p118 = scmp.eq.s32.totalorder %s10, 0
    %p119 = por %p117, %p118
    %p120 = scmp.ne.s32.totalorder %s109, %s112
    %p121 = scmp.eq.s32.totalorder %s15, 1
    %p122 = por %p120, %p121
    %p123 = scmp.ne.s32.totalorder %s112, %s113
    %p124 = scmp.eq.s32.totalorder %s15, 0
    %p125 = por %p123, %p124
    %p126 = scmp.ne.s32.totalorder %s112, %s113
    %p127 = scmp.eq.s32.totalorder %s16, 1
    %p128 = por %p126, %p127
    %p130 = scmp.ne.s32.totalorder %s113, %s129
    %p131 = scmp.eq.s32.totalorder %s16, 0
    %p132 = por %p130, %p131
    %p133 = scmp.le.s32.totalorder 1, %s10
    %p134 = scmp.lt.s32.totalorder %s10, 3
    %p135 = pnand %p133, %p134
    %p136 = pneg %p135
    // Predicated region
    $region9: #{shufflenet_v2_forward.28} parent=5 // pred_check
      _
    $region10: #{shufflenet_v2_forward.28} parent=5 // pred_check_branch
      %138 = sbr.rel (%p135) target = $region12
    $region11: #{shufflenet_v2_forward.28} parent=5 // pred_region
      %s139 = ssub.s32 %s10, 1
      // Predicated region
      $region13: #{shufflenet_v2_forward.28} parent=11 // pred_check
        %p140 = pneg %p57
      $region14: #{shufflenet_v2_forward.28} parent=11 // pred_check_branch
        %142 = sbr.rel (%p140) target = $region16
      $region15: #{shufflenet_v2_forward.28} parent=11 // pred_region
        _
      $region16: #{shufflenet_v2_forward.28} parent=11 // pred_fallthru
        _
      // Predicated region
      $region17: #{shufflenet_v2_forward.28} parent=11 // pred_check
        %p143 = pneg %p78
      $region18: #{shufflenet_v2_forward.28} parent=11 // pred_check_branch
        %145 = sbr.rel (%p143) target = $region20
      $region19: #{shufflenet_v2_forward.28} parent=11 // pred_region
        _
      $region20: #{shufflenet_v2_forward.28} parent=11 // pred_fallthru
        _
      // Predicated region
      $region21: #{shufflenet_v2_forward.28} parent=11 // pred_check
        %p146 = pneg %p99
      $region22: #{shufflenet_v2_forward.28} parent=11 // pred_check_branch
        %148 = sbr.rel (%p146) target = $region24
      $region23: #{shufflenet_v2_forward.28} parent=11 // pred_region
        _
      $region24: #{shufflenet_v2_forward.28} parent=11 // pred_fallthru
        _
    $region12: #{shufflenet_v2_forward.28} parent=5 // pred_fallthru
      _
    %p149 = scmp.lt.s32.totalorder %s10, 2
    // Predicated region
    $region25: #{shufflenet_v2_forward.28} parent=5 // pred_check
      %p150 = pneg %p149
    $region26: #{shufflenet_v2_forward.28} parent=5 // pred_check_branch
      %152 = sbr.rel (%p150) target = $region28
    $region27: #{shufflenet_v2_forward.28} parent=5 // pred_region
      // Predicated region
      $region29: #{shufflenet_v2_forward.28} parent=27 // pred_check
        %p153 = pneg %p30
      $region30: #{shufflenet_v2_forward.28} parent=27 // pred_check_branch
        %155 = sbr.rel (%p153) target = $region32
      $region31: #{shufflenet_v2_forward.28} parent=27 // pred_region
        %s156 = smul.u32 32, %s10
        %p157 = scmp.lt.s32.totalorder %s156, 63
        %s158 = scalar_select %p157, %s156, 63
        %s159 = smul.addr %s158, 4
        %s160 = scalar_lea.vmem %s0, %s159
        %s161 = smul.u32 32, %s10
      $region32: #{shufflenet_v2_forward.28} parent=27 // pred_fallthru
        _
    $region28: #{shufflenet_v2_forward.28} parent=5 // pred_fallthru
      _
    %p162 = scmp.le.s32.totalorder 1, %s10
    %p163 = scmp.lt.s32.totalorder %s10, 3
    %p164 = pnand %p162, %p163
    %p165 = pneg %p164
    // Predicated region
    $region33: #{shufflenet_v2_forward.28} parent=5 // pred_check
      _
    $region34: #{shufflenet_v2_forward.28} parent=5 // pred_check_branch
      %167 = sbr.rel (%p164) target = $region36
    $region35: #{shufflenet_v2_forward.28} parent=5 // pred_region
      %s168 = ssub.s32 %s10, 1
      %s169 = smul.u32 32, %s15
      %p170 = scmp.lt.s32.totalorder %s169, 63
      %s171 = scalar_select %p170, %s169, 63
      %s172 = smul.addr %s171, 4
      %s173 = scalar_lea.vmem %s0, %s172
      %p174 = pneg %p36
      %p175 = pneg %p33
      %p176 = pneg %p57
      %p177 = pneg %p54
      %p178 = pneg %p78
      %p179 = pneg %p75
      %p180 = pneg %p99
      %p181 = pneg %p96
      %p182 = pneg %p125
      %p183 = pneg %p122
      %s184 = smul.u32 32, %s15
      %p185 = scmp.lt.s32.totalorder %s184, 63
      %s186 = scalar_select %p185, %s184, 63
      %s187 = smul.addr %s186, 4
      %s188 = scalar_lea.vmem %s4, %s187
      %s189 = smul.u32 32, %s15
      %p190 = scmp.lt.s32.totalorder %s189, 63
      %s191 = scalar_select %p190, %s189, 63
      %s192 = smul.addr %s191, 4
      %s193 = scalar_lea.vmem %s0, %s192
      %s194 = smul.u32 32, %s15
      %s195 = smul.u32 32, %s15
      %p196 = scmp.lt.s32.totalorder %s195, 63
      %s197 = scalar_select %p196, %s195, 63
      %s198 = smul.addr %s197, 4
      %s199 = scalar_lea.vmem %s4, %s198
      %s200 = smul.u32 32, %s15
      %v202 = vld [vmem:[%s193] sm:$0xf]
      %v203 = vld [vmem:[%s193 + $0x4] sm:$0xf]
      %v204 = vld [vmem:[%s193 + $0x8] sm:$0xf]
      %v205 = vld [vmem:[%s193 + $0xc] sm:$0xf]
      %v206 = vld [vmem:[%s193 + $0x10] sm:$0xf]
      %v207 = vld [vmem:[%s193 + $0x14] sm:$0xf]
      %v208 = vld [vmem:[%s193 + $0x18] sm:$0xf]
      %v209 = vld [vmem:[%s193 + $0x1c] sm:$0xf]
      %v210 = vld [vmem:[%s193 + $0x20] sm:$0xf]
      %v211 = vld [vmem:[%s193 + $0x24] sm:$0xf]
      %v212 = vld [vmem:[%s193 + $0x28] sm:$0xf]
      %v213 = vld [vmem:[%s193 + $0x2c] sm:$0xf]
      %v214 = vld [vmem:[%s193 + $0x30] sm:$0xf]
      %v215 = vld [vmem:[%s193 + $0x34] sm:$0xf]
      %v216 = vld [vmem:[%s193 + $0x38] sm:$0xf]
      %v217 = vld [vmem:[%s193 + $0x3c] sm:$0xf]
      %v218 = vld [vmem:[%s193 + $0x40] sm:$0xf]
      %v219 = vld [vmem:[%s193 + $0x44] sm:$0xf]
      %v220 = vld [vmem:[%s193 + $0x48] sm:$0xf]
      %v221 = vld [vmem:[%s193 + $0x4c] sm:$0xf]
      %v222 = vld [vmem:[%s193 + $0x50] sm:$0xf]
      %v223 = vld [vmem:[%s193 + $0x54] sm:$0xf]
      %v224 = vld [vmem:[%s193 + $0x58] sm:$0xf]
      %v225 = vld [vmem:[%s193 + $0x5c] sm:$0xf]
      %v226 = vld [vmem:[%s193 + $0x60] sm:$0xf]
      %v227 = vld [vmem:[%s193 + $0x64] sm:$0xf]
      %v228 = vld [vmem:[%s193 + $0x68] sm:$0xf]
      %v229 = vld [vmem:[%s193 + $0x6c] sm:$0xf]
      %v230 = vld [vmem:[%s193 + $0x70] sm:$0xf]
      %v231 = vld [vmem:[%s193 + $0x74] sm:$0xf]
      %v232 = vld [vmem:[%s193 + $0x78] sm:$0xf]
      %v233 = vld [vmem:[%s193 + $0x7c] sm:$0xf]
      %v234 = vld [vmem:[%s1] sm:$0xf]
      %v235 = vld [vmem:[%s1 + $0x4] sm:$0xf]
      %v236 = vld [vmem:[%s1 + $0x8] sm:$0xf]
      %v237 = vld [vmem:[%s1 + $0xc] sm:$0x3]
      %v270 = vunpack.c.l.b16 %v202
      %v271 = vunpack.c.l.b16 %v203
      %v272 = vunpack.c.l.b16 %v204
      %v273 = vunpack.c.l.b16 %v205
      %v274 = vunpack.c.l.b16 %v206
      %v275 = vunpack.c.l.b16 %v207
      %v276 = vunpack.c.l.b16 %v208
      %v277 = vunpack.c.l.b16 %v209
      %v278 = vunpack.c.l.b16 %v210
      %v279 = vunpack.c.l.b16 %v211
      %v280 = vunpack.c.l.b16 %v212
      %v281 = vunpack.c.l.b16 %v213
      %v282 = vunpack.c.l.b16 %v214
      %v283 = vunpack.c.l.b16 %v215
      %v284 = vunpack.c.l.b16 %v216
      %v285 = vunpack.c.l.b16 %v217
      %v286 = vunpack.c.l.b16 %v218
      %v287 = vunpack.c.l.b16 %v219
      %v288 = vunpack.c.l.b16 %v220
      %v289 = vunpack.c.l.b16 %v221
      %v290 = vunpack.c.l.b16 %v222
      %v291 = vunpack.c.l.b16 %v223
      %v292 = vunpack.c.l.b16 %v224
      %v293 = vunpack.c.l.b16 %v225
      %v294 = vunpack.c.l.b16 %v226
      %v295 = vunpack.c.l.b16 %v227
      %v296 = vunpack.c.l.b16 %v228
      %v297 = vunpack.c.l.b16 %v229
      %v298 = vunpack.c.l.b16 %v230
      %v299 = vunpack.c.l.b16 %v231
      %v300 = vunpack.c.l.b16 %v232
      %v301 = vunpack.c.l.b16 %v233
      %v302 = vpack.c.b16 %v271, %v270
      %v303 = vpack.c.b16 %v273, %v272
      %v304 = vpack.c.b16 %v275, %v274
      %v305 = vpack.c.b16 %v277, %v276
      %v306 = vpack.c.b16 %v279, %v278
      %v307 = vpack.c.b16 %v281, %v280
      %v308 = vpack.c.b16 %v283, %v282
      %v309 = vpack.c.b16 %v285, %v284
      %v310 = vpack.c.b16 %v287, %v286
      %v311 = vpack.c.b16 %v289, %v288
      %v312 = vpack.c.b16 %v291, %v290
      %v313 = vpack.c.b16 %v293, %v292
      %v314 = vpack.c.b16 %v295, %v294
      %v315 = vpack.c.b16 %v297, %v296
      %v316 = vpack.c.b16 %v299, %v298
      %v317 = vpack.c.b16 %v301, %v300
      %v322 = vunpack.c.l.b16 %v234
      %v323 = vunpack.c.l.b16 %v235
      %v324 = vunpack.c.l.b16 %v236
      %v325 = vunpack.c.l.b16 %v237
      %v326 = vpack.c.b16 %v323, %v322
      %v327 = vpack.c.b16 %v325, %v324
      %vm329 = vcmask 220160
      %v331 = vsel %vm329, %v302, 0
      %v334 = vsel %vm329, %v303, 0
      %v337 = vsel %vm329, %v304, 0
      %v340 = vsel %vm329, %v305, 0
      %v343 = vsel %vm329, %v306, 0
      %v346 = vsel %vm329, %v307, 0
      %v349 = vsel %vm329, %v308, 0
      %v352 = vsel %vm329, %v309, 0
      %v355 = vsel %vm329, %v310, 0
      %v358 = vsel %vm329, %v311, 0
      %v361 = vsel %vm329, %v312, 0
      %v364 = vsel %vm329, %v313, 0
      %v367 = vsel %vm329, %v314, 0
      %v370 = vsel %vm329, %v315, 0
      %v373 = vsel %vm329, %v316, 0
      %v376 = vsel %vm329, %v317, 0
      %vm378 = vcmask 1044480
      %vm379 = vcmask 1045504
      %v380 = vsel %vm378, 4294967295, 65535
      %v381 = vsel %vm379, %v380, 0
      %v383 = vand.u32 %v327, %v381
      %385 = vmatprep.subr.bf16.mxu0 0
      %386 = vmatpush1.bf16.msra.mxu0 %v326
      %387 = vmatprep.subr.bf16.mxu0 0
      %388 = vmatpush1.bf16.msra.mxu0 %v383
      %389 = vmatprep.subr.bf16.mxu0 0
      %390 = vmatpush1.bf16.msra.mxu0 0
      %391 = vmatprep.subr.bf16.mxu0 0
      %392 = vmatpush1.bf16.msra.mxu0 0
      %393 = vmatprep.subr.bf16.mxu0 0
      %394 = vmatpush1.bf16.msra.mxu0 0
      %395 = vmatprep.subr.bf16.mxu0 0
      %396 = vmatpush1.bf16.msra.mxu0 0
      %397 = vmatprep.subr.bf16.mxu0 0
      %398 = vmatpush1.bf16.msra.mxu0 0
      %399 = vmatprep.subr.bf16.mxu0 0
      %400 = vmatpush1.bf16.msra.mxu0 0
      %401 = vmatprep.subr.bf16.mxu0 0
      %402 = vmatpush1.bf16.msra.mxu0 0
      %403 = vmatprep.subr.bf16.mxu0 0
      %404 = vmatpush1.bf16.msra.mxu0 0
      %405 = vmatprep.subr.bf16.mxu0 0
      %406 = vmatpush1.bf16.msra.mxu0 0
      %407 = vmatprep.subr.bf16.mxu0 0
      %408 = vmatpush1.bf16.msra.mxu0 0
      %409 = vmatprep.subr.bf16.mxu0 0
      %410 = vmatpush1.bf16.msra.mxu0 0
      %411 = vmatprep.subr.bf16.mxu0 0
      %412 = vmatpush1.bf16.msra.mxu0 0
      %413 = vmatprep.subr.bf16.mxu0 0
      %414 = vmatpush1.bf16.msra.mxu0 0
      %415 = vmatprep.subr.bf16.mxu0 0
      %416 = vmatpush1.bf16.msra.mxu0 0
      %417 = vmatprep.mubr.bf16.mxu0 0
      %418 = vmatmul.mubr.bf16.gmra.mrb[0].mxu0 %v331
      %v419 = vpop.f32.mrb[0].mxu0
      %v420 = vadd.f32 0.0, %v419
      %v421 = vpop.f32.mrb[0].mxu0
      %v422 = vpop.f32.mrb[0].mxu0
      %v423 = vadd.f32 0.0, %v422
      %v424 = vpop.f32.mrb[0].mxu0
      %425 = vmatprep.mubr.bf16.mxu0 0
      %426 = vmatmul.mubr.bf16.gmra.mrb[0].mxu0 %v334
      %v427 = vpop.f32.mrb[0].mxu0
      %v428 = vadd.f32 0.0, %v427
      %v429 = vpop.f32.mrb[0].mxu0
      %v430 = vpop.f32.mrb[0].mxu0
      %v431 = vadd.f32 0.0, %v430
      %v432 = vpop.f32.mrb[0].mxu0
      %433 = vmatprep.mubr.bf16.mxu0 0
      %434 = vmatmul.mubr.bf16.gmra.mrb[0].mxu0 %v337
      %v435 = vpop.f32.mrb[0].mxu0
      %v436 = vadd.f32 0.0, %v435
      %v437 = vpop.f32.mrb[0].mxu0
      %v438 = vpop.f32.mrb[0].mxu0
      %v439 = vadd.f32 0.0, %v438
      %v440 = vpop.f32.mrb[0].mxu0
      %441 = vmatprep.mubr.bf16.mxu0 0
      %442 = vmatmul.mubr.bf16.gmra.mrb[0].mxu0 %v340
      %v443 = vpop.f32.mrb[0].mxu0
      %v444 = vadd.f32 0.0, %v443
      %v445 = vpop.f32.mrb[0].mxu0
      %v446 = vpop.f32.mrb[0].mxu0
      %v447 = vadd.f32 0.0, %v446
      %v448 = vpop.f32.mrb[0].mxu0
      %449 = vmatprep.mubr.bf16.mxu0 0
      %450 = vmatmul.mubr.bf16.gmra.mrb[0].mxu0 %v343
      %v451 = vpop.f32.mrb[0].mxu0
      %v452 = vadd.f32 0.0, %v451
      %v453 = vpop.f32.mrb[0].mxu0
      %v454 = vpop.f32.mrb[0].mxu0
      %v455 = vadd.f32 0.0, %v454
      %v456 = vpop.f32.mrb[0].mxu0
      %457 = vmatprep.mubr.bf16.mxu0 0
      %458 = vmatmul.mubr.bf16.gmra.mrb[0].mxu0 %v346
      %v459 = vpop.f32.mrb[0].mxu0
      %v460 = vadd.f32 0.0, %v459
      %v461 = vpop.f32.mrb[0].mxu0
      %v462 = vpop.f32.mrb[0].mxu0
      %v463 = vadd.f32 0.0, %v462
      %v464 = vpop.f32.mrb[0].mxu0
      %465 = vmatprep.mubr.bf16.mxu0 0
      %466 = vmatmul.mubr.bf16.gmra.mrb[0].mxu0 %v349
      %v467 = vpop.f32.mrb[0].mxu0
      %v468 = vadd.f32 0.0, %v467
      %v469 = vpop.f32.mrb[0].mxu0
      %v470 = vpop.f32.mrb[0].mxu0
      %v471 = vadd.f32 0.0, %v470
      %v472 = vpop.f32.mrb[0].mxu0
      %473 = vmatprep.mubr.bf16.mxu0 0
      %474 = vmatmul.mubr.bf16.gmra.mrb[0].mxu0 %v352
      %v475 = vpop.f32.mrb[0].mxu0
      %v476 = vadd.f32 0.0, %v475
      %v477 = vpop.f32.mrb[0].mxu0
      %v478 = vpop.f32.mrb[0].mxu0
      %v479 = vadd.f32 0.0, %v478
      %v480 = vpop.f32.mrb[0].mxu0
      %481 = vmatprep.mubr.bf16.mxu0 0
      %482 = vmatmul.mubr.bf16.gmra.mrb[0].mxu0 %v355
      %v483 = vpop.f32.mrb[0].mxu0
      %v484 = vadd.f32 0.0, %v483
      %v485 = vpop.f32.mrb[0].mxu0
      %v486 = vpop.f32.mrb[0].mxu0
      %v487 = vadd.f32 0.0, %v486
      %v488 = vpop.f32.mrb[0].mxu0
      %489 = vmatprep.mubr.bf16.mxu0 0
      %490 = vmatmul.mubr.bf16.gmra.mrb[0].mxu0 %v358
      %v491 = vpop.f32.mrb[0].mxu0
      %v492 = vadd.f32 0.0, %v491
      %v493 = vpop.f32.mrb[0].mxu0
      %v494 = vpop.f32.mrb[0].mxu0
      %v495 = vadd.f32 0.0, %v494
      %v496 = vpop.f32.mrb[0].mxu0
      %497 = vmatprep.mubr.bf16.mxu0 0
      %498 = vmatmul.mubr.bf16.gmra.mrb[0].mxu0 %v361
      %v499 = vpop.f32.mrb[0].mxu0
      %v500 = vadd.f32 0.0, %v499
      %v501 = vpop.f32.mrb[0].mxu0
      %v502 = vpop.f32.mrb[0].mxu0
      %v503 = vadd.f32 0.0, %v502
      %v504 = vpop.f32.mrb[0].mxu0
      %505 = vmatprep.mubr.bf16.mxu0 0
      %506 = vmatmul.mubr.bf16.gmra.mrb[0].mxu0 %v364
      %v507 = vpop.f32.mrb[0].mxu0
      %v508 = vadd.f32 0.0, %v507
      %v509 = vpop.f32.mrb[0].mxu0
      %v510 = vpop.f32.mrb[0].mxu0
      %v511 = vadd.f32 0.0, %v510
      %v512 = vpop.f32.mrb[0].mxu0
      %513 = vmatprep.mubr.bf16.mxu0 0
      %514 = vmatmul.mubr.bf16.gmra.mrb[0].mxu0 %v367
      %v515 = vpop.f32.mrb[0].mxu0
      %v516 = vadd.f32 0.0, %v515
      %v517 = vpop.f32.mrb[0].mxu0
      %v518 = vpop.f32.mrb[0].mxu0
      %v519 = vadd.f32 0.0, %v518
      %v520 = vpop.f32.mrb[0].mxu0
      %521 = vmatprep.mubr.bf16.mxu0 0
      %522 = vmatmul.mubr.bf16.gmra.mrb[0].mxu0 %v370
      %v523 = vpop.f32.mrb[0].mxu0
      %v524 = vadd.f32 0.0, %v523
      %v525 = vpop.f32.mrb[0].mxu0
      %v526 = vpop.f32.mrb[0].mxu0
      %v527 = vadd.f32 0.0, %v526
      %v528 = vpop.f32.mrb[0].mxu0
      %529 = vmatprep.mubr.bf16.mxu0 0
      %530 = vmatmul.mubr.bf16.gmra.mrb[0].mxu0 %v373
      %v531 = vpop.f32.mrb[0].mxu0
      %v532 = vadd.f32 0.0, %v531
      %v533 = vpop.f32.mrb[0].mxu0
      %v534 = vpop.f32.mrb[0].mxu0
      %v535 = vadd.f32 0.0, %v534
      %v536 = vpop.f32.mrb[0].mxu0
      %537 = vmatprep.mubr.bf16.mxu0 0
      %538 = vmatmul.mubr.bf16.gmra.mrb[0].mxu0 %v376
      %v539 = vpop.f32.mrb[0].mxu0
      %v540 = vadd.f32 0.0, %v539
      %v541 = vpop.f32.mrb[0].mxu0
      %v542 = vpop.f32.mrb[0].mxu0
      %v543 = vadd.f32 0.0, %v542
      %v544 = vpop.f32.mrb[0].mxu0
      %545 = vdwg.mxu0
      %v546 = vld [vmem:[%s2] sm:$0x1]
      %v548 = vlaneseq
      %v549 = vshrl.u32 %v548, 7
      %v550 = vsub.s32 0, %v549
      %v551 = vrot.slane %v546, %v550
      %v553 = vmul.f32 %v420, %v551
      %v554 = vmul.f32 %v423, %v551
      %v555 = vmul.f32 %v428, %v551
      %v556 = vmul.f32 %v431, %v551
      %v557 = vmul.f32 %v436, %v551
      %v558 = vmul.f32 %v439, %v551
      %v559 = vmul.f32 %v444, %v551
      %v560 = vmul.f32 %v447, %v551
      %v561 = vmul.f32 %v452, %v551
      %v562 = vmul.f32 %v455, %v551
      %v563 = vmul.f32 %v460, %v551
      %v564 = vmul.f32 %v463, %v551
      %v565 = vmul.f32 %v468, %v551
      %v566 = vmul.f32 %v471, %v551
      %v567 = vmul.f32 %v476, %v551
      %v568 = vmul.f32 %v479, %v551
      %v569 = vmul.f32 %v484, %v551
      %v570 = vmul.f32 %v487, %v551
      %v571 = vmul.f32 %v492, %v551
      %v572 = vmul.f32 %v495, %v551
      %v573 = vmul.f32 %v500, %v551
      %v574 = vmul.f32 %v503, %v551
      %v575 = vmul.f32 %v508, %v551
      %v576 = vmul.f32 %v511, %v551
      %v577 = vmul.f32 %v516, %v551
      %v578 = vmul.f32 %v519, %v551
      %v579 = vmul.f32 %v524, %v551
      %v580 = vmul.f32 %v527, %v551
      %v581 = vmul.f32 %v532, %v551
      %v582 = vmul.f32 %v535, %v551
      %v583 = vmul.f32 %v540, %v551
      %v584 = vmul.f32 %v543, %v551
      %v585 = vld [vmem:[%s3] sm:$0x1]
      %v587 = vlaneseq
      %v588 = vshrl.u32 %v587, 7
      %v589 = vsub.s32 0, %v588
      %v590 = vrot.slane %v585, %v589
      %v592 = vadd.f32 %v553, %v590
      %v593 = vadd.f32 %v554, %v590
      %v594 = vadd.f32 %v555, %v590
      %v595 = vadd.f32 %v556, %v590
      %v596 = vadd.f32 %v557, %v590
      %v597 = vadd.f32 %v558, %v590
      %v598 = vadd.f32 %v559, %v590
      %v599 = vadd.f32 %v560, %v590
      %v600 = vadd.f32 %v561, %v590
      %v601 = vadd.f32 %v562, %v590
      %v602 = vadd.f32 %v563, %v590
      %v603 = vadd.f32 %v564, %v590
      %v604 = vadd.f32 %v565, %v590
      %v605 = vadd.f32 %v566, %v590
      %v606 = vadd.f32 %v567, %v590
      %v607 = vadd.f32 %v568, %v590
      %v608 = vadd.f32 %v569, %v590
      %v609 = vadd.f32 %v570, %v590
      %v610 = vadd.f32 %v571, %v590
      %v611 = vadd.f32 %v572, %v590
      %v612 = vadd.f32 %v573, %v590
      %v613 = vadd.f32 %v574, %v590
      %v614 = vadd.f32 %v575, %v590
      %v615 = vadd.f32 %v576, %v590
      %v616 = vadd.f32 %v577, %v590
      %v617 = vadd.f32 %v578, %v590
      %v618 = vadd.f32 %v579, %v590
      %v619 = vadd.f32 %v580, %v590
      %v620 = vadd.f32 %v581, %v590
      %v621 = vadd.f32 %v582, %v590
      %v622 = vadd.f32 %v583, %v590
      %v623 = vadd.f32 %v584, %v590
      %v624 = vmax.f32 %v592, 0.0
      %v625 = vmax.f32 %v593, 0.0
      %v626 = vmax.f32 %v594, 0.0
      %v627 = vmax.f32 %v595, 0.0
      %v628 = vmax.f32 %v596, 0.0
      %v629 = vmax.f32 %v597, 0.0
      %v630 = vmax.f32 %v598, 0.0
      %v631 = vmax.f32 %v599, 0.0
      %v632 = vmax.f32 %v600, 0.0
      %v633 = vmax.f32 %v601, 0.0
      %v634 = vmax.f32 %v602, 0.0
      %v635 = vmax.f32 %v603, 0.0
      %v636 = vmax.f32 %v604, 0.0
      %v637 = vmax.f32 %v605, 0.0
      %v638 = vmax.f32 %v606, 0.0
      %v639 = vmax.f32 %v607, 0.0
      %v640 = vmax.f32 %v608, 0.0
      %v641 = vmax.f32 %v609, 0.0
      %v642 = vmax.f32 %v610, 0.0
      %v643 = vmax.f32 %v611, 0.0
      %v644 = vmax.f32 %v612, 0.0
      %v645 = vmax.f32 %v613, 0.0
      %v646 = vmax.f32 %v614, 0.0
      %v647 = vmax.f32 %v615, 0.0
      %v648 = vmax.f32 %v616, 0.0
      %v649 = vmax.f32 %v617, 0.0
      %v650 = vmax.f32 %v618, 0.0
      %v651 = vmax.f32 %v619, 0.0
      %v652 = vmax.f32 %v620, 0.0
      %v653 = vmax.f32 %v621, 0.0
      %v654 = vmax.f32 %v622, 0.0
      %v655 = vmax.f32 %v623, 0.0
      %v656 = vpack.c.bf16 %v625, %v624
      %v657 = vpack.c.bf16 %v627, %v626
      %v658 = vpack.c.bf16 %v629, %v628
      %v659 = vpack.c.bf16 %v631, %v630
      %v660 = vpack.c.bf16 %v633, %v632
      %v661 = vpack.c.bf16 %v635, %v634
      %v662 = vpack.c.bf16 %v637, %v636
      %v663 = vpack.c.bf16 %v639, %v638
      %v664 = vpack.c.bf16 %v641, %v640
      %v665 = vpack.c.bf16 %v643, %v642
      %v666 = vpack.c.bf16 %v645, %v644
      %v667 = vpack.c.bf16 %v647, %v646
      %v668 = vpack.c.bf16 %v649, %v648
      %v669 = vpack.c.bf16 %v651, %v650
      %v670 = vpack.c.bf16 %v653, %v652
      %v671 = vpack.c.bf16 %v655, %v654
      %v688 = vunpack.c.l.b16 %v656
      %v689 = vunpack.c.h.b16 %v656
      %v690 = vunpack.c.l.b16 %v657
      %v691 = vunpack.c.h.b16 %v657
      %v692 = vunpack.c.l.b16 %v658
      %v693 = vunpack.c.h.b16 %v658
      %v694 = vunpack.c.l.b16 %v659
      %v695 = vunpack.c.h.b16 %v659
      %v696 = vunpack.c.l.b16 %v660
      %v697 = vunpack.c.h.b16 %v660
      %v698 = vunpack.c.l.b16 %v661
      %v699 = vunpack.c.h.b16 %v661
      %v700 = vunpack.c.l.b16 %v662
      %v701 = vunpack.c.h.b16 %v662
      %v702 = vunpack.c.l.b16 %v663
      %v703 = vunpack.c.h.b16 %v663
      %v704 = vunpack.c.l.b16 %v664
      %v705 = vunpack.c.h.b16 %v664
      %v706 = vunpack.c.l.b16 %v665
      %v707 = vunpack.c.h.b16 %v665
      %v708 = vunpack.c.l.b16 %v666
      %v709 = vunpack.c.h.b16 %v666
      %v710 = vunpack.c.l.b16 %v667
      %v711 = vunpack.c.h.b16 %v667
      %v712 = vunpack.c.l.b16 %v668
      %v713 = vunpack.c.h.b16 %v668
      %v714 = vunpack.c.l.b16 %v669
      %v715 = vunpack.c.h.b16 %v669
      %v716 = vunpack.c.l.b16 %v670
      %v717 = vunpack.c.h.b16 %v670
      %v718 = vunpack.c.l.b16 %v671
      %v719 = vunpack.c.h.b16 %v671
      %v720 = vpack.c.b16 %v688, %v688
      %v721 = vpack.c.b16 %v689, %v689
      %v722 = vpack.c.b16 %v690, %v690
      %v723 = vpack.c.b16 %v691, %v691
      %v724 = vpack.c.b16 %v692, %v692
      %v725 = vpack.c.b16 %v693, %v693
      %v726 = vpack.c.b16 %v694, %v694
      %v727 = vpack.c.b16 %v695, %v695
      %v728 = vpack.c.b16 %v696, %v696
      %v729 = vpack.c.b16 %v697, %v697
      %v730 = vpack.c.b16 %v698, %v698
      %v731 = vpack.c.b16 %v699, %v699
      %v732 = vpack.c.b16 %v700, %v700
      %v733 = vpack.c.b16 %v701, %v701
      %v734 = vpack.c.b16 %v702, %v702
      %v735 = vpack.c.b16 %v703, %v703
      %v736 = vpack.c.b16 %v704, %v704
      %v737 = vpack.c.b16 %v705, %v705
      %v738 = vpack.c.b16 %v706, %v706
      %v739 = vpack.c.b16 %v707, %v707
      %v740 = vpack.c.b16 %v708, %v708
      %v741 = vpack.c.b16 %v709, %v709
      %v742 = vpack.c.b16 %v710, %v710
      %v743 = vpack.c.b16 %v711, %v711
      %v744 = vpack.c.b16 %v712, %v712
      %v745 = vpack.c.b16 %v713, %v713
      %v746 = vpack.c.b16 %v714, %v714
      %v747 = vpack.c.b16 %v715, %v715
      %v748 = vpack.c.b16 %v716, %v716
      %v749 = vpack.c.b16 %v717, %v717
      %v750 = vpack.c.b16 %v718, %v718
      %v751 = vpack.c.b16 %v719, %v719
      %vm784 = vcmask 60416
      %785 = vst.msk [vmem:[%s199] sm:$0xf] %vm784, %v720
      %786 = vst.msk [vmem:[%s199 + $0x4] sm:$0xf] %vm784, %v721
      %787 = vst.msk [vmem:[%s199 + $0x8] sm:$0xf] %vm784, %v722
      %788 = vst.msk [vmem:[%s199 + $0xc] sm:$0xf] %vm784, %v723
      %789 = vst.msk [vmem:[%s199 + $0x10] sm:$0xf] %vm784, %v724
      %790 = vst.msk [vmem:[%s199 + $0x14] sm:$0xf] %vm784, %v725
      %791 = vst.msk [vmem:[%s199 + $0x18] sm:$0xf] %vm784, %v726
      %792 = vst.msk [vmem:[%s199 + $0x1c] sm:$0xf] %vm784, %v727
      %793 = vst.msk [vmem:[%s199 + $0x20] sm:$0xf] %vm784, %v728
      %794 = vst.msk [vmem:[%s199 + $0x24] sm:$0xf] %vm784, %v729
      %795 = vst.msk [vmem:[%s199 + $0x28] sm:$0xf] %vm784, %v730
      %796 = vst.msk [vmem:[%s199 + $0x2c] sm:$0xf] %vm784, %v731
      %797 = vst.msk [vmem:[%s199 + $0x30] sm:$0xf] %vm784, %v732
      %798 = vst.msk [vmem:[%s199 + $0x34] sm:$0xf] %vm784, %v733
      %799 = vst.msk [vmem:[%s199 + $0x38] sm:$0xf] %vm784, %v734
      %800 = vst.msk [vmem:[%s199 + $0x3c] sm:$0xf] %vm784, %v735
      %801 = vst.msk [vmem:[%s199 + $0x40] sm:$0xf] %vm784, %v736
      %802 = vst.msk [vmem:[%s199 + $0x44] sm:$0xf] %vm784, %v737
      %803 = vst.msk [vmem:[%s199 + $0x48] sm:$0xf] %vm784, %v738
      %804 = vst.msk [vmem:[%s199 + $0x4c] sm:$0xf] %vm784, %v739
      %805 = vst.msk [vmem:[%s199 + $0x50] sm:$0xf] %vm784, %v740
      %806 = vst.msk [vmem:[%s199 + $0x54] sm:$0xf] %vm784, %v741
      %807 = vst.msk [vmem:[%s199 + $0x58] sm:$0xf] %vm784, %v742
      %808 = vst.msk [vmem:[%s199 + $0x5c] sm:$0xf] %vm784, %v743
      %809 = vst.msk [vmem:[%s199 + $0x60] sm:$0xf] %vm784, %v744
      %810 = vst.msk [vmem:[%s199 + $0x64] sm:$0xf] %vm784, %v745
      %811 = vst.msk [vmem:[%s199 + $0x68] sm:$0xf] %vm784, %v746
      %812 = vst.msk [vmem:[%s199 + $0x6c] sm:$0xf] %vm784, %v747
      %813 = vst.msk [vmem:[%s199 + $0x70] sm:$0xf] %vm784, %v748
      %814 = vst.msk [vmem:[%s199 + $0x74] sm:$0xf] %vm784, %v749
      %815 = vst.msk [vmem:[%s199 + $0x78] sm:$0xf] %vm784, %v750
      %816 = vst.msk [vmem:[%s199 + $0x7c] sm:$0xf] %vm784, %v751
      %s817 = smul.u32 32, %s15
      %p818 = scmp.lt.s32.totalorder %s817, 63
      %s819 = scalar_select %p818, %s817, 63
      %s820 = smul.addr %s819, 4
      %s821 = scalar_lea.vmem %s4, %s820
      // Predicated region
      $region37: #{shufflenet_v2_forward.28} parent=35 // pred_check
        %p822 = pneg %p122
      $region38: #{shufflenet_v2_forward.28} parent=35 // pred_check_branch
        %824 = sbr.rel (%p822) target = $region40
      $region39: #{shufflenet_v2_forward.28} parent=35 // pred_region
        %s825 = smul.u32 32, %s15
      $region40: #{shufflenet_v2_forward.28} parent=35 // pred_fallthru
        _
    $region36: #{shufflenet_v2_forward.28} parent=5 // pred_fallthru
      _
    %p826 = scmp.le.s32.totalorder 2, %s10
    // Predicated region
    $region41: #{shufflenet_v2_forward.28} parent=5 // pred_check
      %p827 = pneg %p826
    $region42: #{shufflenet_v2_forward.28} parent=5 // pred_check_branch
      %829 = sbr.rel (%p827) target = $region44
    $region43: #{shufflenet_v2_forward.28} parent=5 // pred_region
      %s830 = ssub.s32 %s10, 2
      // Predicated region
      $region45: #{shufflenet_v2_forward.28} parent=43 // pred_check
        %p831 = pneg %p128
      $region46: #{shufflenet_v2_forward.28} parent=43 // pred_check_branch
        %833 = sbr.rel (%p831) target = $region48
      $region47: #{shufflenet_v2_forward.28} parent=43 // pred_region
        %s834 = smul.u32 32, %s16
        %p835 = scmp.lt.s32.totalorder %s834, 63
        %s836 = scalar_select %p835, %s834, 63
        %s837 = smul.addr %s836, 4
        %s838 = scalar_lea.vmem %s4, %s837
      $region48: #{shufflenet_v2_forward.28} parent=43 // pred_fallthru
        _
    $region44: #{shufflenet_v2_forward.28} parent=5 // pred_fallthru
      _
  $region6: #{shufflenet_v2_forward.28} parent=0 // loop_footer
    %s14 = sadd.s32 1, %s10
  $region7: #{shufflenet_v2_forward.28} parent=0 // loop_footer_branch
    %9 = sbr.rel target = $region3
  $region8: #{shufflenet_v2_forward.28} parent=0 // loop_exit
    _

// kernel: shufflenet_v2_forward.29
$region0: #{shufflenet_v2_forward.29}
  #allocation0 [shape = 'u32[]', space=smem, size = 0x4, offset = 0x4, fixed_abs, tag = 'smem constant byte address 0x4 - core index']
  #allocation1 [shape = 'u32[144,128]{1,0:T(1,128)}', space=vmem, size = 0x12000, scoped, tag = 'internal scratch']
  %s0 = inlined_call_operand.vmem [shape: bf16[2,9,9,8], index: 0, kind: input, shape index: {}]
  %s1 = inlined_call_operand.vmem [shape: bf16[2,9,9,8], index: 1, kind: input, shape index: {}]
  %s2 = inlined_call_operand.vmem [shape: bf16[2,9,9,8], index: 2, kind: input, shape index: {}]
  %s3 = inlined_call_operand.vmem [shape: bf16[2,9,9,8], index: 3, kind: input, shape index: {}]
  %s4 = inlined_call_operand.vmem [shape: bf16[2,8,8,8], index: 4, kind: output, shape index: {}]
  %s5 = sld [smem:[#allocation0]]
  $region49: #{shufflenet_v2_forward.29} parent=0
    _
  %s7 = ssub.s32 1, %s5
  %s8 = scalar_select 0, %s7, %s5
  loop: start=0, step=1, limit=4
  $region2: #{shufflenet_v2_forward.29} parent=0 // loop_pre_header
    _
  $region3: #{shufflenet_v2_forward.29} parent=0 // loop_header
    %s10 = sphi 0, %s14
    %p11 = scmp.ge.s32.totalorder %s10, 4
    %s20 = sphi 0, %s22
    %s23 = sphi 0, %s20
    %s24 = sphi 0, %s23
    %s40 = sphi 0, %s24
    %s46 = sphi 0, %s48
    %s49 = sphi 0, %s46
    %s50 = sphi 0, %s49
    %s66 = sphi 0, %s50
    %s72 = sphi 0, %s74
    %s75 = sphi 0, %s72
    %s76 = sphi 0, %s75
    %s92 = sphi 0, %s76
    %s98 = sphi 0, %s100
    %s101 = sphi 0, %s98
    %s102 = sphi 0, %s101
    %s118 = sphi 0, %s102
    %s124 = sphi 0, %s126
    %s127 = sphi 0, %s124
    %s128 = sphi 0, %s127
    %s144 = sphi 0, %s128
  $region4: #{shufflenet_v2_forward.29} parent=0 // loop_header_branch
    %13 = sbr.rel (%p11) target = $region8
  $region5: #{shufflenet_v2_forward.29} parent=0 // loop_body
    %s15 = ssub.s32 %s10, 1
    %s16 = ssub.s32 %s10, 2
    %s17 = sadd.s32 %s10, 1
    %s18 = ssub.s32 %s10, %s17
    %p19 = scmp.eq.s32.totalorder %s18, 0
    %s21 = sadd.s32 %s20, 1
    %s22 = scalar_select %p19, %s20, %s21
    %p25 = pneg %p19
    %p26 = scmp.eq.s32.totalorder %s10, 1
    %p27 = por %p25, %p26
    %p28 = scmp.ne.s32.totalorder %s20, %s23
    %p29 = scmp.eq.s32.totalorder %s10, 0
    %p30 = por %p28, %p29
    %p31 = scmp.ne.s32.totalorder %s20, %s23
    %p32 = scmp.eq.s32.totalorder %s15, 1
    %p33 = por %p31, %p32
    %p34 = scmp.ne.s32.totalorder %s23, %s24
    %p35 = scmp.eq.s32.totalorder %s15, 0
    %p36 = por %p34, %p35
    %p37 = scmp.ne.s32.totalorder %s23, %s24
    %p38 = scmp.eq.s32.totalorder %s16, 1
    %p39 = por %p37, %p38
    %p41 = scmp.ne.s32.totalorder %s24, %s40
    %p42 = scmp.eq.s32.totalorder %s16, 0
    %p43 = por %p41, %p42
    %s44 = ssub.s32 %s10, %s17
    %p45 = scmp.eq.s32.totalorder %s44, 0
    %s47 = sadd.s32 %s46, 1
    %s48 = scalar_select %p45, %s46, %s47
    %p51 = pneg %p45
    %p52 = scmp.eq.s32.totalorder %s10, 1
    %p53 = por %p51, %p52
    %p54 = scmp.ne.s32.totalorder %s46, %s49
    %p55 = scmp.eq.s32.totalorder %s10, 0
    %p56 = por %p54, %p55
    %p57 = scmp.ne.s32.totalorder %s46, %s49
    %p58 = scmp.eq.s32.totalorder %s15, 1
    %p59 = por %p57, %p58
    %p60 = scmp.ne.s32.totalorder %s49, %s50
    %p61 = scmp.eq.s32.totalorder %s15, 0
    %p62 = por %p60, %p61
    %p63 = scmp.ne.s32.totalorder %s49, %s50
    %p64 = scmp.eq.s32.totalorder %s16, 1
    %p65 = por %p63, %p64
    %p67 = scmp.ne.s32.totalorder %s50, %s66
    %p68 = scmp.eq.s32.totalorder %s16, 0
    %p69 = por %p67, %p68
    %s70 = ssub.s32 %s10, %s17
    %p71 = scmp.eq.s32.totalorder %s70, 0
    %s73 = sadd.s32 %s72, 1
    %s74 = scalar_select %p71, %s72, %s73
    %p77 = pneg %p71
    %p78 = scmp.eq.s32.totalorder %s10, 1
    %p79 = por %p77, %p78
    %p80 = scmp.ne.s32.totalorder %s72, %s75
    %p81 = scmp.eq.s32.totalorder %s10, 0
    %p82 = por %p80, %p81
    %p83 = scmp.ne.s32.totalorder %s72, %s75
    %p84 = scmp.eq.s32.totalorder %s15, 1
    %p85 = por %p83, %p84
    %p86 = scmp.ne.s32.totalorder %s75, %s76
    %p87 = scmp.eq.s32.totalorder %s15, 0
    %p88 = por %p86, %p87
    %p89 = scmp.ne.s32.totalorder %s75, %s76
    %p90 = scmp.eq.s32.totalorder %s16, 1
    %p91 = por %p89, %p90
    %p93 = scmp.ne.s32.totalorder %s76, %s92
    %p94 = scmp.eq.s32.totalorder %s16, 0
    %p95 = por %p93, %p94
    %s96 = ssub.s32 %s10, %s17
    %p97 = scmp.eq.s32.totalorder %s96, 0
    %s99 = sadd.s32 %s98, 1
    %s100 = scalar_select %p97, %s98, %s99
    %p103 = pneg %p97
    %p104 = scmp.eq.s32.totalorder %s10, 1
    %p105 = por %p103, %p104
    %p106 = scmp.ne.s32.totalorder %s98, %s101
    %p107 = scmp.eq.s32.totalorder %s10, 0
    %p108 = por %p106, %p107
    %p109 = scmp.ne.s32.totalorder %s98, %s101
    %p110 = scmp.eq.s32.totalorder %s15, 1
    %p111 = por %p109, %p110
    %p112 = scmp.ne.s32.totalorder %s101, %s102
    %p113 = scmp.eq.s32.totalorder %s15, 0
    %p114 = por %p112, %p113
    %p115 = scmp.ne.s32.totalorder %s101, %s102
    %p116 = scmp.eq.s32.totalorder %s16, 1
    %p117 = por %p115, %p116
    %p119 = scmp.ne.s32.totalorder %s102, %s118
    %p120 = scmp.eq.s32.totalorder %s16, 0
    %p121 = por %p119, %p120
    %s122 = ssub.s32 %s10, %s17
    %p123 = scmp.eq.s32.totalorder %s122, 0
    %s125 = sadd.s32 %s124, 1
    %s126 = scalar_select %p123, %s124, %s125
    %p129 = pneg %p123
    %p130 = scmp.eq.s32.totalorder %s10, 1
    %p131 = por %p129, %p130
    %p132 = scmp.ne.s32.totalorder %s124, %s127
    %p133 = scmp.eq.s32.totalorder %s10, 0
    %p134 = por %p132, %p133
    %p135 = scmp.ne.s32.totalorder %s124, %s127
    %p136 = scmp.eq.s32.totalorder %s15, 1
    %p137 = por %p135, %p136
    %p138 = scmp.ne.s32.totalorder %s127, %s128
    %p139 = scmp.eq.s32.totalorder %s15, 0
    %p140 = por %p138, %p139
    %p141 = scmp.ne.s32.totalorder %s127, %s128
    %p142 = scmp.eq.s32.totalorder %s16, 1
    %p143 = por %p141, %p142
    %p145 = scmp.ne.s32.totalorder %s128, %s144
    %p146 = scmp.eq.s32.totalorder %s16, 0
    %p147 = por %p145, %p146
    %p148 = scmp.le.s32.totalorder 1, %s10
    %p149 = scmp.lt.s32.totalorder %s10, 3
    %p150 = pnand %p148, %p149
    %p151 = pneg %p150
    // Predicated region
    $region9: #{shufflenet_v2_forward.29} parent=5 // pred_check
      _
    $region10: #{shufflenet_v2_forward.29} parent=5 // pred_check_branch
      %153 = sbr.rel (%p150) target = $region12
    $region11: #{shufflenet_v2_forward.29} parent=5 // pred_region
      %s154 = ssub.s32 %s10, 1
    $region12: #{shufflenet_v2_forward.29} parent=5 // pred_fallthru
      _
    %p155 = scmp.lt.s32.totalorder %s10, 2
    // Predicated region
    $region13: #{shufflenet_v2_forward.29} parent=5 // pred_check
      %p156 = pneg %p155
    $region14: #{shufflenet_v2_forward.29} parent=5 // pred_check_branch
      %158 = sbr.rel (%p156) target = $region16
    $region15: #{shufflenet_v2_forward.29} parent=5 // pred_region
      // Predicated region
      $region17: #{shufflenet_v2_forward.29} parent=15 // pred_check
        %p159 = pneg %p30
      $region18: #{shufflenet_v2_forward.29} parent=15 // pred_check_branch
        %161 = sbr.rel (%p159) target = $region20
      $region19: #{shufflenet_v2_forward.29} parent=15 // pred_region
        %p162 = scmp.lt.s32.totalorder %s10, 1
        %s163 = scalar_select %p162, %s10, 1
        %s164 = smul.addr %s163, 18
        %s165 = smul.addr %s164, 4
        %s166 = scalar_lea.vmem %s0, %s165
      $region20: #{shufflenet_v2_forward.29} parent=15 // pred_fallthru
        _
      // Predicated region
      $region21: #{shufflenet_v2_forward.29} parent=15 // pred_check
        %p167 = pneg %p56
      $region22: #{shufflenet_v2_forward.29} parent=15 // pred_check_branch
        %169 = sbr.rel (%p167) target = $region24
      $region23: #{shufflenet_v2_forward.29} parent=15 // pred_region
        %p170 = scmp.lt.s32.totalorder %s10, 1
        %s171 = scalar_select %p170, %s10, 1
        %s172 = smul.addr %s171, 18
        %s173 = smul.addr %s172, 4
        %s174 = scalar_lea.vmem %s1, %s173
      $region24: #{shufflenet_v2_forward.29} parent=15 // pred_fallthru
        _
      // Predicated region
      $region25: #{shufflenet_v2_forward.29} parent=15 // pred_check
        %p175 = pneg %p82
      $region26: #{shufflenet_v2_forward.29} parent=15 // pred_check_branch
        %177 = sbr.rel (%p175) target = $region28
      $region27: #{shufflenet_v2_forward.29} parent=15 // pred_region
        %p178 = scmp.lt.s32.totalorder %s10, 1
        %s179 = scalar_select %p178, %s10, 1
        %s180 = smul.addr %s179, 18
        %s181 = smul.addr %s180, 4
        %s182 = scalar_lea.vmem %s2, %s181
      $region28: #{shufflenet_v2_forward.29} parent=15 // pred_fallthru
        _
      // Predicated region
      $region29: #{shufflenet_v2_forward.29} parent=15 // pred_check
        %p183 = pneg %p108
      $region30: #{shufflenet_v2_forward.29} parent=15 // pred_check_branch
        %185 = sbr.rel (%p183) target = $region32
      $region31: #{shufflenet_v2_forward.29} parent=15 // pred_region
        %p186 = scmp.lt.s32.totalorder %s10, 1
        %s187 = scalar_select %p186, %s10, 1
        %s188 = smul.addr %s187, 18
        %s189 = smul.addr %s188, 4
        %s190 = scalar_lea.vmem %s3, %s189
      $region32: #{shufflenet_v2_forward.29} parent=15 // pred_fallthru
        _
    $region16: #{shufflenet_v2_forward.29} parent=5 // pred_fallthru
      _
    %p191 = scmp.le.s32.totalorder 1, %s10
    %p192 = scmp.lt.s32.totalorder %s10, 3
    %p193 = pnand %p191, %p192
    %p194 = pneg %p193
    // Predicated region
    $region33: #{shufflenet_v2_forward.29} parent=5 // pred_check
      _
    $region34: #{shufflenet_v2_forward.29} parent=5 // pred_check_branch
      %196 = sbr.rel (%p193) target = $region36
    $region35: #{shufflenet_v2_forward.29} parent=5 // pred_region
      %s197 = ssub.s32 %s10, 1
      %p198 = scmp.lt.s32.totalorder %s15, 1
      %s199 = scalar_select %p198, %s15, 1
      %s200 = smul.addr %s199, 18
      %s201 = smul.addr %s200, 4
      %s202 = scalar_lea.vmem %s0, %s201
      %p203 = pneg %p36
      %p204 = pneg %p33
      %p205 = scmp.lt.s32.totalorder %s15, 1
      %s206 = scalar_select %p205, %s15, 1
      %s207 = smul.addr %s206, 18
      %s208 = smul.addr %s207, 4
      %s209 = scalar_lea.vmem %s1, %s208
      %p210 = pneg %p62
      %p211 = pneg %p59
      %p212 = scmp.lt.s32.totalorder %s15, 1
      %s213 = scalar_select %p212, %s15, 1
      %s214 = smul.addr %s213, 18
      %s215 = smul.addr %s214, 4
      %s216 = scalar_lea.vmem %s2, %s215
      %p217 = pneg %p88
      %p218 = pneg %p85
      %p219 = scmp.lt.s32.totalorder %s15, 1
      %s220 = scalar_select %p219, %s15, 1
      %s221 = smul.addr %s220, 18
      %s222 = smul.addr %s221, 4
      %s223 = scalar_lea.vmem %s3, %s222
      %p224 = pneg %p114
      %p225 = pneg %p111
      %p226 = pneg %p140
      %p227 = pneg %p137
      %p228 = scmp.lt.s32.totalorder %s15, 1
      %s229 = scalar_select %p228, %s15, 1
      %s230 = smul.addr %s229, 8
      %s231 = smul.addr %s230, 4
      %s232 = scalar_lea.vmem %s4, %s231
      %p233 = scmp.lt.s32.totalorder %s15, 1
      %s234 = scalar_select %p233, %s15, 1
      %s235 = smul.addr %s234, 18
      %s236 = smul.addr %s235, 4
      %s237 = scalar_lea.vmem %s0, %s236
      %p238 = scmp.lt.s32.totalorder %s15, 1
      %s239 = scalar_select %p238, %s15, 1
      %s240 = smul.addr %s239, 18
      %s241 = smul.addr %s240, 4
      %s242 = scalar_lea.vmem %s1, %s241
      %p243 = scmp.lt.s32.totalorder %s15, 1
      %s244 = scalar_select %p243, %s15, 1
      %s245 = smul.addr %s244, 18
      %s246 = smul.addr %s245, 4
      %s247 = scalar_lea.vmem %s2, %s246
      %p248 = scmp.lt.s32.totalorder %s15, 1
      %s249 = scalar_select %p248, %s15, 1
      %s250 = smul.addr %s249, 18
      %s251 = smul.addr %s250, 4
      %s252 = scalar_lea.vmem %s3, %s251
      %p253 = scmp.lt.s32.totalorder %s15, 1
      %s254 = scalar_select %p253, %s15, 1
      %s255 = smul.addr %s254, 8
      %s256 = smul.addr %s255, 4
      %s257 = scalar_lea.vmem %s4, %s256
      %v258 = vld [vmem:[%s237] sm:$0xf]
      %v259 = vld [vmem:[%s237 + $0x4] sm:$0x1]
      %v260 = vld [vmem:[%s237 + $0x8] sm:$0xf]
      %v261 = vld [vmem:[%s237 + $0xc] sm:$0x1]
      %v262 = vld [vmem:[%s237 + $0x10] sm:$0xf]
      %v263 = vld [vmem:[%s237 + $0x14] sm:$0x1]
      %v264 = vld [vmem:[%s237 + $0x18] sm:$0xf]
      %v265 = vld [vmem:[%s237 + $0x1c] sm:$0x1]
      %v266 = vld [vmem:[%s237 + $0x20] sm:$0xf]
      %v267 = vld [vmem:[%s237 + $0x24] sm:$0x1]
      %v268 = vld [vmem:[%s237 + $0x28] sm:$0xf]
      %v269 = vld [vmem:[%s237 + $0x2c] sm:$0x1]
      %v270 = vld [vmem:[%s237 + $0x30] sm:$0xf]
      %v271 = vld [vmem:[%s237 + $0x34] sm:$0x1]
      %v272 = vld [vmem:[%s237 + $0x38] sm:$0xf]
      %v273 = vld [vmem:[%s237 + $0x3c] sm:$0x1]
      %v274 = vld [vmem:[%s237 + $0x40] sm:$0xf]
      %v275 = vld [vmem:[%s237 + $0x44] sm:$0x1]
      %v276 = vunpack.c.l.bf16 %v258
      %v277 = vunpack.c.l.bf16 %v259
      %v278 = vunpack.c.l.bf16 %v260
      %v279 = vunpack.c.l.bf16 %v261
      %v280 = vunpack.c.l.bf16 %v262
      %v281 = vunpack.c.l.bf16 %v263
      %v282 = vunpack.c.l.bf16 %v264
      %v283 = vunpack.c.l.bf16 %v265
      %v284 = vunpack.c.l.bf16 %v266
      %v285 = vunpack.c.l.bf16 %v267
      %v286 = vunpack.c.l.bf16 %v268
      %v287 = vunpack.c.l.bf16 %v269
      %v288 = vunpack.c.l.bf16 %v270
      %v289 = vunpack.c.l.bf16 %v271
      %v290 = vunpack.c.l.bf16 %v272
      %v291 = vunpack.c.l.bf16 %v273
      %v292 = vunpack.c.l.bf16 %v274
      %v293 = vunpack.c.l.bf16 %v275
      %v294 = vld [vmem:[%s242] sm:$0xf]
      %v295 = vld [vmem:[%s242 + $0x8] sm:$0xf]
      %v296 = vld [vmem:[%s242 + $0x10] sm:$0xf]
      %v297 = vld [vmem:[%s242 + $0x18] sm:$0xf]
      %v298 = vld [vmem:[%s242 + $0x20] sm:$0xf]
      %v299 = vld [vmem:[%s242 + $0x28] sm:$0xf]
      %v300 = vld [vmem:[%s242 + $0x30] sm:$0xf]
      %v301 = vld [vmem:[%s242 + $0x38] sm:$0xf]
      %v302 = vld [vmem:[%s242 + $0x40] sm:$0xf]
      %v303 = vunpack.c.l.bf16 %v294
      %v304 = vunpack.c.l.bf16 %v295
      %v305 = vunpack.c.l.bf16 %v296
      %v306 = vunpack.c.l.bf16 %v297
      %v307 = vunpack.c.l.bf16 %v298
      %v308 = vunpack.c.l.bf16 %v299
      %v309 = vunpack.c.l.bf16 %v300
      %v310 = vunpack.c.l.bf16 %v301
      %v311 = vunpack.c.l.bf16 %v302
      %v312 = vld [vmem:[%s247] sm:$0xf]
      %v313 = vld [vmem:[%s247 + $0x4] sm:$0x1]
      %v314 = vld [vmem:[%s247 + $0x8] sm:$0xf]
      %v315 = vld [vmem:[%s247 + $0xc] sm:$0x1]
      %v316 = vld [vmem:[%s247 + $0x10] sm:$0xf]
      %v317 = vld [vmem:[%s247 + $0x14] sm:$0x1]
      %v318 = vld [vmem:[%s247 + $0x18] sm:$0xf]
      %v319 = vld [vmem:[%s247 + $0x1c] sm:$0x1]
      %v320 = vld [vmem:[%s247 + $0x20] sm:$0xf]
      %v321 = vld [vmem:[%s247 + $0x24] sm:$0x1]
      %v322 = vld [vmem:[%s247 + $0x28] sm:$0xf]
      %v323 = vld [vmem:[%s247 + $0x2c] sm:$0x1]
      %v324 = vld [vmem:[%s247 + $0x30] sm:$0xf]
      %v325 = vld [vmem:[%s247 + $0x34] sm:$0x1]
      %v326 = vld [vmem:[%s247 + $0x38] sm:$0xf]
      %v327 = vld [vmem:[%s247 + $0x3c] sm:$0x1]
      %v328 = vunpack.c.l.bf16 %v312
      %v329 = vunpack.c.l.bf16 %v313
      %v330 = vunpack.c.l.bf16 %v314
      %v331 = vunpack.c.l.bf16 %v315
      %v332 = vunpack.c.l.bf16 %v316
      %v333 = vunpack.c.l.bf16 %v317
      %v334 = vunpack.c.l.bf16 %v318
      %v335 = vunpack.c.l.bf16 %v319
      %v336 = vunpack.c.l.bf16 %v320
      %v337 = vunpack.c.l.bf16 %v321
      %v338 = vunpack.c.l.bf16 %v322
      %v339 = vunpack.c.l.bf16 %v323
      %v340 = vunpack.c.l.bf16 %v324
      %v341 = vunpack.c.l.bf16 %v325
      %v342 = vunpack.c.l.bf16 %v326
      %v343 = vunpack.c.l.bf16 %v327
      %v344 = vld [vmem:[%s252] sm:$0xf]
      %v345 = vld [vmem:[%s252 + $0x8] sm:$0xf]
      %v346 = vld [vmem:[%s252 + $0x10] sm:$0xf]
      %v347 = vld [vmem:[%s252 + $0x18] sm:$0xf]
      %v348 = vld [vmem:[%s252 + $0x20] sm:$0xf]
      %v349 = vld [vmem:[%s252 + $0x28] sm:$0xf]
      %v350 = vld [vmem:[%s252 + $0x30] sm:$0xf]
      %v351 = vld [vmem:[%s252 + $0x38] sm:$0xf]
      %v352 = vunpack.c.l.bf16 %v344
      %v353 = vunpack.c.l.bf16 %v345
      %v354 = vunpack.c.l.bf16 %v346
      %v355 = vunpack.c.l.bf16 %v347
      %v356 = vunpack.c.l.bf16 %v348
      %v357 = vunpack.c.l.bf16 %v349
      %v358 = vunpack.c.l.bf16 %v350
      %v359 = vunpack.c.l.bf16 %v351
      %v360 = vmax.f32 %v276, %v303
      %v361 = vmax.f32 %v278, %v304
      %v362 = vmax.f32 %v280, %v305
      %v363 = vmax.f32 %v282, %v306
      %v364 = vmax.f32 %v284, %v307
      %v365 = vmax.f32 %v286, %v308
      %v366 = vmax.f32 %v288, %v309
      %v367 = vmax.f32 %v290, %v310
      %vm384 = vcmask 1046528
      %v385 = vrot.slane %v276, 1
      %v386 = vrot.slane %v277, 1
      %v387 = vsel %vm384, %v385, %v386
      %v388 = vrot.slane %v278, 1
      %v389 = vrot.slane %v279, 1
      %v390 = vsel %vm384, %v388, %v389
      %v391 = vrot.slane %v280, 1
      %v392 = vrot.slane %v281, 1
      %v393 = vsel %vm384, %v391, %v392
      %v394 = vrot.slane %v282, 1
      %v395 = vrot.slane %v283, 1
      %v396 = vsel %vm384, %v394, %v395
      %v397 = vrot.slane %v284, 1
      %v398 = vrot.slane %v285, 1
      %v399 = vsel %vm384, %v397, %v398
      %v400 = vrot.slane %v286, 1
      %v401 = vrot.slane %v287, 1
      %v402 = vsel %vm384, %v400, %v401
      %v403 = vrot.slane %v288, 1
      %v404 = vrot.slane %v289, 1
      %v405 = vsel %vm384, %v403, %v404
      %v406 = vrot.slane %v290, 1
      %v407 = vrot.slane %v291, 1
      %v408 = vsel %vm384, %v406, %v407
      %v417 = vmax.f32 %v360, %v387
      %v418 = vmax.f32 %v361, %v390
      %v419 = vmax.f32 %v362, %v393
      %v420 = vmax.f32 %v363, %v396
      %v421 = vmax.f32 %v364, %v399
      %v422 = vmax.f32 %v365, %v402
      %v423 = vmax.f32 %v366, %v405
      %v424 = vmax.f32 %v367, %v408
      %v425 = vmax.f32 %v417, %v328
      %v426 = vmax.f32 %v418, %v330
      %v427 = vmax.f32 %v419, %v332
      %v428 = vmax.f32 %v420, %v334
      %v429 = vmax.f32 %v421, %v336
      %v430 = vmax.f32 %v422, %v338
      %v431 = vmax.f32 %v423, %v340
      %v432 = vmax.f32 %v424, %v342
      %v433 = vmax.f32 %v425, %v352
      %v434 = vmax.f32 %v426, %v353
      %v435 = vmax.f32 %v427, %v354
      %v436 = vmax.f32 %v428, %v355
      %v437 = vmax.f32 %v429, %v356
      %v438 = vmax.f32 %v430, %v357
      %v439 = vmax.f32 %v431, %v358
      %v440 = vmax.f32 %v432, %v359
      %v457 = vrot.slane %v328, 1
      %v458 = vrot.slane %v329, 1
      %v459 = vsel %vm384, %v457, %v458
      %v460 = vrot.slane %v330, 1
      %v461 = vrot.slane %v331, 1
      %v462 = vsel %vm384, %v460, %v461
      %v463 = vrot.slane %v332, 1
      %v464 = vrot.slane %v333, 1
      %v465 = vsel %vm384, %v463, %v464
      %v466 = vrot.slane %v334, 1
      %v467 = vrot.slane %v335, 1
      %v468 = vsel %vm384, %v466, %v467
      %v469 = vrot.slane %v336, 1
      %v470 = vrot.slane %v337, 1
      %v471 = vsel %vm384, %v469, %v470
      %v472 = vrot.slane %v338, 1
      %v473 = vrot.slane %v339, 1
      %v474 = vsel %vm384, %v472, %v473
      %v475 = vrot.slane %v340, 1
      %v476 = vrot.slane %v341, 1
      %v477 = vsel %vm384, %v475, %v476
      %v478 = vrot.slane %v342, 1
      %v479 = vrot.slane %v343, 1
      %v480 = vsel %vm384, %v478, %v479
      %v489 = vmax.f32 %v433, %v459
      %v490 = vmax.f32 %v434, %v462
      %v491 = vmax.f32 %v435, %v465
      %v492 = vmax.f32 %v436, %v468
      %v493 = vmax.f32 %v437, %v471
      %v494 = vmax.f32 %v438, %v474
      %v495 = vmax.f32 %v439, %v477
      %v496 = vmax.f32 %v440, %v480
      %v497 = vmax.f32 %v489, %v278
      %v498 = vmax.f32 %v490, %v280
      %v499 = vmax.f32 %v491, %v282
      %v500 = vmax.f32 %v492, %v284
      %v501 = vmax.f32 %v493, %v286
      %v502 = vmax.f32 %v494, %v288
      %v503 = vmax.f32 %v495, %v290
      %v504 = vmax.f32 %v496, %v292
      %v505 = vmax.f32 %v497, %v304
      %v506 = vmax.f32 %v498, %v305
      %v507 = vmax.f32 %v499, %v306
      %v508 = vmax.f32 %v500, %v307
      %v509 = vmax.f32 %v501, %v308
      %v510 = vmax.f32 %v502, %v309
      %v511 = vmax.f32 %v503, %v310
      %v512 = vmax.f32 %v504, %v311
      %v515 = vrot.slane %v292, 1
      %v516 = vrot.slane %v293, 1
      %v517 = vsel %vm384, %v515, %v516
      %v519 = vmax.f32 %v505, %v390
      %v520 = vmax.f32 %v506, %v393
      %v521 = vmax.f32 %v507, %v396
      %v522 = vmax.f32 %v508, %v399
      %v523 = vmax.f32 %v509, %v402
      %v524 = vmax.f32 %v510, %v405
      %v525 = vmax.f32 %v511, %v408
      %v526 = vmax.f32 %v512, %v517
      %v527 = vpack.c.bf16 %v519, %v519
      %v528 = vpack.c.bf16 %v520, %v520
      %v529 = vpack.c.bf16 %v521, %v521
      %v530 = vpack.c.bf16 %v522, %v522
      %v531 = vpack.c.bf16 %v523, %v523
      %v532 = vpack.c.bf16 %v524, %v524
      %v533 = vpack.c.bf16 %v525, %v525
      %v534 = vpack.c.bf16 %v526, %v526
      %vm535 = vcmask 60416
      %536 = vst.msk [vmem:[%s257] sm:$0xf] %vm535, %v527
      %537 = vst.msk [vmem:[%s257 + $0x4] sm:$0xf] %vm535, %v528
      %538 = vst.msk [vmem:[%s257 + $0x8] sm:$0xf] %vm535, %v529
      %539 = vst.msk [vmem:[%s257 + $0xc] sm:$0xf] %vm535, %v530
      %540 = vst.msk [vmem:[%s257 + $0x10] sm:$0xf] %vm535, %v531
      %541 = vst.msk [vmem:[%s257 + $0x14] sm:$0xf] %vm535, %v532
      %542 = vst.msk [vmem:[%s257 + $0x18] sm:$0xf] %vm535, %v533
      %543 = vst.msk [vmem:[%s257 + $0x1c] sm:$0xf] %vm535, %v534
      %p544 = scmp.lt.s32.totalorder %s15, 1
      %s545 = scalar_select %p544, %s15, 1
      %s546 = smul.addr %s545, 8
      %s547 = smul.addr %s546, 4
      %s548 = scalar_lea.vmem %s4, %s547
      // Predicated region
      $region37: #{shufflenet_v2_forward.29} parent=35 // pred_check
        %p549 = pneg %p137
      $region38: #{shufflenet_v2_forward.29} parent=35 // pred_check_branch
        %551 = sbr.rel (%p549) target = $region40
      $region39: #{shufflenet_v2_forward.29} parent=35 // pred_region
        _
      $region40: #{shufflenet_v2_forward.29} parent=35 // pred_fallthru
        _
    $region36: #{shufflenet_v2_forward.29} parent=5 // pred_fallthru
      _
    %p552 = scmp.le.s32.totalorder 2, %s10
    // Predicated region
    $region41: #{shufflenet_v2_forward.29} parent=5 // pred_check
      %p553 = pneg %p552
    $region42: #{shufflenet_v2_forward.29} parent=5 // pred_check_branch
      %555 = sbr.rel (%p553) target = $region44
    $region43: #{shufflenet_v2_forward.29} parent=5 // pred_region
      %s556 = ssub.s32 %s10, 2
      // Predicated region
      $region45: #{shufflenet_v2_forward.29} parent=43 // pred_check
        %p557 = pneg %p143
      $region46: #{shufflenet_v2_forward.29} parent=43 // pred_check_branch
        %559 = sbr.rel (%p557) target = $region48
      $region47: #{shufflenet_v2_forward.29} parent=43 // pred_region
        %p560 = scmp.lt.s32.totalorder %s16, 1
        %s561 = scalar_select %p560, %s16, 1
        %s562 = smul.addr %s561, 8
        %s563 = smul.addr %s562, 4
        %s564 = scalar_lea.vmem %s4, %s563
      $region48: #{shufflenet_v2_forward.29} parent=43 // pred_fallthru
        _
    $region44: #{shufflenet_v2_forward.29} parent=5 // pred_fallthru
      _
  $region6: #{shufflenet_v2_forward.29} parent=0 // loop_footer
    %s14 = sadd.s32 1, %s10
  $region7: #{shufflenet_v2_forward.29} parent=0 // loop_footer_branch
    %9 = sbr.rel target = $region3
  $region8: #{shufflenet_v2_forward.29} parent=0 // loop_exit
    _

// kernel: shufflenet_v2_forward.31
$region0: #{shufflenet_v2_forward.31}
  #allocation0 [shape = 'u32[]', space=smem, size = 0x4, offset = 0x4, fixed_abs, tag = 'smem constant byte address 0x4 - core index']
  #allocation1 [shape = 'u32[144,128]{1,0:T(1,128)}', space=vmem, size = 0x12000, scoped, tag = 'internal scratch']
  %s0 = inlined_call_operand.vmem [shape: bf16[32,8], index: 0, kind: input, shape index: {}]
  %s1 = inlined_call_operand.vmem [shape: bf16[8,8], index: 1, kind: input, shape index: {}]
  %s2 = inlined_call_operand.vmem [shape: f32[1,8], index: 2, kind: input, shape index: {}]
  %s3 = inlined_call_operand.vmem [shape: f32[1,8], index: 3, kind: input, shape index: {}]
  %s4 = inlined_call_operand.vmem [shape: bf16[32,8], index: 4, kind: output, shape index: {}]
  %s5 = sld [smem:[#allocation0]]
  $region26: #{shufflenet_v2_forward.31} parent=0
    _
  %s7 = ssub.s32 1, %s5
  %s8 = scalar_select 0, %s7, %s5
  // Predicated region
  $region2: #{shufflenet_v2_forward.31} parent=0 // pred_check
    _
  $region3: #{shufflenet_v2_forward.31} parent=0 // pred_check_branch
    %10 = sbr.rel (0) target = $region5
  $region4: #{shufflenet_v2_forward.31} parent=0 // pred_region
    _
  $region5: #{shufflenet_v2_forward.31} parent=0 // pred_fallthru
    _
  // Predicated region
  $region6: #{shufflenet_v2_forward.31} parent=0 // pred_check
    _
  $region7: #{shufflenet_v2_forward.31} parent=0 // pred_check_branch
    %12 = sbr.rel (0) target = $region9
  $region8: #{shufflenet_v2_forward.31} parent=0 // pred_region
    _
  $region9: #{shufflenet_v2_forward.31} parent=0 // pred_fallthru
    _
  // Predicated region
  $region10: #{shufflenet_v2_forward.31} parent=0 // pred_check
    _
  $region11: #{shufflenet_v2_forward.31} parent=0 // pred_check_branch
    %14 = sbr.rel (0) target = $region13
  $region12: #{shufflenet_v2_forward.31} parent=0 // pred_region
    _
  $region13: #{shufflenet_v2_forward.31} parent=0 // pred_fallthru
    _
  // Predicated region
  $region14: #{shufflenet_v2_forward.31} parent=0 // pred_check
    _
  $region15: #{shufflenet_v2_forward.31} parent=0 // pred_check_branch
    %16 = sbr.rel (0) target = $region17
  $region16: #{shufflenet_v2_forward.31} parent=0 // pred_region
    _
  $region17: #{shufflenet_v2_forward.31} parent=0 // pred_fallthru
    _
  %v18 = vld [vmem:[%s0] sm:$0xf]
  %v19 = vld [vmem:[%s0 + $0x4] sm:$0xf]
  %v20 = vld [vmem:[%s0 + $0x8] sm:$0xf]
  %v21 = vld [vmem:[%s0 + $0xc] sm:$0xf]
  %v22 = vld [vmem:[%s1] sm:$0xf]
  %v27 = vunpack.c.l.b16 %v18
  %v28 = vunpack.c.l.b16 %v19
  %v29 = vunpack.c.l.b16 %v20
  %v30 = vunpack.c.l.b16 %v21
  %v31 = vpack.c.b16 %v28, %v27
  %v32 = vpack.c.b16 %v30, %v29
  %vm33 = vcmask 64512
  %v35 = vsel %vm33, %v31, 0
  %v38 = vsel %vm33, %v32, 0
  %vm40 = vcmask 1043456
  %v42 = vsel %vm40, %v22, 0
  %44 = vmatprep.subr.bf16.mxu0 0
  %45 = vmatpush1.bf16.msra.mxu0 %v42
  %46 = vmatprep.subr.bf16.mxu0 0
  %47 = vmatpush1.bf16.msra.mxu0 0
  %48 = vmatprep.subr.bf16.mxu0 0
  %49 = vmatpush1.bf16.msra.mxu0 0
  %50 = vmatprep.subr.bf16.mxu0 0
  %51 = vmatpush1.bf16.msra.mxu0 0
  %52 = vmatprep.subr.bf16.mxu0 0
  %53 = vmatpush1.bf16.msra.mxu0 0
  %54 = vmatprep.subr.bf16.mxu0 0
  %55 = vmatpush1.bf16.msra.mxu0 0
  %56 = vmatprep.subr.bf16.mxu0 0
  %57 = vmatpush1.bf16.msra.mxu0 0
  %58 = vmatprep.subr.bf16.mxu0 0
  %59 = vmatpush1.bf16.msra.mxu0 0
  %60 = vmatprep.subr.bf16.mxu0 0
  %61 = vmatpush1.bf16.msra.mxu0 0
  %62 = vmatprep.subr.bf16.mxu0 0
  %63 = vmatpush1.bf16.msra.mxu0 0
  %64 = vmatprep.subr.bf16.mxu0 0
  %65 = vmatpush1.bf16.msra.mxu0 0
  %66 = vmatprep.subr.bf16.mxu0 0
  %67 = vmatpush1.bf16.msra.mxu0 0
  %68 = vmatprep.subr.bf16.mxu0 0
  %69 = vmatpush1.bf16.msra.mxu0 0
  %70 = vmatprep.subr.bf16.mxu0 0
  %71 = vmatpush1.bf16.msra.mxu0 0
  %72 = vmatprep.subr.bf16.mxu0 0
  %73 = vmatpush1.bf16.msra.mxu0 0
  %74 = vmatprep.subr.bf16.mxu0 0
  %75 = vmatpush1.bf16.msra.mxu0 0
  %76 = vmatprep.mubr.bf16.mxu0 0
  %77 = vmatmul.mubr.bf16.gmra.mrb[0].mxu0 %v35
  %v78 = vpop.f32.mrb[0].mxu0
  %v79 = vadd.f32 0.0, %v78
  %v80 = vpop.f32.mrb[0].mxu0
  %v81 = vpop.f32.mrb[0].mxu0
  %v82 = vadd.f32 0.0, %v81
  %v83 = vpop.f32.mrb[0].mxu0
  %84 = vmatprep.mubr.bf16.mxu0 0
  %85 = vmatmul.mubr.bf16.gmra.mrb[0].mxu0 %v38
  %v86 = vpop.f32.mrb[0].mxu0
  %v87 = vadd.f32 0.0, %v86
  %v88 = vpop.f32.mrb[0].mxu0
  %v89 = vpop.f32.mrb[0].mxu0
  %v90 = vadd.f32 0.0, %v89
  %v91 = vpop.f32.mrb[0].mxu0
  %92 = vdwg.mxu0
  %v93 = vld [vmem:[%s2] sm:$0x1]
  %v95 = vlaneseq
  %v96 = vshrl.u32 %v95, 7
  %v97 = vsub.s32 0, %v96
  %v98 = vrot.slane %v93, %v97
  %v100 = vmul.f32 %v79, %v98
  %v101 = vmul.f32 %v82, %v98
  %v102 = vmul.f32 %v87, %v98
  %v103 = vmul.f32 %v90, %v98
  %v104 = vld [vmem:[%s3] sm:$0x1]
  %v106 = vlaneseq
  %v107 = vshrl.u32 %v106, 7
  %v108 = vsub.s32 0, %v107
  %v109 = vrot.slane %v104, %v108
  %v111 = vadd.f32 %v100, %v109
  %v112 = vadd.f32 %v101, %v109
  %v113 = vadd.f32 %v102, %v109
  %v114 = vadd.f32 %v103, %v109
  %v115 = vmax.f32 %v111, 0.0
  %v116 = vmax.f32 %v112, 0.0
  %v117 = vmax.f32 %v113, 0.0
  %v118 = vmax.f32 %v114, 0.0
  %v119 = vpack.c.bf16 %v116, %v115
  %v120 = vpack.c.bf16 %v118, %v117
  %v123 = vunpack.c.l.b16 %v119
  %v124 = vunpack.c.h.b16 %v119
  %v125 = vunpack.c.l.b16 %v120
  %v126 = vunpack.c.h.b16 %v120
  %v127 = vpack.c.b16 %v123, %v123
  %v128 = vpack.c.b16 %v124, %v124
  %v129 = vpack.c.b16 %v125, %v125
  %v130 = vpack.c.b16 %v126, %v126
  %vm135 = vcmask 60416
  %136 = vst.msk [vmem:[%s4] sm:$0xf] %vm135, %v127
  %137 = vst.msk [vmem:[%s4 + $0x4] sm:$0xf] %vm135, %v128
  %138 = vst.msk [vmem:[%s4 + $0x8] sm:$0xf] %vm135, %v129
  %139 = vst.msk [vmem:[%s4 + $0xc] sm:$0xf] %vm135, %v130
  // Predicated region
  $region18: #{shufflenet_v2_forward.31} parent=0 // pred_check
    _
  $region19: #{shufflenet_v2_forward.31} parent=0 // pred_check_branch
    %141 = sbr.rel (0) target = $region21
  $region20: #{shufflenet_v2_forward.31} parent=0 // pred_region
    _
  $region21: #{shufflenet_v2_forward.31} parent=0 // pred_fallthru
    _
  // Predicated region
  $region22: #{shufflenet_v2_forward.31} parent=0 // pred_check
    _
  $region23: #{shufflenet_v2_forward.31} parent=0 // pred_check_branch
    %143 = sbr.rel (0) target = $region25
  $region24: #{shufflenet_v2_forward.31} parent=0 // pred_region
    _
  $region25: #{shufflenet_v2_forward.31} parent=0 // pred_fallthru
    _

// kernel: shufflenet_v2_forward.32
$region0: #{shufflenet_v2_forward.32}
  #allocation0 [shape = 'u32[]', space=smem, size = 0x4, offset = 0x4, fixed_abs, tag = 'smem constant byte address 0x4 - core index']
  #allocation1 [shape = 'u32[144,128]{1,0:T(1,128)}', space=vmem, size = 0x12000, scoped, tag = 'internal scratch']
  %s0 = inlined_call_operand.vmem [shape: bf16[128,8], index: 0, kind: input, shape index: {}]
  %s1 = inlined_call_operand.vmem [shape: bf16[8,8], index: 1, kind: input, shape index: {}]
  %s2 = inlined_call_operand.vmem [shape: f32[1,8], index: 2, kind: input, shape index: {}]
  %s3 = inlined_call_operand.vmem [shape: f32[1,8], index: 3, kind: input, shape index: {}]
  %s4 = inlined_call_operand.vmem [shape: bf16[128,8], index: 4, kind: output, shape index: {}]
  %s5 = sld [smem:[#allocation0]]
  $region26: #{shufflenet_v2_forward.32} parent=0
    _
  %s7 = ssub.s32 1, %s5
  %s8 = scalar_select 0, %s7, %s5
  // Predicated region
  $region2: #{shufflenet_v2_forward.32} parent=0 // pred_check
    _
  $region3: #{shufflenet_v2_forward.32} parent=0 // pred_check_branch
    %10 = sbr.rel (0) target = $region5
  $region4: #{shufflenet_v2_forward.32} parent=0 // pred_region
    _
  $region5: #{shufflenet_v2_forward.32} parent=0 // pred_fallthru
    _
  // Predicated region
  $region6: #{shufflenet_v2_forward.32} parent=0 // pred_check
    _
  $region7: #{shufflenet_v2_forward.32} parent=0 // pred_check_branch
    %12 = sbr.rel (0) target = $region9
  $region8: #{shufflenet_v2_forward.32} parent=0 // pred_region
    _
  $region9: #{shufflenet_v2_forward.32} parent=0 // pred_fallthru
    _
  // Predicated region
  $region10: #{shufflenet_v2_forward.32} parent=0 // pred_check
    _
  $region11: #{shufflenet_v2_forward.32} parent=0 // pred_check_branch
    %14 = sbr.rel (0) target = $region13
  $region12: #{shufflenet_v2_forward.32} parent=0 // pred_region
    _
  $region13: #{shufflenet_v2_forward.32} parent=0 // pred_fallthru
    _
  // Predicated region
  $region14: #{shufflenet_v2_forward.32} parent=0 // pred_check
    _
  $region15: #{shufflenet_v2_forward.32} parent=0 // pred_check_branch
    %16 = sbr.rel (0) target = $region17
  $region16: #{shufflenet_v2_forward.32} parent=0 // pred_region
    _
  $region17: #{shufflenet_v2_forward.32} parent=0 // pred_fallthru
    _
  %v18 = vld [vmem:[%s0] sm:$0xf]
  %v19 = vld [vmem:[%s0 + $0x4] sm:$0xf]
  %v20 = vld [vmem:[%s0 + $0x8] sm:$0xf]
  %v21 = vld [vmem:[%s0 + $0xc] sm:$0xf]
  %v22 = vld [vmem:[%s0 + $0x10] sm:$0xf]
  %v23 = vld [vmem:[%s0 + $0x14] sm:$0xf]
  %v24 = vld [vmem:[%s0 + $0x18] sm:$0xf]
  %v25 = vld [vmem:[%s0 + $0x1c] sm:$0xf]
  %v26 = vld [vmem:[%s0 + $0x20] sm:$0xf]
  %v27 = vld [vmem:[%s0 + $0x24] sm:$0xf]
  %v28 = vld [vmem:[%s0 + $0x28] sm:$0xf]
  %v29 = vld [vmem:[%s0 + $0x2c] sm:$0xf]
  %v30 = vld [vmem:[%s0 + $0x30] sm:$0xf]
  %v31 = vld [vmem:[%s0 + $0x34] sm:$0xf]
  %v32 = vld [vmem:[%s0 + $0x38] sm:$0xf]
  %v33 = vld [vmem:[%s0 + $0x3c] sm:$0xf]
  %v34 = vld [vmem:[%s1] sm:$0xf]
  %v51 = vunpack.c.l.b16 %v18
  %v52 = vunpack.c.l.b16 %v19
  %v53 = vunpack.c.l.b16 %v20
  %v54 = vunpack.c.l.b16 %v21
  %v55 = vunpack.c.l.b16 %v22
  %v56 = vunpack.c.l.b16 %v23
  %v57 = vunpack.c.l.b16 %v24
  %v58 = vunpack.c.l.b16 %v25
  %v59 = vunpack.c.l.b16 %v26
  %v60 = vunpack.c.l.b16 %v27
  %v61 = vunpack.c.l.b16 %v28
  %v62 = vunpack.c.l.b16 %v29
  %v63 = vunpack.c.l.b16 %v30
  %v64 = vunpack.c.l.b16 %v31
  %v65 = vunpack.c.l.b16 %v32
  %v66 = vunpack.c.l.b16 %v33
  %v67 = vpack.c.b16 %v52, %v51
  %v68 = vpack.c.b16 %v54, %v53
  %v69 = vpack.c.b16 %v56, %v55
  %v70 = vpack.c.b16 %v58, %v57
  %v71 = vpack.c.b16 %v60, %v59
  %v72 = vpack.c.b16 %v62, %v61
  %v73 = vpack.c.b16 %v64, %v63
  %v74 = vpack.c.b16 %v66, %v65
  %vm75 = vcmask 64512
  %v77 = vsel %vm75, %v67, 0
  %v80 = vsel %vm75, %v68, 0
  %v83 = vsel %vm75, %v69, 0
  %v86 = vsel %vm75, %v70, 0
  %v89 = vsel %vm75, %v71, 0
  %v92 = vsel %vm75, %v72, 0
  %v95 = vsel %vm75, %v73, 0
  %v98 = vsel %vm75, %v74, 0
  %vm100 = vcmask 1043456
  %v102 = vsel %vm100, %v34, 0
  %104 = vmatprep.subr.bf16.mxu0 0
  %105 = vmatpush1.bf16.msra.mxu0 %v102
  %106 = vmatprep.subr.bf16.mxu0 0
  %107 = vmatpush1.bf16.msra.mxu0 0
  %108 = vmatprep.subr.bf16.mxu0 0
  %109 = vmatpush1.bf16.msra.mxu0 0
  %110 = vmatprep.subr.bf16.mxu0 0
  %111 = vmatpush1.bf16.msra.mxu0 0
  %112 = vmatprep.subr.bf16.mxu0 0
  %113 = vmatpush1.bf16.msra.mxu0 0
  %114 = vmatprep.subr.bf16.mxu0 0
  %115 = vmatpush1.bf16.msra.mxu0 0
  %116 = vmatprep.subr.bf16.mxu0 0
  %117 = vmatpush1.bf16.msra.mxu0 0
  %118 = vmatprep.subr.bf16.mxu0 0
  %119 = vmatpush1.bf16.msra.mxu0 0
  %120 = vmatprep.subr.bf16.mxu0 0
  %121 = vmatpush1.bf16.msra.mxu0 0
  %122 = vmatprep.subr.bf16.mxu0 0
  %123 = vmatpush1.bf16.msra.mxu0 0
  %124 = vmatprep.subr.bf16.mxu0 0
  %125 = vmatpush1.bf16.msra.mxu0 0
  %126 = vmatprep.subr.bf16.mxu0 0
  %127 = vmatpush1.bf16.msra.mxu0 0
  %128 = vmatprep.subr.bf16.mxu0 0
  %129 = vmatpush1.bf16.msra.mxu0 0
  %130 = vmatprep.subr.bf16.mxu0 0
  %131 = vmatpush1.bf16.msra.mxu0 0
  %132 = vmatprep.subr.bf16.mxu0 0
  %133 = vmatpush1.bf16.msra.mxu0 0
  %134 = vmatprep.subr.bf16.mxu0 0
  %135 = vmatpush1.bf16.msra.mxu0 0
  %136 = vmatprep.mubr.bf16.mxu0 0
  %137 = vmatmul.mubr.bf16.gmra.mrb[0].mxu0 %v77
  %v138 = vpop.f32.mrb[0].mxu0
  %v139 = vadd.f32 0.0, %v138
  %v140 = vpop.f32.mrb[0].mxu0
  %v141 = vpop.f32.mrb[0].mxu0
  %v142 = vadd.f32 0.0, %v141
  %v143 = vpop.f32.mrb[0].mxu0
  %144 = vmatprep.mubr.bf16.mxu0 0
  %145 = vmatmul.mubr.bf16.gmra.mrb[0].mxu0 %v80
  %v146 = vpop.f32.mrb[0].mxu0
  %v147 = vadd.f32 0.0, %v146
  %v148 = vpop.f32.mrb[0].mxu0
  %v149 = vpop.f32.mrb[0].mxu0
  %v150 = vadd.f32 0.0, %v149
  %v151 = vpop.f32.mrb[0].mxu0
  %152 = vmatprep.mubr.bf16.mxu0 0
  %153 = vmatmul.mubr.bf16.gmra.mrb[0].mxu0 %v83
  %v154 = vpop.f32.mrb[0].mxu0
  %v155 = vadd.f32 0.0, %v154
  %v156 = vpop.f32.mrb[0].mxu0
  %v157 = vpop.f32.mrb[0].mxu0
  %v158 = vadd.f32 0.0, %v157
  %v159 = vpop.f32.mrb[0].mxu0
  %160 = vmatprep.mubr.bf16.mxu0 0
  %161 = vmatmul.mubr.bf16.gmra.mrb[0].mxu0 %v86
  %v162 = vpop.f32.mrb[0].mxu0
  %v163 = vadd.f32 0.0, %v162
  %v164 = vpop.f32.mrb[0].mxu0
  %v165 = vpop.f32.mrb[0].mxu0
  %v166 = vadd.f32 0.0, %v165
  %v167 = vpop.f32.mrb[0].mxu0
  %168 = vmatprep.mubr.bf16.mxu0 0
  %169 = vmatmul.mubr.bf16.gmra.mrb[0].mxu0 %v89
  %v170 = vpop.f32.mrb[0].mxu0
  %v171 = vadd.f32 0.0, %v170
  %v172 = vpop.f32.mrb[0].mxu0
  %v173 = vpop.f32.mrb[0].mxu0
  %v174 = vadd.f32 0.0, %v173
  %v175 = vpop.f32.mrb[0].mxu0
  %176 = vmatprep.mubr.bf16.mxu0 0
  %177 = vmatmul.mubr.bf16.gmra.mrb[0].mxu0 %v92
  %v178 = vpop.f32.mrb[0].mxu0
  %v179 = vadd.f32 0.0, %v178
  %v180 = vpop.f32.mrb[0].mxu0
  %v181 = vpop.f32.mrb[0].mxu0
  %v182 = vadd.f32 0.0, %v181
  %v183 = vpop.f32.mrb[0].mxu0
  %184 = vmatprep.mubr.bf16.mxu0 0
  %185 = vmatmul.mubr.bf16.gmra.mrb[0].mxu0 %v95
  %v186 = vpop.f32.mrb[0].mxu0
  %v187 = vadd.f32 0.0, %v186
  %v188 = vpop.f32.mrb[0].mxu0
  %v189 = vpop.f32.mrb[0].mxu0
  %v190 = vadd.f32 0.0, %v189
  %v191 = vpop.f32.mrb[0].mxu0
  %192 = vmatprep.mubr.bf16.mxu0 0
  %193 = vmatmul.mubr.bf16.gmra.mrb[0].mxu0 %v98
  %v194 = vpop.f32.mrb[0].mxu0
  %v195 = vadd.f32 0.0, %v194
  %v196 = vpop.f32.mrb[0].mxu0
  %v197 = vpop.f32.mrb[0].mxu0
  %v198 = vadd.f32 0.0, %v197
  %v199 = vpop.f32.mrb[0].mxu0
  %200 = vdwg.mxu0
  %v201 = vld [vmem:[%s2] sm:$0x1]
  %v203 = vlaneseq
  %v204 = vshrl.u32 %v203, 7
  %v205 = vsub.s32 0, %v204
  %v206 = vrot.slane %v201, %v205
  %v208 = vmul.f32 %v139, %v206
  %v209 = vmul.f32 %v142, %v206
  %v210 = vmul.f32 %v147, %v206
  %v211 = vmul.f32 %v150, %v206
  %v212 = vmul.f32 %v155, %v206
  %v213 = vmul.f32 %v158, %v206
  %v214 = vmul.f32 %v163, %v206
  %v215 = vmul.f32 %v166, %v206
  %v216 = vmul.f32 %v171, %v206
  %v217 = vmul.f32 %v174, %v206
  %v218 = vmul.f32 %v179, %v206
  %v219 = vmul.f32 %v182, %v206
  %v220 = vmul.f32 %v187, %v206
  %v221 = vmul.f32 %v190, %v206
  %v222 = vmul.f32 %v195, %v206
  %v223 = vmul.f32 %v198, %v206
  %v224 = vld [vmem:[%s3] sm:$0x1]
  %v226 = vlaneseq
  %v227 = vshrl.u32 %v226, 7
  %v228 = vsub.s32 0, %v227
  %v229 = vrot.slane %v224, %v228
  %v231 = vadd.f32 %v208, %v229
  %v232 = vadd.f32 %v209, %v229
  %v233 = vadd.f32 %v210, %v229
  %v234 = vadd.f32 %v211, %v229
  %v235 = vadd.f32 %v212, %v229
  %v236 = vadd.f32 %v213, %v229
  %v237 = vadd.f32 %v214, %v229
  %v238 = vadd.f32 %v215, %v229
  %v239 = vadd.f32 %v216, %v229
  %v240 = vadd.f32 %v217, %v229
  %v241 = vadd.f32 %v218, %v229
  %v242 = vadd.f32 %v219, %v229
  %v243 = vadd.f32 %v220, %v229
  %v244 = vadd.f32 %v221, %v229
  %v245 = vadd.f32 %v222, %v229
  %v246 = vadd.f32 %v223, %v229
  %v247 = vmax.f32 %v231, 0.0
  %v248 = vmax.f32 %v232, 0.0
  %v249 = vmax.f32 %v233, 0.0
  %v250 = vmax.f32 %v234, 0.0
  %v251 = vmax.f32 %v235, 0.0
  %v252 = vmax.f32 %v236, 0.0
  %v253 = vmax.f32 %v237, 0.0
  %v254 = vmax.f32 %v238, 0.0
  %v255 = vmax.f32 %v239, 0.0
  %v256 = vmax.f32 %v240, 0.0
  %v257 = vmax.f32 %v241, 0.0
  %v258 = vmax.f32 %v242, 0.0
  %v259 = vmax.f32 %v243, 0.0
  %v260 = vmax.f32 %v244, 0.0
  %v261 = vmax.f32 %v245, 0.0
  %v262 = vmax.f32 %v246, 0.0
  %v263 = vpack.c.bf16 %v248, %v247
  %v264 = vpack.c.bf16 %v250, %v249
  %v265 = vpack.c.bf16 %v252, %v251
  %v266 = vpack.c.bf16 %v254, %v253
  %v267 = vpack.c.bf16 %v256, %v255
  %v268 = vpack.c.bf16 %v258, %v257
  %v269 = vpack.c.bf16 %v260, %v259
  %v270 = vpack.c.bf16 %v262, %v261
  %v279 = vunpack.c.l.b16 %v263
  %v280 = vunpack.c.h.b16 %v263
  %v281 = vunpack.c.l.b16 %v264
  %v282 = vunpack.c.h.b16 %v264
  %v283 = vunpack.c.l.b16 %v265
  %v284 = vunpack.c.h.b16 %v265
  %v285 = vunpack.c.l.b16 %v266
  %v286 = vunpack.c.h.b16 %v266
  %v287 = vunpack.c.l.b16 %v267
  %v288 = vunpack.c.h.b16 %v267
  %v289 = vunpack.c.l.b16 %v268
  %v290 = vunpack.c.h.b16 %v268
  %v291 = vunpack.c.l.b16 %v269
  %v292 = vunpack.c.h.b16 %v269
  %v293 = vunpack.c.l.b16 %v270
  %v294 = vunpack.c.h.b16 %v270
  %v295 = vpack.c.b16 %v279, %v279
  %v296 = vpack.c.b16 %v280, %v280
  %v297 = vpack.c.b16 %v281, %v281
  %v298 = vpack.c.b16 %v282, %v282
  %v299 = vpack.c.b16 %v283, %v283
  %v300 = vpack.c.b16 %v284, %v284
  %v301 = vpack.c.b16 %v285, %v285
  %v302 = vpack.c.b16 %v286, %v286
  %v303 = vpack.c.b16 %v287, %v287
  %v304 = vpack.c.b16 %v288, %v288
  %v305 = vpack.c.b16 %v289, %v289
  %v306 = vpack.c.b16 %v290, %v290
  %v307 = vpack.c.b16 %v291, %v291
  %v308 = vpack.c.b16 %v292, %v292
  %v309 = vpack.c.b16 %v293, %v293
  %v310 = vpack.c.b16 %v294, %v294
  %vm327 = vcmask 60416
  %328 = vst.msk [vmem:[%s4] sm:$0xf] %vm327, %v295
  %329 = vst.msk [vmem:[%s4 + $0x4] sm:$0xf] %vm327, %v296
  %330 = vst.msk [vmem:[%s4 + $0x8] sm:$0xf] %vm327, %v297
  %331 = vst.msk [vmem:[%s4 + $0xc] sm:$0xf] %vm327, %v298
  %332 = vst.msk [vmem:[%s4 + $0x10] sm:$0xf] %vm327, %v299
  %333 = vst.msk [vmem:[%s4 + $0x14] sm:$0xf] %vm327, %v300
  %334 = vst.msk [vmem:[%s4 + $0x18] sm:$0xf] %vm327, %v301
  %335 = vst.msk [vmem:[%s4 + $0x1c] sm:$0xf] %vm327, %v302
  %336 = vst.msk [vmem:[%s4 + $0x20] sm:$0xf] %vm327, %v303
  %337 = vst.msk [vmem:[%s4 + $0x24] sm:$0xf] %vm327, %v304
  %338 = vst.msk [vmem:[%s4 + $0x28] sm:$0xf] %vm327, %v305
  %339 = vst.msk [vmem:[%s4 + $0x2c] sm:$0xf] %vm327, %v306
  %340 = vst.msk [vmem:[%s4 + $0x30] sm:$0xf] %vm327, %v307
  %341 = vst.msk [vmem:[%s4 + $0x34] sm:$0xf] %vm327, %v308
  %342 = vst.msk [vmem:[%s4 + $0x38] sm:$0xf] %vm327, %v309
  %343 = vst.msk [vmem:[%s4 + $0x3c] sm:$0xf] %vm327, %v310
  // Predicated region
  $region18: #{shufflenet_v2_forward.32} parent=0 // pred_check
    _
  $region19: #{shufflenet_v2_forward.32} parent=0 // pred_check_branch
    %345 = sbr.rel (0) target = $region21
  $region20: #{shufflenet_v2_forward.32} parent=0 // pred_region
    _
  $region21: #{shufflenet_v2_forward.32} parent=0 // pred_fallthru
    _
  // Predicated region
  $region22: #{shufflenet_v2_forward.32} parent=0 // pred_check
    _
  $region23: #{shufflenet_v2_forward.32} parent=0 // pred_check_branch
    %347 = sbr.rel (0) target = $region25
  $region24: #{shufflenet_v2_forward.32} parent=0 // pred_region
    _
  $region25: #{shufflenet_v2_forward.32} parent=0 // pred_fallthru
    _

// kernel: shufflenet_v2_forward.30
$region0: #{shufflenet_v2_forward.30}
  #allocation0 [shape = 'u32[]', space=smem, size = 0x4, offset = 0x4, fixed_abs, tag = 'smem constant byte address 0x4 - core index']
  #allocation1 [shape = 'u32[144,128]{1,0:T(1,128)}', space=vmem, size = 0x12000, scoped, tag = 'internal scratch']
  %s0 = inlined_call_operand.vmem [shape: bf16[2,5,5,8], index: 0, kind: input, shape index: {}]
  %s1 = inlined_call_operand.vmem [shape: bf16[2,5,5,8], index: 1, kind: input, shape index: {}]
  %s2 = inlined_call_operand.vmem [shape: bf16[2,5,5,8], index: 2, kind: input, shape index: {}]
  %s3 = inlined_call_operand.vmem [shape: bf16[2,5,5,8], index: 3, kind: input, shape index: {}]
  %s4 = inlined_call_operand.vmem [shape: f32[9,1,1,8], index: 4, kind: input, shape index: {}]
  %s5 = inlined_call_operand.vmem [shape: f32[1,1,1,8], index: 5, kind: input, shape index: {}]
  %s6 = inlined_call_operand.vmem [shape: f32[1,1,1,8], index: 6, kind: input, shape index: {}]
  %s7 = inlined_call_operand.vmem [shape: bf16[2,4,4,8], index: 7, kind: output, shape index: {}]
  %s8 = sld [smem:[#allocation0]]
  $region61: #{shufflenet_v2_forward.30} parent=0
    _
  %s10 = ssub.s32 1, %s8
  %s11 = scalar_select 0, %s10, %s8
  loop: start=0, step=1, limit=4
  $region2: #{shufflenet_v2_forward.30} parent=0 // loop_pre_header
    _
  $region3: #{shufflenet_v2_forward.30} parent=0 // loop_header
    %s13 = sphi 0, %s17
    %p14 = scmp.ge.s32.totalorder %s13, 4
    %s23 = sphi 0, %s25
    %s26 = sphi 0, %s23
    %s27 = sphi 0, %s26
    %s43 = sphi 0, %s27
    %s49 = sphi 0, %s51
    %s52 = sphi 0, %s49
    %s53 = sphi 0, %s52
    %s69 = sphi 0, %s53
    %s75 = sphi 0, %s77
    %s78 = sphi 0, %s75
    %s79 = sphi 0, %s78
    %s95 = sphi 0, %s79
    %s101 = sphi 0, %s103
    %s104 = sphi 0, %s101
    %s105 = sphi 0, %s104
    %s121 = sphi 0, %s105
    %s125 = sphi 0, %s125
    %s127 = sphi 0, %s125
    %s128 = sphi 0, %s127
    %s142 = sphi 0, %s128
    %s146 = sphi 0, %s146
    %s148 = sphi 0, %s146
    %s149 = sphi 0, %s148
    %s163 = sphi 0, %s149
    %s167 = sphi 0, %s167
    %s169 = sphi 0, %s167
    %s170 = sphi 0, %s169
    %s184 = sphi 0, %s170
    %s190 = sphi 0, %s192
    %s193 = sphi 0, %s190
    %s194 = sphi 0, %s193
    %s210 = sphi 0, %s194
  $region4: #{shufflenet_v2_forward.30} parent=0 // loop_header_branch
    %16 = sbr.rel (%p14) target = $region8
  $region5: #{shufflenet_v2_forward.30} parent=0 // loop_body
    %s18 = ssub.s32 %s13, 1
    %s19 = ssub.s32 %s13, 2
    %s20 = sadd.s32 %s13, 1
    %s21 = ssub.s32 %s13, %s20
    %p22 = scmp.eq.s32.totalorder %s21, 0
    %s24 = sadd.s32 %s23, 1
    %s25 = scalar_select %p22, %s23, %s24
    %p28 = pneg %p22
    %p29 = scmp.eq.s32.totalorder %s13, 1
    %p30 = por %p28, %p29
    %p31 = scmp.ne.s32.totalorder %s23, %s26
    %p32 = scmp.eq.s32.totalorder %s13, 0
    %p33 = por %p31, %p32
    %p34 = scmp.ne.s32.totalorder %s23, %s26
    %p35 = scmp.eq.s32.totalorder %s18, 1
    %p36 = por %p34, %p35
    %p37 = scmp.ne.s32.totalorder %s26, %s27
    %p38 = scmp.eq.s32.totalorder %s18, 0
    %p39 = por %p37, %p38
    %p40 = scmp.ne.s32.totalorder %s26, %s27
    %p41 = scmp.eq.s32.totalorder %s19, 1
    %p42 = por %p40, %p41
    %p44 = scmp.ne.s32.totalorder %s27, %s43
    %p45 = scmp.eq.s32.totalorder %s19, 0
    %p46 = por %p44, %p45
    %s47 = ssub.s32 %s13, %s20
    %p48 = scmp.eq.s32.totalorder %s47, 0
    %s50 = sadd.s32 %s49, 1
    %s51 = scalar_select %p48, %s49, %s50
    %p54 = pneg %p48
    %p55 = scmp.eq.s32.totalorder %s13, 1
    %p56 = por %p54, %p55
    %p57 = scmp.ne.s32.totalorder %s49, %s52
    %p58 = scmp.eq.s32.totalorder %s13, 0
    %p59 = por %p57, %p58
    %p60 = scmp.ne.s32.totalorder %s49, %s52
    %p61 = scmp.eq.s32.totalorder %s18, 1
    %p62 = por %p60, %p61
    %p63 = scmp.ne.s32.totalorder %s52, %s53
    %p64 = scmp.eq.s32.totalorder %s18, 0
    %p65 = por %p63, %p64
    %p66 = scmp.ne.s32.totalorder %s52, %s53
    %p67 = scmp.eq.s32.totalorder %s19, 1
    %p68 = por %p66, %p67
    %p70 = scmp.ne.s32.totalorder %s53, %s69
    %p71 = scmp.eq.s32.totalorder %s19, 0
    %p72 = por %p70, %p71
    %s73 = ssub.s32 %s13, %s20
    %p74 = scmp.eq.s32.totalorder %s73, 0
    %s76 = sadd.s32 %s75, 1
    %s77 = scalar_select %p74, %s75, %s76
    %p80 = pneg %p74
    %p81 = scmp.eq.s32.totalorder %s13, 1
    %p82 = por %p80, %p81
    %p83 = scmp.ne.s32.totalorder %s75, %s78
    %p84 = scmp.eq.s32.totalorder %s13, 0
    %p85 = por %p83, %p84
    %p86 = scmp.ne.s32.totalorder %s75, %s78
    %p87 = scmp.eq.s32.totalorder %s18, 1
    %p88 = por %p86, %p87
    %p89 = scmp.ne.s32.totalorder %s78, %s79
    %p90 = scmp.eq.s32.totalorder %s18, 0
    %p91 = por %p89, %p90
    %p92 = scmp.ne.s32.totalorder %s78, %s79
    %p93 = scmp.eq.s32.totalorder %s19, 1
    %p94 = por %p92, %p93
    %p96 = scmp.ne.s32.totalorder %s79, %s95
    %p97 = scmp.eq.s32.totalorder %s19, 0
    %p98 = por %p96, %p97
    %s99 = ssub.s32 %s13, %s20
    %p100 = scmp.eq.s32.totalorder %s99, 0
    %s102 = sadd.s32 %s101, 1
    %s103 = scalar_select %p100, %s101, %s102
    %p106 = pneg %p100
    %p107 = scmp.eq.s32.totalorder %s13, 1
    %p108 = por %p106, %p107
    %p109 = scmp.ne.s32.totalorder %s101, %s104
    %p110 = scmp.eq.s32.totalorder %s13, 0
    %p111 = por %p109, %p110
    %p112 = scmp.ne.s32.totalorder %s101, %s104
    %p113 = scmp.eq.s32.totalorder %s18, 1
    %p114 = por %p112, %p113
    %p115 = scmp.ne.s32.totalorder %s104, %s105
    %p116 = scmp.eq.s32.totalorder %s18, 0
    %p117 = por %p115, %p116
    %p118 = scmp.ne.s32.totalorder %s104, %s105
    %p119 = scmp.eq.s32.totalorder %s19, 1
    %p120 = por %p118, %p119
    %p122 = scmp.ne.s32.totalorder %s105, %s121
    %p123 = scmp.eq.s32.totalorder %s19, 0
    %p124 = por %p122, %p123
    %s126 = sadd.s32 %s125, 1
    %p129 = scmp.eq.s32.totalorder %s13, 1
    %p130 = scmp.ne.s32.totalorder %s125, %s127
    %p131 = scmp.eq.s32.totalorder %s13, 0
    %p132 = por %p130, %p131
    %p133 = scmp.ne.s32.totalorder %s125, %s127
    %p134 = scmp.eq.s32.totalorder %s18, 1
    %p135 = por %p133, %p134
    %p136 = scmp.ne.s32.totalorder %s127, %s128
    %p137 = scmp.eq.s32.totalorder %s18, 0
    %p138 = por %p136, %p137
    %p139 = scmp.ne.s32.totalorder %s127, %s128
    %p140 = scmp.eq.s32.totalorder %s19, 1
    %p141 = por %p139, %p140
    %p143 = scmp.ne.s32.totalorder %s128, %s142
    %p144 = scmp.eq.s32.totalorder %s19, 0
    %p145 = por %p143, %p144
    %s147 = sadd.s32 %s146, 1
    %p150 = scmp.eq.s32.totalorder %s13, 1
    %p151 = scmp.ne.s32.totalorder %s146, %s148
    %p152 = scmp.eq.s32.totalorder %s13, 0
    %p153 = por %p151, %p152
    %p154 = scmp.ne.s32.totalorder %s146, %s148
    %p155 = scmp.eq.s32.totalorder %s18, 1
    %p156 = por %p154, %p155
    %p157 = scmp.ne.s32.totalorder %s148, %s149
    %p158 = scmp.eq.s32.totalorder %s18, 0
    %p159 = por %p157, %p158
    %p160 = scmp.ne.s32.totalorder %s148, %s149
    %p161 = scmp.eq.s32.totalorder %s19, 1
    %p162 = por %p160, %p161
    %p164 = scmp.ne.s32.totalorder %s149, %s163
    %p165 = scmp.eq.s32.totalorder %s19, 0
    %p166 = por %p164, %p165
    %s168 = sadd.s32 %s167, 1
    %p171 = scmp.eq.s32.totalorder %s13, 1
    %p172 = scmp.ne.s32.totalorder %s167, %s169
    %p173 = scmp.eq.s32.totalorder %s13, 0
    %p174 = por %p172, %p173
    %p175 = scmp.ne.s32.totalorder %s167, %s169
    %p176 = scmp.eq.s32.totalorder %s18, 1
    %p177 = por %p175, %p176
    %p178 = scmp.ne.s32.totalorder %s169, %s170
    %p179 = scmp.eq.s32.totalorder %s18, 0
    %p180 = por %p178, %p179
    %p181 = scmp.ne.s32.totalorder %s169, %s170
    %p182 = scmp.eq.s32.totalorder %s19, 1
    %p183 = por %p181, %p182
    %p185 = scmp.ne.s32.totalorder %s170, %s184
    %p186 = scmp.eq.s32.totalorder %s19, 0
    %p187 = por %p185, %p186
    %s188 = ssub.s32 %s13, %s20
    %p189 = scmp.eq.s32.totalorder %s188, 0
    %s191 = sadd.s32 %s190, 1
    %s192 = scalar_select %p189, %s190, %s191
    %p195 = pneg %p189
    %p196 = scmp.eq.s32.totalorder %s13, 1
    %p197 = por %p195, %p196
    %p198 = scmp.ne.s32.totalorder %s190, %s193
    %p199 = scmp.eq.s32.totalorder %s13, 0
    %p200 = por %p198, %p199
    %p201 = scmp.ne.s32.totalorder %s190, %s193
    %p202 = scmp.eq.s32.totalorder %s18, 1
    %p203 = por %p201, %p202
    %p204 = scmp.ne.s32.totalorder %s193, %s194
    %p205 = scmp.eq.s32.totalorder %s18, 0
    %p206 = por %p204, %p205
    %p207 = scmp.ne.s32.totalorder %s193, %s194
    %p208 = scmp.eq.s32.totalorder %s19, 1
    %p209 = por %p207, %p208
    %p211 = scmp.ne.s32.totalorder %s194, %s210
    %p212 = scmp.eq.s32.totalorder %s19, 0
    %p213 = por %p211, %p212
    %p214 = scmp.le.s32.totalorder 1, %s13
    %p215 = scmp.lt.s32.totalorder %s13, 3
    %p216 = pnand %p214, %p215
    %p217 = pneg %p216
    // Predicated region
    $region9: #{shufflenet_v2_forward.30} parent=5 // pred_check
      _
    $region10: #{shufflenet_v2_forward.30} parent=5 // pred_check_branch
      %219 = sbr.rel (%p216) target = $region12
    $region11: #{shufflenet_v2_forward.30} parent=5 // pred_region
      %s220 = ssub.s32 %s13, 1
      // Predicated region
      $region13: #{shufflenet_v2_forward.30} parent=11 // pred_check
        %p221 = pneg %p138
      $region14: #{shufflenet_v2_forward.30} parent=11 // pred_check_branch
        %223 = sbr.rel (%p221) target = $region16
      $region15: #{shufflenet_v2_forward.30} parent=11 // pred_region
        _
      $region16: #{shufflenet_v2_forward.30} parent=11 // pred_fallthru
        _
      // Predicated region
      $region17: #{shufflenet_v2_forward.30} parent=11 // pred_check
        %p224 = pneg %p159
      $region18: #{shufflenet_v2_forward.30} parent=11 // pred_check_branch
        %226 = sbr.rel (%p224) target = $region20
      $region19: #{shufflenet_v2_forward.30} parent=11 // pred_region
        _
      $region20: #{shufflenet_v2_forward.30} parent=11 // pred_fallthru
        _
      // Predicated region
      $region21: #{shufflenet_v2_forward.30} parent=11 // pred_check
        %p227 = pneg %p180
      $region22: #{shufflenet_v2_forward.30} parent=11 // pred_check_branch
        %229 = sbr.rel (%p227) target = $region24
      $region23: #{shufflenet_v2_forward.30} parent=11 // pred_region
        _
      $region24: #{shufflenet_v2_forward.30} parent=11 // pred_fallthru
        _
    $region12: #{shufflenet_v2_forward.30} parent=5 // pred_fallthru
      _
    %p230 = scmp.lt.s32.totalorder %s13, 2
    // Predicated region
    $region25: #{shufflenet_v2_forward.30} parent=5 // pred_check
      %p231 = pneg %p230
    $region26: #{shufflenet_v2_forward.30} parent=5 // pred_check_branch
      %233 = sbr.rel (%p231) target = $region28
    $region27: #{shufflenet_v2_forward.30} parent=5 // pred_region
      // Predicated region
      $region29: #{shufflenet_v2_forward.30} parent=27 // pred_check
        %p234 = pneg %p33
      $region30: #{shufflenet_v2_forward.30} parent=27 // pred_check_branch
        %236 = sbr.rel (%p234) target = $region32
      $region31: #{shufflenet_v2_forward.30} parent=27 // pred_region
        %p237 = scmp.lt.s32.totalorder %s13, 1
        %s238 = scalar_select %p237, %s13, 1
        %s239 = smul.addr %s238, 5
        %s240 = smul.addr %s239, 4
        %s241 = scalar_lea.vmem %s0, %s240
      $region32: #{shufflenet_v2_forward.30} parent=27 // pred_fallthru
        _
      // Predicated region
      $region33: #{shufflenet_v2_forward.30} parent=27 // pred_check
        %p242 = pneg %p59
      $region34: #{shufflenet_v2_forward.30} parent=27 // pred_check_branch
        %244 = sbr.rel (%p242) target = $region36
      $region35: #{shufflenet_v2_forward.30} parent=27 // pred_region
        %p245 = scmp.lt.s32.totalorder %s13, 1
        %s246 = scalar_select %p245, %s13, 1
        %s247 = smul.addr %s246, 5
        %s248 = smul.addr %s247, 4
        %s249 = scalar_lea.vmem %s1, %s248
      $region36: #{shufflenet_v2_forward.30} parent=27 // pred_fallthru
        _
      // Predicated region
      $region37: #{shufflenet_v2_forward.30} parent=27 // pred_check
        %p250 = pneg %p85
      $region38: #{shufflenet_v2_forward.30} parent=27 // pred_check_branch
        %252 = sbr.rel (%p250) target = $region40
      $region39: #{shufflenet_v2_forward.30} parent=27 // pred_region
        %p253 = scmp.lt.s32.totalorder %s13, 1
        %s254 = scalar_select %p253, %s13, 1
        %s255 = smul.addr %s254, 5
        %s256 = smul.addr %s255, 4
        %s257 = scalar_lea.vmem %s2, %s256
      $region40: #{shufflenet_v2_forward.30} parent=27 // pred_fallthru
        _
      // Predicated region
      $region41: #{shufflenet_v2_forward.30} parent=27 // pred_check
        %p258 = pneg %p111
      $region42: #{shufflenet_v2_forward.30} parent=27 // pred_check_branch
        %260 = sbr.rel (%p258) target = $region44
      $region43: #{shufflenet_v2_forward.30} parent=27 // pred_region
        %p261 = scmp.lt.s32.totalorder %s13, 1
        %s262 = scalar_select %p261, %s13, 1
        %s263 = smul.addr %s262, 5
        %s264 = smul.addr %s263, 4
        %s265 = scalar_lea.vmem %s3, %s264
      $region44: #{shufflenet_v2_forward.30} parent=27 // pred_fallthru
        _
    $region28: #{shufflenet_v2_forward.30} parent=5 // pred_fallthru
      _
    %p266 = scmp.le.s32.totalorder 1, %s13
    %p267 = scmp.lt.s32.totalorder %s13, 3
    %p268 = pnand %p266, %p267
    %p269 = pneg %p268
    // Predicated region
    $region45: #{shufflenet_v2_forward.30} parent=5 // pred_check
      _
    $region46: #{shufflenet_v2_forward.30} parent=5 // pred_check_branch
      %271 = sbr.rel (%p268) target = $region48
    $region47: #{shufflenet_v2_forward.30} parent=5 // pred_region
      %s272 = ssub.s32 %s13, 1
      %p273 = scmp.lt.s32.totalorder %s18, 1
      %s274 = scalar_select %p273, %s18, 1
      %s275 = smul.addr %s274, 5
      %s276 = smul.addr %s275, 4
      %s277 = scalar_lea.vmem %s0, %s276
      %p278 = pneg %p39
      %p279 = pneg %p36
      %p280 = scmp.lt.s32.totalorder %s18, 1
      %s281 = scalar_select %p280, %s18, 1
      %s282 = smul.addr %s281, 5
      %s283 = smul.addr %s282, 4
      %s284 = scalar_lea.vmem %s1, %s283
      %p285 = pneg %p65
      %p286 = pneg %p62
      %p287 = scmp.lt.s32.totalorder %s18, 1
      %s288 = scalar_select %p287, %s18, 1
      %s289 = smul.addr %s288, 5
      %s290 = smul.addr %s289, 4
      %s291 = scalar_lea.vmem %s2, %s290
      %p292 = pneg %p91
      %p293 = pneg %p88
      %p294 = scmp.lt.s32.totalorder %s18, 1
      %s295 = scalar_select %p294, %s18, 1
      %s296 = smul.addr %s295, 5
      %s297 = smul.addr %s296, 4
      %s298 = scalar_lea.vmem %s3, %s297
      %p299 = pneg %p117
      %p300 = pneg %p114
      %p301 = pneg %p138
      %p302 = pneg %p135
      %p303 = pneg %p159
      %p304 = pneg %p156
      %p305 = pneg %p180
      %p306 = pneg %p177
      %p307 = pneg %p206
      %p308 = pneg %p203
      %p309 = scmp.lt.s32.totalorder %s18, 1
      %s310 = scalar_select %p309, %s18, 1
      %s311 = smul.addr %s310, 4
      %s312 = smul.addr %s311, 2
      %s313 = scalar_lea.vmem %s7, %s312
      %p314 = scmp.lt.s32.totalorder %s18, 1
      %s315 = scalar_select %p314, %s18, 1
      %s316 = smul.addr %s315, 5
      %s317 = smul.addr %s316, 4
      %s318 = scalar_lea.vmem %s0, %s317
      %p319 = scmp.lt.s32.totalorder %s18, 1
      %s320 = scalar_select %p319, %s18, 1
      %s321 = smul.addr %s320, 5
      %s322 = smul.addr %s321, 4
      %s323 = scalar_lea.vmem %s1, %s322
      %p324 = scmp.lt.s32.totalorder %s18, 1
      %s325 = scalar_select %p324, %s18, 1
      %s326 = smul.addr %s325, 5
      %s327 = smul.addr %s326, 4
      %s328 = scalar_lea.vmem %s2, %s327
      %p329 = scmp.lt.s32.totalorder %s18, 1
      %s330 = scalar_select %p329, %s18, 1
      %s331 = smul.addr %s330, 5
      %s332 = smul.addr %s331, 4
      %s333 = scalar_lea.vmem %s3, %s332
      %p334 = scmp.lt.s32.totalorder %s18, 1
      %s335 = scalar_select %p334, %s18, 1
      %s336 = smul.addr %s335, 4
      %s337 = smul.addr %s336, 2
      %s338 = scalar_lea.vmem %s7, %s337
      %v339 = vld [vmem:[%s318] sm:$0x7]
      %v340 = vld [vmem:[%s318 + $0x4] sm:$0x7]
      %v341 = vld [vmem:[%s318 + $0x8] sm:$0x7]
      %v342 = vld [vmem:[%s318 + $0xc] sm:$0x7]
      %v343 = vld [vmem:[%s318 + $0x10] sm:$0x7]
      %v344 = vunpack.c.l.bf16 %v339
      %v345 = vunpack.c.l.bf16 %v340
      %v346 = vunpack.c.l.bf16 %v341
      %v347 = vunpack.c.l.bf16 %v342
      %v348 = vunpack.c.l.bf16 %v343
      %v349 = vld [vmem:[%s323] sm:$0x7]
      %v350 = vld [vmem:[%s323 + $0x4] sm:$0x7]
      %v351 = vld [vmem:[%s323 + $0x8] sm:$0x7]
      %v352 = vld [vmem:[%s323 + $0xc] sm:$0x7]
      %v353 = vld [vmem:[%s323 + $0x10] sm:$0x7]
      %v354 = vunpack.c.l.bf16 %v349
      %v355 = vunpack.c.l.bf16 %v350
      %v356 = vunpack.c.l.bf16 %v351
      %v357 = vunpack.c.l.bf16 %v352
      %v358 = vunpack.c.l.bf16 %v353
      %v359 = vld [vmem:[%s328] sm:$0x7]
      %v360 = vld [vmem:[%s328 + $0x4] sm:$0x7]
      %v361 = vld [vmem:[%s328 + $0x8] sm:$0x7]
      %v362 = vld [vmem:[%s328 + $0xc] sm:$0x7]
      %v363 = vunpack.c.l.bf16 %v359
      %v364 = vunpack.c.l.bf16 %v360
      %v365 = vunpack.c.l.bf16 %v361
      %v366 = vunpack.c.l.bf16 %v362
      %v367 = vld [vmem:[%s333] sm:$0x7]
      %v368 = vld [vmem:[%s333 + $0x4] sm:$0x7]
      %v369 = vld [vmem:[%s333 + $0x8] sm:$0x7]
      %v370 = vld [vmem:[%s333 + $0xc] sm:$0x7]
      %v371 = vunpack.c.l.bf16 %v367
      %v372 = vunpack.c.l.bf16 %v368
      %v373 = vunpack.c.l.bf16 %v369
      %v374 = vunpack.c.l.bf16 %v370
      %v375 = vld [vmem:[%s4] sm:$0x1]
      %v377 = vlaneseq
      %v378 = vshrl.u32 %v377, 7
      %v379 = vsub.s32 0, %v378
      %v380 = vrot.slane %v375, %v379
      %v382 = vmul.f32 %v344, %v380
      %v383 = vmul.f32 %v345, %v380
      %v384 = vmul.f32 %v346, %v380
      %v385 = vmul.f32 %v347, %v380
      %v386 = vadd.f32 %v382, 0.0
      %v387 = vadd.f32 %v383, 0.0
      %v388 = vadd.f32 %v384, 0.0
      %v389 = vadd.f32 %v385, 0.0
      %s390 = scalar_lea.vmem %s4, 1
      %v391 = vld [vmem:[%s390] sm:$0x1]
      %v393 = vlaneseq
      %v394 = vshrl.u32 %v393, 7
      %v395 = vsub.s32 0, %v394
      %v396 = vrot.slane %v391, %v395
      %v398 = vmul.f32 %v354, %v396
      %v399 = vmul.f32 %v355, %v396
      %v400 = vmul.f32 %v356, %v396
      %v401 = vmul.f32 %v357, %v396
      %v402 = vadd.f32 %v386, %v398
      %v403 = vadd.f32 %v387, %v399
      %v404 = vadd.f32 %v388, %v400
      %v405 = vadd.f32 %v389, %v401
      %s406 = scalar_lea.vmem %s4, 2
      %v407 = vld [vmem:[%s406] sm:$0x1]
      %v409 = vlaneseq
      %v410 = vshrl.u32 %v409, 7
      %v411 = vsub.s32 0, %v410
      %v412 = vrot.slane %v407, %v411
      %v414 = vmul.f32 %v344, %v412
      %v415 = vmul.f32 %v345, %v412
      %v416 = vmul.f32 %v346, %v412
      %v417 = vmul.f32 %v347, %v412
      %v422 = vrot.slane %v414, 1
      %v423 = vrot.slane %v415, 1
      %v424 = vrot.slane %v416, 1
      %v425 = vrot.slane %v417, 1
      %v430 = vadd.f32 %v402, %v422
      %v431 = vadd.f32 %v403, %v423
      %v432 = vadd.f32 %v404, %v424
      %v433 = vadd.f32 %v405, %v425
      %s434 = scalar_lea.vmem %s4, 3
      %v435 = vld [vmem:[%s434] sm:$0x1]
      %v437 = vlaneseq
      %v438 = vshrl.u32 %v437, 7
      %v439 = vsub.s32 0, %v438
      %v440 = vrot.slane %v435, %v439
      %v442 = vmul.f32 %v363, %v440
      %v443 = vmul.f32 %v364, %v440
      %v444 = vmul.f32 %v365, %v440
      %v445 = vmul.f32 %v366, %v440
      %v446 = vadd.f32 %v430, %v442
      %v447 = vadd.f32 %v431, %v443
      %v448 = vadd.f32 %v432, %v444
      %v449 = vadd.f32 %v433, %v445
      %s450 = scalar_lea.vmem %s4, 4
      %v451 = vld [vmem:[%s450] sm:$0x1]
      %v453 = vlaneseq
      %v454 = vshrl.u32 %v453, 7
      %v455 = vsub.s32 0, %v454
      %v456 = vrot.slane %v451, %v455
      %v458 = vmul.f32 %v371, %v456
      %v459 = vmul.f32 %v372, %v456
      %v460 = vmul.f32 %v373, %v456
      %v461 = vmul.f32 %v374, %v456
      %v462 = vadd.f32 %v446, %v458
      %v463 = vadd.f32 %v447, %v459
      %v464 = vadd.f32 %v448, %v460
      %v465 = vadd.f32 %v449, %v461
      %s466 = scalar_lea.vmem %s4, 5
      %v467 = vld [vmem:[%s466] sm:$0x1]
      %v469 = vlaneseq
      %v470 = vshrl.u32 %v469, 7
      %v471 = vsub.s32 0, %v470
      %v472 = vrot.slane %v467, %v471
      %v474 = vmul.f32 %v363, %v472
      %v475 = vmul.f32 %v364, %v472
      %v476 = vmul.f32 %v365, %v472
      %v477 = vmul.f32 %v366, %v472
      %v482 = vrot.slane %v474, 1
      %v483 = vrot.slane %v475, 1
      %v484 = vrot.slane %v476, 1
      %v485 = vrot.slane %v477, 1
      %v490 = vadd.f32 %v462, %v482
      %v491 = vadd.f32 %v463, %v483
      %v492 = vadd.f32 %v464, %v484
      %v493 = vadd.f32 %v465, %v485
      %s494 = scalar_lea.vmem %s4, 6
      %v495 = vld [vmem:[%s494] sm:$0x1]
      %v497 = vlaneseq
      %v498 = vshrl.u32 %v497, 7
      %v499 = vsub.s32 0, %v498
      %v500 = vrot.slane %v495, %v499
      %v502 = vmul.f32 %v345, %v500
      %v503 = vmul.f32 %v346, %v500
      %v504 = vmul.f32 %v347, %v500
      %v505 = vmul.f32 %v348, %v500
      %v506 = vadd.f32 %v490, %v502
      %v507 = vadd.f32 %v491, %v503
      %v508 = vadd.f32 %v492, %v504
      %v509 = vadd.f32 %v493, %v505
      %s510 = scalar_lea.vmem %s4, 7
      %v511 = vld [vmem:[%s510] sm:$0x1]
      %v513 = vlaneseq
      %v514 = vshrl.u32 %v513, 7
      %v515 = vsub.s32 0, %v514
      %v516 = vrot.slane %v511, %v515
      %v518 = vmul.f32 %v355, %v516
      %v519 = vmul.f32 %v356, %v516
      %v520 = vmul.f32 %v357, %v516
      %v521 = vmul.f32 %v358, %v516
      %v522 = vadd.f32 %v506, %v518
      %v523 = vadd.f32 %v507, %v519
      %v524 = vadd.f32 %v508, %v520
      %v525 = vadd.f32 %v509, %v521
      %s526 = scalar_lea.vmem %s4, 8
      %v527 = vld [vmem:[%s526] sm:$0x1]
      %v529 = vlaneseq
      %v530 = vshrl.u32 %v529, 7
      %v531 = vsub.s32 0, %v530
      %v532 = vrot.slane %v527, %v531
      %v534 = vmul.f32 %v345, %v532
      %v535 = vmul.f32 %v346, %v532
      %v536 = vmul.f32 %v347, %v532
      %v537 = vmul.f32 %v348, %v532
      %v542 = vrot.slane %v534, 1
      %v543 = vrot.slane %v535, 1
      %v544 = vrot.slane %v536, 1
      %v545 = vrot.slane %v537, 1
      %v550 = vadd.f32 %v522, %v542
      %v551 = vadd.f32 %v523, %v543
      %v552 = vadd.f32 %v524, %v544
      %v553 = vadd.f32 %v525, %v545
      %v554 = vld [vmem:[%s5] sm:$0x1]
      %v556 = vlaneseq
      %v557 = vshrl.u32 %v556, 7
      %v558 = vsub.s32 0, %v557
      %v559 = vrot.slane %v554, %v558
      %v561 = vmul.f32 %v550, %v559
      %v562 = vmul.f32 %v551, %v559
      %v563 = vmul.f32 %v552, %v559
      %v564 = vmul.f32 %v553, %v559
      %v565 = vld [vmem:[%s6] sm:$0x1]
      %v567 = vlaneseq
      %v568 = vshrl.u32 %v567, 7
      %v569 = vsub.s32 0, %v568
      %v570 = vrot.slane %v565, %v569
      %v572 = vadd.f32 %v561, %v570
      %v573 = vadd.f32 %v562, %v570
      %v574 = vadd.f32 %v563, %v570
      %v575 = vadd.f32 %v564, %v570
      %v576 = vpack.c.bf16 %v572, %v572
      %v577 = vpack.c.bf16 %v573, %v573
      %v578 = vpack.c.bf16 %v574, %v574
      %v579 = vpack.c.bf16 %v575, %v575
      %vm580 = vcmask 58368
      %581 = vst.msk [vmem:[%s338] sm:$0x3] %vm580, %v576
      %582 = vst.msk [vmem:[%s338 + $0x2] sm:$0x3] %vm580, %v577
      %583 = vst.msk [vmem:[%s338 + $0x4] sm:$0x3] %vm580, %v578
      %584 = vst.msk [vmem:[%s338 + $0x6] sm:$0x3] %vm580, %v579
      %p585 = scmp.lt.s32.totalorder %s18, 1
      %s586 = scalar_select %p585, %s18, 1
      %s587 = smul.addr %s586, 4
      %s588 = smul.addr %s587, 2
      %s589 = scalar_lea.vmem %s7, %s588
      // Predicated region
      $region49: #{shufflenet_v2_forward.30} parent=47 // pred_check
        %p590 = pneg %p203
      $region50: #{shufflenet_v2_forward.30} parent=47 // pred_check_branch
        %592 = sbr.rel (%p590) target = $region52
      $region51: #{shufflenet_v2_forward.30} parent=47 // pred_region
        _
      $region52: #{shufflenet_v2_forward.30} parent=47 // pred_fallthru
        _
    $region48: #{shufflenet_v2_forward.30} parent=5 // pred_fallthru
      _
    %p593 = scmp.le.s32.totalorder 2, %s13
    // Predicated region
    $region53: #{shufflenet_v2_forward.30} parent=5 // pred_check
      %p594 = pneg %p593
    $region54: #{shufflenet_v2_forward.30} parent=5 // pred_check_branch
      %596 = sbr.rel (%p594) target = $region56
    $region55: #{shufflenet_v2_forward.30} parent=5 // pred_region
      %s597 = ssub.s32 %s13, 2
      // Predicated region
      $region57: #{shufflenet_v2_forward.30} parent=55 // pred_check
        %p598 = pneg %p209
      $region58: #{shufflenet_v2_forward.30} parent=55 // pred_check_branch
        %600 = sbr.rel (%p598) target = $region60
      $region59: #{shufflenet_v2_forward.30} parent=55 // pred_region
        %p601 = scmp.lt.s32.totalorder %s19, 1
        %s602 = scalar_select %p601, %s19, 1
        %s603 = smul.addr %s602, 4
        %s604 = smul.addr %s603, 2
        %s605 = scalar_lea.vmem %s7, %s604
      $region60: #{shufflenet_v2_forward.30} parent=55 // pred_fallthru
        _
    $region56: #{shufflenet_v2_forward.30} parent=5 // pred_fallthru
      _
  $region6: #{shufflenet_v2_forward.30} parent=0 // loop_footer
    %s17 = sadd.s32 1, %s13
  $region7: #{shufflenet_v2_forward.30} parent=0 // loop_footer_branch
    %12 = sbr.rel target = $region3
  $region8: #{shufflenet_v2_forward.30} parent=0 // loop_exit
    _

// kernel: shufflenet_v2_forward.36
$region0: #{shufflenet_v2_forward.36}
  #allocation0 [shape = 'u32[]', space=smem, size = 0x4, offset = 0x4, fixed_abs, tag = 'smem constant byte address 0x4 - core index']
  #allocation1 [shape = 'u32[144,128]{1,0:T(1,128)}', space=vmem, size = 0x12000, scoped, tag = 'internal scratch']
  %s0 = inlined_call_operand.vmem [shape: bf16[2,6,6,8], index: 0, kind: input, shape index: {}]
  %s1 = inlined_call_operand.vmem [shape: f32[9,1,1,8], index: 1, kind: input, shape index: {}]
  %s2 = inlined_call_operand.vmem [shape: f32[1,1,1,8], index: 2, kind: input, shape index: {}]
  %s3 = inlined_call_operand.vmem [shape: f32[1,1,1,8], index: 3, kind: input, shape index: {}]
  %s4 = inlined_call_operand.vmem [shape: bf16[2,4,4,8], index: 4, kind: output, shape index: {}]
  %s5 = sld [smem:[#allocation0]]
  $region49: #{shufflenet_v2_forward.36} parent=0
    _
  %s7 = ssub.s32 1, %s5
  %s8 = scalar_select 0, %s7, %s5
  loop: start=0, step=1, limit=4
  $region2: #{shufflenet_v2_forward.36} parent=0 // loop_pre_header
    _
  $region3: #{shufflenet_v2_forward.36} parent=0 // loop_header
    %s10 = sphi 0, %s14
    %p11 = scmp.ge.s32.totalorder %s10, 4
    %s20 = sphi 0, %s22
    %s23 = sphi 0, %s20
    %s24 = sphi 0, %s23
    %s40 = sphi 0, %s24
    %s44 = sphi 0, %s44
    %s46 = sphi 0, %s44
    %s47 = sphi 0, %s46
    %s61 = sphi 0, %s47
    %s65 = sphi 0, %s65
    %s67 = sphi 0, %s65
    %s68 = sphi 0, %s67
    %s82 = sphi 0, %s68
    %s86 = sphi 0, %s86
    %s88 = sphi 0, %s86
    %s89 = sphi 0, %s88
    %s103 = sphi 0, %s89
    %s109 = sphi 0, %s111
    %s112 = sphi 0, %s109
    %s113 = sphi 0, %s112
    %s129 = sphi 0, %s113
  $region4: #{shufflenet_v2_forward.36} parent=0 // loop_header_branch
    %13 = sbr.rel (%p11) target = $region8
  $region5: #{shufflenet_v2_forward.36} parent=0 // loop_body
    %s15 = ssub.s32 %s10, 1
    %s16 = ssub.s32 %s10, 2
    %s17 = sadd.s32 %s10, 1
    %s18 = ssub.s32 %s10, %s17
    %p19 = scmp.eq.s32.totalorder %s18, 0
    %s21 = sadd.s32 %s20, 1
    %s22 = scalar_select %p19, %s20, %s21
    %p25 = pneg %p19
    %p26 = scmp.eq.s32.totalorder %s10, 1
    %p27 = por %p25, %p26
    %p28 = scmp.ne.s32.totalorder %s20, %s23
    %p29 = scmp.eq.s32.totalorder %s10, 0
    %p30 = por %p28, %p29
    %p31 = scmp.ne.s32.totalorder %s20, %s23
    %p32 = scmp.eq.s32.totalorder %s15, 1
    %p33 = por %p31, %p32
    %p34 = scmp.ne.s32.totalorder %s23, %s24
    %p35 = scmp.eq.s32.totalorder %s15, 0
    %p36 = por %p34, %p35
    %p37 = scmp.ne.s32.totalorder %s23, %s24
    %p38 = scmp.eq.s32.totalorder %s16, 1
    %p39 = por %p37, %p38
    %p41 = scmp.ne.s32.totalorder %s24, %s40
    %p42 = scmp.eq.s32.totalorder %s16, 0
    %p43 = por %p41, %p42
    %s45 = sadd.s32 %s44, 1
    %p48 = scmp.eq.s32.totalorder %s10, 1
    %p49 = scmp.ne.s32.totalorder %s44, %s46
    %p50 = scmp.eq.s32.totalorder %s10, 0
    %p51 = por %p49, %p50
    %p52 = scmp.ne.s32.totalorder %s44, %s46
    %p53 = scmp.eq.s32.totalorder %s15, 1
    %p54 = por %p52, %p53
    %p55 = scmp.ne.s32.totalorder %s46, %s47
    %p56 = scmp.eq.s32.totalorder %s15, 0
    %p57 = por %p55, %p56
    %p58 = scmp.ne.s32.totalorder %s46, %s47
    %p59 = scmp.eq.s32.totalorder %s16, 1
    %p60 = por %p58, %p59
    %p62 = scmp.ne.s32.totalorder %s47, %s61
    %p63 = scmp.eq.s32.totalorder %s16, 0
    %p64 = por %p62, %p63
    %s66 = sadd.s32 %s65, 1
    %p69 = scmp.eq.s32.totalorder %s10, 1
    %p70 = scmp.ne.s32.totalorder %s65, %s67
    %p71 = scmp.eq.s32.totalorder %s10, 0
    %p72 = por %p70, %p71
    %p73 = scmp.ne.s32.totalorder %s65, %s67
    %p74 = scmp.eq.s32.totalorder %s15, 1
    %p75 = por %p73, %p74
    %p76 = scmp.ne.s32.totalorder %s67, %s68
    %p77 = scmp.eq.s32.totalorder %s15, 0
    %p78 = por %p76, %p77
    %p79 = scmp.ne.s32.totalorder %s67, %s68
    %p80 = scmp.eq.s32.totalorder %s16, 1
    %p81 = por %p79, %p80
    %p83 = scmp.ne.s32.totalorder %s68, %s82
    %p84 = scmp.eq.s32.totalorder %s16, 0
    %p85 = por %p83, %p84
    %s87 = sadd.s32 %s86, 1
    %p90 = scmp.eq.s32.totalorder %s10, 1
    %p91 = scmp.ne.s32.totalorder %s86, %s88
    %p92 = scmp.eq.s32.totalorder %s10, 0
    %p93 = por %p91, %p92
    %p94 = scmp.ne.s32.totalorder %s86, %s88
    %p95 = scmp.eq.s32.totalorder %s15, 1
    %p96 = por %p94, %p95
    %p97 = scmp.ne.s32.totalorder %s88, %s89
    %p98 = scmp.eq.s32.totalorder %s15, 0
    %p99 = por %p97, %p98
    %p100 = scmp.ne.s32.totalorder %s88, %s89
    %p101 = scmp.eq.s32.totalorder %s16, 1
    %p102 = por %p100, %p101
    %p104 = scmp.ne.s32.totalorder %s89, %s103
    %p105 = scmp.eq.s32.totalorder %s16, 0
    %p106 = por %p104, %p105
    %s107 = ssub.s32 %s10, %s17
    %p108 = scmp.eq.s32.totalorder %s107, 0
    %s110 = sadd.s32 %s109, 1
    %s111 = scalar_select %p108, %s109, %s110
    %p114 = pneg %p108
    %p115 = scmp.eq.s32.totalorder %s10, 1
    %p116 = por %p114, %p115
    %p117 = scmp.ne.s32.totalorder %s109, %s112
    %p118 = scmp.eq.s32.totalorder %s10, 0
    %p119 = por %p117, %p118
    %p120 = scmp.ne.s32.totalorder %s109, %s112
    %p121 = scmp.eq.s32.totalorder %s15, 1
    %p122 = por %p120, %p121
    %p123 = scmp.ne.s32.totalorder %s112, %s113
    %p124 = scmp.eq.s32.totalorder %s15, 0
    %p125 = por %p123, %p124
    %p126 = scmp.ne.s32.totalorder %s112, %s113
    %p127 = scmp.eq.s32.totalorder %s16, 1
    %p128 = por %p126, %p127
    %p130 = scmp.ne.s32.totalorder %s113, %s129
    %p131 = scmp.eq.s32.totalorder %s16, 0
    %p132 = por %p130, %p131
    %p133 = scmp.le.s32.totalorder 1, %s10
    %p134 = scmp.lt.s32.totalorder %s10, 3
    %p135 = pnand %p133, %p134
    %p136 = pneg %p135
    // Predicated region
    $region9: #{shufflenet_v2_forward.36} parent=5 // pred_check
      _
    $region10: #{shufflenet_v2_forward.36} parent=5 // pred_check_branch
      %138 = sbr.rel (%p135) target = $region12
    $region11: #{shufflenet_v2_forward.36} parent=5 // pred_region
      %s139 = ssub.s32 %s10, 1
      // Predicated region
      $region13: #{shufflenet_v2_forward.36} parent=11 // pred_check
        %p140 = pneg %p57
      $region14: #{shufflenet_v2_forward.36} parent=11 // pred_check_branch
        %142 = sbr.rel (%p140) target = $region16
      $region15: #{shufflenet_v2_forward.36} parent=11 // pred_region
        _
      $region16: #{shufflenet_v2_forward.36} parent=11 // pred_fallthru
        _
      // Predicated region
      $region17: #{shufflenet_v2_forward.36} parent=11 // pred_check
        %p143 = pneg %p78
      $region18: #{shufflenet_v2_forward.36} parent=11 // pred_check_branch
        %145 = sbr.rel (%p143) target = $region20
      $region19: #{shufflenet_v2_forward.36} parent=11 // pred_region
        _
      $region20: #{shufflenet_v2_forward.36} parent=11 // pred_fallthru
        _
      // Predicated region
      $region21: #{shufflenet_v2_forward.36} parent=11 // pred_check
        %p146 = pneg %p99
      $region22: #{shufflenet_v2_forward.36} parent=11 // pred_check_branch
        %148 = sbr.rel (%p146) target = $region24
      $region23: #{shufflenet_v2_forward.36} parent=11 // pred_region
        _
      $region24: #{shufflenet_v2_forward.36} parent=11 // pred_fallthru
        _
    $region12: #{shufflenet_v2_forward.36} parent=5 // pred_fallthru
      _
    %p149 = scmp.lt.s32.totalorder %s10, 2
    // Predicated region
    $region25: #{shufflenet_v2_forward.36} parent=5 // pred_check
      %p150 = pneg %p149
    $region26: #{shufflenet_v2_forward.36} parent=5 // pred_check_branch
      %152 = sbr.rel (%p150) target = $region28
    $region27: #{shufflenet_v2_forward.36} parent=5 // pred_region
      // Predicated region
      $region29: #{shufflenet_v2_forward.36} parent=27 // pred_check
        %p153 = pneg %p30
      $region30: #{shufflenet_v2_forward.36} parent=27 // pred_check_branch
        %155 = sbr.rel (%p153) target = $region32
      $region31: #{shufflenet_v2_forward.36} parent=27 // pred_region
        %p156 = scmp.lt.s32.totalorder %s10, 1
        %s157 = scalar_select %p156, %s10, 1
        %s158 = smul.addr %s157, 6
        %s159 = smul.addr %s158, 4
        %s160 = scalar_lea.vmem %s0, %s159
      $region32: #{shufflenet_v2_forward.36} parent=27 // pred_fallthru
        _
    $region28: #{shufflenet_v2_forward.36} parent=5 // pred_fallthru
      _
    %p161 = scmp.le.s32.totalorder 1, %s10
    %p162 = scmp.lt.s32.totalorder %s10, 3
    %p163 = pnand %p161, %p162
    %p164 = pneg %p163
    // Predicated region
    $region33: #{shufflenet_v2_forward.36} parent=5 // pred_check
      _
    $region34: #{shufflenet_v2_forward.36} parent=5 // pred_check_branch
      %166 = sbr.rel (%p163) target = $region36
    $region35: #{shufflenet_v2_forward.36} parent=5 // pred_region
      %s167 = ssub.s32 %s10, 1
      %p168 = scmp.lt.s32.totalorder %s15, 1
      %s169 = scalar_select %p168, %s15, 1
      %s170 = smul.addr %s169, 6
      %s171 = smul.addr %s170, 4
      %s172 = scalar_lea.vmem %s0, %s171
      %p173 = pneg %p36
      %p174 = pneg %p33
      %p175 = pneg %p57
      %p176 = pneg %p54
      %p177 = pneg %p78
      %p178 = pneg %p75
      %p179 = pneg %p99
      %p180 = pneg %p96
      %p181 = pneg %p125
      %p182 = pneg %p122
      %p183 = scmp.lt.s32.totalorder %s15, 1
      %s184 = scalar_select %p183, %s15, 1
      %s185 = smul.addr %s184, 4
      %s186 = smul.addr %s185, 2
      %s187 = scalar_lea.vmem %s4, %s186
      %p188 = scmp.lt.s32.totalorder %s15, 1
      %s189 = scalar_select %p188, %s15, 1
      %s190 = smul.addr %s189, 6
      %s191 = smul.addr %s190, 4
      %s192 = scalar_lea.vmem %s0, %s191
      %p193 = scmp.lt.s32.totalorder %s15, 1
      %s194 = scalar_select %p193, %s15, 1
      %s195 = smul.addr %s194, 4
      %s196 = smul.addr %s195, 2
      %s197 = scalar_lea.vmem %s4, %s196
      %v198 = vld [vmem:[%s192] sm:$0x7]
      %v199 = vld [vmem:[%s192 + $0x4] sm:$0x7]
      %v200 = vld [vmem:[%s192 + $0x8] sm:$0x7]
      %v201 = vld [vmem:[%s192 + $0xc] sm:$0x7]
      %v202 = vld [vmem:[%s192 + $0x10] sm:$0x7]
      %v203 = vld [vmem:[%s192 + $0x14] sm:$0x7]
      %v204 = vunpack.c.l.bf16 %v198
      %v205 = vunpack.c.l.bf16 %v199
      %v206 = vunpack.c.l.bf16 %v200
      %v207 = vunpack.c.l.bf16 %v201
      %v208 = vunpack.c.l.bf16 %v202
      %v209 = vunpack.c.l.bf16 %v203
      %v210 = vld [vmem:[%s1] sm:$0x1]
      %v212 = vlaneseq
      %v213 = vshrl.u32 %v212, 7
      %v214 = vsub.s32 0, %v213
      %v215 = vrot.slane %v210, %v214
      %v217 = vmul.f32 %v204, %v215
      %v218 = vmul.f32 %v205, %v215
      %v219 = vmul.f32 %v206, %v215
      %v220 = vmul.f32 %v207, %v215
      %v221 = vadd.f32 %v217, 0.0
      %v222 = vadd.f32 %v218, 0.0
      %v223 = vadd.f32 %v219, 0.0
      %v224 = vadd.f32 %v220, 0.0
      %s225 = scalar_lea.vmem %s1, 1
      %v226 = vld [vmem:[%s225] sm:$0x1]
      %v228 = vlaneseq
      %v229 = vshrl.u32 %v228, 7
      %v230 = vsub.s32 0, %v229
      %v231 = vrot.slane %v226, %v230
      %v233 = vmul.f32 %v204, %v231
      %v234 = vmul.f32 %v205, %v231
      %v235 = vmul.f32 %v206, %v231
      %v236 = vmul.f32 %v207, %v231
      %v241 = vrot.slane %v233, 1
      %v242 = vrot.slane %v234, 1
      %v243 = vrot.slane %v235, 1
      %v244 = vrot.slane %v236, 1
      %v249 = vadd.f32 %v221, %v241
      %v250 = vadd.f32 %v222, %v242
      %v251 = vadd.f32 %v223, %v243
      %v252 = vadd.f32 %v224, %v244
      %s253 = scalar_lea.vmem %s1, 2
      %v254 = vld [vmem:[%s253] sm:$0x1]
      %v256 = vlaneseq
      %v257 = vshrl.u32 %v256, 7
      %v258 = vsub.s32 0, %v257
      %v259 = vrot.slane %v254, %v258
      %v261 = vmul.f32 %v204, %v259
      %v262 = vmul.f32 %v205, %v259
      %v263 = vmul.f32 %v206, %v259
      %v264 = vmul.f32 %v207, %v259
      %v269 = vrot.slane %v261, 2
      %v270 = vrot.slane %v262, 2
      %v271 = vrot.slane %v263, 2
      %v272 = vrot.slane %v264, 2
      %v277 = vadd.f32 %v249, %v269
      %v278 = vadd.f32 %v250, %v270
      %v279 = vadd.f32 %v251, %v271
      %v280 = vadd.f32 %v252, %v272
      %s281 = scalar_lea.vmem %s1, 3
      %v282 = vld [vmem:[%s281] sm:$0x1]
      %v284 = vlaneseq
      %v285 = vshrl.u32 %v284, 7
      %v286 = vsub.s32 0, %v285
      %v287 = vrot.slane %v282, %v286
      %v289 = vmul.f32 %v205, %v287
      %v290 = vmul.f32 %v206, %v287
      %v291 = vmul.f32 %v207, %v287
      %v292 = vmul.f32 %v208, %v287
      %v293 = vadd.f32 %v277, %v289
      %v294 = vadd.f32 %v278, %v290
      %v295 = vadd.f32 %v279, %v291
      %v296 = vadd.f32 %v280, %v292
      %s297 = scalar_lea.vmem %s1, 4
      %v298 = vld [vmem:[%s297] sm:$0x1]
      %v300 = vlaneseq
      %v301 = vshrl.u32 %v300, 7
      %v302 = vsub.s32 0, %v301
      %v303 = vrot.slane %v298, %v302
      %v305 = vmul.f32 %v205, %v303
      %v306 = vmul.f32 %v206, %v303
      %v307 = vmul.f32 %v207, %v303
      %v308 = vmul.f32 %v208, %v303
      %v313 = vrot.slane %v305, 1
      %v314 = vrot.slane %v306, 1
      %v315 = vrot.slane %v307, 1
      %v316 = vrot.slane %v308, 1
      %v321 = vadd.f32 %v293, %v313
      %v322 = vadd.f32 %v294, %v314
      %v323 = vadd.f32 %v295, %v315
      %v324 = vadd.f32 %v296, %v316
      %s325 = scalar_lea.vmem %s1, 5
      %v326 = vld [vmem:[%s325] sm:$0x1]
      %v328 = vlaneseq
      %v329 = vshrl.u32 %v328, 7
      %v330 = vsub.s32 0, %v329
      %v331 = vrot.slane %v326, %v330
      %v333 = vmul.f32 %v205, %v331
      %v334 = vmul.f32 %v206, %v331
      %v335 = vmul.f32 %v207, %v331
      %v336 = vmul.f32 %v208, %v331
      %v341 = vrot.slane %v333, 2
      %v342 = vrot.slane %v334, 2
      %v343 = vrot.slane %v335, 2
      %v344 = vrot.slane %v336, 2
      %v349 = vadd.f32 %v321, %v341
      %v350 = vadd.f32 %v322, %v342
      %v351 = vadd.f32 %v323, %v343
      %v352 = vadd.f32 %v324, %v344
      %s353 = scalar_lea.vmem %s1, 6
      %v354 = vld [vmem:[%s353] sm:$0x1]
      %v356 = vlaneseq
      %v357 = vshrl.u32 %v356, 7
      %v358 = vsub.s32 0, %v357
      %v359 = vrot.slane %v354, %v358
      %v361 = vmul.f32 %v206, %v359
      %v362 = vmul.f32 %v207, %v359
      %v363 = vmul.f32 %v208, %v359
      %v364 = vmul.f32 %v209, %v359
      %v365 = vadd.f32 %v349, %v361
      %v366 = vadd.f32 %v350, %v362
      %v367 = vadd.f32 %v351, %v363
      %v368 = vadd.f32 %v352, %v364
      %s369 = scalar_lea.vmem %s1, 7
      %v370 = vld [vmem:[%s369] sm:$0x1]
      %v372 = vlaneseq
      %v373 = vshrl.u32 %v372, 7
      %v374 = vsub.s32 0, %v373
      %v375 = vrot.slane %v370, %v374
      %v377 = vmul.f32 %v206, %v375
      %v378 = vmul.f32 %v207, %v375
      %v379 = vmul.f32 %v208, %v375
      %v380 = vmul.f32 %v209, %v375
      %v385 = vrot.slane %v377, 1
      %v386 = vrot.slane %v378, 1
      %v387 = vrot.slane %v379, 1
      %v388 = vrot.slane %v380, 1
      %v393 = vadd.f32 %v365, %v385
      %v394 = vadd.f32 %v366, %v386
      %v395 = vadd.f32 %v367, %v387
      %v396 = vadd.f32 %v368, %v388
      %s397 = scalar_lea.vmem %s1, 8
      %v398 = vld [vmem:[%s397] sm:$0x1]
      %v400 = vlaneseq
      %v401 = vshrl.u32 %v400, 7
      %v402 = vsub.s32 0, %v401
      %v403 = vrot.slane %v398, %v402
      %v405 = vmul.f32 %v206, %v403
      %v406 = vmul.f32 %v207, %v403
      %v407 = vmul.f32 %v208, %v403
      %v408 = vmul.f32 %v209, %v403
      %v413 = vrot.slane %v405, 2
      %v414 = vrot.slane %v406, 2
      %v415 = vrot.slane %v407, 2
      %v416 = vrot.slane %v408, 2
      %v421 = vadd.f32 %v393, %v413
      %v422 = vadd.f32 %v394, %v414
      %v423 = vadd.f32 %v395, %v415
      %v424 = vadd.f32 %v396, %v416
      %v425 = vld [vmem:[%s2] sm:$0x1]
      %v427 = vlaneseq
      %v428 = vshrl.u32 %v427, 7
      %v429 = vsub.s32 0, %v428
      %v430 = vrot.slane %v425, %v429
      %v432 = vmul.f32 %v421, %v430
      %v433 = vmul.f32 %v422, %v430
      %v434 = vmul.f32 %v423, %v430
      %v435 = vmul.f32 %v424, %v430
      %v436 = vld [vmem:[%s3] sm:$0x1]
      %v438 = vlaneseq
      %v439 = vshrl.u32 %v438, 7
      %v440 = vsub.s32 0, %v439
      %v441 = vrot.slane %v436, %v440
      %v443 = vadd.f32 %v432, %v441
      %v444 = vadd.f32 %v433, %v441
      %v445 = vadd.f32 %v434, %v441
      %v446 = vadd.f32 %v435, %v441
      %v447 = vpack.c.bf16 %v443, %v443
      %v448 = vpack.c.bf16 %v444, %v444
      %v449 = vpack.c.bf16 %v445, %v445
      %v450 = vpack.c.bf16 %v446, %v446
      %vm451 = vcmask 58368
      %452 = vst.msk [vmem:[%s197] sm:$0x3] %vm451, %v447
      %453 = vst.msk [vmem:[%s197 + $0x2] sm:$0x3] %vm451, %v448
      %454 = vst.msk [vmem:[%s197 + $0x4] sm:$0x3] %vm451, %v449
      %455 = vst.msk [vmem:[%s197 + $0x6] sm:$0x3] %vm451, %v450
      %p456 = scmp.lt.s32.totalorder %s15, 1
      %s457 = scalar_select %p456, %s15, 1
      %s458 = smul.addr %s457, 4
      %s459 = smul.addr %s458, 2
      %s460 = scalar_lea.vmem %s4, %s459
      // Predicated region
      $region37: #{shufflenet_v2_forward.36} parent=35 // pred_check
        %p461 = pneg %p122
      $region38: #{shufflenet_v2_forward.36} parent=35 // pred_check_branch
        %463 = sbr.rel (%p461) target = $region40
      $region39: #{shufflenet_v2_forward.36} parent=35 // pred_region
        _
      $region40: #{shufflenet_v2_forward.36} parent=35 // pred_fallthru
        _
    $region36: #{shufflenet_v2_forward.36} parent=5 // pred_fallthru
      _
    %p464 = scmp.le.s32.totalorder 2, %s10
    // Predicated region
    $region41: #{shufflenet_v2_forward.36} parent=5 // pred_check
      %p465 = pneg %p464
    $region42: #{shufflenet_v2_forward.36} parent=5 // pred_check_branch
      %467 = sbr.rel (%p465) target = $region44
    $region43: #{shufflenet_v2_forward.36} parent=5 // pred_region
      %s468 = ssub.s32 %s10, 2
      // Predicated region
      $region45: #{shufflenet_v2_forward.36} parent=43 // pred_check
        %p469 = pneg %p128
      $region46: #{shufflenet_v2_forward.36} parent=43 // pred_check_branch
        %471 = sbr.rel (%p469) target = $region48
      $region47: #{shufflenet_v2_forward.36} parent=43 // pred_region
        %p472 = scmp.lt.s32.totalorder %s16, 1
        %s473 = scalar_select %p472, %s16, 1
        %s474 = smul.addr %s473, 4
        %s475 = smul.addr %s474, 2
        %s476 = scalar_lea.vmem %s4, %s475
      $region48: #{shufflenet_v2_forward.36} parent=43 // pred_fallthru
        _
    $region44: #{shufflenet_v2_forward.36} parent=5 // pred_fallthru
      _
  $region6: #{shufflenet_v2_forward.36} parent=0 // loop_footer
    %s14 = sadd.s32 1, %s10
  $region7: #{shufflenet_v2_forward.36} parent=0 // loop_footer_branch
    %9 = sbr.rel target = $region3
  $region8: #{shufflenet_v2_forward.36} parent=0 // loop_exit
    _

// kernel: shufflenet_v2_forward.39
$region0: #{shufflenet_v2_forward.39}
  #allocation0 [shape = 'u32[]', space=smem, size = 0x4, offset = 0x4, fixed_abs, tag = 'smem constant byte address 0x4 - core index']
  #allocation1 [shape = 'u32[144,128]{1,0:T(1,128)}', space=vmem, size = 0x12000, scoped, tag = 'internal scratch']
  %s0 = inlined_call_operand.vmem [shape: bf16[8,16], index: 0, kind: input, shape index: {}]
  %s1 = inlined_call_operand.vmem [shape: bf16[16,16], index: 1, kind: input, shape index: {}]
  %s2 = inlined_call_operand.vmem [shape: f32[1,16], index: 2, kind: input, shape index: {}]
  %s3 = inlined_call_operand.vmem [shape: f32[1,16], index: 3, kind: input, shape index: {}]
  %s4 = inlined_call_operand.vmem [shape: bf16[8,16], index: 4, kind: output, shape index: {}]
  %s5 = sld [smem:[#allocation0]]
  $region26: #{shufflenet_v2_forward.39} parent=0
    _
  %s7 = ssub.s32 1, %s5
  %s8 = scalar_select 0, %s7, %s5
  // Predicated region
  $region2: #{shufflenet_v2_forward.39} parent=0 // pred_check
    _
  $region3: #{shufflenet_v2_forward.39} parent=0 // pred_check_branch
    %10 = sbr.rel (0) target = $region5
  $region4: #{shufflenet_v2_forward.39} parent=0 // pred_region
    _
  $region5: #{shufflenet_v2_forward.39} parent=0 // pred_fallthru
    _
  // Predicated region
  $region6: #{shufflenet_v2_forward.39} parent=0 // pred_check
    _
  $region7: #{shufflenet_v2_forward.39} parent=0 // pred_check_branch
    %12 = sbr.rel (0) target = $region9
  $region8: #{shufflenet_v2_forward.39} parent=0 // pred_region
    _
  $region9: #{shufflenet_v2_forward.39} parent=0 // pred_fallthru
    _
  // Predicated region
  $region10: #{shufflenet_v2_forward.39} parent=0 // pred_check
    _
  $region11: #{shufflenet_v2_forward.39} parent=0 // pred_check_branch
    %14 = sbr.rel (0) target = $region13
  $region12: #{shufflenet_v2_forward.39} parent=0 // pred_region
    _
  $region13: #{shufflenet_v2_forward.39} parent=0 // pred_fallthru
    _
  // Predicated region
  $region14: #{shufflenet_v2_forward.39} parent=0 // pred_check
    _
  $region15: #{shufflenet_v2_forward.39} parent=0 // pred_check_branch
    %16 = sbr.rel (0) target = $region17
  $region16: #{shufflenet_v2_forward.39} parent=0 // pred_region
    _
  $region17: #{shufflenet_v2_forward.39} parent=0 // pred_fallthru
    _
  %v18 = vld [vmem:[%s0] sm:$0xf]
  %v19 = vld [vmem:[%s1] sm:$0xf]
  %v20 = vld [vmem:[%s1 + $0x4] sm:$0xf]
  %v23 = vunpack.c.l.b16 %v19
  %v24 = vunpack.c.l.b16 %v20
  %v25 = vpack.c.b16 %v24, %v23
  %vm27 = vcmask 130048
  %v29 = vsel %vm27, %v18, 0
  %31 = vmatprep.subr.bf16.mxu0 0
  %32 = vmatpush1.bf16.msra.mxu0 %v25
  %33 = vmatprep.subr.bf16.mxu0 0
  %34 = vmatpush1.bf16.msra.mxu0 0
  %35 = vmatprep.subr.bf16.mxu0 0
  %36 = vmatpush1.bf16.msra.mxu0 0
  %37 = vmatprep.subr.bf16.mxu0 0
  %38 = vmatpush1.bf16.msra.mxu0 0
  %39 = vmatprep.subr.bf16.mxu0 0
  %40 = vmatpush1.bf16.msra.mxu0 0
  %41 = vmatprep.subr.bf16.mxu0 0
  %42 = vmatpush1.bf16.msra.mxu0 0
  %43 = vmatprep.subr.bf16.mxu0 0
  %44 = vmatpush1.bf16.msra.mxu0 0
  %45 = vmatprep.subr.bf16.mxu0 0
  %46 = vmatpush1.bf16.msra.mxu0 0
  %47 = vmatprep.subr.bf16.mxu0 0
  %48 = vmatpush1.bf16.msra.mxu0 0
  %49 = vmatprep.subr.bf16.mxu0 0
  %50 = vmatpush1.bf16.msra.mxu0 0
  %51 = vmatprep.subr.bf16.mxu0 0
  %52 = vmatpush1.bf16.msra.mxu0 0
  %53 = vmatprep.subr.bf16.mxu0 0
  %54 = vmatpush1.bf16.msra.mxu0 0
  %55 = vmatprep.subr.bf16.mxu0 0
  %56 = vmatpush1.bf16.msra.mxu0 0
  %57 = vmatprep.subr.bf16.mxu0 0
  %58 = vmatpush1.bf16.msra.mxu0 0
  %59 = vmatprep.subr.bf16.mxu0 0
  %60 = vmatpush1.bf16.msra.mxu0 0
  %61 = vmatprep.subr.bf16.mxu0 0
  %62 = vmatpush1.bf16.msra.mxu0 0
  %63 = vmatprep.mubr.bf16.mxu0 0
  %64 = vmatmul.mubr.bf16.gmra.mrb[0].mxu0 %v29
  %v65 = vpop.f32.mrb[0].mxu0
  %v66 = vadd.f32 0.0, %v65
  %v67 = vpop.f32.mrb[0].mxu0
  %v68 = vpop.f32.mrb[0].mxu0
  %v69 = vpop.f32.mrb[0].mxu0
  %70 = vdwg.mxu0
  %v71 = vld [vmem:[%s2] sm:$0x1]
  %v73 = vlaneseq
  %v74 = vshrl.u32 %v73, 7
  %v75 = vsub.s32 0, %v74
  %v76 = vrot.slane %v71, %v75
  %v78 = vmul.f32 %v66, %v76
  %v79 = vld [vmem:[%s3] sm:$0x1]
  %v81 = vlaneseq
  %v82 = vshrl.u32 %v81, 7
  %v83 = vsub.s32 0, %v82
  %v84 = vrot.slane %v79, %v83
  %v86 = vadd.f32 %v78, %v84
  %v87 = vmax.f32 %v86, 0.0
  %v88 = vpack.c.bf16 %v87, %v87
  %vm89 = vcmask 125952
  %90 = vst.msk [vmem:[%s4] sm:$0xf] %vm89, %v88
  // Predicated region
  $region18: #{shufflenet_v2_forward.39} parent=0 // pred_check
    _
  $region19: #{shufflenet_v2_forward.39} parent=0 // pred_check_branch
    %92 = sbr.rel (0) target = $region21
  $region20: #{shufflenet_v2_forward.39} parent=0 // pred_region
    _
  $region21: #{shufflenet_v2_forward.39} parent=0 // pred_fallthru
    _
  // Predicated region
  $region22: #{shufflenet_v2_forward.39} parent=0 // pred_check
    _
  $region23: #{shufflenet_v2_forward.39} parent=0 // pred_check_branch
    %94 = sbr.rel (0) target = $region25
  $region24: #{shufflenet_v2_forward.39} parent=0 // pred_region
    _
  $region25: #{shufflenet_v2_forward.39} parent=0 // pred_fallthru
    _

// kernel: shufflenet_v2_forward.38
$region0: #{shufflenet_v2_forward.38}
  #allocation0 [shape = 'u32[]', space=smem, size = 0x4, offset = 0x4, fixed_abs, tag = 'smem constant byte address 0x4 - core index']
  #allocation1 [shape = 'u32[144,128]{1,0:T(1,128)}', space=vmem, size = 0x12000, scoped, tag = 'internal scratch']
  %s0 = inlined_call_operand.vmem [shape: bf16[2,3,3,16], index: 0, kind: input, shape index: {}]
  %s1 = inlined_call_operand.vmem [shape: bf16[2,3,3,16], index: 1, kind: input, shape index: {}]
  %s2 = inlined_call_operand.vmem [shape: bf16[2,3,3,16], index: 2, kind: input, shape index: {}]
  %s3 = inlined_call_operand.vmem [shape: bf16[2,3,3,16], index: 3, kind: input, shape index: {}]
  %s4 = inlined_call_operand.vmem [shape: f32[9,1,1,16], index: 4, kind: input, shape index: {}]
  %s5 = inlined_call_operand.vmem [shape: f32[1,1,1,16], index: 5, kind: input, shape index: {}]
  %s6 = inlined_call_operand.vmem [shape: f32[1,1,1,16], index: 6, kind: input, shape index: {}]
  %s7 = inlined_call_operand.vmem [shape: bf16[2,2,2,16], index: 7, kind: output, shape index: {}]
  %s8 = sld [smem:[#allocation0]]
  $region61: #{shufflenet_v2_forward.38} parent=0
    _
  %s10 = ssub.s32 1, %s8
  %s11 = scalar_select 0, %s10, %s8
  loop: start=0, step=1, limit=4
  $region2: #{shufflenet_v2_forward.38} parent=0 // loop_pre_header
    _
  $region3: #{shufflenet_v2_forward.38} parent=0 // loop_header
    %s13 = sphi 0, %s17
    %p14 = scmp.ge.s32.totalorder %s13, 4
    %s23 = sphi 0, %s25
    %s26 = sphi 0, %s23
    %s27 = sphi 0, %s26
    %s43 = sphi 0, %s27
    %s49 = sphi 0, %s51
    %s52 = sphi 0, %s49
    %s53 = sphi 0, %s52
    %s69 = sphi 0, %s53
    %s75 = sphi 0, %s77
    %s78 = sphi 0, %s75
    %s79 = sphi 0, %s78
    %s95 = sphi 0, %s79
    %s101 = sphi 0, %s103
    %s104 = sphi 0, %s101
    %s105 = sphi 0, %s104
    %s121 = sphi 0, %s105
    %s125 = sphi 0, %s125
    %s127 = sphi 0, %s125
    %s128 = sphi 0, %s127
    %s142 = sphi 0, %s128
    %s146 = sphi 0, %s146
    %s148 = sphi 0, %s146
    %s149 = sphi 0, %s148
    %s163 = sphi 0, %s149
    %s167 = sphi 0, %s167
    %s169 = sphi 0, %s167
    %s170 = sphi 0, %s169
    %s184 = sphi 0, %s170
    %s190 = sphi 0, %s192
    %s193 = sphi 0, %s190
    %s194 = sphi 0, %s193
    %s210 = sphi 0, %s194
  $region4: #{shufflenet_v2_forward.38} parent=0 // loop_header_branch
    %16 = sbr.rel (%p14) target = $region8
  $region5: #{shufflenet_v2_forward.38} parent=0 // loop_body
    %s18 = ssub.s32 %s13, 1
    %s19 = ssub.s32 %s13, 2
    %s20 = sadd.s32 %s13, 1
    %s21 = ssub.s32 %s13, %s20
    %p22 = scmp.eq.s32.totalorder %s21, 0
    %s24 = sadd.s32 %s23, 1
    %s25 = scalar_select %p22, %s23, %s24
    %p28 = pneg %p22
    %p29 = scmp.eq.s32.totalorder %s13, 1
    %p30 = por %p28, %p29
    %p31 = scmp.ne.s32.totalorder %s23, %s26
    %p32 = scmp.eq.s32.totalorder %s13, 0
    %p33 = por %p31, %p32
    %p34 = scmp.ne.s32.totalorder %s23, %s26
    %p35 = scmp.eq.s32.totalorder %s18, 1
    %p36 = por %p34, %p35
    %p37 = scmp.ne.s32.totalorder %s26, %s27
    %p38 = scmp.eq.s32.totalorder %s18, 0
    %p39 = por %p37, %p38
    %p40 = scmp.ne.s32.totalorder %s26, %s27
    %p41 = scmp.eq.s32.totalorder %s19, 1
    %p42 = por %p40, %p41
    %p44 = scmp.ne.s32.totalorder %s27, %s43
    %p45 = scmp.eq.s32.totalorder %s19, 0
    %p46 = por %p44, %p45
    %s47 = ssub.s32 %s13, %s20
    %p48 = scmp.eq.s32.totalorder %s47, 0
    %s50 = sadd.s32 %s49, 1
    %s51 = scalar_select %p48, %s49, %s50
    %p54 = pneg %p48
    %p55 = scmp.eq.s32.totalorder %s13, 1
    %p56 = por %p54, %p55
    %p57 = scmp.ne.s32.totalorder %s49, %s52
    %p58 = scmp.eq.s32.totalorder %s13, 0
    %p59 = por %p57, %p58
    %p60 = scmp.ne.s32.totalorder %s49, %s52
    %p61 = scmp.eq.s32.totalorder %s18, 1
    %p62 = por %p60, %p61
    %p63 = scmp.ne.s32.totalorder %s52, %s53
    %p64 = scmp.eq.s32.totalorder %s18, 0
    %p65 = por %p63, %p64
    %p66 = scmp.ne.s32.totalorder %s52, %s53
    %p67 = scmp.eq.s32.totalorder %s19, 1
    %p68 = por %p66, %p67
    %p70 = scmp.ne.s32.totalorder %s53, %s69
    %p71 = scmp.eq.s32.totalorder %s19, 0
    %p72 = por %p70, %p71
    %s73 = ssub.s32 %s13, %s20
    %p74 = scmp.eq.s32.totalorder %s73, 0
    %s76 = sadd.s32 %s75, 1
    %s77 = scalar_select %p74, %s75, %s76
    %p80 = pneg %p74
    %p81 = scmp.eq.s32.totalorder %s13, 1
    %p82 = por %p80, %p81
    %p83 = scmp.ne.s32.totalorder %s75, %s78
    %p84 = scmp.eq.s32.totalorder %s13, 0
    %p85 = por %p83, %p84
    %p86 = scmp.ne.s32.totalorder %s75, %s78
    %p87 = scmp.eq.s32.totalorder %s18, 1
    %p88 = por %p86, %p87
    %p89 = scmp.ne.s32.totalorder %s78, %s79
    %p90 = scmp.eq.s32.totalorder %s18, 0
    %p91 = por %p89, %p90
    %p92 = scmp.ne.s32.totalorder %s78, %s79
    %p93 = scmp.eq.s32.totalorder %s19, 1
    %p94 = por %p92, %p93
    %p96 = scmp.ne.s32.totalorder %s79, %s95
    %p97 = scmp.eq.s32.totalorder %s19, 0
    %p98 = por %p96, %p97
    %s99 = ssub.s32 %s13, %s20
    %p100 = scmp.eq.s32.totalorder %s99, 0
    %s102 = sadd.s32 %s101, 1
    %s103 = scalar_select %p100, %s101, %s102
    %p106 = pneg %p100
    %p107 = scmp.eq.s32.totalorder %s13, 1
    %p108 = por %p106, %p107
    %p109 = scmp.ne.s32.totalorder %s101, %s104
    %p110 = scmp.eq.s32.totalorder %s13, 0
    %p111 = por %p109, %p110
    %p112 = scmp.ne.s32.totalorder %s101, %s104
    %p113 = scmp.eq.s32.totalorder %s18, 1
    %p114 = por %p112, %p113
    %p115 = scmp.ne.s32.totalorder %s104, %s105
    %p116 = scmp.eq.s32.totalorder %s18, 0
    %p117 = por %p115, %p116
    %p118 = scmp.ne.s32.totalorder %s104, %s105
    %p119 = scmp.eq.s32.totalorder %s19, 1
    %p120 = por %p118, %p119
    %p122 = scmp.ne.s32.totalorder %s105, %s121
    %p123 = scmp.eq.s32.totalorder %s19, 0
    %p124 = por %p122, %p123
    %s126 = sadd.s32 %s125, 1
    %p129 = scmp.eq.s32.totalorder %s13, 1
    %p130 = scmp.ne.s32.totalorder %s125, %s127
    %p131 = scmp.eq.s32.totalorder %s13, 0
    %p132 = por %p130, %p131
    %p133 = scmp.ne.s32.totalorder %s125, %s127
    %p134 = scmp.eq.s32.totalorder %s18, 1
    %p135 = por %p133, %p134
    %p136 = scmp.ne.s32.totalorder %s127, %s128
    %p137 = scmp.eq.s32.totalorder %s18, 0
    %p138 = por %p136, %p137
    %p139 = scmp.ne.s32.totalorder %s127, %s128
    %p140 = scmp.eq.s32.totalorder %s19, 1
    %p141 = por %p139, %p140
    %p143 = scmp.ne.s32.totalorder %s128, %s142
    %p144 = scmp.eq.s32.totalorder %s19, 0
    %p145 = por %p143, %p144
    %s147 = sadd.s32 %s146, 1
    %p150 = scmp.eq.s32.totalorder %s13, 1
    %p151 = scmp.ne.s32.totalorder %s146, %s148
    %p152 = scmp.eq.s32.totalorder %s13, 0
    %p153 = por %p151, %p152
    %p154 = scmp.ne.s32.totalorder %s146, %s148
    %p155 = scmp.eq.s32.totalorder %s18, 1
    %p156 = por %p154, %p155
    %p157 = scmp.ne.s32.totalorder %s148, %s149
    %p158 = scmp.eq.s32.totalorder %s18, 0
    %p159 = por %p157, %p158
    %p160 = scmp.ne.s32.totalorder %s148, %s149
    %p161 = scmp.eq.s32.totalorder %s19, 1
    %p162 = por %p160, %p161
    %p164 = scmp.ne.s32.totalorder %s149, %s163
    %p165 = scmp.eq.s32.totalorder %s19, 0
    %p166 = por %p164, %p165
    %s168 = sadd.s32 %s167, 1
    %p171 = scmp.eq.s32.totalorder %s13, 1
    %p172 = scmp.ne.s32.totalorder %s167, %s169
    %p173 = scmp.eq.s32.totalorder %s13, 0
    %p174 = por %p172, %p173
    %p175 = scmp.ne.s32.totalorder %s167, %s169
    %p176 = scmp.eq.s32.totalorder %s18, 1
    %p177 = por %p175, %p176
    %p178 = scmp.ne.s32.totalorder %s169, %s170
    %p179 = scmp.eq.s32.totalorder %s18, 0
    %p180 = por %p178, %p179
    %p181 = scmp.ne.s32.totalorder %s169, %s170
    %p182 = scmp.eq.s32.totalorder %s19, 1
    %p183 = por %p181, %p182
    %p185 = scmp.ne.s32.totalorder %s170, %s184
    %p186 = scmp.eq.s32.totalorder %s19, 0
    %p187 = por %p185, %p186
    %s188 = ssub.s32 %s13, %s20
    %p189 = scmp.eq.s32.totalorder %s188, 0
    %s191 = sadd.s32 %s190, 1
    %s192 = scalar_select %p189, %s190, %s191
    %p195 = pneg %p189
    %p196 = scmp.eq.s32.totalorder %s13, 1
    %p197 = por %p195, %p196
    %p198 = scmp.ne.s32.totalorder %s190, %s193
    %p199 = scmp.eq.s32.totalorder %s13, 0
    %p200 = por %p198, %p199
    %p201 = scmp.ne.s32.totalorder %s190, %s193
    %p202 = scmp.eq.s32.totalorder %s18, 1
    %p203 = por %p201, %p202
    %p204 = scmp.ne.s32.totalorder %s193, %s194
    %p205 = scmp.eq.s32.totalorder %s18, 0
    %p206 = por %p204, %p205
    %p207 = scmp.ne.s32.totalorder %s193, %s194
    %p208 = scmp.eq.s32.totalorder %s19, 1
    %p209 = por %p207, %p208
    %p211 = scmp.ne.s32.totalorder %s194, %s210
    %p212 = scmp.eq.s32.totalorder %s19, 0
    %p213 = por %p211, %p212
    %p214 = scmp.le.s32.totalorder 1, %s13
    %p215 = scmp.lt.s32.totalorder %s13, 3
    %p216 = pnand %p214, %p215
    %p217 = pneg %p216
    // Predicated region
    $region9: #{shufflenet_v2_forward.38} parent=5 // pred_check
      _
    $region10: #{shufflenet_v2_forward.38} parent=5 // pred_check_branch
      %219 = sbr.rel (%p216) target = $region12
    $region11: #{shufflenet_v2_forward.38} parent=5 // pred_region
      %s220 = ssub.s32 %s13, 1
      // Predicated region
      $region13: #{shufflenet_v2_forward.38} parent=11 // pred_check
        %p221 = pneg %p138
      $region14: #{shufflenet_v2_forward.38} parent=11 // pred_check_branch
        %223 = sbr.rel (%p221) target = $region16
      $region15: #{shufflenet_v2_forward.38} parent=11 // pred_region
        _
      $region16: #{shufflenet_v2_forward.38} parent=11 // pred_fallthru
        _
      // Predicated region
      $region17: #{shufflenet_v2_forward.38} parent=11 // pred_check
        %p224 = pneg %p159
      $region18: #{shufflenet_v2_forward.38} parent=11 // pred_check_branch
        %226 = sbr.rel (%p224) target = $region20
      $region19: #{shufflenet_v2_forward.38} parent=11 // pred_region
        _
      $region20: #{shufflenet_v2_forward.38} parent=11 // pred_fallthru
        _
      // Predicated region
      $region21: #{shufflenet_v2_forward.38} parent=11 // pred_check
        %p227 = pneg %p180
      $region22: #{shufflenet_v2_forward.38} parent=11 // pred_check_branch
        %229 = sbr.rel (%p227) target = $region24
      $region23: #{shufflenet_v2_forward.38} parent=11 // pred_region
        _
      $region24: #{shufflenet_v2_forward.38} parent=11 // pred_fallthru
        _
    $region12: #{shufflenet_v2_forward.38} parent=5 // pred_fallthru
      _
    %p230 = scmp.lt.s32.totalorder %s13, 2
    // Predicated region
    $region25: #{shufflenet_v2_forward.38} parent=5 // pred_check
      %p231 = pneg %p230
    $region26: #{shufflenet_v2_forward.38} parent=5 // pred_check_branch
      %233 = sbr.rel (%p231) target = $region28
    $region27: #{shufflenet_v2_forward.38} parent=5 // pred_region
      // Predicated region
      $region29: #{shufflenet_v2_forward.38} parent=27 // pred_check
        %p234 = pneg %p33
      $region30: #{shufflenet_v2_forward.38} parent=27 // pred_check_branch
        %236 = sbr.rel (%p234) target = $region32
      $region31: #{shufflenet_v2_forward.38} parent=27 // pred_region
        %p237 = scmp.lt.s32.totalorder %s13, 1
        %s238 = scalar_select %p237, %s13, 1
        %s239 = smul.addr %s238, 3
        %s240 = smul.addr %s239, 2
        %s241 = scalar_lea.vmem %s0, %s240
      $region32: #{shufflenet_v2_forward.38} parent=27 // pred_fallthru
        _
      // Predicated region
      $region33: #{shufflenet_v2_forward.38} parent=27 // pred_check
        %p242 = pneg %p59
      $region34: #{shufflenet_v2_forward.38} parent=27 // pred_check_branch
        %244 = sbr.rel (%p242) target = $region36
      $region35: #{shufflenet_v2_forward.38} parent=27 // pred_region
        %p245 = scmp.lt.s32.totalorder %s13, 1
        %s246 = scalar_select %p245, %s13, 1
        %s247 = smul.addr %s246, 3
        %s248 = smul.addr %s247, 2
        %s249 = scalar_lea.vmem %s1, %s248
      $region36: #{shufflenet_v2_forward.38} parent=27 // pred_fallthru
        _
      // Predicated region
      $region37: #{shufflenet_v2_forward.38} parent=27 // pred_check
        %p250 = pneg %p85
      $region38: #{shufflenet_v2_forward.38} parent=27 // pred_check_branch
        %252 = sbr.rel (%p250) target = $region40
      $region39: #{shufflenet_v2_forward.38} parent=27 // pred_region
        %p253 = scmp.lt.s32.totalorder %s13, 1
        %s254 = scalar_select %p253, %s13, 1
        %s255 = smul.addr %s254, 3
        %s256 = smul.addr %s255, 2
        %s257 = scalar_lea.vmem %s2, %s256
      $region40: #{shufflenet_v2_forward.38} parent=27 // pred_fallthru
        _
      // Predicated region
      $region41: #{shufflenet_v2_forward.38} parent=27 // pred_check
        %p258 = pneg %p111
      $region42: #{shufflenet_v2_forward.38} parent=27 // pred_check_branch
        %260 = sbr.rel (%p258) target = $region44
      $region43: #{shufflenet_v2_forward.38} parent=27 // pred_region
        %p261 = scmp.lt.s32.totalorder %s13, 1
        %s262 = scalar_select %p261, %s13, 1
        %s263 = smul.addr %s262, 3
        %s264 = smul.addr %s263, 2
        %s265 = scalar_lea.vmem %s3, %s264
      $region44: #{shufflenet_v2_forward.38} parent=27 // pred_fallthru
        _
    $region28: #{shufflenet_v2_forward.38} parent=5 // pred_fallthru
      _
    %p266 = scmp.le.s32.totalorder 1, %s13
    %p267 = scmp.lt.s32.totalorder %s13, 3
    %p268 = pnand %p266, %p267
    %p269 = pneg %p268
    // Predicated region
    $region45: #{shufflenet_v2_forward.38} parent=5 // pred_check
      _
    $region46: #{shufflenet_v2_forward.38} parent=5 // pred_check_branch
      %271 = sbr.rel (%p268) target = $region48
    $region47: #{shufflenet_v2_forward.38} parent=5 // pred_region
      %s272 = ssub.s32 %s13, 1
      %p273 = scmp.lt.s32.totalorder %s18, 1
      %s274 = scalar_select %p273, %s18, 1
      %s275 = smul.addr %s274, 3
      %s276 = smul.addr %s275, 2
      %s277 = scalar_lea.vmem %s0, %s276
      %p278 = pneg %p39
      %p279 = pneg %p36
      %p280 = scmp.lt.s32.totalorder %s18, 1
      %s281 = scalar_select %p280, %s18, 1
      %s282 = smul.addr %s281, 3
      %s283 = smul.addr %s282, 2
      %s284 = scalar_lea.vmem %s1, %s283
      %p285 = pneg %p65
      %p286 = pneg %p62
      %p287 = scmp.lt.s32.totalorder %s18, 1
      %s288 = scalar_select %p287, %s18, 1
      %s289 = smul.addr %s288, 3
      %s290 = smul.addr %s289, 2
      %s291 = scalar_lea.vmem %s2, %s290
      %p292 = pneg %p91
      %p293 = pneg %p88
      %p294 = scmp.lt.s32.totalorder %s18, 1
      %s295 = scalar_select %p294, %s18, 1
      %s296 = smul.addr %s295, 3
      %s297 = smul.addr %s296, 2
      %s298 = scalar_lea.vmem %s3, %s297
      %p299 = pneg %p117
      %p300 = pneg %p114
      %p301 = pneg %p138
      %p302 = pneg %p135
      %p303 = pneg %p159
      %p304 = pneg %p156
      %p305 = pneg %p180
      %p306 = pneg %p177
      %p307 = pneg %p206
      %p308 = pneg %p203
      %p309 = scmp.lt.s32.totalorder %s18, 1
      %s310 = scalar_select %p309, %s18, 1
      %s311 = smul.addr %s310, 2
      %s312 = scalar_lea.vmem %s7, %s311
      %p313 = scmp.lt.s32.totalorder %s18, 1
      %s314 = scalar_select %p313, %s18, 1
      %s315 = smul.addr %s314, 3
      %s316 = smul.addr %s315, 2
      %s317 = scalar_lea.vmem %s0, %s316
      %p318 = scmp.lt.s32.totalorder %s18, 1
      %s319 = scalar_select %p318, %s18, 1
      %s320 = smul.addr %s319, 3
      %s321 = smul.addr %s320, 2
      %s322 = scalar_lea.vmem %s1, %s321
      %p323 = scmp.lt.s32.totalorder %s18, 1
      %s324 = scalar_select %p323, %s18, 1
      %s325 = smul.addr %s324, 3
      %s326 = smul.addr %s325, 2
      %s327 = scalar_lea.vmem %s2, %s326
      %p328 = scmp.lt.s32.totalorder %s18, 1
      %s329 = scalar_select %p328, %s18, 1
      %s330 = smul.addr %s329, 3
      %s331 = smul.addr %s330, 2
      %s332 = scalar_lea.vmem %s3, %s331
      %p333 = scmp.lt.s32.totalorder %s18, 1
      %s334 = scalar_select %p333, %s18, 1
      %s335 = smul.addr %s334, 2
      %s336 = scalar_lea.vmem %s7, %s335
      %v337 = vld [vmem:[%s317] sm:$0x3]
      %v338 = vld [vmem:[%s317 + $0x2] sm:$0x3]
      %v339 = vld [vmem:[%s317 + $0x4] sm:$0x3]
      %v340 = vunpack.c.l.bf16 %v337
      %v341 = vunpack.c.l.bf16 %v338
      %v342 = vunpack.c.l.bf16 %v339
      %v343 = vld [vmem:[%s322] sm:$0x3]
      %v344 = vld [vmem:[%s322 + $0x2] sm:$0x3]
      %v345 = vld [vmem:[%s322 + $0x4] sm:$0x3]
      %v346 = vunpack.c.l.bf16 %v343
      %v347 = vunpack.c.l.bf16 %v344
      %v348 = vunpack.c.l.bf16 %v345
      %v349 = vld [vmem:[%s327] sm:$0x3]
      %v350 = vld [vmem:[%s327 + $0x2] sm:$0x3]
      %v351 = vunpack.c.l.bf16 %v349
      %v352 = vunpack.c.l.bf16 %v350
      %v353 = vld [vmem:[%s332] sm:$0x3]
      %v354 = vld [vmem:[%s332 + $0x2] sm:$0x3]
      %v355 = vunpack.c.l.bf16 %v353
      %v356 = vunpack.c.l.bf16 %v354
      %v357 = vld [vmem:[%s4] sm:$0x1]
      %v359 = vlaneseq
      %v360 = vshrl.u32 %v359, 7
      %v361 = vsub.s32 0, %v360
      %v362 = vrot.slane %v357, %v361
      %v364 = vmul.f32 %v340, %v362
      %v365 = vmul.f32 %v341, %v362
      %v366 = vadd.f32 %v364, 0.0
      %v367 = vadd.f32 %v365, 0.0
      %s368 = scalar_lea.vmem %s4, 1
      %v369 = vld [vmem:[%s368] sm:$0x1]
      %v371 = vlaneseq
      %v372 = vshrl.u32 %v371, 7
      %v373 = vsub.s32 0, %v372
      %v374 = vrot.slane %v369, %v373
      %v376 = vmul.f32 %v346, %v374
      %v377 = vmul.f32 %v347, %v374
      %v378 = vadd.f32 %v366, %v376
      %v379 = vadd.f32 %v367, %v377
      %s380 = scalar_lea.vmem %s4, 2
      %v381 = vld [vmem:[%s380] sm:$0x1]
      %v383 = vlaneseq
      %v384 = vshrl.u32 %v383, 7
      %v385 = vsub.s32 0, %v384
      %v386 = vrot.slane %v381, %v385
      %v388 = vmul.f32 %v340, %v386
      %v389 = vmul.f32 %v341, %v386
      %v392 = vrot.slane %v388, 5
      %v393 = vrot.slane %v392, 4
      %v394 = vrot.slane %v389, 5
      %v395 = vrot.slane %v394, 4
      %v398 = vadd.f32 %v378, %v393
      %v399 = vadd.f32 %v379, %v395
      %s400 = scalar_lea.vmem %s4, 3
      %v401 = vld [vmem:[%s400] sm:$0x1]
      %v403 = vlaneseq
      %v404 = vshrl.u32 %v403, 7
      %v405 = vsub.s32 0, %v404
      %v406 = vrot.slane %v401, %v405
      %v408 = vmul.f32 %v351, %v406
      %v409 = vmul.f32 %v352, %v406
      %v410 = vadd.f32 %v398, %v408
      %v411 = vadd.f32 %v399, %v409
      %s412 = scalar_lea.vmem %s4, 4
      %v413 = vld [vmem:[%s412] sm:$0x1]
      %v415 = vlaneseq
      %v416 = vshrl.u32 %v415, 7
      %v417 = vsub.s32 0, %v416
      %v418 = vrot.slane %v413, %v417
      %v420 = vmul.f32 %v355, %v418
      %v421 = vmul.f32 %v356, %v418
      %v422 = vadd.f32 %v410, %v420
      %v423 = vadd.f32 %v411, %v421
      %s424 = scalar_lea.vmem %s4, 5
      %v425 = vld [vmem:[%s424] sm:$0x1]
      %v427 = vlaneseq
      %v428 = vshrl.u32 %v427, 7
      %v429 = vsub.s32 0, %v428
      %v430 = vrot.slane %v425, %v429
      %v432 = vmul.f32 %v351, %v430
      %v433 = vmul.f32 %v352, %v430
      %v436 = vrot.slane %v432, 5
      %v437 = vrot.slane %v436, 4
      %v438 = vrot.slane %v433, 5
      %v439 = vrot.slane %v438, 4
      %v442 = vadd.f32 %v422, %v437
      %v443 = vadd.f32 %v423, %v439
      %s444 = scalar_lea.vmem %s4, 6
      %v445 = vld [vmem:[%s444] sm:$0x1]
      %v447 = vlaneseq
      %v448 = vshrl.u32 %v447, 7
      %v449 = vsub.s32 0, %v448
      %v450 = vrot.slane %v445, %v449
      %v452 = vmul.f32 %v341, %v450
      %v453 = vmul.f32 %v342, %v450
      %v454 = vadd.f32 %v442, %v452
      %v455 = vadd.f32 %v443, %v453
      %s456 = scalar_lea.vmem %s4, 7
      %v457 = vld [vmem:[%s456] sm:$0x1]
      %v459 = vlaneseq
      %v460 = vshrl.u32 %v459, 7
      %v461 = vsub.s32 0, %v460
      %v462 = vrot.slane %v457, %v461
      %v464 = vmul.f32 %v347, %v462
      %v465 = vmul.f32 %v348, %v462
      %v466 = vadd.f32 %v454, %v464
      %v467 = vadd.f32 %v455, %v465
      %s468 = scalar_lea.vmem %s4, 8
      %v469 = vld [vmem:[%s468] sm:$0x1]
      %v471 = vlaneseq
      %v472 = vshrl.u32 %v471, 7
      %v473 = vsub.s32 0, %v472
      %v474 = vrot.slane %v469, %v473
      %v476 = vmul.f32 %v341, %v474
      %v477 = vmul.f32 %v342, %v474
      %v480 = vrot.slane %v476, 5
      %v481 = vrot.slane %v480, 4
      %v482 = vrot.slane %v477, 5
      %v483 = vrot.slane %v482, 4
      %v486 = vadd.f32 %v466, %v481
      %v487 = vadd.f32 %v467, %v483
      %v488 = vld [vmem:[%s5] sm:$0x1]
      %v490 = vlaneseq
      %v491 = vshrl.u32 %v490, 7
      %v492 = vsub.s32 0, %v491
      %v493 = vrot.slane %v488, %v492
      %v495 = vmul.f32 %v486, %v493
      %v496 = vmul.f32 %v487, %v493
      %v497 = vld [vmem:[%s6] sm:$0x1]
      %v499 = vlaneseq
      %v500 = vshrl.u32 %v499, 7
      %v501 = vsub.s32 0, %v500
      %v502 = vrot.slane %v497, %v501
      %v504 = vadd.f32 %v495, %v502
      %v505 = vadd.f32 %v496, %v502
      %v506 = vpack.c.bf16 %v504, %v504
      %v507 = vpack.c.bf16 %v505, %v505
      %vm508 = vcmask 122880
      %509 = vst.msk [vmem:[%s336] sm:$0x1] %vm508, %v506
      %510 = vst.msk [vmem:[%s336 + $0x1] sm:$0x1] %vm508, %v507
      %p511 = scmp.lt.s32.totalorder %s18, 1
      %s512 = scalar_select %p511, %s18, 1
      %s513 = smul.addr %s512, 2
      %s514 = scalar_lea.vmem %s7, %s513
      // Predicated region
      $region49: #{shufflenet_v2_forward.38} parent=47 // pred_check
        %p515 = pneg %p203
      $region50: #{shufflenet_v2_forward.38} parent=47 // pred_check_branch
        %517 = sbr.rel (%p515) target = $region52
      $region51: #{shufflenet_v2_forward.38} parent=47 // pred_region
        _
      $region52: #{shufflenet_v2_forward.38} parent=47 // pred_fallthru
        _
    $region48: #{shufflenet_v2_forward.38} parent=5 // pred_fallthru
      _
    %p518 = scmp.le.s32.totalorder 2, %s13
    // Predicated region
    $region53: #{shufflenet_v2_forward.38} parent=5 // pred_check
      %p519 = pneg %p518
    $region54: #{shufflenet_v2_forward.38} parent=5 // pred_check_branch
      %521 = sbr.rel (%p519) target = $region56
    $region55: #{shufflenet_v2_forward.38} parent=5 // pred_region
      %s522 = ssub.s32 %s13, 2
      // Predicated region
      $region57: #{shufflenet_v2_forward.38} parent=55 // pred_check
        %p523 = pneg %p209
      $region58: #{shufflenet_v2_forward.38} parent=55 // pred_check_branch
        %525 = sbr.rel (%p523) target = $region60
      $region59: #{shufflenet_v2_forward.38} parent=55 // pred_region
        %p526 = scmp.lt.s32.totalorder %s19, 1
        %s527 = scalar_select %p526, %s19, 1
        %s528 = smul.addr %s527, 2
        %s529 = scalar_lea.vmem %s7, %s528
      $region60: #{shufflenet_v2_forward.38} parent=55 // pred_fallthru
        _
    $region56: #{shufflenet_v2_forward.38} parent=5 // pred_fallthru
      _
  $region6: #{shufflenet_v2_forward.38} parent=0 // loop_footer
    %s17 = sadd.s32 1, %s13
  $region7: #{shufflenet_v2_forward.38} parent=0 // loop_footer_branch
    %12 = sbr.rel target = $region3
  $region8: #{shufflenet_v2_forward.38} parent=0 // loop_exit
    _

// kernel: shufflenet_v2_forward.40
$region0: #{shufflenet_v2_forward.40}
  #allocation0 [shape = 'u32[]', space=smem, size = 0x4, offset = 0x4, fixed_abs, tag = 'smem constant byte address 0x4 - core index']
  #allocation1 [shape = 'u32[144,128]{1,0:T(1,128)}', space=vmem, size = 0x12000, scoped, tag = 'internal scratch']
  %s0 = inlined_call_operand.vmem [shape: bf16[32,16], index: 0, kind: input, shape index: {}]
  %s1 = inlined_call_operand.vmem [shape: bf16[16,16], index: 1, kind: input, shape index: {}]
  %s2 = inlined_call_operand.vmem [shape: f32[1,16], index: 2, kind: input, shape index: {}]
  %s3 = inlined_call_operand.vmem [shape: f32[1,16], index: 3, kind: input, shape index: {}]
  %s4 = inlined_call_operand.vmem [shape: bf16[32,16], index: 4, kind: output, shape index: {}]
  %s5 = sld [smem:[#allocation0]]
  $region26: #{shufflenet_v2_forward.40} parent=0
    _
  %s7 = ssub.s32 1, %s5
  %s8 = scalar_select 0, %s7, %s5
  // Predicated region
  $region2: #{shufflenet_v2_forward.40} parent=0 // pred_check
    _
  $region3: #{shufflenet_v2_forward.40} parent=0 // pred_check_branch
    %10 = sbr.rel (0) target = $region5
  $region4: #{shufflenet_v2_forward.40} parent=0 // pred_region
    _
  $region5: #{shufflenet_v2_forward.40} parent=0 // pred_fallthru
    _
  // Predicated region
  $region6: #{shufflenet_v2_forward.40} parent=0 // pred_check
    _
  $region7: #{shufflenet_v2_forward.40} parent=0 // pred_check_branch
    %12 = sbr.rel (0) target = $region9
  $region8: #{shufflenet_v2_forward.40} parent=0 // pred_region
    _
  $region9: #{shufflenet_v2_forward.40} parent=0 // pred_fallthru
    _
  // Predicated region
  $region10: #{shufflenet_v2_forward.40} parent=0 // pred_check
    _
  $region11: #{shufflenet_v2_forward.40} parent=0 // pred_check_branch
    %14 = sbr.rel (0) target = $region13
  $region12: #{shufflenet_v2_forward.40} parent=0 // pred_region
    _
  $region13: #{shufflenet_v2_forward.40} parent=0 // pred_fallthru
    _
  // Predicated region
  $region14: #{shufflenet_v2_forward.40} parent=0 // pred_check
    _
  $region15: #{shufflenet_v2_forward.40} parent=0 // pred_check_branch
    %16 = sbr.rel (0) target = $region17
  $region16: #{shufflenet_v2_forward.40} parent=0 // pred_region
    _
  $region17: #{shufflenet_v2_forward.40} parent=0 // pred_fallthru
    _
  %v18 = vld [vmem:[%s0] sm:$0xf]
  %v19 = vld [vmem:[%s0 + $0x4] sm:$0xf]
  %v20 = vld [vmem:[%s0 + $0x8] sm:$0xf]
  %v21 = vld [vmem:[%s0 + $0xc] sm:$0xf]
  %v22 = vld [vmem:[%s1] sm:$0xf]
  %v23 = vld [vmem:[%s1 + $0x4] sm:$0xf]
  %v28 = vunpack.c.l.b16 %v18
  %v29 = vunpack.c.l.b16 %v19
  %v30 = vunpack.c.l.b16 %v20
  %v31 = vunpack.c.l.b16 %v21
  %v32 = vpack.c.b16 %v29, %v28
  %v33 = vpack.c.b16 %v31, %v30
  %v36 = vunpack.c.l.b16 %v22
  %v37 = vunpack.c.l.b16 %v23
  %v38 = vpack.c.b16 %v37, %v36
  %vm40 = vcmask 130048
  %v42 = vsel %vm40, %v32, 0
  %v45 = vsel %vm40, %v33, 0
  %47 = vmatprep.subr.bf16.mxu0 0
  %48 = vmatpush1.bf16.msra.mxu0 %v38
  %49 = vmatprep.subr.bf16.mxu0 0
  %50 = vmatpush1.bf16.msra.mxu0 0
  %51 = vmatprep.subr.bf16.mxu0 0
  %52 = vmatpush1.bf16.msra.mxu0 0
  %53 = vmatprep.subr.bf16.mxu0 0
  %54 = vmatpush1.bf16.msra.mxu0 0
  %55 = vmatprep.subr.bf16.mxu0 0
  %56 = vmatpush1.bf16.msra.mxu0 0
  %57 = vmatprep.subr.bf16.mxu0 0
  %58 = vmatpush1.bf16.msra.mxu0 0
  %59 = vmatprep.subr.bf16.mxu0 0
  %60 = vmatpush1.bf16.msra.mxu0 0
  %61 = vmatprep.subr.bf16.mxu0 0
  %62 = vmatpush1.bf16.msra.mxu0 0
  %63 = vmatprep.subr.bf16.mxu0 0
  %64 = vmatpush1.bf16.msra.mxu0 0
  %65 = vmatprep.subr.bf16.mxu0 0
  %66 = vmatpush1.bf16.msra.mxu0 0
  %67 = vmatprep.subr.bf16.mxu0 0
  %68 = vmatpush1.bf16.msra.mxu0 0
  %69 = vmatprep.subr.bf16.mxu0 0
  %70 = vmatpush1.bf16.msra.mxu0 0
  %71 = vmatprep.subr.bf16.mxu0 0
  %72 = vmatpush1.bf16.msra.mxu0 0
  %73 = vmatprep.subr.bf16.mxu0 0
  %74 = vmatpush1.bf16.msra.mxu0 0
  %75 = vmatprep.subr.bf16.mxu0 0
  %76 = vmatpush1.bf16.msra.mxu0 0
  %77 = vmatprep.subr.bf16.mxu0 0
  %78 = vmatpush1.bf16.msra.mxu0 0
  %79 = vmatprep.mubr.bf16.mxu0 0
  %80 = vmatmul.mubr.bf16.gmra.mrb[0].mxu0 %v42
  %v81 = vpop.f32.mrb[0].mxu0
  %v82 = vadd.f32 0.0, %v81
  %v83 = vpop.f32.mrb[0].mxu0
  %v84 = vpop.f32.mrb[0].mxu0
  %v85 = vadd.f32 0.0, %v84
  %v86 = vpop.f32.mrb[0].mxu0
  %87 = vmatprep.mubr.bf16.mxu0 0
  %88 = vmatmul.mubr.bf16.gmra.mrb[0].mxu0 %v45
  %v89 = vpop.f32.mrb[0].mxu0
  %v90 = vadd.f32 0.0, %v89
  %v91 = vpop.f32.mrb[0].mxu0
  %v92 = vpop.f32.mrb[0].mxu0
  %v93 = vadd.f32 0.0, %v92
  %v94 = vpop.f32.mrb[0].mxu0
  %95 = vdwg.mxu0
  %v96 = vld [vmem:[%s2] sm:$0x1]
  %v98 = vlaneseq
  %v99 = vshrl.u32 %v98, 7
  %v100 = vsub.s32 0, %v99
  %v101 = vrot.slane %v96, %v100
  %v103 = vmul.f32 %v82, %v101
  %v104 = vmul.f32 %v85, %v101
  %v105 = vmul.f32 %v90, %v101
  %v106 = vmul.f32 %v93, %v101
  %v107 = vld [vmem:[%s3] sm:$0x1]
  %v109 = vlaneseq
  %v110 = vshrl.u32 %v109, 7
  %v111 = vsub.s32 0, %v110
  %v112 = vrot.slane %v107, %v111
  %v114 = vadd.f32 %v103, %v112
  %v115 = vadd.f32 %v104, %v112
  %v116 = vadd.f32 %v105, %v112
  %v117 = vadd.f32 %v106, %v112
  %v118 = vmax.f32 %v114, 0.0
  %v119 = vmax.f32 %v115, 0.0
  %v120 = vmax.f32 %v116, 0.0
  %v121 = vmax.f32 %v117, 0.0
  %v122 = vpack.c.bf16 %v119, %v118
  %v123 = vpack.c.bf16 %v121, %v120
  %v126 = vunpack.c.l.b16 %v122
  %v127 = vunpack.c.h.b16 %v122
  %v128 = vunpack.c.l.b16 %v123
  %v129 = vunpack.c.h.b16 %v123
  %v130 = vpack.c.b16 %v126, %v126
  %v131 = vpack.c.b16 %v127, %v127
  %v132 = vpack.c.b16 %v128, %v128
  %v133 = vpack.c.b16 %v129, %v129
  %vm138 = vcmask 125952
  %139 = vst.msk [vmem:[%s4] sm:$0xf] %vm138, %v130
  %140 = vst.msk [vmem:[%s4 + $0x4] sm:$0xf] %vm138, %v131
  %141 = vst.msk [vmem:[%s4 + $0x8] sm:$0xf] %vm138, %v132
  %142 = vst.msk [vmem:[%s4 + $0xc] sm:$0xf] %vm138, %v133
  // Predicated region
  $region18: #{shufflenet_v2_forward.40} parent=0 // pred_check
    _
  $region19: #{shufflenet_v2_forward.40} parent=0 // pred_check_branch
    %144 = sbr.rel (0) target = $region21
  $region20: #{shufflenet_v2_forward.40} parent=0 // pred_region
    _
  $region21: #{shufflenet_v2_forward.40} parent=0 // pred_fallthru
    _
  // Predicated region
  $region22: #{shufflenet_v2_forward.40} parent=0 // pred_check
    _
  $region23: #{shufflenet_v2_forward.40} parent=0 // pred_check_branch
    %146 = sbr.rel (0) target = $region25
  $region24: #{shufflenet_v2_forward.40} parent=0 // pred_region
    _
  $region25: #{shufflenet_v2_forward.40} parent=0 // pred_fallthru
    _

// kernel: shufflenet_v2_forward.44
$region0: #{shufflenet_v2_forward.44}
  #allocation0 [shape = 'u32[]', space=smem, size = 0x4, offset = 0x4, fixed_abs, tag = 'smem constant byte address 0x4 - core index']
  #allocation1 [shape = 'u32[144,128]{1,0:T(1,128)}', space=vmem, size = 0x12000, scoped, tag = 'internal scratch']
  %s0 = inlined_call_operand.vmem [shape: bf16[2,4,4,16], index: 0, kind: input, shape index: {}]
  %s1 = inlined_call_operand.vmem [shape: f32[9,1,1,16], index: 1, kind: input, shape index: {}]
  %s2 = inlined_call_operand.vmem [shape: f32[1,1,1,16], index: 2, kind: input, shape index: {}]
  %s3 = inlined_call_operand.vmem [shape: f32[1,1,1,16], index: 3, kind: input, shape index: {}]
  %s4 = inlined_call_operand.vmem [shape: bf16[2,2,2,16], index: 4, kind: output, shape index: {}]
  %s5 = sld [smem:[#allocation0]]
  $region49: #{shufflenet_v2_forward.44} parent=0
    _
  %s7 = ssub.s32 1, %s5
  %s8 = scalar_select 0, %s7, %s5
  loop: start=0, step=1, limit=4
  $region2: #{shufflenet_v2_forward.44} parent=0 // loop_pre_header
    _
  $region3: #{shufflenet_v2_forward.44} parent=0 // loop_header
    %s10 = sphi 0, %s14
    %p11 = scmp.ge.s32.totalorder %s10, 4
    %s20 = sphi 0, %s22
    %s23 = sphi 0, %s20
    %s24 = sphi 0, %s23
    %s40 = sphi 0, %s24
    %s44 = sphi 0, %s44
    %s46 = sphi 0, %s44
    %s47 = sphi 0, %s46
    %s61 = sphi 0, %s47
    %s65 = sphi 0, %s65
    %s67 = sphi 0, %s65
    %s68 = sphi 0, %s67
    %s82 = sphi 0, %s68
    %s86 = sphi 0, %s86
    %s88 = sphi 0, %s86
    %s89 = sphi 0, %s88
    %s103 = sphi 0, %s89
    %s109 = sphi 0, %s111
    %s112 = sphi 0, %s109
    %s113 = sphi 0, %s112
    %s129 = sphi 0, %s113
  $region4: #{shufflenet_v2_forward.44} parent=0 // loop_header_branch
    %13 = sbr.rel (%p11) target = $region8
  $region5: #{shufflenet_v2_forward.44} parent=0 // loop_body
    %s15 = ssub.s32 %s10, 1
    %s16 = ssub.s32 %s10, 2
    %s17 = sadd.s32 %s10, 1
    %s18 = ssub.s32 %s10, %s17
    %p19 = scmp.eq.s32.totalorder %s18, 0
    %s21 = sadd.s32 %s20, 1
    %s22 = scalar_select %p19, %s20, %s21
    %p25 = pneg %p19
    %p26 = scmp.eq.s32.totalorder %s10, 1
    %p27 = por %p25, %p26
    %p28 = scmp.ne.s32.totalorder %s20, %s23
    %p29 = scmp.eq.s32.totalorder %s10, 0
    %p30 = por %p28, %p29
    %p31 = scmp.ne.s32.totalorder %s20, %s23
    %p32 = scmp.eq.s32.totalorder %s15, 1
    %p33 = por %p31, %p32
    %p34 = scmp.ne.s32.totalorder %s23, %s24
    %p35 = scmp.eq.s32.totalorder %s15, 0
    %p36 = por %p34, %p35
    %p37 = scmp.ne.s32.totalorder %s23, %s24
    %p38 = scmp.eq.s32.totalorder %s16, 1
    %p39 = por %p37, %p38
    %p41 = scmp.ne.s32.totalorder %s24, %s40
    %p42 = scmp.eq.s32.totalorder %s16, 0
    %p43 = por %p41, %p42
    %s45 = sadd.s32 %s44, 1
    %p48 = scmp.eq.s32.totalorder %s10, 1
    %p49 = scmp.ne.s32.totalorder %s44, %s46
    %p50 = scmp.eq.s32.totalorder %s10, 0
    %p51 = por %p49, %p50
    %p52 = scmp.ne.s32.totalorder %s44, %s46
    %p53 = scmp.eq.s32.totalorder %s15, 1
    %p54 = por %p52, %p53
    %p55 = scmp.ne.s32.totalorder %s46, %s47
    %p56 = scmp.eq.s32.totalorder %s15, 0
    %p57 = por %p55, %p56
    %p58 = scmp.ne.s32.totalorder %s46, %s47
    %p59 = scmp.eq.s32.totalorder %s16, 1
    %p60 = por %p58, %p59
    %p62 = scmp.ne.s32.totalorder %s47, %s61
    %p63 = scmp.eq.s32.totalorder %s16, 0
    %p64 = por %p62, %p63
    %s66 = sadd.s32 %s65, 1
    %p69 = scmp.eq.s32.totalorder %s10, 1
    %p70 = scmp.ne.s32.totalorder %s65, %s67
    %p71 = scmp.eq.s32.totalorder %s10, 0
    %p72 = por %p70, %p71
    %p73 = scmp.ne.s32.totalorder %s65, %s67
    %p74 = scmp.eq.s32.totalorder %s15, 1
    %p75 = por %p73, %p74
    %p76 = scmp.ne.s32.totalorder %s67, %s68
    %p77 = scmp.eq.s32.totalorder %s15, 0
    %p78 = por %p76, %p77
    %p79 = scmp.ne.s32.totalorder %s67, %s68
    %p80 = scmp.eq.s32.totalorder %s16, 1
    %p81 = por %p79, %p80
    %p83 = scmp.ne.s32.totalorder %s68, %s82
    %p84 = scmp.eq.s32.totalorder %s16, 0
    %p85 = por %p83, %p84
    %s87 = sadd.s32 %s86, 1
    %p90 = scmp.eq.s32.totalorder %s10, 1
    %p91 = scmp.ne.s32.totalorder %s86, %s88
    %p92 = scmp.eq.s32.totalorder %s10, 0
    %p93 = por %p91, %p92
    %p94 = scmp.ne.s32.totalorder %s86, %s88
    %p95 = scmp.eq.s32.totalorder %s15, 1
    %p96 = por %p94, %p95
    %p97 = scmp.ne.s32.totalorder %s88, %s89
    %p98 = scmp.eq.s32.totalorder %s15, 0
    %p99 = por %p97, %p98
    %p100 = scmp.ne.s32.totalorder %s88, %s89
    %p101 = scmp.eq.s32.totalorder %s16, 1
    %p102 = por %p100, %p101
    %p104 = scmp.ne.s32.totalorder %s89, %s103
    %p105 = scmp.eq.s32.totalorder %s16, 0
    %p106 = por %p104, %p105
    %s107 = ssub.s32 %s10, %s17
    %p108 = scmp.eq.s32.totalorder %s107, 0
    %s110 = sadd.s32 %s109, 1
    %s111 = scalar_select %p108, %s109, %s110
    %p114 = pneg %p108
    %p115 = scmp.eq.s32.totalorder %s10, 1
    %p116 = por %p114, %p115
    %p117 = scmp.ne.s32.totalorder %s109, %s112
    %p118 = scmp.eq.s32.totalorder %s10, 0
    %p119 = por %p117, %p118
    %p120 = scmp.ne.s32.totalorder %s109, %s112
    %p121 = scmp.eq.s32.totalorder %s15, 1
    %p122 = por %p120, %p121
    %p123 = scmp.ne.s32.totalorder %s112, %s113
    %p124 = scmp.eq.s32.totalorder %s15, 0
    %p125 = por %p123, %p124
    %p126 = scmp.ne.s32.totalorder %s112, %s113
    %p127 = scmp.eq.s32.totalorder %s16, 1
    %p128 = por %p126, %p127
    %p130 = scmp.ne.s32.totalorder %s113, %s129
    %p131 = scmp.eq.s32.totalorder %s16, 0
    %p132 = por %p130, %p131
    %p133 = scmp.le.s32.totalorder 1, %s10
    %p134 = scmp.lt.s32.totalorder %s10, 3
    %p135 = pnand %p133, %p134
    %p136 = pneg %p135
    // Predicated region
    $region9: #{shufflenet_v2_forward.44} parent=5 // pred_check
      _
    $region10: #{shufflenet_v2_forward.44} parent=5 // pred_check_branch
      %138 = sbr.rel (%p135) target = $region12
    $region11: #{shufflenet_v2_forward.44} parent=5 // pred_region
      %s139 = ssub.s32 %s10, 1
      // Predicated region
      $region13: #{shufflenet_v2_forward.44} parent=11 // pred_check
        %p140 = pneg %p57
      $region14: #{shufflenet_v2_forward.44} parent=11 // pred_check_branch
        %142 = sbr.rel (%p140) target = $region16
      $region15: #{shufflenet_v2_forward.44} parent=11 // pred_region
        _
      $region16: #{shufflenet_v2_forward.44} parent=11 // pred_fallthru
        _
      // Predicated region
      $region17: #{shufflenet_v2_forward.44} parent=11 // pred_check
        %p143 = pneg %p78
      $region18: #{shufflenet_v2_forward.44} parent=11 // pred_check_branch
        %145 = sbr.rel (%p143) target = $region20
      $region19: #{shufflenet_v2_forward.44} parent=11 // pred_region
        _
      $region20: #{shufflenet_v2_forward.44} parent=11 // pred_fallthru
        _
      // Predicated region
      $region21: #{shufflenet_v2_forward.44} parent=11 // pred_check
        %p146 = pneg %p99
      $region22: #{shufflenet_v2_forward.44} parent=11 // pred_check_branch
        %148 = sbr.rel (%p146) target = $region24
      $region23: #{shufflenet_v2_forward.44} parent=11 // pred_region
        _
      $region24: #{shufflenet_v2_forward.44} parent=11 // pred_fallthru
        _
    $region12: #{shufflenet_v2_forward.44} parent=5 // pred_fallthru
      _
    %p149 = scmp.lt.s32.totalorder %s10, 2
    // Predicated region
    $region25: #{shufflenet_v2_forward.44} parent=5 // pred_check
      %p150 = pneg %p149
    $region26: #{shufflenet_v2_forward.44} parent=5 // pred_check_branch
      %152 = sbr.rel (%p150) target = $region28
    $region27: #{shufflenet_v2_forward.44} parent=5 // pred_region
      // Predicated region
      $region29: #{shufflenet_v2_forward.44} parent=27 // pred_check
        %p153 = pneg %p30
      $region30: #{shufflenet_v2_forward.44} parent=27 // pred_check_branch
        %155 = sbr.rel (%p153) target = $region32
      $region31: #{shufflenet_v2_forward.44} parent=27 // pred_region
        %p156 = scmp.lt.s32.totalorder %s10, 1
        %s157 = scalar_select %p156, %s10, 1
        %s158 = smul.addr %s157, 4
        %s159 = smul.addr %s158, 2
        %s160 = scalar_lea.vmem %s0, %s159
      $region32: #{shufflenet_v2_forward.44} parent=27 // pred_fallthru
        _
    $region28: #{shufflenet_v2_forward.44} parent=5 // pred_fallthru
      _
    %p161 = scmp.le.s32.totalorder 1, %s10
    %p162 = scmp.lt.s32.totalorder %s10, 3
    %p163 = pnand %p161, %p162
    %p164 = pneg %p163
    // Predicated region
    $region33: #{shufflenet_v2_forward.44} parent=5 // pred_check
      _
    $region34: #{shufflenet_v2_forward.44} parent=5 // pred_check_branch
      %166 = sbr.rel (%p163) target = $region36
    $region35: #{shufflenet_v2_forward.44} parent=5 // pred_region
      %s167 = ssub.s32 %s10, 1
      %p168 = scmp.lt.s32.totalorder %s15, 1
      %s169 = scalar_select %p168, %s15, 1
      %s170 = smul.addr %s169, 4
      %s171 = smul.addr %s170, 2
      %s172 = scalar_lea.vmem %s0, %s171
      %p173 = pneg %p36
      %p174 = pneg %p33
      %p175 = pneg %p57
      %p176 = pneg %p54
      %p177 = pneg %p78
      %p178 = pneg %p75
      %p179 = pneg %p99
      %p180 = pneg %p96
      %p181 = pneg %p125
      %p182 = pneg %p122
      %p183 = scmp.lt.s32.totalorder %s15, 1
      %s184 = scalar_select %p183, %s15, 1
      %s185 = smul.addr %s184, 2
      %s186 = scalar_lea.vmem %s4, %s185
      %p187 = scmp.lt.s32.totalorder %s15, 1
      %s188 = scalar_select %p187, %s15, 1
      %s189 = smul.addr %s188, 4
      %s190 = smul.addr %s189, 2
      %s191 = scalar_lea.vmem %s0, %s190
      %p192 = scmp.lt.s32.totalorder %s15, 1
      %s193 = scalar_select %p192, %s15, 1
      %s194 = smul.addr %s193, 2
      %s195 = scalar_lea.vmem %s4, %s194
      %v196 = vld [vmem:[%s191] sm:$0x3]
      %v197 = vld [vmem:[%s191 + $0x2] sm:$0x3]
      %v198 = vld [vmem:[%s191 + $0x4] sm:$0x3]
      %v199 = vld [vmem:[%s191 + $0x6] sm:$0x3]
      %v200 = vunpack.c.l.bf16 %v196
      %v201 = vunpack.c.l.bf16 %v197
      %v202 = vunpack.c.l.bf16 %v198
      %v203 = vunpack.c.l.bf16 %v199
      %v204 = vld [vmem:[%s1] sm:$0x1]
      %v206 = vlaneseq
      %v207 = vshrl.u32 %v206, 7
      %v208 = vsub.s32 0, %v207
      %v209 = vrot.slane %v204, %v208
      %v211 = vmul.f32 %v200, %v209
      %v212 = vmul.f32 %v201, %v209
      %v213 = vadd.f32 %v211, 0.0
      %v214 = vadd.f32 %v212, 0.0
      %s215 = scalar_lea.vmem %s1, 1
      %v216 = vld [vmem:[%s215] sm:$0x1]
      %v218 = vlaneseq
      %v219 = vshrl.u32 %v218, 7
      %v220 = vsub.s32 0, %v219
      %v221 = vrot.slane %v216, %v220
      %v223 = vmul.f32 %v200, %v221
      %v224 = vmul.f32 %v201, %v221
      %v227 = vrot.slane %v223, 5
      %v228 = vrot.slane %v227, 4
      %v229 = vrot.slane %v224, 5
      %v230 = vrot.slane %v229, 4
      %v233 = vadd.f32 %v213, %v228
      %v234 = vadd.f32 %v214, %v230
      %s235 = scalar_lea.vmem %s1, 2
      %v236 = vld [vmem:[%s235] sm:$0x1]
      %v238 = vlaneseq
      %v239 = vshrl.u32 %v238, 7
      %v240 = vsub.s32 0, %v239
      %v241 = vrot.slane %v236, %v240
      %v243 = vmul.f32 %v200, %v241
      %v244 = vmul.f32 %v201, %v241
      %v247 = vrot.slane %v243, 6
      %v248 = vrot.slane %v247, 4
      %v249 = vrot.slane %v244, 6
      %v250 = vrot.slane %v249, 4
      %v253 = vadd.f32 %v233, %v248
      %v254 = vadd.f32 %v234, %v250
      %s255 = scalar_lea.vmem %s1, 3
      %v256 = vld [vmem:[%s255] sm:$0x1]
      %v258 = vlaneseq
      %v259 = vshrl.u32 %v258, 7
      %v260 = vsub.s32 0, %v259
      %v261 = vrot.slane %v256, %v260
      %v263 = vmul.f32 %v201, %v261
      %v264 = vmul.f32 %v202, %v261
      %v265 = vadd.f32 %v253, %v263
      %v266 = vadd.f32 %v254, %v264
      %s267 = scalar_lea.vmem %s1, 4
      %v268 = vld [vmem:[%s267] sm:$0x1]
      %v270 = vlaneseq
      %v271 = vshrl.u32 %v270, 7
      %v272 = vsub.s32 0, %v271
      %v273 = vrot.slane %v268, %v272
      %v275 = vmul.f32 %v201, %v273
      %v276 = vmul.f32 %v202, %v273
      %v279 = vrot.slane %v275, 5
      %v280 = vrot.slane %v279, 4
      %v281 = vrot.slane %v276, 5
      %v282 = vrot.slane %v281, 4
      %v285 = vadd.f32 %v265, %v280
      %v286 = vadd.f32 %v266, %v282
      %s287 = scalar_lea.vmem %s1, 5
      %v288 = vld [vmem:[%s287] sm:$0x1]
      %v290 = vlaneseq
      %v291 = vshrl.u32 %v290, 7
      %v292 = vsub.s32 0, %v291
      %v293 = vrot.slane %v288, %v292
      %v295 = vmul.f32 %v201, %v293
      %v296 = vmul.f32 %v202, %v293
      %v299 = vrot.slane %v295, 6
      %v300 = vrot.slane %v299, 4
      %v301 = vrot.slane %v296, 6
      %v302 = vrot.slane %v301, 4
      %v305 = vadd.f32 %v285, %v300
      %v306 = vadd.f32 %v286, %v302
      %s307 = scalar_lea.vmem %s1, 6
      %v308 = vld [vmem:[%s307] sm:$0x1]
      %v310 = vlaneseq
      %v311 = vshrl.u32 %v310, 7
      %v312 = vsub.s32 0, %v311
      %v313 = vrot.slane %v308, %v312
      %v315 = vmul.f32 %v202, %v313
      %v316 = vmul.f32 %v203, %v313
      %v317 = vadd.f32 %v305, %v315
      %v318 = vadd.f32 %v306, %v316
      %s319 = scalar_lea.vmem %s1, 7
      %v320 = vld [vmem:[%s319] sm:$0x1]
      %v322 = vlaneseq
      %v323 = vshrl.u32 %v322, 7
      %v324 = vsub.s32 0, %v323
      %v325 = vrot.slane %v320, %v324
      %v327 = vmul.f32 %v202, %v325
      %v328 = vmul.f32 %v203, %v325
      %v331 = vrot.slane %v327, 5
      %v332 = vrot.slane %v331, 4
      %v333 = vrot.slane %v328, 5
      %v334 = vrot.slane %v333, 4
      %v337 = vadd.f32 %v317, %v332
      %v338 = vadd.f32 %v318, %v334
      %s339 = scalar_lea.vmem %s1, 8
      %v340 = vld [vmem:[%s339] sm:$0x1]
      %v342 = vlaneseq
      %v343 = vshrl.u32 %v342, 7
      %v344 = vsub.s32 0, %v343
      %v345 = vrot.slane %v340, %v344
      %v347 = vmul.f32 %v202, %v345
      %v348 = vmul.f32 %v203, %v345
      %v351 = vrot.slane %v347, 6
      %v352 = vrot.slane %v351, 4
      %v353 = vrot.slane %v348, 6
      %v354 = vrot.slane %v353, 4
      %v357 = vadd.f32 %v337, %v352
      %v358 = vadd.f32 %v338, %v354
      %v359 = vld [vmem:[%s2] sm:$0x1]
      %v361 = vlaneseq
      %v362 = vshrl.u32 %v361, 7
      %v363 = vsub.s32 0, %v362
      %v364 = vrot.slane %v359, %v363
      %v366 = vmul.f32 %v357, %v364
      %v367 = vmul.f32 %v358, %v364
      %v368 = vld [vmem:[%s3] sm:$0x1]
      %v370 = vlaneseq
      %v371 = vshrl.u32 %v370, 7
      %v372 = vsub.s32 0, %v371
      %v373 = vrot.slane %v368, %v372
      %v375 = vadd.f32 %v366, %v373
      %v376 = vadd.f32 %v367, %v373
      %v377 = vpack.c.bf16 %v375, %v375
      %v378 = vpack.c.bf16 %v376, %v376
      %vm379 = vcmask 122880
      %380 = vst.msk [vmem:[%s195] sm:$0x1] %vm379, %v377
      %381 = vst.msk [vmem:[%s195 + $0x1] sm:$0x1] %vm379, %v378
      %p382 = scmp.lt.s32.totalorder %s15, 1
      %s383 = scalar_select %p382, %s15, 1
      %s384 = smul.addr %s383, 2
      %s385 = scalar_lea.vmem %s4, %s384
      // Predicated region
      $region37: #{shufflenet_v2_forward.44} parent=35 // pred_check
        %p386 = pneg %p122
      $region38: #{shufflenet_v2_forward.44} parent=35 // pred_check_branch
        %388 = sbr.rel (%p386) target = $region40
      $region39: #{shufflenet_v2_forward.44} parent=35 // pred_region
        _
      $region40: #{shufflenet_v2_forward.44} parent=35 // pred_fallthru
        _
    $region36: #{shufflenet_v2_forward.44} parent=5 // pred_fallthru
      _
    %p389 = scmp.le.s32.totalorder 2, %s10
    // Predicated region
    $region41: #{shufflenet_v2_forward.44} parent=5 // pred_check
      %p390 = pneg %p389
    $region42: #{shufflenet_v2_forward.44} parent=5 // pred_check_branch
      %392 = sbr.rel (%p390) target = $region44
    $region43: #{shufflenet_v2_forward.44} parent=5 // pred_region
      %s393 = ssub.s32 %s10, 2
      // Predicated region
      $region45: #{shufflenet_v2_forward.44} parent=43 // pred_check
        %p394 = pneg %p128
      $region46: #{shufflenet_v2_forward.44} parent=43 // pred_check_branch
        %396 = sbr.rel (%p394) target = $region48
      $region47: #{shufflenet_v2_forward.44} parent=43 // pred_region
        %p397 = scmp.lt.s32.totalorder %s16, 1
        %s398 = scalar_select %p397, %s16, 1
        %s399 = smul.addr %s398, 2
        %s400 = scalar_lea.vmem %s4, %s399
      $region48: #{shufflenet_v2_forward.44} parent=43 // pred_fallthru
        _
    $region44: #{shufflenet_v2_forward.44} parent=5 // pred_fallthru
      _
  $region6: #{shufflenet_v2_forward.44} parent=0 // loop_footer
    %s14 = sadd.s32 1, %s10
  $region7: #{shufflenet_v2_forward.44} parent=0 // loop_footer_branch
    %9 = sbr.rel target = $region3
  $region8: #{shufflenet_v2_forward.44} parent=0 // loop_exit
    _

// kernel: shufflenet_v2_forward.47
$region0: #{shufflenet_v2_forward.47}
  #allocation0 [shape = 'u32[]', space=smem, size = 0x4, offset = 0x4, fixed_abs, tag = 'smem constant byte address 0x4 - core index']
  #allocation1 [shape = 'u32[144,128]{1,0:T(1,128)}', space=vmem, size = 0x12000, scoped, tag = 'internal scratch']
  %s0 = inlined_call_operand.vmem [shape: bf16[2,32], index: 0, kind: input, shape index: {}]
  %s1 = inlined_call_operand.vmem [shape: bf16[32,32], index: 1, kind: input, shape index: {}]
  %s2 = inlined_call_operand.vmem [shape: f32[1,32], index: 2, kind: input, shape index: {}]
  %s3 = inlined_call_operand.vmem [shape: f32[1,32], index: 3, kind: input, shape index: {}]
  %s4 = inlined_call_operand.vmem [shape: bf16[2,32], index: 4, kind: output, shape index: {}]
  %s5 = sld [smem:[#allocation0]]
  $region26: #{shufflenet_v2_forward.47} parent=0
    _
  %s7 = ssub.s32 1, %s5
  %s8 = scalar_select 0, %s7, %s5
  // Predicated region
  $region2: #{shufflenet_v2_forward.47} parent=0 // pred_check
    _
  $region3: #{shufflenet_v2_forward.47} parent=0 // pred_check_branch
    %10 = sbr.rel (0) target = $region5
  $region4: #{shufflenet_v2_forward.47} parent=0 // pred_region
    _
  $region5: #{shufflenet_v2_forward.47} parent=0 // pred_fallthru
    _
  // Predicated region
  $region6: #{shufflenet_v2_forward.47} parent=0 // pred_check
    _
  $region7: #{shufflenet_v2_forward.47} parent=0 // pred_check_branch
    %12 = sbr.rel (0) target = $region9
  $region8: #{shufflenet_v2_forward.47} parent=0 // pred_region
    _
  $region9: #{shufflenet_v2_forward.47} parent=0 // pred_fallthru
    _
  // Predicated region
  $region10: #{shufflenet_v2_forward.47} parent=0 // pred_check
    _
  $region11: #{shufflenet_v2_forward.47} parent=0 // pred_check_branch
    %14 = sbr.rel (0) target = $region13
  $region12: #{shufflenet_v2_forward.47} parent=0 // pred_region
    _
  $region13: #{shufflenet_v2_forward.47} parent=0 // pred_fallthru
    _
  // Predicated region
  $region14: #{shufflenet_v2_forward.47} parent=0 // pred_check
    _
  $region15: #{shufflenet_v2_forward.47} parent=0 // pred_check_branch
    %16 = sbr.rel (0) target = $region17
  $region16: #{shufflenet_v2_forward.47} parent=0 // pred_region
    _
  $region17: #{shufflenet_v2_forward.47} parent=0 // pred_fallthru
    _
  %v18 = vld [vmem:[%s0] sm:$0x1]
  %v19 = vld [vmem:[%s1] sm:$0xf]
  %v20 = vld [vmem:[%s1 + $0x4] sm:$0xf]
  %v21 = vld [vmem:[%s1 + $0x8] sm:$0xf]
  %v22 = vld [vmem:[%s1 + $0xc] sm:$0xf]
  %v27 = vunpack.c.l.b16 %v19
  %v28 = vunpack.c.l.b16 %v20
  %v29 = vunpack.c.l.b16 %v21
  %v30 = vunpack.c.l.b16 %v22
  %v31 = vpack.c.b16 %v28, %v27
  %v32 = vpack.c.b16 %v30, %v29
  %vm35 = vcmask 261120
  %v37 = vsel %vm35, %v18, 0
  %39 = vmatprep.subr.bf16.mxu0 0
  %40 = vmatpush1.bf16.msra.mxu0 %v31
  %41 = vmatprep.subr.bf16.mxu0 0
  %42 = vmatpush1.bf16.msra.mxu0 %v32
  %43 = vmatprep.subr.bf16.mxu0 0
  %44 = vmatpush1.bf16.msra.mxu0 0
  %45 = vmatprep.subr.bf16.mxu0 0
  %46 = vmatpush1.bf16.msra.mxu0 0
  %47 = vmatprep.subr.bf16.mxu0 0
  %48 = vmatpush1.bf16.msra.mxu0 0
  %49 = vmatprep.subr.bf16.mxu0 0
  %50 = vmatpush1.bf16.msra.mxu0 0
  %51 = vmatprep.subr.bf16.mxu0 0
  %52 = vmatpush1.bf16.msra.mxu0 0
  %53 = vmatprep.subr.bf16.mxu0 0
  %54 = vmatpush1.bf16.msra.mxu0 0
  %55 = vmatprep.subr.bf16.mxu0 0
  %56 = vmatpush1.bf16.msra.mxu0 0
  %57 = vmatprep.subr.bf16.mxu0 0
  %58 = vmatpush1.bf16.msra.mxu0 0
  %59 = vmatprep.subr.bf16.mxu0 0
  %60 = vmatpush1.bf16.msra.mxu0 0
  %61 = vmatprep.subr.bf16.mxu0 0
  %62 = vmatpush1.bf16.msra.mxu0 0
  %63 = vmatprep.subr.bf16.mxu0 0
  %64 = vmatpush1.bf16.msra.mxu0 0
  %65 = vmatprep.subr.bf16.mxu0 0
  %66 = vmatpush1.bf16.msra.mxu0 0
  %67 = vmatprep.subr.bf16.mxu0 0
  %68 = vmatpush1.bf16.msra.mxu0 0
  %69 = vmatprep.subr.bf16.mxu0 0
  %70 = vmatpush1.bf16.msra.mxu0 0
  %71 = vmatprep.mubr.bf16.mxu0 0
  %72 = vmatmul.mubr.bf16.gmra.mrb[0].mxu0 %v37
  %v73 = vpop.f32.mrb[0].mxu0
  %v74 = vadd.f32 0.0, %v73
  %v75 = vpop.f32.mrb[0].mxu0
  %v76 = vpop.f32.mrb[0].mxu0
  %v77 = vpop.f32.mrb[0].mxu0
  %78 = vdwg.mxu0
  %v79 = vld [vmem:[%s2] sm:$0x1]
  %v81 = vlaneseq
  %v82 = vshrl.u32 %v81, 7
  %v83 = vsub.s32 0, %v82
  %v84 = vrot.slane %v79, %v83
  %v86 = vmul.f32 %v74, %v84
  %v87 = vld [vmem:[%s3] sm:$0x1]
  %v89 = vlaneseq
  %v90 = vshrl.u32 %v89, 7
  %v91 = vsub.s32 0, %v90
  %v92 = vrot.slane %v87, %v91
  %v94 = vadd.f32 %v86, %v92
  %v95 = vmax.f32 %v94, 0.0
  %v96 = vpack.c.bf16 %v95, %v95
  %vm97 = vcmask 253952
  %98 = vst.msk [vmem:[%s4] sm:$0x1] %vm97, %v96
  // Predicated region
  $region18: #{shufflenet_v2_forward.47} parent=0 // pred_check
    _
  $region19: #{shufflenet_v2_forward.47} parent=0 // pred_check_branch
    %100 = sbr.rel (0) target = $region21
  $region20: #{shufflenet_v2_forward.47} parent=0 // pred_region
    _
  $region21: #{shufflenet_v2_forward.47} parent=0 // pred_fallthru
    _
  // Predicated region
  $region22: #{shufflenet_v2_forward.47} parent=0 // pred_check
    _
  $region23: #{shufflenet_v2_forward.47} parent=0 // pred_check_branch
    %102 = sbr.rel (0) target = $region25
  $region24: #{shufflenet_v2_forward.47} parent=0 // pred_region
    _
  $region25: #{shufflenet_v2_forward.47} parent=0 // pred_fallthru
    _

// kernel: shufflenet_v2_forward.46
$region0: #{shufflenet_v2_forward.46}
  #allocation0 [shape = 'u32[]', space=smem, size = 0x4, offset = 0x4, fixed_abs, tag = 'smem constant byte address 0x4 - core index']
  #allocation1 [shape = 'u32[144,128]{1,0:T(1,128)}', space=vmem, size = 0x12000, scoped, tag = 'internal scratch']
  %s0 = inlined_call_operand.vmem [shape: bf16[2,2,2,32], index: 0, kind: input, shape index: {}]
  %s1 = inlined_call_operand.vmem [shape: bf16[2,2,2,32], index: 1, kind: input, shape index: {}]
  %s2 = inlined_call_operand.vmem [shape: bf16[2,2,2,32], index: 2, kind: input, shape index: {}]
  %s3 = inlined_call_operand.vmem [shape: bf16[2,2,2,32], index: 3, kind: input, shape index: {}]
  %s4 = inlined_call_operand.vmem [shape: f32[9,1,1,32], index: 4, kind: input, shape index: {}]
  %s5 = inlined_call_operand.vmem [shape: f32[1,1,1,32], index: 5, kind: input, shape index: {}]
  %s6 = inlined_call_operand.vmem [shape: f32[1,1,1,32], index: 6, kind: input, shape index: {}]
  %s7 = inlined_call_operand.vmem [shape: bf16[2,1,1,32], index: 7, kind: output, shape index: {}]
  %s8 = sld [smem:[#allocation0]]
  $region61: #{shufflenet_v2_forward.46} parent=0
    _
  %s10 = ssub.s32 1, %s8
  %s11 = scalar_select 0, %s10, %s8
  loop: start=0, step=1, limit=4
  $region2: #{shufflenet_v2_forward.46} parent=0 // loop_pre_header
    _
  $region3: #{shufflenet_v2_forward.46} parent=0 // loop_header
    %s13 = sphi 0, %s17
    %p14 = scmp.ge.s32.totalorder %s13, 4
    %s23 = sphi 0, %s25
    %s26 = sphi 0, %s23
    %s27 = sphi 0, %s26
    %s43 = sphi 0, %s27
    %s49 = sphi 0, %s51
    %s52 = sphi 0, %s49
    %s53 = sphi 0, %s52
    %s69 = sphi 0, %s53
    %s75 = sphi 0, %s77
    %s78 = sphi 0, %s75
    %s79 = sphi 0, %s78
    %s95 = sphi 0, %s79
    %s101 = sphi 0, %s103
    %s104 = sphi 0, %s101
    %s105 = sphi 0, %s104
    %s121 = sphi 0, %s105
    %s125 = sphi 0, %s125
    %s127 = sphi 0, %s125
    %s128 = sphi 0, %s127
    %s142 = sphi 0, %s128
    %s146 = sphi 0, %s146
    %s148 = sphi 0, %s146
    %s149 = sphi 0, %s148
    %s163 = sphi 0, %s149
    %s167 = sphi 0, %s167
    %s169 = sphi 0, %s167
    %s170 = sphi 0, %s169
    %s184 = sphi 0, %s170
    %s190 = sphi 0, %s192
    %s193 = sphi 0, %s190
    %s194 = sphi 0, %s193
    %s210 = sphi 0, %s194
  $region4: #{shufflenet_v2_forward.46} parent=0 // loop_header_branch
    %16 = sbr.rel (%p14) target = $region8
  $region5: #{shufflenet_v2_forward.46} parent=0 // loop_body
    %s18 = ssub.s32 %s13, 1
    %s19 = ssub.s32 %s13, 2
    %s20 = sadd.s32 %s13, 1
    %s21 = ssub.s32 %s13, %s20
    %p22 = scmp.eq.s32.totalorder %s21, 0
    %s24 = sadd.s32 %s23, 1
    %s25 = scalar_select %p22, %s23, %s24
    %p28 = pneg %p22
    %p29 = scmp.eq.s32.totalorder %s13, 1
    %p30 = por %p28, %p29
    %p31 = scmp.ne.s32.totalorder %s23, %s26
    %p32 = scmp.eq.s32.totalorder %s13, 0
    %p33 = por %p31, %p32
    %p34 = scmp.ne.s32.totalorder %s23, %s26
    %p35 = scmp.eq.s32.totalorder %s18, 1
    %p36 = por %p34, %p35
    %p37 = scmp.ne.s32.totalorder %s26, %s27
    %p38 = scmp.eq.s32.totalorder %s18, 0
    %p39 = por %p37, %p38
    %p40 = scmp.ne.s32.totalorder %s26, %s27
    %p41 = scmp.eq.s32.totalorder %s19, 1
    %p42 = por %p40, %p41
    %p44 = scmp.ne.s32.totalorder %s27, %s43
    %p45 = scmp.eq.s32.totalorder %s19, 0
    %p46 = por %p44, %p45
    %s47 = ssub.s32 %s13, %s20
    %p48 = scmp.eq.s32.totalorder %s47, 0
    %s50 = sadd.s32 %s49, 1
    %s51 = scalar_select %p48, %s49, %s50
    %p54 = pneg %p48
    %p55 = scmp.eq.s32.totalorder %s13, 1
    %p56 = por %p54, %p55
    %p57 = scmp.ne.s32.totalorder %s49, %s52
    %p58 = scmp.eq.s32.totalorder %s13, 0
    %p59 = por %p57, %p58
    %p60 = scmp.ne.s32.totalorder %s49, %s52
    %p61 = scmp.eq.s32.totalorder %s18, 1
    %p62 = por %p60, %p61
    %p63 = scmp.ne.s32.totalorder %s52, %s53
    %p64 = scmp.eq.s32.totalorder %s18, 0
    %p65 = por %p63, %p64
    %p66 = scmp.ne.s32.totalorder %s52, %s53
    %p67 = scmp.eq.s32.totalorder %s19, 1
    %p68 = por %p66, %p67
    %p70 = scmp.ne.s32.totalorder %s53, %s69
    %p71 = scmp.eq.s32.totalorder %s19, 0
    %p72 = por %p70, %p71
    %s73 = ssub.s32 %s13, %s20
    %p74 = scmp.eq.s32.totalorder %s73, 0
    %s76 = sadd.s32 %s75, 1
    %s77 = scalar_select %p74, %s75, %s76
    %p80 = pneg %p74
    %p81 = scmp.eq.s32.totalorder %s13, 1
    %p82 = por %p80, %p81
    %p83 = scmp.ne.s32.totalorder %s75, %s78
    %p84 = scmp.eq.s32.totalorder %s13, 0
    %p85 = por %p83, %p84
    %p86 = scmp.ne.s32.totalorder %s75, %s78
    %p87 = scmp.eq.s32.totalorder %s18, 1
    %p88 = por %p86, %p87
    %p89 = scmp.ne.s32.totalorder %s78, %s79
    %p90 = scmp.eq.s32.totalorder %s18, 0
    %p91 = por %p89, %p90
    %p92 = scmp.ne.s32.totalorder %s78, %s79
    %p93 = scmp.eq.s32.totalorder %s19, 1
    %p94 = por %p92, %p93
    %p96 = scmp.ne.s32.totalorder %s79, %s95
    %p97 = scmp.eq.s32.totalorder %s19, 0
    %p98 = por %p96, %p97
    %s99 = ssub.s32 %s13, %s20
    %p100 = scmp.eq.s32.totalorder %s99, 0
    %s102 = sadd.s32 %s101, 1
    %s103 = scalar_select %p100, %s101, %s102
    %p106 = pneg %p100
    %p107 = scmp.eq.s32.totalorder %s13, 1
    %p108 = por %p106, %p107
    %p109 = scmp.ne.s32.totalorder %s101, %s104
    %p110 = scmp.eq.s32.totalorder %s13, 0
    %p111 = por %p109, %p110
    %p112 = scmp.ne.s32.totalorder %s101, %s104
    %p113 = scmp.eq.s32.totalorder %s18, 1
    %p114 = por %p112, %p113
    %p115 = scmp.ne.s32.totalorder %s104, %s105
    %p116 = scmp.eq.s32.totalorder %s18, 0
    %p117 = por %p115, %p116
    %p118 = scmp.ne.s32.totalorder %s104, %s105
    %p119 = scmp.eq.s32.totalorder %s19, 1
    %p120 = por %p118, %p119
    %p122 = scmp.ne.s32.totalorder %s105, %s121
    %p123 = scmp.eq.s32.totalorder %s19, 0
    %p124 = por %p122, %p123
    %s126 = sadd.s32 %s125, 1
    %p129 = scmp.eq.s32.totalorder %s13, 1
    %p130 = scmp.ne.s32.totalorder %s125, %s127
    %p131 = scmp.eq.s32.totalorder %s13, 0
    %p132 = por %p130, %p131
    %p133 = scmp.ne.s32.totalorder %s125, %s127
    %p134 = scmp.eq.s32.totalorder %s18, 1
    %p135 = por %p133, %p134
    %p136 = scmp.ne.s32.totalorder %s127, %s128
    %p137 = scmp.eq.s32.totalorder %s18, 0
    %p138 = por %p136, %p137
    %p139 = scmp.ne.s32.totalorder %s127, %s128
    %p140 = scmp.eq.s32.totalorder %s19, 1
    %p141 = por %p139, %p140
    %p143 = scmp.ne.s32.totalorder %s128, %s142
    %p144 = scmp.eq.s32.totalorder %s19, 0
    %p145 = por %p143, %p144
    %s147 = sadd.s32 %s146, 1
    %p150 = scmp.eq.s32.totalorder %s13, 1
    %p151 = scmp.ne.s32.totalorder %s146, %s148
    %p152 = scmp.eq.s32.totalorder %s13, 0
    %p153 = por %p151, %p152
    %p154 = scmp.ne.s32.totalorder %s146, %s148
    %p155 = scmp.eq.s32.totalorder %s18, 1
    %p156 = por %p154, %p155
    %p157 = scmp.ne.s32.totalorder %s148, %s149
    %p158 = scmp.eq.s32.totalorder %s18, 0
    %p159 = por %p157, %p158
    %p160 = scmp.ne.s32.totalorder %s148, %s149
    %p161 = scmp.eq.s32.totalorder %s19, 1
    %p162 = por %p160, %p161
    %p164 = scmp.ne.s32.totalorder %s149, %s163
    %p165 = scmp.eq.s32.totalorder %s19, 0
    %p166 = por %p164, %p165
    %s168 = sadd.s32 %s167, 1
    %p171 = scmp.eq.s32.totalorder %s13, 1
    %p172 = scmp.ne.s32.totalorder %s167, %s169
    %p173 = scmp.eq.s32.totalorder %s13, 0
    %p174 = por %p172, %p173
    %p175 = scmp.ne.s32.totalorder %s167, %s169
    %p176 = scmp.eq.s32.totalorder %s18, 1
    %p177 = por %p175, %p176
    %p178 = scmp.ne.s32.totalorder %s169, %s170
    %p179 = scmp.eq.s32.totalorder %s18, 0
    %p180 = por %p178, %p179
    %p181 = scmp.ne.s32.totalorder %s169, %s170
    %p182 = scmp.eq.s32.totalorder %s19, 1
    %p183 = por %p181, %p182
    %p185 = scmp.ne.s32.totalorder %s170, %s184
    %p186 = scmp.eq.s32.totalorder %s19, 0
    %p187 = por %p185, %p186
    %s188 = ssub.s32 %s13, %s20
    %p189 = scmp.eq.s32.totalorder %s188, 0
    %s191 = sadd.s32 %s190, 1
    %s192 = scalar_select %p189, %s190, %s191
    %p195 = pneg %p189
    %p196 = scmp.eq.s32.totalorder %s13, 1
    %p197 = por %p195, %p196
    %p198 = scmp.ne.s32.totalorder %s190, %s193
    %p199 = scmp.eq.s32.totalorder %s13, 0
    %p200 = por %p198, %p199
    %p201 = scmp.ne.s32.totalorder %s190, %s193
    %p202 = scmp.eq.s32.totalorder %s18, 1
    %p203 = por %p201, %p202
    %p204 = scmp.ne.s32.totalorder %s193, %s194
    %p205 = scmp.eq.s32.totalorder %s18, 0
    %p206 = por %p204, %p205
    %p207 = scmp.ne.s32.totalorder %s193, %s194
    %p208 = scmp.eq.s32.totalorder %s19, 1
    %p209 = por %p207, %p208
    %p211 = scmp.ne.s32.totalorder %s194, %s210
    %p212 = scmp.eq.s32.totalorder %s19, 0
    %p213 = por %p211, %p212
    %p214 = scmp.le.s32.totalorder 1, %s13
    %p215 = scmp.lt.s32.totalorder %s13, 3
    %p216 = pnand %p214, %p215
    %p217 = pneg %p216
    // Predicated region
    $region9: #{shufflenet_v2_forward.46} parent=5 // pred_check
      _
    $region10: #{shufflenet_v2_forward.46} parent=5 // pred_check_branch
      %219 = sbr.rel (%p216) target = $region12
    $region11: #{shufflenet_v2_forward.46} parent=5 // pred_region
      %s220 = ssub.s32 %s13, 1
      // Predicated region
      $region13: #{shufflenet_v2_forward.46} parent=11 // pred_check
        %p221 = pneg %p138
      $region14: #{shufflenet_v2_forward.46} parent=11 // pred_check_branch
        %223 = sbr.rel (%p221) target = $region16
      $region15: #{shufflenet_v2_forward.46} parent=11 // pred_region
        _
      $region16: #{shufflenet_v2_forward.46} parent=11 // pred_fallthru
        _
      // Predicated region
      $region17: #{shufflenet_v2_forward.46} parent=11 // pred_check
        %p224 = pneg %p159
      $region18: #{shufflenet_v2_forward.46} parent=11 // pred_check_branch
        %226 = sbr.rel (%p224) target = $region20
      $region19: #{shufflenet_v2_forward.46} parent=11 // pred_region
        _
      $region20: #{shufflenet_v2_forward.46} parent=11 // pred_fallthru
        _
      // Predicated region
      $region21: #{shufflenet_v2_forward.46} parent=11 // pred_check
        %p227 = pneg %p180
      $region22: #{shufflenet_v2_forward.46} parent=11 // pred_check_branch
        %229 = sbr.rel (%p227) target = $region24
      $region23: #{shufflenet_v2_forward.46} parent=11 // pred_region
        _
      $region24: #{shufflenet_v2_forward.46} parent=11 // pred_fallthru
        _
    $region12: #{shufflenet_v2_forward.46} parent=5 // pred_fallthru
      _
    %p230 = scmp.lt.s32.totalorder %s13, 2
    // Predicated region
    $region25: #{shufflenet_v2_forward.46} parent=5 // pred_check
      %p231 = pneg %p230
    $region26: #{shufflenet_v2_forward.46} parent=5 // pred_check_branch
      %233 = sbr.rel (%p231) target = $region28
    $region27: #{shufflenet_v2_forward.46} parent=5 // pred_region
      // Predicated region
      $region29: #{shufflenet_v2_forward.46} parent=27 // pred_check
        %p234 = pneg %p33
      $region30: #{shufflenet_v2_forward.46} parent=27 // pred_check_branch
        %236 = sbr.rel (%p234) target = $region32
      $region31: #{shufflenet_v2_forward.46} parent=27 // pred_region
        %p237 = scmp.lt.s32.totalorder %s13, 1
        %s238 = scalar_select %p237, %s13, 1
        %s239 = smul.addr %s238, 2
        %s240 = scalar_lea.vmem %s0, %s239
      $region32: #{shufflenet_v2_forward.46} parent=27 // pred_fallthru
        _
      // Predicated region
      $region33: #{shufflenet_v2_forward.46} parent=27 // pred_check
        %p241 = pneg %p59
      $region34: #{shufflenet_v2_forward.46} parent=27 // pred_check_branch
        %243 = sbr.rel (%p241) target = $region36
      $region35: #{shufflenet_v2_forward.46} parent=27 // pred_region
        %p244 = scmp.lt.s32.totalorder %s13, 1
        %s245 = scalar_select %p244, %s13, 1
        %s246 = smul.addr %s245, 2
        %s247 = scalar_lea.vmem %s1, %s246
      $region36: #{shufflenet_v2_forward.46} parent=27 // pred_fallthru
        _
      // Predicated region
      $region37: #{shufflenet_v2_forward.46} parent=27 // pred_check
        %p248 = pneg %p85
      $region38: #{shufflenet_v2_forward.46} parent=27 // pred_check_branch
        %250 = sbr.rel (%p248) target = $region40
      $region39: #{shufflenet_v2_forward.46} parent=27 // pred_region
        %p251 = scmp.lt.s32.totalorder %s13, 1
        %s252 = scalar_select %p251, %s13, 1
        %s253 = smul.addr %s252, 2
        %s254 = scalar_lea.vmem %s2, %s253
      $region40: #{shufflenet_v2_forward.46} parent=27 // pred_fallthru
        _
      // Predicated region
      $region41: #{shufflenet_v2_forward.46} parent=27 // pred_check
        %p255 = pneg %p111
      $region42: #{shufflenet_v2_forward.46} parent=27 // pred_check_branch
        %257 = sbr.rel (%p255) target = $region44
      $region43: #{shufflenet_v2_forward.46} parent=27 // pred_region
        %p258 = scmp.lt.s32.totalorder %s13, 1
        %s259 = scalar_select %p258, %s13, 1
        %s260 = smul.addr %s259, 2
        %s261 = scalar_lea.vmem %s3, %s260
      $region44: #{shufflenet_v2_forward.46} parent=27 // pred_fallthru
        _
    $region28: #{shufflenet_v2_forward.46} parent=5 // pred_fallthru
      _
    %p262 = scmp.le.s32.totalorder 1, %s13
    %p263 = scmp.lt.s32.totalorder %s13, 3
    %p264 = pnand %p262, %p263
    %p265 = pneg %p264
    // Predicated region
    $region45: #{shufflenet_v2_forward.46} parent=5 // pred_check
      _
    $region46: #{shufflenet_v2_forward.46} parent=5 // pred_check_branch
      %267 = sbr.rel (%p264) target = $region48
    $region47: #{shufflenet_v2_forward.46} parent=5 // pred_region
      %s268 = ssub.s32 %s13, 1
      %p269 = scmp.lt.s32.totalorder %s18, 1
      %s270 = scalar_select %p269, %s18, 1
      %s271 = smul.addr %s270, 2
      %s272 = scalar_lea.vmem %s0, %s271
      %p273 = pneg %p39
      %p274 = pneg %p36
      %p275 = scmp.lt.s32.totalorder %s18, 1
      %s276 = scalar_select %p275, %s18, 1
      %s277 = smul.addr %s276, 2
      %s278 = scalar_lea.vmem %s1, %s277
      %p279 = pneg %p65
      %p280 = pneg %p62
      %p281 = scmp.lt.s32.totalorder %s18, 1
      %s282 = scalar_select %p281, %s18, 1
      %s283 = smul.addr %s282, 2
      %s284 = scalar_lea.vmem %s2, %s283
      %p285 = pneg %p91
      %p286 = pneg %p88
      %p287 = scmp.lt.s32.totalorder %s18, 1
      %s288 = scalar_select %p287, %s18, 1
      %s289 = smul.addr %s288, 2
      %s290 = scalar_lea.vmem %s3, %s289
      %p291 = pneg %p117
      %p292 = pneg %p114
      %p293 = pneg %p138
      %p294 = pneg %p135
      %p295 = pneg %p159
      %p296 = pneg %p156
      %p297 = pneg %p180
      %p298 = pneg %p177
      %p299 = pneg %p206
      %p300 = pneg %p203
      %p301 = scmp.lt.s32.totalorder %s18, 1
      %s302 = scalar_select %p301, %s18, 1
      %s303 = scalar_lea.vmem %s7, %s302
      %p304 = scmp.lt.s32.totalorder %s18, 1
      %s305 = scalar_select %p304, %s18, 1
      %s306 = smul.addr %s305, 2
      %s307 = scalar_lea.vmem %s0, %s306
      %p308 = scmp.lt.s32.totalorder %s18, 1
      %s309 = scalar_select %p308, %s18, 1
      %s310 = smul.addr %s309, 2
      %s311 = scalar_lea.vmem %s1, %s310
      %p312 = scmp.lt.s32.totalorder %s18, 1
      %s313 = scalar_select %p312, %s18, 1
      %s314 = smul.addr %s313, 2
      %s315 = scalar_lea.vmem %s2, %s314
      %p316 = scmp.lt.s32.totalorder %s18, 1
      %s317 = scalar_select %p316, %s18, 1
      %s318 = smul.addr %s317, 2
      %s319 = scalar_lea.vmem %s3, %s318
      %p320 = scmp.lt.s32.totalorder %s18, 1
      %s321 = scalar_select %p320, %s18, 1
      %s322 = scalar_lea.vmem %s7, %s321
      %v323 = vld [vmem:[%s307] sm:$0x1]
      %v324 = vld [vmem:[%s307 + $0x1] sm:$0x1]
      %v325 = vunpack.c.l.bf16 %v323
      %v326 = vunpack.c.l.bf16 %v324
      %v327 = vld [vmem:[%s311] sm:$0x1]
      %v328 = vld [vmem:[%s311 + $0x1] sm:$0x1]
      %v329 = vunpack.c.l.bf16 %v327
      %v330 = vunpack.c.l.bf16 %v328
      %v331 = vld [vmem:[%s315] sm:$0x1]
      %v332 = vunpack.c.l.bf16 %v331
      %v333 = vld [vmem:[%s319] sm:$0x1]
      %v334 = vunpack.c.l.bf16 %v333
      %v335 = vld [vmem:[%s4] sm:$0x1]
      %v336 = vmul.f32 %v325, %v335
      %v337 = vadd.f32 %v336, 0.0
      %s338 = scalar_lea.vmem %s4, 1
      %v339 = vld [vmem:[%s338] sm:$0x1]
      %v340 = vmul.f32 %v329, %v339
      %v341 = vadd.f32 %v337, %v340
      %s342 = scalar_lea.vmem %s4, 2
      %v343 = vld [vmem:[%s342] sm:$0x1]
      %v346 = vunpack.c.l.s4 857870592
      %v347 = vunpack.c.0.s8 %v346
      %v348 = vlaneseq
      %v349 = vshrl.u32 %v348, 7
      %v350 = vsub.s32 %v347, %v349
      %v351 = vrot.slane %v343, %v350
      %v353 = vmul.f32 %v325, %v351
      %v355 = vrot.slane %v353, 7
      %v356 = vrot.slane %v355, 2
      %v358 = vadd.f32 %v341, %v356
      %s359 = scalar_lea.vmem %s4, 3
      %v360 = vld [vmem:[%s359] sm:$0x1]
      %v361 = vmul.f32 %v332, %v360
      %v362 = vadd.f32 %v358, %v361
      %s363 = scalar_lea.vmem %s4, 4
      %v364 = vld [vmem:[%s363] sm:$0x1]
      %v365 = vmul.f32 %v334, %v364
      %v366 = vadd.f32 %v362, %v365
      %s367 = scalar_lea.vmem %s4, 5
      %v368 = vld [vmem:[%s367] sm:$0x1]
      %v371 = vunpack.c.l.s4 857870592
      %v372 = vunpack.c.0.s8 %v371
      %v373 = vlaneseq
      %v374 = vshrl.u32 %v373, 7
      %v375 = vsub.s32 %v372, %v374
      %v376 = vrot.slane %v368, %v375
      %v378 = vmul.f32 %v332, %v376
      %v380 = vrot.slane %v378, 7
      %v381 = vrot.slane %v380, 2
      %v383 = vadd.f32 %v366, %v381
      %s384 = scalar_lea.vmem %s4, 6
      %v385 = vld [vmem:[%s384] sm:$0x1]
      %v386 = vmul.f32 %v326, %v385
      %v387 = vadd.f32 %v383, %v386
      %s388 = scalar_lea.vmem %s4, 7
      %v389 = vld [vmem:[%s388] sm:$0x1]
      %v390 = vmul.f32 %v330, %v389
      %v391 = vadd.f32 %v387, %v390
      %s392 = scalar_lea.vmem %s4, 8
      %v393 = vld [vmem:[%s392] sm:$0x1]
      %v396 = vunpack.c.l.s4 857870592
      %v397 = vunpack.c.0.s8 %v396
      %v398 = vlaneseq
      %v399 = vshrl.u32 %v398, 7
      %v400 = vsub.s32 %v397, %v399
      %v401 = vrot.slane %v393, %v400
      %v403 = vmul.f32 %v326, %v401
      %v405 = vrot.slane %v403, 7
      %v406 = vrot.slane %v405, 2
      %v408 = vadd.f32 %v391, %v406
      %v409 = vld [vmem:[%s5] sm:$0x1]
      %v410 = vmul.f32 %v408, %v409
      %v411 = vld [vmem:[%s6] sm:$0x1]
      %v412 = vadd.f32 %v410, %v411
      %v413 = vpack.c.bf16 %v412, %v412
      %vm414 = vcmask 253952
      %vm415 = vsmask.f32 256
      %vm416 = vmand %vm414, %vm415
      %v417 = vld [vmem:[%s322] sm:$0x1]
      %v418 = vsel %vm416, %v413, %v417
      %419 = vst [vmem:[%s322] sm:$0x1] %v418
      %p420 = scmp.lt.s32.totalorder %s18, 1
      %s421 = scalar_select %p420, %s18, 1
      %s422 = scalar_lea.vmem %s7, %s421
      // Predicated region
      $region49: #{shufflenet_v2_forward.46} parent=47 // pred_check
        %p423 = pneg %p203
      $region50: #{shufflenet_v2_forward.46} parent=47 // pred_check_branch
        %425 = sbr.rel (%p423) target = $region52
      $region51: #{shufflenet_v2_forward.46} parent=47 // pred_region
        _
      $region52: #{shufflenet_v2_forward.46} parent=47 // pred_fallthru
        _
    $region48: #{shufflenet_v2_forward.46} parent=5 // pred_fallthru
      _
    %p426 = scmp.le.s32.totalorder 2, %s13
    // Predicated region
    $region53: #{shufflenet_v2_forward.46} parent=5 // pred_check
      %p427 = pneg %p426
    $region54: #{shufflenet_v2_forward.46} parent=5 // pred_check_branch
      %429 = sbr.rel (%p427) target = $region56
    $region55: #{shufflenet_v2_forward.46} parent=5 // pred_region
      %s430 = ssub.s32 %s13, 2
      // Predicated region
      $region57: #{shufflenet_v2_forward.46} parent=55 // pred_check
        %p431 = pneg %p209
      $region58: #{shufflenet_v2_forward.46} parent=55 // pred_check_branch
        %433 = sbr.rel (%p431) target = $region60
      $region59: #{shufflenet_v2_forward.46} parent=55 // pred_region
        %p434 = scmp.lt.s32.totalorder %s19, 1
        %s435 = scalar_select %p434, %s19, 1
        %s436 = scalar_lea.vmem %s7, %s435
      $region60: #{shufflenet_v2_forward.46} parent=55 // pred_fallthru
        _
    $region56: #{shufflenet_v2_forward.46} parent=5 // pred_fallthru
      _
  $region6: #{shufflenet_v2_forward.46} parent=0 // loop_footer
    %s17 = sadd.s32 1, %s13
  $region7: #{shufflenet_v2_forward.46} parent=0 // loop_footer_branch
    %12 = sbr.rel target = $region3
  $region8: #{shufflenet_v2_forward.46} parent=0 // loop_exit
    _

// kernel: shufflenet_v2_forward.48
$region0: #{shufflenet_v2_forward.48}
  #allocation0 [shape = 'u32[]', space=smem, size = 0x4, offset = 0x4, fixed_abs, tag = 'smem constant byte address 0x4 - core index']
  #allocation1 [shape = 'u32[144,128]{1,0:T(1,128)}', space=vmem, size = 0x12000, scoped, tag = 'internal scratch']
  %s0 = inlined_call_operand.vmem [shape: bf16[8,32], index: 0, kind: input, shape index: {}]
  %s1 = inlined_call_operand.vmem [shape: bf16[32,32], index: 1, kind: input, shape index: {}]
  %s2 = inlined_call_operand.vmem [shape: f32[1,32], index: 2, kind: input, shape index: {}]
  %s3 = inlined_call_operand.vmem [shape: f32[1,32], index: 3, kind: input, shape index: {}]
  %s4 = inlined_call_operand.vmem [shape: bf16[8,32], index: 4, kind: output, shape index: {}]
  %s5 = sld [smem:[#allocation0]]
  $region26: #{shufflenet_v2_forward.48} parent=0
    _
  %s7 = ssub.s32 1, %s5
  %s8 = scalar_select 0, %s7, %s5
  // Predicated region
  $region2: #{shufflenet_v2_forward.48} parent=0 // pred_check
    _
  $region3: #{shufflenet_v2_forward.48} parent=0 // pred_check_branch
    %10 = sbr.rel (0) target = $region5
  $region4: #{shufflenet_v2_forward.48} parent=0 // pred_region
    _
  $region5: #{shufflenet_v2_forward.48} parent=0 // pred_fallthru
    _
  // Predicated region
  $region6: #{shufflenet_v2_forward.48} parent=0 // pred_check
    _
  $region7: #{shufflenet_v2_forward.48} parent=0 // pred_check_branch
    %12 = sbr.rel (0) target = $region9
  $region8: #{shufflenet_v2_forward.48} parent=0 // pred_region
    _
  $region9: #{shufflenet_v2_forward.48} parent=0 // pred_fallthru
    _
  // Predicated region
  $region10: #{shufflenet_v2_forward.48} parent=0 // pred_check
    _
  $region11: #{shufflenet_v2_forward.48} parent=0 // pred_check_branch
    %14 = sbr.rel (0) target = $region13
  $region12: #{shufflenet_v2_forward.48} parent=0 // pred_region
    _
  $region13: #{shufflenet_v2_forward.48} parent=0 // pred_fallthru
    _
  // Predicated region
  $region14: #{shufflenet_v2_forward.48} parent=0 // pred_check
    _
  $region15: #{shufflenet_v2_forward.48} parent=0 // pred_check_branch
    %16 = sbr.rel (0) target = $region17
  $region16: #{shufflenet_v2_forward.48} parent=0 // pred_region
    _
  $region17: #{shufflenet_v2_forward.48} parent=0 // pred_fallthru
    _
  %v18 = vld [vmem:[%s0] sm:$0xf]
  %v19 = vld [vmem:[%s1] sm:$0xf]
  %v20 = vld [vmem:[%s1 + $0x4] sm:$0xf]
  %v21 = vld [vmem:[%s1 + $0x8] sm:$0xf]
  %v22 = vld [vmem:[%s1 + $0xc] sm:$0xf]
  %v27 = vunpack.c.l.b16 %v19
  %v28 = vunpack.c.l.b16 %v20
  %v29 = vunpack.c.l.b16 %v21
  %v30 = vunpack.c.l.b16 %v22
  %v31 = vpack.c.b16 %v28, %v27
  %v32 = vpack.c.b16 %v30, %v29
  %vm35 = vcmask 261120
  %v37 = vsel %vm35, %v18, 0
  %39 = vmatprep.subr.bf16.mxu0 0
  %40 = vmatpush1.bf16.msra.mxu0 %v31
  %41 = vmatprep.subr.bf16.mxu0 0
  %42 = vmatpush1.bf16.msra.mxu0 %v32
  %43 = vmatprep.subr.bf16.mxu0 0
  %44 = vmatpush1.bf16.msra.mxu0 0
  %45 = vmatprep.subr.bf16.mxu0 0
  %46 = vmatpush1.bf16.msra.mxu0 0
  %47 = vmatprep.subr.bf16.mxu0 0
  %48 = vmatpush1.bf16.msra.mxu0 0
  %49 = vmatprep.subr.bf16.mxu0 0
  %50 = vmatpush1.bf16.msra.mxu0 0
  %51 = vmatprep.subr.bf16.mxu0 0
  %52 = vmatpush1.bf16.msra.mxu0 0
  %53 = vmatprep.subr.bf16.mxu0 0
  %54 = vmatpush1.bf16.msra.mxu0 0
  %55 = vmatprep.subr.bf16.mxu0 0
  %56 = vmatpush1.bf16.msra.mxu0 0
  %57 = vmatprep.subr.bf16.mxu0 0
  %58 = vmatpush1.bf16.msra.mxu0 0
  %59 = vmatprep.subr.bf16.mxu0 0
  %60 = vmatpush1.bf16.msra.mxu0 0
  %61 = vmatprep.subr.bf16.mxu0 0
  %62 = vmatpush1.bf16.msra.mxu0 0
  %63 = vmatprep.subr.bf16.mxu0 0
  %64 = vmatpush1.bf16.msra.mxu0 0
  %65 = vmatprep.subr.bf16.mxu0 0
  %66 = vmatpush1.bf16.msra.mxu0 0
  %67 = vmatprep.subr.bf16.mxu0 0
  %68 = vmatpush1.bf16.msra.mxu0 0
  %69 = vmatprep.subr.bf16.mxu0 0
  %70 = vmatpush1.bf16.msra.mxu0 0
  %71 = vmatprep.mubr.bf16.mxu0 0
  %72 = vmatmul.mubr.bf16.gmra.mrb[0].mxu0 %v37
  %v73 = vpop.f32.mrb[0].mxu0
  %v74 = vadd.f32 0.0, %v73
  %v75 = vpop.f32.mrb[0].mxu0
  %v76 = vpop.f32.mrb[0].mxu0
  %v77 = vpop.f32.mrb[0].mxu0
  %78 = vdwg.mxu0
  %v79 = vld [vmem:[%s2] sm:$0x1]
  %v81 = vlaneseq
  %v82 = vshrl.u32 %v81, 7
  %v83 = vsub.s32 0, %v82
  %v84 = vrot.slane %v79, %v83
  %v86 = vmul.f32 %v74, %v84
  %v87 = vld [vmem:[%s3] sm:$0x1]
  %v89 = vlaneseq
  %v90 = vshrl.u32 %v89, 7
  %v91 = vsub.s32 0, %v90
  %v92 = vrot.slane %v87, %v91
  %v94 = vadd.f32 %v86, %v92
  %v95 = vmax.f32 %v94, 0.0
  %v96 = vpack.c.bf16 %v95, %v95
  %vm97 = vcmask 257024
  %98 = vst.msk [vmem:[%s4] sm:$0xf] %vm97, %v96
  // Predicated region
  $region18: #{shufflenet_v2_forward.48} parent=0 // pred_check
    _
  $region19: #{shufflenet_v2_forward.48} parent=0 // pred_check_branch
    %100 = sbr.rel (0) target = $region21
  $region20: #{shufflenet_v2_forward.48} parent=0 // pred_region
    _
  $region21: #{shufflenet_v2_forward.48} parent=0 // pred_fallthru
    _
  // Predicated region
  $region22: #{shufflenet_v2_forward.48} parent=0 // pred_check
    _
  $region23: #{shufflenet_v2_forward.48} parent=0 // pred_check_branch
    %102 = sbr.rel (0) target = $region25
  $region24: #{shufflenet_v2_forward.48} parent=0 // pred_region
    _
  $region25: #{shufflenet_v2_forward.48} parent=0 // pred_fallthru
    _

// kernel: shufflenet_v2_forward.52
$region0: #{shufflenet_v2_forward.52}
  #allocation0 [shape = 'u32[]', space=smem, size = 0x4, offset = 0x4, fixed_abs, tag = 'smem constant byte address 0x4 - core index']
  #allocation1 [shape = 'u32[144,128]{1,0:T(1,128)}', space=vmem, size = 0x12000, scoped, tag = 'internal scratch']
  %s0 = inlined_call_operand.vmem [shape: bf16[2,3,3,32], index: 0, kind: input, shape index: {}]
  %s1 = inlined_call_operand.vmem [shape: f32[9,1,1,32], index: 1, kind: input, shape index: {}]
  %s2 = inlined_call_operand.vmem [shape: f32[1,1,1,32], index: 2, kind: input, shape index: {}]
  %s3 = inlined_call_operand.vmem [shape: f32[1,1,1,32], index: 3, kind: input, shape index: {}]
  %s4 = inlined_call_operand.vmem [shape: bf16[2,1,1,32], index: 4, kind: output, shape index: {}]
  %s5 = sld [smem:[#allocation0]]
  $region49: #{shufflenet_v2_forward.52} parent=0
    _
  %s7 = ssub.s32 1, %s5
  %s8 = scalar_select 0, %s7, %s5
  loop: start=0, step=1, limit=4
  $region2: #{shufflenet_v2_forward.52} parent=0 // loop_pre_header
    _
  $region3: #{shufflenet_v2_forward.52} parent=0 // loop_header
    %s10 = sphi 0, %s14
    %p11 = scmp.ge.s32.totalorder %s10, 4
    %s20 = sphi 0, %s22
    %s23 = sphi 0, %s20
    %s24 = sphi 0, %s23
    %s40 = sphi 0, %s24
    %s44 = sphi 0, %s44
    %s46 = sphi 0, %s44
    %s47 = sphi 0, %s46
    %s61 = sphi 0, %s47
    %s65 = sphi 0, %s65
    %s67 = sphi 0, %s65
    %s68 = sphi 0, %s67
    %s82 = sphi 0, %s68
    %s86 = sphi 0, %s86
    %s88 = sphi 0, %s86
    %s89 = sphi 0, %s88
    %s103 = sphi 0, %s89
    %s109 = sphi 0, %s111
    %s112 = sphi 0, %s109
    %s113 = sphi 0, %s112
    %s129 = sphi 0, %s113
  $region4: #{shufflenet_v2_forward.52} parent=0 // loop_header_branch
    %13 = sbr.rel (%p11) target = $region8
  $region5: #{shufflenet_v2_forward.52} parent=0 // loop_body
    %s15 = ssub.s32 %s10, 1
    %s16 = ssub.s32 %s10, 2
    %s17 = sadd.s32 %s10, 1
    %s18 = ssub.s32 %s10, %s17
    %p19 = scmp.eq.s32.totalorder %s18, 0
    %s21 = sadd.s32 %s20, 1
    %s22 = scalar_select %p19, %s20, %s21
    %p25 = pneg %p19
    %p26 = scmp.eq.s32.totalorder %s10, 1
    %p27 = por %p25, %p26
    %p28 = scmp.ne.s32.totalorder %s20, %s23
    %p29 = scmp.eq.s32.totalorder %s10, 0
    %p30 = por %p28, %p29
    %p31 = scmp.ne.s32.totalorder %s20, %s23
    %p32 = scmp.eq.s32.totalorder %s15, 1
    %p33 = por %p31, %p32
    %p34 = scmp.ne.s32.totalorder %s23, %s24
    %p35 = scmp.eq.s32.totalorder %s15, 0
    %p36 = por %p34, %p35
    %p37 = scmp.ne.s32.totalorder %s23, %s24
    %p38 = scmp.eq.s32.totalorder %s16, 1
    %p39 = por %p37, %p38
    %p41 = scmp.ne.s32.totalorder %s24, %s40
    %p42 = scmp.eq.s32.totalorder %s16, 0
    %p43 = por %p41, %p42
    %s45 = sadd.s32 %s44, 1
    %p48 = scmp.eq.s32.totalorder %s10, 1
    %p49 = scmp.ne.s32.totalorder %s44, %s46
    %p50 = scmp.eq.s32.totalorder %s10, 0
    %p51 = por %p49, %p50
    %p52 = scmp.ne.s32.totalorder %s44, %s46
    %p53 = scmp.eq.s32.totalorder %s15, 1
    %p54 = por %p52, %p53
    %p55 = scmp.ne.s32.totalorder %s46, %s47
    %p56 = scmp.eq.s32.totalorder %s15, 0
    %p57 = por %p55, %p56
    %p58 = scmp.ne.s32.totalorder %s46, %s47
    %p59 = scmp.eq.s32.totalorder %s16, 1
    %p60 = por %p58, %p59
    %p62 = scmp.ne.s32.totalorder %s47, %s61
    %p63 = scmp.eq.s32.totalorder %s16, 0
    %p64 = por %p62, %p63
    %s66 = sadd.s32 %s65, 1
    %p69 = scmp.eq.s32.totalorder %s10, 1
    %p70 = scmp.ne.s32.totalorder %s65, %s67
    %p71 = scmp.eq.s32.totalorder %s10, 0
    %p72 = por %p70, %p71
    %p73 = scmp.ne.s32.totalorder %s65, %s67
    %p74 = scmp.eq.s32.totalorder %s15, 1
    %p75 = por %p73, %p74
    %p76 = scmp.ne.s32.totalorder %s67, %s68
    %p77 = scmp.eq.s32.totalorder %s15, 0
    %p78 = por %p76, %p77
    %p79 = scmp.ne.s32.totalorder %s67, %s68
    %p80 = scmp.eq.s32.totalorder %s16, 1
    %p81 = por %p79, %p80
    %p83 = scmp.ne.s32.totalorder %s68, %s82
    %p84 = scmp.eq.s32.totalorder %s16, 0
    %p85 = por %p83, %p84
    %s87 = sadd.s32 %s86, 1
    %p90 = scmp.eq.s32.totalorder %s10, 1
    %p91 = scmp.ne.s32.totalorder %s86, %s88
    %p92 = scmp.eq.s32.totalorder %s10, 0
    %p93 = por %p91, %p92
    %p94 = scmp.ne.s32.totalorder %s86, %s88
    %p95 = scmp.eq.s32.totalorder %s15, 1
    %p96 = por %p94, %p95
    %p97 = scmp.ne.s32.totalorder %s88, %s89
    %p98 = scmp.eq.s32.totalorder %s15, 0
    %p99 = por %p97, %p98
    %p100 = scmp.ne.s32.totalorder %s88, %s89
    %p101 = scmp.eq.s32.totalorder %s16, 1
    %p102 = por %p100, %p101
    %p104 = scmp.ne.s32.totalorder %s89, %s103
    %p105 = scmp.eq.s32.totalorder %s16, 0
    %p106 = por %p104, %p105
    %s107 = ssub.s32 %s10, %s17
    %p108 = scmp.eq.s32.totalorder %s107, 0
    %s110 = sadd.s32 %s109, 1
    %s111 = scalar_select %p108, %s109, %s110
    %p114 = pneg %p108
    %p115 = scmp.eq.s32.totalorder %s10, 1
    %p116 = por %p114, %p115
    %p117 = scmp.ne.s32.totalorder %s109, %s112
    %p118 = scmp.eq.s32.totalorder %s10, 0
    %p119 = por %p117, %p118
    %p120 = scmp.ne.s32.totalorder %s109, %s112
    %p121 = scmp.eq.s32.totalorder %s15, 1
    %p122 = por %p120, %p121
    %p123 = scmp.ne.s32.totalorder %s112, %s113
    %p124 = scmp.eq.s32.totalorder %s15, 0
    %p125 = por %p123, %p124
    %p126 = scmp.ne.s32.totalorder %s112, %s113
    %p127 = scmp.eq.s32.totalorder %s16, 1
    %p128 = por %p126, %p127
    %p130 = scmp.ne.s32.totalorder %s113, %s129
    %p131 = scmp.eq.s32.totalorder %s16, 0
    %p132 = por %p130, %p131
    %p133 = scmp.le.s32.totalorder 1, %s10
    %p134 = scmp.lt.s32.totalorder %s10, 3
    %p135 = pnand %p133, %p134
    %p136 = pneg %p135
    // Predicated region
    $region9: #{shufflenet_v2_forward.52} parent=5 // pred_check
      _
    $region10: #{shufflenet_v2_forward.52} parent=5 // pred_check_branch
      %138 = sbr.rel (%p135) target = $region12
    $region11: #{shufflenet_v2_forward.52} parent=5 // pred_region
      %s139 = ssub.s32 %s10, 1
      // Predicated region
      $region13: #{shufflenet_v2_forward.52} parent=11 // pred_check
        %p140 = pneg %p57
      $region14: #{shufflenet_v2_forward.52} parent=11 // pred_check_branch
        %142 = sbr.rel (%p140) target = $region16
      $region15: #{shufflenet_v2_forward.52} parent=11 // pred_region
        _
      $region16: #{shufflenet_v2_forward.52} parent=11 // pred_fallthru
        _
      // Predicated region
      $region17: #{shufflenet_v2_forward.52} parent=11 // pred_check
        %p143 = pneg %p78
      $region18: #{shufflenet_v2_forward.52} parent=11 // pred_check_branch
        %145 = sbr.rel (%p143) target = $region20
      $region19: #{shufflenet_v2_forward.52} parent=11 // pred_region
        _
      $region20: #{shufflenet_v2_forward.52} parent=11 // pred_fallthru
        _
      // Predicated region
      $region21: #{shufflenet_v2_forward.52} parent=11 // pred_check
        %p146 = pneg %p99
      $region22: #{shufflenet_v2_forward.52} parent=11 // pred_check_branch
        %148 = sbr.rel (%p146) target = $region24
      $region23: #{shufflenet_v2_forward.52} parent=11 // pred_region
        _
      $region24: #{shufflenet_v2_forward.52} parent=11 // pred_fallthru
        _
    $region12: #{shufflenet_v2_forward.52} parent=5 // pred_fallthru
      _
    %p149 = scmp.lt.s32.totalorder %s10, 2
    // Predicated region
    $region25: #{shufflenet_v2_forward.52} parent=5 // pred_check
      %p150 = pneg %p149
    $region26: #{shufflenet_v2_forward.52} parent=5 // pred_check_branch
      %152 = sbr.rel (%p150) target = $region28
    $region27: #{shufflenet_v2_forward.52} parent=5 // pred_region
      // Predicated region
      $region29: #{shufflenet_v2_forward.52} parent=27 // pred_check
        %p153 = pneg %p30
      $region30: #{shufflenet_v2_forward.52} parent=27 // pred_check_branch
        %155 = sbr.rel (%p153) target = $region32
      $region31: #{shufflenet_v2_forward.52} parent=27 // pred_region
        %p156 = scmp.lt.s32.totalorder %s10, 1
        %s157 = scalar_select %p156, %s10, 1
        %s158 = smul.addr %s157, 3
        %s159 = smul.addr %s158, 2
        %s160 = scalar_lea.vmem %s0, %s159
      $region32: #{shufflenet_v2_forward.52} parent=27 // pred_fallthru
        _
    $region28: #{shufflenet_v2_forward.52} parent=5 // pred_fallthru
      _
    %p161 = scmp.le.s32.totalorder 1, %s10
    %p162 = scmp.lt.s32.totalorder %s10, 3
    %p163 = pnand %p161, %p162
    %p164 = pneg %p163
    // Predicated region
    $region33: #{shufflenet_v2_forward.52} parent=5 // pred_check
      _
    $region34: #{shufflenet_v2_forward.52} parent=5 // pred_check_branch
      %166 = sbr.rel (%p163) target = $region36
    $region35: #{shufflenet_v2_forward.52} parent=5 // pred_region
      %s167 = ssub.s32 %s10, 1
      %p168 = scmp.lt.s32.totalorder %s15, 1
      %s169 = scalar_select %p168, %s15, 1
      %s170 = smul.addr %s169, 3
      %s171 = smul.addr %s170, 2
      %s172 = scalar_lea.vmem %s0, %s171
      %p173 = pneg %p36
      %p174 = pneg %p33
      %p175 = pneg %p57
      %p176 = pneg %p54
      %p177 = pneg %p78
      %p178 = pneg %p75
      %p179 = pneg %p99
      %p180 = pneg %p96
      %p181 = pneg %p125
      %p182 = pneg %p122
      %p183 = scmp.lt.s32.totalorder %s15, 1
      %s184 = scalar_select %p183, %s15, 1
      %s185 = scalar_lea.vmem %s4, %s184
      %p186 = scmp.lt.s32.totalorder %s15, 1
      %s187 = scalar_select %p186, %s15, 1
      %s188 = smul.addr %s187, 3
      %s189 = smul.addr %s188, 2
      %s190 = scalar_lea.vmem %s0, %s189
      %p191 = scmp.lt.s32.totalorder %s15, 1
      %s192 = scalar_select %p191, %s15, 1
      %s193 = scalar_lea.vmem %s4, %s192
      %v194 = vld [vmem:[%s190] sm:$0x3]
      %v195 = vld [vmem:[%s190 + $0x2] sm:$0x3]
      %v196 = vld [vmem:[%s190 + $0x4] sm:$0x3]
      %v197 = vunpack.c.l.bf16 %v194
      %v198 = vunpack.c.l.bf16 %v195
      %v199 = vunpack.c.l.bf16 %v196
      %v200 = vld [vmem:[%s1] sm:$0x1]
      %v201 = vmul.f32 %v197, %v200
      %v202 = vadd.f32 %v201, 0.0
      %s203 = scalar_lea.vmem %s1, 1
      %v204 = vld [vmem:[%s203] sm:$0x1]
      %v207 = vunpack.c.l.s4 286326784
      %v208 = vunpack.c.0.s8 %v207
      %v209 = vlaneseq
      %v210 = vshrl.u32 %v209, 7
      %v211 = vsub.s32 %v208, %v210
      %v212 = vrot.slane %v204, %v211
      %v214 = vmul.f32 %v197, %v212
      %v216 = vrot.slane %v214, 5
      %v217 = vrot.slane %v216, 4
      %v219 = vadd.f32 %v202, %v217
      %s220 = scalar_lea.vmem %s1, 2
      %v221 = vld [vmem:[%s220] sm:$0x1]
      %v224 = vunpack.c.l.s4 286326784
      %v225 = vunpack.c.0.s8 %v224
      %v226 = vlaneseq
      %v227 = vshrl.u32 %v226, 7
      %v228 = vsub.s32 %v225, %v227
      %v229 = vrot.slane %v221, %v228
      %v231 = vmul.f32 %v197, %v229
      %v233 = vrot.slane %v231, 6
      %v234 = vrot.slane %v233, 4
      %v236 = vadd.f32 %v219, %v234
      %s237 = scalar_lea.vmem %s1, 3
      %v238 = vld [vmem:[%s237] sm:$0x1]
      %v239 = vmul.f32 %v198, %v238
      %v240 = vadd.f32 %v236, %v239
      %s241 = scalar_lea.vmem %s1, 4
      %v242 = vld [vmem:[%s241] sm:$0x1]
      %v245 = vunpack.c.l.s4 286326784
      %v246 = vunpack.c.0.s8 %v245
      %v247 = vlaneseq
      %v248 = vshrl.u32 %v247, 7
      %v249 = vsub.s32 %v246, %v248
      %v250 = vrot.slane %v242, %v249
      %v252 = vmul.f32 %v198, %v250
      %v254 = vrot.slane %v252, 5
      %v255 = vrot.slane %v254, 4
      %v257 = vadd.f32 %v240, %v255
      %s258 = scalar_lea.vmem %s1, 5
      %v259 = vld [vmem:[%s258] sm:$0x1]
      %v262 = vunpack.c.l.s4 286326784
      %v263 = vunpack.c.0.s8 %v262
      %v264 = vlaneseq
      %v265 = vshrl.u32 %v264, 7
      %v266 = vsub.s32 %v263, %v265
      %v267 = vrot.slane %v259, %v266
      %v269 = vmul.f32 %v198, %v267
      %v271 = vrot.slane %v269, 6
      %v272 = vrot.slane %v271, 4
      %v274 = vadd.f32 %v257, %v272
      %s275 = scalar_lea.vmem %s1, 6
      %v276 = vld [vmem:[%s275] sm:$0x1]
      %v277 = vmul.f32 %v199, %v276
      %v278 = vadd.f32 %v274, %v277
      %s279 = scalar_lea.vmem %s1, 7
      %v280 = vld [vmem:[%s279] sm:$0x1]
      %v283 = vunpack.c.l.s4 286326784
      %v284 = vunpack.c.0.s8 %v283
      %v285 = vlaneseq
      %v286 = vshrl.u32 %v285, 7
      %v287 = vsub.s32 %v284, %v286
      %v288 = vrot.slane %v280, %v287
      %v290 = vmul.f32 %v199, %v288
      %v292 = vrot.slane %v290, 5
      %v293 = vrot.slane %v292, 4
      %v295 = vadd.f32 %v278, %v293
      %s296 = scalar_lea.vmem %s1, 8
      %v297 = vld [vmem:[%s296] sm:$0x1]
      %v300 = vunpack.c.l.s4 286326784
      %v301 = vunpack.c.0.s8 %v300
      %v302 = vlaneseq
      %v303 = vshrl.u32 %v302, 7
      %v304 = vsub.s32 %v301, %v303
      %v305 = vrot.slane %v297, %v304
      %v307 = vmul.f32 %v199, %v305
      %v309 = vrot.slane %v307, 6
      %v310 = vrot.slane %v309, 4
      %v312 = vadd.f32 %v295, %v310
      %v313 = vld [vmem:[%s2] sm:$0x1]
      %v314 = vmul.f32 %v312, %v313
      %v315 = vld [vmem:[%s3] sm:$0x1]
      %v316 = vadd.f32 %v314, %v315
      %v317 = vpack.c.bf16 %v316, %v316
      %vm318 = vcmask 253952
      %vm319 = vsmask.f32 256
      %vm320 = vmand %vm318, %vm319
      %v321 = vld [vmem:[%s193] sm:$0x1]
      %v322 = vsel %vm320, %v317, %v321
      %323 = vst [vmem:[%s193] sm:$0x1] %v322
      %p324 = scmp.lt.s32.totalorder %s15, 1
      %s325 = scalar_select %p324, %s15, 1
      %s326 = scalar_lea.vmem %s4, %s325
      // Predicated region
      $region37: #{shufflenet_v2_forward.52} parent=35 // pred_check
        %p327 = pneg %p122
      $region38: #{shufflenet_v2_forward.52} parent=35 // pred_check_branch
        %329 = sbr.rel (%p327) target = $region40
      $region39: #{shufflenet_v2_forward.52} parent=35 // pred_region
        _
      $region40: #{shufflenet_v2_forward.52} parent=35 // pred_fallthru
        _
    $region36: #{shufflenet_v2_forward.52} parent=5 // pred_fallthru
      _
    %p330 = scmp.le.s32.totalorder 2, %s10
    // Predicated region
    $region41: #{shufflenet_v2_forward.52} parent=5 // pred_check
      %p331 = pneg %p330
    $region42: #{shufflenet_v2_forward.52} parent=5 // pred_check_branch
      %333 = sbr.rel (%p331) target = $region44
    $region43: #{shufflenet_v2_forward.52} parent=5 // pred_region
      %s334 = ssub.s32 %s10, 2
      // Predicated region
      $region45: #{shufflenet_v2_forward.52} parent=43 // pred_check
        %p335 = pneg %p128
      $region46: #{shufflenet_v2_forward.52} parent=43 // pred_check_branch
        %337 = sbr.rel (%p335) target = $region48
      $region47: #{shufflenet_v2_forward.52} parent=43 // pred_region
        %p338 = scmp.lt.s32.totalorder %s16, 1
        %s339 = scalar_select %p338, %s16, 1
        %s340 = scalar_lea.vmem %s4, %s339
      $region48: #{shufflenet_v2_forward.52} parent=43 // pred_fallthru
        _
    $region44: #{shufflenet_v2_forward.52} parent=5 // pred_fallthru
      _
  $region6: #{shufflenet_v2_forward.52} parent=0 // loop_footer
    %s14 = sadd.s32 1, %s10
  $region7: #{shufflenet_v2_forward.52} parent=0 // loop_footer_branch
    %9 = sbr.rel target = $region3
  $region8: #{shufflenet_v2_forward.52} parent=0 // loop_exit
    _

// kernel: shufflenet_v2_forward.54
$region0: #{shufflenet_v2_forward.54}
  #allocation0 [shape = 'u32[]', space=smem, size = 0x4, offset = 0x4, fixed_abs, tag = 'smem constant byte address 0x4 - core index']
  #allocation1 [shape = 'u32[144,128]{1,0:T(1,128)}', space=vmem, size = 0x12000, scoped, tag = 'internal scratch']
  %s0 = inlined_call_operand.vmem [shape: bf16[2,64], index: 0, kind: input, shape index: {}]
  %s1 = inlined_call_operand.vmem [shape: bf16[64,128], index: 1, kind: input, shape index: {}]
  %s2 = inlined_call_operand.vmem [shape: f32[1,128], index: 2, kind: input, shape index: {}]
  %s3 = inlined_call_operand.vmem [shape: f32[1,128], index: 3, kind: input, shape index: {}]
  %s4 = inlined_call_operand.vmem [shape: bf16[2,128], index: 4, kind: output, shape index: {}]
  %s5 = sld [smem:[#allocation0]]
  $region26: #{shufflenet_v2_forward.54} parent=0
    _
  %s7 = ssub.s32 1, %s5
  %s8 = scalar_select 0, %s7, %s5
  // Predicated region
  $region2: #{shufflenet_v2_forward.54} parent=0 // pred_check
    _
  $region3: #{shufflenet_v2_forward.54} parent=0 // pred_check_branch
    %10 = sbr.rel (0) target = $region5
  $region4: #{shufflenet_v2_forward.54} parent=0 // pred_region
    _
  $region5: #{shufflenet_v2_forward.54} parent=0 // pred_fallthru
    _
  // Predicated region
  $region6: #{shufflenet_v2_forward.54} parent=0 // pred_check
    _
  $region7: #{shufflenet_v2_forward.54} parent=0 // pred_check_branch
    %12 = sbr.rel (0) target = $region9
  $region8: #{shufflenet_v2_forward.54} parent=0 // pred_region
    _
  $region9: #{shufflenet_v2_forward.54} parent=0 // pred_fallthru
    _
  // Predicated region
  $region10: #{shufflenet_v2_forward.54} parent=0 // pred_check
    _
  $region11: #{shufflenet_v2_forward.54} parent=0 // pred_check_branch
    %14 = sbr.rel (0) target = $region13
  $region12: #{shufflenet_v2_forward.54} parent=0 // pred_region
    _
  $region13: #{shufflenet_v2_forward.54} parent=0 // pred_fallthru
    _
  // Predicated region
  $region14: #{shufflenet_v2_forward.54} parent=0 // pred_check
    _
  $region15: #{shufflenet_v2_forward.54} parent=0 // pred_check_branch
    %16 = sbr.rel (0) target = $region17
  $region16: #{shufflenet_v2_forward.54} parent=0 // pred_region
    _
  $region17: #{shufflenet_v2_forward.54} parent=0 // pred_fallthru
    _
  %v18 = vld [vmem:[%s0] sm:$0x1]
  %v19 = vld [vmem:[%s1] sm:$0xf]
  %v20 = vld [vmem:[%s1 + $0x4] sm:$0xf]
  %v21 = vld [vmem:[%s1 + $0x8] sm:$0xf]
  %v22 = vld [vmem:[%s1 + $0xc] sm:$0xf]
  %v23 = vld [vmem:[%s1 + $0x10] sm:$0xf]
  %v24 = vld [vmem:[%s1 + $0x14] sm:$0xf]
  %v25 = vld [vmem:[%s1 + $0x18] sm:$0xf]
  %v26 = vld [vmem:[%s1 + $0x1c] sm:$0xf]
  %v35 = vunpack.c.l.b16 %v19
  %v36 = vunpack.c.l.b16 %v20
  %v37 = vunpack.c.l.b16 %v21
  %v38 = vunpack.c.l.b16 %v22
  %v39 = vunpack.c.l.b16 %v23
  %v40 = vunpack.c.l.b16 %v24
  %v41 = vunpack.c.l.b16 %v25
  %v42 = vunpack.c.l.b16 %v26
  %v43 = vpack.c.b16 %v36, %v35
  %v44 = vpack.c.b16 %v38, %v37
  %v45 = vpack.c.b16 %v40, %v39
  %v46 = vpack.c.b16 %v42, %v41
  %vm51 = vcmask 523264
  %v53 = vsel %vm51, %v18, 0
  %55 = vmatprep.subr.bf16.mxu0 0
  %56 = vmatpush1.bf16.msra.mxu0 %v43
  %57 = vmatprep.subr.bf16.mxu0 0
  %58 = vmatpush1.bf16.msra.mxu0 %v44
  %59 = vmatprep.subr.bf16.mxu0 0
  %60 = vmatpush1.bf16.msra.mxu0 %v45
  %61 = vmatprep.subr.bf16.mxu0 0
  %62 = vmatpush1.bf16.msra.mxu0 %v46
  %63 = vmatprep.subr.bf16.mxu0 0
  %64 = vmatpush1.bf16.msra.mxu0 0
  %65 = vmatprep.subr.bf16.mxu0 0
  %66 = vmatpush1.bf16.msra.mxu0 0
  %67 = vmatprep.subr.bf16.mxu0 0
  %68 = vmatpush1.bf16.msra.mxu0 0
  %69 = vmatprep.subr.bf16.mxu0 0
  %70 = vmatpush1.bf16.msra.mxu0 0
  %71 = vmatprep.subr.bf16.mxu0 0
  %72 = vmatpush1.bf16.msra.mxu0 0
  %73 = vmatprep.subr.bf16.mxu0 0
  %74 = vmatpush1.bf16.msra.mxu0 0
  %75 = vmatprep.subr.bf16.mxu0 0
  %76 = vmatpush1.bf16.msra.mxu0 0
  %77 = vmatprep.subr.bf16.mxu0 0
  %78 = vmatpush1.bf16.msra.mxu0 0
  %79 = vmatprep.subr.bf16.mxu0 0
  %80 = vmatpush1.bf16.msra.mxu0 0
  %81 = vmatprep.subr.bf16.mxu0 0
  %82 = vmatpush1.bf16.msra.mxu0 0
  %83 = vmatprep.subr.bf16.mxu0 0
  %84 = vmatpush1.bf16.msra.mxu0 0
  %85 = vmatprep.subr.bf16.mxu0 0
  %86 = vmatpush1.bf16.msra.mxu0 0
  %87 = vmatprep.mubr.bf16.mxu0 0
  %88 = vmatmul.mubr.bf16.gmra.mrb[0].mxu0 %v53
  %v89 = vpop.f32.mrb[0].mxu0
  %v90 = vadd.f32 0.0, %v89
  %v91 = vpop.f32.mrb[0].mxu0
  %v92 = vpop.f32.mrb[0].mxu0
  %v93 = vpop.f32.mrb[0].mxu0
  %94 = vdwg.mxu0
  %v95 = vld [vmem:[%s2] sm:$0x1]
  %v97 = vlaneseq
  %v98 = vshrl.u32 %v97, 7
  %v99 = vsub.s32 0, %v98
  %v100 = vrot.slane %v95, %v99
  %v102 = vmul.f32 %v90, %v100
  %v103 = vld [vmem:[%s3] sm:$0x1]
  %v105 = vlaneseq
  %v106 = vshrl.u32 %v105, 7
  %v107 = vsub.s32 0, %v106
  %v108 = vrot.slane %v103, %v107
  %v110 = vadd.f32 %v102, %v108
  %v111 = vmax.f32 %v110, 0.0
  %v112 = vpack.c.bf16 %v111, %v111
  %113 = vst [vmem:[%s4] sm:$0x1] %v112
  // Predicated region
  $region18: #{shufflenet_v2_forward.54} parent=0 // pred_check
    _
  $region19: #{shufflenet_v2_forward.54} parent=0 // pred_check_branch
    %115 = sbr.rel (0) target = $region21
  $region20: #{shufflenet_v2_forward.54} parent=0 // pred_region
    _
  $region21: #{shufflenet_v2_forward.54} parent=0 // pred_fallthru
    _
  // Predicated region
  $region22: #{shufflenet_v2_forward.54} parent=0 // pred_check
    _
  $region23: #{shufflenet_v2_forward.54} parent=0 // pred_check_branch
    %117 = sbr.rel (0) target = $region25
  $region24: #{shufflenet_v2_forward.54} parent=0 // pred_region
    _
  $region25: #{shufflenet_v2_forward.54} parent=0 // pred_fallthru
    _

// kernel: shufflenet_v2_forward.55
$region0: #{shufflenet_v2_forward.55}
  #allocation0 [shape = 'u32[]', space=smem, size = 0x4, offset = 0x4, fixed_abs, tag = 'smem constant byte address 0x4 - core index']
  #allocation1 [shape = 'u32[144,128]{1,0:T(1,128)}', space=vmem, size = 0x12000, scoped, tag = 'internal scratch']
  %s0 = inlined_call_operand.vmem [shape: bf16[2,1,128], index: 0, kind: input, shape index: {}]
  %s1 = inlined_call_operand.vmem [shape: bf16[128,10], index: 1, kind: input, shape index: {}]
  %s2 = inlined_call_operand.vmem [shape: f32[1,10], index: 2, kind: input, shape index: {}]
  %s3 = inlined_call_operand.hbm [shape: f32[2,10], index: 3, kind: output, shape index: {}]
  %s4 = sld [smem:[#allocation0]]
  $region22: #{shufflenet_v2_forward.55} parent=0
    _
  %s6 = ssub.s32 1, %s4
  %s7 = scalar_select 0, %s6, %s4
  $region1: #{shufflenet_v2_forward.55} parent=0
    #allocation2 [shape = 'u8[1024]{0}', space=vmem, size = 0x400, scoped, tag = 'output window, operand 0, single buffered']
    #allocation3 [shape = 's32[1]{0}', space=sflag, size = 0x4, scoped, tag = 'scoped memory for shufflenet_v2_forward.55']
    %8 = vsyncpa [#allocation3], 0
    // Predicated region
    $region2: #{shufflenet_v2_forward.55} parent=1 // pred_check
      _
    $region3: #{shufflenet_v2_forward.55} parent=1 // pred_check_branch
      %10 = sbr.rel (0) target = $region5
    $region4: #{shufflenet_v2_forward.55} parent=1 // pred_region
      _
    $region5: #{shufflenet_v2_forward.55} parent=1 // pred_fallthru
      _
    // Predicated region
    $region6: #{shufflenet_v2_forward.55} parent=1 // pred_check
      _
    $region7: #{shufflenet_v2_forward.55} parent=1 // pred_check_branch
      %12 = sbr.rel (0) target = $region9
    $region8: #{shufflenet_v2_forward.55} parent=1 // pred_region
      _
    $region9: #{shufflenet_v2_forward.55} parent=1 // pred_fallthru
      _
    // Predicated region
    $region10: #{shufflenet_v2_forward.55} parent=1 // pred_check
      _
    $region11: #{shufflenet_v2_forward.55} parent=1 // pred_check_branch
      %14 = sbr.rel (0) target = $region13
    $region12: #{shufflenet_v2_forward.55} parent=1 // pred_region
      _
    $region13: #{shufflenet_v2_forward.55} parent=1 // pred_fallthru
      _
    %v16 = vld [vmem:[%s0] sm:$0x1]
    %v17 = vld [vmem:[%s0 + $0x1] sm:$0x1]
    %v18 = vunpack.c.l.bf16 %v16
    %v19 = vunpack.c.l.bf16 %v17
    %v20 = vadd.f32 %v18, 0.0
    %v21 = vadd.f32 %v19, 0.0
    %v22 = vpack.c.bf16 %v20, %v20
    %v23 = vpack.c.bf16 %v21, %v21
    %v24 = vld [vmem:[%s1] sm:$0xf]
    %v25 = vld [vmem:[%s1 + $0x4] sm:$0xf]
    %v26 = vld [vmem:[%s1 + $0x8] sm:$0xf]
    %v27 = vld [vmem:[%s1 + $0xc] sm:$0xf]
    %v28 = vld [vmem:[%s1 + $0x10] sm:$0xf]
    %v29 = vld [vmem:[%s1 + $0x14] sm:$0xf]
    %v30 = vld [vmem:[%s1 + $0x18] sm:$0xf]
    %v31 = vld [vmem:[%s1 + $0x1c] sm:$0xf]
    %v32 = vld [vmem:[%s1 + $0x20] sm:$0xf]
    %v33 = vld [vmem:[%s1 + $0x24] sm:$0xf]
    %v34 = vld [vmem:[%s1 + $0x28] sm:$0xf]
    %v35 = vld [vmem:[%s1 + $0x2c] sm:$0xf]
    %v36 = vld [vmem:[%s1 + $0x30] sm:$0xf]
    %v37 = vld [vmem:[%s1 + $0x34] sm:$0xf]
    %v38 = vld [vmem:[%s1 + $0x38] sm:$0xf]
    %v39 = vld [vmem:[%s1 + $0x3c] sm:$0xf]
    %v40 = vld [vmem:[%s2] sm:$0x1]
    %v42 = vlaneseq
    %v43 = vshrl.u32 %v42, 7
    %v44 = vsub.s32 0, %v43
    %v45 = vrot.slane %v40, %v44
    %v49 = vunpack.c.l.b16 %v22
    %v50 = vunpack.c.l.b16 %v23
    %v51 = vrot.slane %v50, 7
    %vm52 = vcmask 1041409
    %v53 = vsel %vm52, %v51, %v49
    %v54 = vpack.c.b16 %v53, %v53
    %v72 = vunpack.c.l.b16 %v24
    %v73 = vunpack.c.l.b16 %v25
    %v74 = vunpack.c.l.b16 %v26
    %v75 = vunpack.c.l.b16 %v27
    %v76 = vunpack.c.l.b16 %v28
    %v77 = vunpack.c.l.b16 %v29
    %v78 = vunpack.c.l.b16 %v30
    %v79 = vunpack.c.l.b16 %v31
    %v80 = vunpack.c.l.b16 %v32
    %v81 = vunpack.c.l.b16 %v33
    %v82 = vunpack.c.l.b16 %v34
    %v83 = vunpack.c.l.b16 %v35
    %v84 = vunpack.c.l.b16 %v36
    %v85 = vunpack.c.l.b16 %v37
    %v86 = vunpack.c.l.b16 %v38
    %v87 = vunpack.c.l.b16 %v39
    %v88 = vpack.c.b16 %v73, %v72
    %v89 = vpack.c.b16 %v75, %v74
    %v90 = vpack.c.b16 %v77, %v76
    %v91 = vpack.c.b16 %v79, %v78
    %v92 = vpack.c.b16 %v81, %v80
    %v93 = vpack.c.b16 %v83, %v82
    %v94 = vpack.c.b16 %v85, %v84
    %v95 = vpack.c.b16 %v87, %v86
    %104 = vmatprep.subr.bf16.mxu0 0
    %105 = vmatpush1.bf16.msra.mxu0 %v88
    %106 = vmatprep.subr.bf16.mxu0 0
    %107 = vmatpush1.bf16.msra.mxu0 %v89
    %108 = vmatprep.subr.bf16.mxu0 0
    %109 = vmatpush1.bf16.msra.mxu0 %v90
    %110 = vmatprep.subr.bf16.mxu0 0
    %111 = vmatpush1.bf16.msra.mxu0 %v91
    %112 = vmatprep.subr.bf16.mxu0 0
    %113 = vmatpush1.bf16.msra.mxu0 %v92
    %114 = vmatprep.subr.bf16.mxu0 0
    %115 = vmatpush1.bf16.msra.mxu0 %v93
    %116 = vmatprep.subr.bf16.mxu0 0
    %117 = vmatpush1.bf16.msra.mxu0 %v94
    %118 = vmatprep.subr.bf16.mxu0 0
    %119 = vmatpush1.bf16.msra.mxu0 %v95
    %120 = vmatprep.subr.bf16.mxu0 0
    %121 = vmatpush1.bf16.msra.mxu0 0
    %122 = vmatprep.subr.bf16.mxu0 0
    %123 = vmatpush1.bf16.msra.mxu0 0
    %124 = vmatprep.subr.bf16.mxu0 0
    %125 = vmatpush1.bf16.msra.mxu0 0
    %126 = vmatprep.subr.bf16.mxu0 0
    %127 = vmatpush1.bf16.msra.mxu0 0
    %128 = vmatprep.subr.bf16.mxu0 0
    %129 = vmatpush1.bf16.msra.mxu0 0
    %130 = vmatprep.subr.bf16.mxu0 0
    %131 = vmatpush1.bf16.msra.mxu0 0
    %132 = vmatprep.subr.bf16.mxu0 0
    %133 = vmatpush1.bf16.msra.mxu0 0
    %134 = vmatprep.subr.bf16.mxu0 0
    %135 = vmatpush1.bf16.msra.mxu0 0
    %136 = vmatprep.mubr.bf16.mxu0 0
    %137 = vmatmul.mubr.bf16.gmra.mrb[0].mxu0 %v54
    %v138 = vpop.f32.mrb[0].mxu0
    %v139 = vadd.f32 %v45, %v138
    %v140 = vpop.f32.mrb[0].mxu0
    %v141 = vpop.f32.mrb[0].mxu0
    %v142 = vpop.f32.mrb[0].mxu0
    %143 = vdwg.mxu0
    %vm144 = vcmask 74752
    %145 = vst.msk [vmem:[#allocation2] sm:$0x3] %vm144, %v139
    // Predicated region
    $region14: #{shufflenet_v2_forward.55} parent=1 // pred_check
      _
    $region15: #{shufflenet_v2_forward.55} parent=1 // pred_check_branch
      %147 = sbr.rel (0) target = $region17
    $region16: #{shufflenet_v2_forward.55} parent=1 // pred_region
      %s149 = ssub.s32 32, 32
      %150 = vsyncadd [#allocation3], %s149
      %s152 = sshll.u32 [#allocation2], 4
      %s153 = int_to_ptr.vmem [resolvable:$true] %s152
      %155 = dma.vmem_to_hbm [thread:$0]  %s153, 32, %s3, [#allocation3]
    $region17: #{shufflenet_v2_forward.55} parent=1 // pred_fallthru
      _
    // Predicated region
    $region18: #{shufflenet_v2_forward.55} parent=1 // pred_check
      _
    $region19: #{shufflenet_v2_forward.55} parent=1 // pred_check_branch
      %157 = sbr.rel (0) target = $region21
    $region20: #{shufflenet_v2_forward.55} parent=1 // pred_region
      %158 = dma.done [#allocation3], 32
    $region21: #{shufflenet_v2_forward.55} parent=1 // pred_fallthru
      _
    %159 = vsyncpa [#allocation3], 1

</llo_original>
